<compile_context>
chip_gen: v7x
topology: tpu7x:2x2x1
jax: 0.10.0
libtpu: 0.0.40
codegen_flags: <defaults>
</compile_context>

<pallas_src>
import functools

import jax
import jax.numpy as jnp
import numpy as np
from jax.experimental import pallas as pl
from jax.experimental.pallas import tpu as pltpu

EPS = 1e-5
FEAT_DIM = 1024
OUT_PAD = 128   # linearf output padded to a full lane width; sliced in wrapper
K_PAD = 8       # conv1 contraction (3 xyz channels) zero-padded to 8 for the MXU


# ----------------------------------------------------------------------------
# Fused kernel: per-point shared MLP (conv1..conv5 + BN + ReLU), global max
# pool, and the classification head (linear1..linearf) on the last point tile.
# Grid = (B, N // tile_n); the (8, 1024) VMEM scratch is the running raw max.
# ----------------------------------------------------------------------------
def pointnet_kernel(x_ref,
                    w1, t1, w2, t2, w3, t3, w4, t4, w5, t5,
                    w6, t6, w7, t7, wf, bf,
                    out_ref, acc_ref):
    nt = pl.program_id(1)
    x = x_ref[0]                                                  # (tile_n, 8) bf16
    tile_n = x.shape[0]

    def dense_relu(h_bf16, w_ref, t_ref):
        # BN scale already folded into the (bf16) weight columns; bias is f32.
        y = jnp.dot(h_bf16, w_ref[...], preferred_element_type=jnp.float32)
        # Emit bf16 directly so the next layer's MXU-input cast disappears.
        return jnp.maximum(y + t_ref[...], 0.0).astype(jnp.bfloat16)

    # conv1..conv4 (+ folded BN + ReLU): all on the MXU, bf16 in / f32 acc.
    h = dense_relu(x, w1, t1)                                     # (tile_n, 64)
    h = dense_relu(h, w2, t2)                                     # (tile_n, 64)
    h = dense_relu(h, w3, t3)                                     # (tile_n, 64)
    h = dense_relu(h, w4, t4)                                     # (tile_n, 128)

    # conv5: raw dot only.  bn5 bias + ReLU are hoisted onto the pooled
    # accumulator (exact: max_p relu(y_p + t) == relu(max_p y_p + t)).
    y5 = jnp.dot(h, w5[...], preferred_element_type=jnp.float32)  # (tile_n, 1024) f32

    # Running max over points: VALU-only reduce on (8,1024)-aligned vregs.
    tile_max8 = jnp.max(y5.reshape(tile_n // 8, 8, FEAT_DIM), axis=0)   # (8, 1024)

    @pl.when(nt == 0)
    def _():
        acc_ref[...] = tile_max8
        # Defensive: the output block stays resident across the nt axis and is
        # only meaningfully written on the last step; make sure it is never
        # flushed uninitialized.
        out_ref[...] = jnp.zeros_like(out_ref)

    @pl.when(nt != 0)
    def _():
        acc_ref[...] = jnp.maximum(acc_ref[...], tile_max8)

    # Fused classification head, once per batch element on the last tile.
    @pl.when(nt == pl.num_programs(1) - 1)
    def _():
        pooled = jnp.max(acc_ref[...], axis=0, keepdims=True)     # (1, 1024)
        feat = jnp.maximum(pooled + t5[...], 0.0)                 # hoisted bn5 + relu
        feat8 = jnp.broadcast_to(feat, (8, FEAT_DIM)).astype(jnp.bfloat16)
        h6 = jnp.maximum(
            jnp.dot(feat8, w6[...],
                    preferred_element_type=jnp.float32) + t6[...], 0.0)
        # dp1: identity (eval mode)
        h7 = jnp.maximum(
            jnp.dot(h6.astype(jnp.bfloat16), w7[...],
                    preferred_element_type=jnp.float32) + t7[...], 0.0)
        # dp2: identity (eval mode)
        logits = jnp.dot(h7.astype(jnp.bfloat16), wf[...],
                         preferred_element_type=jnp.float32) + bf[...]   # (8, OUT_PAD)
        out_ref[...] = logits[None, :, :]


def run_pointnet(x_bnk, kernel_params, tile_n=1024):
    B, N, k_pad = x_bnk.shape
    tile_n = min(tile_n, N)
    assert N % tile_n == 0 and tile_n % 8 == 0
    n_tiles = N // tile_n

    def const_spec(a):
        # Full-array block, constant index map -> DMA'd once, never re-fetched.
        return pl.BlockSpec(a.shape, lambda b, nt: (0,) * a.ndim)

    in_specs = [pl.BlockSpec((1, tile_n, k_pad), lambda b, nt: (b, nt, 0))]
    in_specs += [const_spec(a) for a in kernel_params]

    out8 = pl.pallas_call(
        pointnet_kernel,
        out_shape=jax.ShapeDtypeStruct((B, 8, OUT_PAD), jnp.float32),
        grid=(B, n_tiles),
        in_specs=in_specs,
        out_specs=pl.BlockSpec((1, 8, OUT_PAD), lambda b, nt: (b, 0, 0)),
        scratch_shapes=[pltpu.VMEM((8, FEAT_DIM), jnp.float32)],
        compiler_params=pltpu.CompilerParams(
            dimension_semantics=("parallel", "arbitrary")),
    )(x_bnk, *kernel_params)
    # logits replicated across the 8 sublanes; take row 0 (still OUT_PAD wide).
    return out8[:, 0, :]                                          # (B, OUT_PAD)


@functools.partial(jax.jit, static_argnames=("out_ch", "tile_n"))
def pointnet_forward(x_b3n, kernel_params, out_ch=40, tile_n=1024):
    x_bnc = jnp.transpose(x_b3n, (0, 2, 1)).astype(jnp.float32)   # (B, N, 3)
    x_pad = jnp.pad(x_bnc, ((0, 0), (0, 0), (0, K_PAD - x_bnc.shape[-1])))
    x_pad = x_pad.astype(jnp.bfloat16)                            # (B, N, 8) bf16
    out_pad = run_pointnet(x_pad, kernel_params, tile_n=tile_n)
    return out_pad[:, :out_ch]                                    # (B, out_ch)


# ----------------------------------------------------------------------------
# Parameter construction (deterministic, synthetic) + kernel-param preparation.
# ----------------------------------------------------------------------------
def make_bn_scale_shift(key, c):
    k1, k2, k3, k4 = jax.random.split(key, 4)
    gamma = 1.0 + 0.1 * jax.random.normal(k1, (c,), jnp.float32)
    beta = 0.1 * jax.random.normal(k2, (c,), jnp.float32)
    mean = 0.1 * jax.random.normal(k3, (c,), jnp.float32)
    var = 0.5 + jnp.abs(jax.random.normal(k4, (c,), jnp.float32))
    scale = gamma / jnp.sqrt(var + EPS)
    shift = beta - mean * scale
    return scale.reshape(1, c), shift.reshape(1, c)


def make_params(key, output_channels=40):
    conv_dims = [(3, 64), (64, 64), (64, 64), (64, 128), (128, 1024)]
    keys = jax.random.split(key, 16)
    backbone = []
    for i, (ci, co) in enumerate(conv_dims):
        w = 0.1 * jax.random.normal(keys[2 * i], (ci, co), jnp.float32)
        s, t = make_bn_scale_shift(keys[2 * i + 1], co)
        backbone.append((w, s, t))

    w6 = 0.05 * jax.random.normal(keys[10], (1024, 512), jnp.float32)
    s6, t6 = make_bn_scale_shift(keys[11], 512)
    w7 = 0.05 * jax.random.normal(keys[12], (512, 256), jnp.float32)
    b7 = 0.05 * jax.random.normal(keys[13], (256,), jnp.float32).reshape(1, 256)
    s7, t7 = make_bn_scale_shift(keys[14], 256)
    wf = 0.05 * jax.random.normal(keys[15], (256, output_channels), jnp.float32)
    bf = jnp.linspace(-0.1, 0.1, output_channels, dtype=jnp.float32).reshape(1, output_channels)
    head = (w6, s6, t6, w7, b7, s7, t7, wf, bf)
    return backbone, head


def prepare_kernel_params(backbone_params, head_params):
    """Fold BN scale into the weight columns, cast MXU weights to bf16, pad the
    conv1 contraction 3->8 for the MXU, and pad linearf to OUT_PAD output lanes
    (lane-dense store).  All biases/shifts stay f32."""
    (w1, s1, t1), *rest = backbone_params
    w1f = w1 * s1                                                  # (3, 64)
    w1p = jnp.zeros((K_PAD, w1f.shape[1]), jnp.float32).at[:w1f.shape[0], :].set(w1f)
    kp = [w1p.astype(jnp.bfloat16), t1]
    for (w, s, t) in rest:
        kp += [(w * s).astype(jnp.bfloat16), t]
    w6, s6, t6, w7, b7, s7, t7, wf, bf = head_params
    kp += [(w6 * s6).astype(jnp.bfloat16), t6]
    kp += [(w7 * s7).astype(jnp.bfloat16), b7 * s7 + t7]
    out_ch = wf.shape[1]
    wf_p = jnp.zeros((wf.shape[0], OUT_PAD), jnp.float32).at[:, :out_ch].set(wf)
    bf_p = jnp.zeros((1, OUT_PAD), jnp.float32).at[:, :out_ch].set(bf)
    kp += [wf_p.astype(jnp.bfloat16), bf_p]
    return tuple(kp)


# ----------------------------------------------------------------------------
# Pure-JAX f32 reference (unfolded params, matches the PyTorch eval-mode math).
# ----------------------------------------------------------------------------
def pointnet_ref(x_b3n, backbone_params, head_params):
    h = jnp.transpose(x_b3n, (0, 2, 1)).astype(jnp.float32)
    for (w, s, t) in backbone_params:
        h = jnp.maximum(h @ w * s + t, 0.0)
    feat = jnp.max(h, axis=1)
    w6, s6, t6, w7, b7, s7, t7, wf, bf = head_params
    h = jnp.maximum(feat @ w6 * s6 + t6, 0.0)
    h = jnp.maximum((h @ w7 + b7) * s7 + t7, 0.0)
    return h @ wf + bf


if __name__ == "__main__":
    key = jax.random.PRNGKey(0)
    k_param, k_x = jax.random.split(key)
    backbone_params, head_params = make_params(k_param, output_channels=40)
    kernel_params = prepare_kernel_params(backbone_params, head_params)

    B, N = 2, 1024                          # small synthetic point cloud
    x = jax.random.normal(k_x, (B, 3, N), jnp.float32)   # PyTorch NCL input

    out = pointnet_forward(x, kernel_params, out_ch=40, tile_n=1024)
    out = jax.block_until_ready(out)

    ref = pointnet_ref(x, backbone_params, head_params)
    assert out.shape == (B, 40), out.shape
    assert bool(jnp.all(jnp.isfinite(out)))
    # bf16 MXU operands / bf16 intermediates with f32 accumulation vs. pure-f32
    # reference.
    np.testing.assert_allclose(np.asarray(out), np.asarray(ref), rtol=5e-2, atol=5e-2)
    print("KERNEL_OK")
</pallas_src>

<mosaic_0001>
module attributes {stable_mosaic.version = 11 : i64} {
  func.func @pointnet_kernel(%arg0: i32, %arg1: i32, %arg2: memref<1x1024x8xbf16, #tpu.memory_space<vmem>>, %arg3: memref<8x64xbf16, #tpu.memory_space<vmem>>, %arg4: memref<1x64xf32, #tpu.memory_space<vmem>>, %arg5: memref<64x64xbf16, #tpu.memory_space<vmem>>, %arg6: memref<1x64xf32, #tpu.memory_space<vmem>>, %arg7: memref<64x64xbf16, #tpu.memory_space<vmem>>, %arg8: memref<1x64xf32, #tpu.memory_space<vmem>>, %arg9: memref<64x128xbf16, #tpu.memory_space<vmem>>, %arg10: memref<1x128xf32, #tpu.memory_space<vmem>>, %arg11: memref<128x1024xbf16, #tpu.memory_space<vmem>>, %arg12: memref<1x1024xf32, #tpu.memory_space<vmem>>, %arg13: memref<1024x512xbf16, #tpu.memory_space<vmem>>, %arg14: memref<1x512xf32, #tpu.memory_space<vmem>>, %arg15: memref<512x256xbf16, #tpu.memory_space<vmem>>, %arg16: memref<1x256xf32, #tpu.memory_space<vmem>>, %arg17: memref<256x128xbf16, #tpu.memory_space<vmem>>, %arg18: memref<1x128xf32, #tpu.memory_space<vmem>>, %arg19: memref<1x8x128xf32, #tpu.memory_space<vmem>>, %arg20: memref<8x1024xf32, #tpu.memory_space<vmem>>) attributes {dimension_semantics = [#tpu.dimension_semantics<parallel>, #tpu.dimension_semantics<arbitrary>], iteration_bounds = array<i64: 2, 1>, scalar_prefetch = 0 : i64, scratch_operands = 1 : i64, tpu.core_type = #tpu.core_type<tc>, window_params = [{transform_indices = @transform_0, window_bounds = array<i64: 1, 1024, 8>}, {pipeline_mode = #tpu.pipeline_mode<synchronous>, transform_indices = @transform_1, window_bounds = array<i64: 8, 64>}, {pipeline_mode = #tpu.pipeline_mode<synchronous>, transform_indices = @transform_2, window_bounds = array<i64: 1, 64>}, {pipeline_mode = #tpu.pipeline_mode<synchronous>, transform_indices = @transform_3, window_bounds = array<i64: 64, 64>}, {pipeline_mode = #tpu.pipeline_mode<synchronous>, transform_indices = @transform_4, window_bounds = array<i64: 1, 64>}, {pipeline_mode = #tpu.pipeline_mode<synchronous>, transform_indices = @transform_5, window_bounds = array<i64: 64, 64>}, {pipeline_mode = #tpu.pipeline_mode<synchronous>, transform_indices = @transform_6, window_bounds = array<i64: 1, 64>}, {pipeline_mode = #tpu.pipeline_mode<synchronous>, transform_indices = @transform_7, window_bounds = array<i64: 64, 128>}, {pipeline_mode = #tpu.pipeline_mode<synchronous>, transform_indices = @transform_8, window_bounds = array<i64: 1, 128>}, {pipeline_mode = #tpu.pipeline_mode<synchronous>, transform_indices = @transform_9, window_bounds = array<i64: 128, 1024>}, {pipeline_mode = #tpu.pipeline_mode<synchronous>, transform_indices = @transform_10, window_bounds = array<i64: 1, 1024>}, {pipeline_mode = #tpu.pipeline_mode<synchronous>, transform_indices = @transform_11, window_bounds = array<i64: 1024, 512>}, {pipeline_mode = #tpu.pipeline_mode<synchronous>, transform_indices = @transform_12, window_bounds = array<i64: 1, 512>}, {pipeline_mode = #tpu.pipeline_mode<synchronous>, transform_indices = @transform_13, window_bounds = array<i64: 512, 256>}, {pipeline_mode = #tpu.pipeline_mode<synchronous>, transform_indices = @transform_14, window_bounds = array<i64: 1, 256>}, {pipeline_mode = #tpu.pipeline_mode<synchronous>, transform_indices = @transform_15, window_bounds = array<i64: 256, 128>}, {pipeline_mode = #tpu.pipeline_mode<synchronous>, transform_indices = @transform_16, window_bounds = array<i64: 1, 128>}, {transform_indices = @transform_17, window_bounds = array<i64: 1, 8, 128>}]} {
    %c0 = arith.constant 0 : index
    %c0_0 = arith.constant 0 : index
    %c0_1 = arith.constant 0 : index
    %0 = vector.load %arg2[%c0, %c0_0, %c0_1] : memref<1x1024x8xbf16, #tpu.memory_space<vmem>>, vector<1x1024x8xbf16>
    %1 = vector.shape_cast %0 : vector<1x1024x8xbf16> to vector<1024x8xbf16>
    %c0_2 = arith.constant 0 : index
    %c0_3 = arith.constant 0 : index
    %2 = vector.load %arg3[%c0_2, %c0_3] : memref<8x64xbf16, #tpu.memory_space<vmem>>, vector<8x64xbf16>
    %cst = arith.constant dense<0.000000e+00> : vector<1024x64xf32>
    %3 = tpu.matmul %1, %2, %cst {dimension_numbers = #tpu.dot_dimension_numbers<[1], [0], [0], [1], [0, 0, 1, 1], [], []>} : vector<1024x8xbf16>, vector<8x64xbf16>, vector<1024x64xf32> -> vector<1024x64xf32>
    %c0_4 = arith.constant 0 : index
    %c0_5 = arith.constant 0 : index
    %4 = vector.load %arg4[%c0_4, %c0_5] : memref<1x64xf32, #tpu.memory_space<vmem>>, vector<1x64xf32>
    %5 = vector.broadcast %4 : vector<1x64xf32> to vector<1024x64xf32>
    %6 = arith.addf %3, %5 : vector<1024x64xf32>
    %cst_6 = arith.constant 0.000000e+00 : f32
    %7 = vector.broadcast %cst_6 : f32 to vector<1024x64xf32>
    %8 = arith.maximumf %6, %7 : vector<1024x64xf32>
    %9 = arith.truncf %8 : vector<1024x64xf32> to vector<1024x64xbf16>
    %c0_7 = arith.constant 0 : index
    %c0_8 = arith.constant 0 : index
    %10 = vector.load %arg5[%c0_7, %c0_8] : memref<64x64xbf16, #tpu.memory_space<vmem>>, vector<64x64xbf16>
    %cst_9 = arith.constant dense<0.000000e+00> : vector<1024x64xf32>
    %11 = tpu.matmul %9, %10, %cst_9 {dimension_numbers = #tpu.dot_dimension_numbers<[1], [0], [0], [1], [0, 0, 1, 1], [], []>} : vector<1024x64xbf16>, vector<64x64xbf16>, vector<1024x64xf32> -> vector<1024x64xf32>
    %c0_10 = arith.constant 0 : index
    %c0_11 = arith.constant 0 : index
    %12 = vector.load %arg6[%c0_10, %c0_11] : memref<1x64xf32, #tpu.memory_space<vmem>>, vector<1x64xf32>
    %13 = vector.broadcast %12 : vector<1x64xf32> to vector<1024x64xf32>
    %14 = arith.addf %11, %13 : vector<1024x64xf32>
    %cst_12 = arith.constant 0.000000e+00 : f32
    %15 = vector.broadcast %cst_12 : f32 to vector<1024x64xf32>
    %16 = arith.maximumf %14, %15 : vector<1024x64xf32>
    %17 = arith.truncf %16 : vector<1024x64xf32> to vector<1024x64xbf16>
    %c0_13 = arith.constant 0 : index
    %c0_14 = arith.constant 0 : index
    %18 = vector.load %arg7[%c0_13, %c0_14] : memref<64x64xbf16, #tpu.memory_space<vmem>>, vector<64x64xbf16>
    %cst_15 = arith.constant dense<0.000000e+00> : vector<1024x64xf32>
    %19 = tpu.matmul %17, %18, %cst_15 {dimension_numbers = #tpu.dot_dimension_numbers<[1], [0], [0], [1], [0, 0, 1, 1], [], []>} : vector<1024x64xbf16>, vector<64x64xbf16>, vector<1024x64xf32> -> vector<1024x64xf32>
    %c0_16 = arith.constant 0 : index
    %c0_17 = arith.constant 0 : index
    %20 = vector.load %arg8[%c0_16, %c0_17] : memref<1x64xf32, #tpu.memory_space<vmem>>, vector<1x64xf32>
    %21 = vector.broadcast %20 : vector<1x64xf32> to vector<1024x64xf32>
    %22 = arith.addf %19, %21 : vector<1024x64xf32>
    %cst_18 = arith.constant 0.000000e+00 : f32
    %23 = vector.broadcast %cst_18 : f32 to vector<1024x64xf32>
    %24 = arith.maximumf %22, %23 : vector<1024x64xf32>
    %25 = arith.truncf %24 : vector<1024x64xf32> to vector<1024x64xbf16>
    %c0_19 = arith.constant 0 : index
    %c0_20 = arith.constant 0 : index
    %26 = vector.load %arg9[%c0_19, %c0_20] : memref<64x128xbf16, #tpu.memory_space<vmem>>, vector<64x128xbf16>
    %cst_21 = arith.constant dense<0.000000e+00> : vector<1024x128xf32>
    %27 = tpu.matmul %25, %26, %cst_21 {dimension_numbers = #tpu.dot_dimension_numbers<[1], [0], [0], [1], [0, 0, 1, 1], [], []>} : vector<1024x64xbf16>, vector<64x128xbf16>, vector<1024x128xf32> -> vector<1024x128xf32>
    %c0_22 = arith.constant 0 : index
    %c0_23 = arith.constant 0 : index
    %28 = vector.load %arg10[%c0_22, %c0_23] : memref<1x128xf32, #tpu.memory_space<vmem>>, vector<1x128xf32>
    %29 = vector.broadcast %28 : vector<1x128xf32> to vector<1024x128xf32>
    %30 = arith.addf %27, %29 : vector<1024x128xf32>
    %cst_24 = arith.constant 0.000000e+00 : f32
    %31 = vector.broadcast %cst_24 : f32 to vector<1024x128xf32>
    %32 = arith.maximumf %30, %31 : vector<1024x128xf32>
    %33 = arith.truncf %32 : vector<1024x128xf32> to vector<1024x128xbf16>
    %c0_25 = arith.constant 0 : index
    %c0_26 = arith.constant 0 : index
    %34 = vector.load %arg11[%c0_25, %c0_26] : memref<128x1024xbf16, #tpu.memory_space<vmem>>, vector<128x1024xbf16>
    %cst_27 = arith.constant dense<0.000000e+00> : vector<1024x1024xf32>
    %35 = tpu.matmul %33, %34, %cst_27 {dimension_numbers = #tpu.dot_dimension_numbers<[1], [0], [0], [1], [0, 0, 1, 1], [], []>} : vector<1024x128xbf16>, vector<128x1024xbf16>, vector<1024x1024xf32> -> vector<1024x1024xf32>
    %36 = vector.shape_cast %35 : vector<1024x1024xf32> to vector<128x8x1024xf32>
    %cst_28 = arith.constant dense<0xFF800000> : vector<8x1024xf32>
    %37 = vector.multi_reduction <maximumf>, %36, %cst_28 [0] : vector<128x8x1024xf32> to vector<8x1024xf32>
    %c0_i32 = arith.constant 0 : i32
    %38 = arith.cmpi eq, %arg1, %c0_i32 : i32
    %39 = arith.extui %38 : i1 to i32
    %c0_i32_29 = arith.constant 0 : i32
    %40 = arith.cmpi ne, %39, %c0_i32_29 : i32
    scf.if %40 {
      %c0_34 = arith.constant 0 : index
      %c0_35 = arith.constant 0 : index
      %47 = vector.load %arg20[%c0_34, %c0_35] : memref<8x1024xf32, #tpu.memory_space<vmem>>, vector<8x1024xf32>
      tpu.vector_store %arg20[%c0_34, %c0_35], %37 {strides = array<i32>} : memref<8x1024xf32, #tpu.memory_space<vmem>>, vector<8x1024xf32>,
      %cst_36 = arith.constant 0.000000e+00 : f32
      %48 = vector.broadcast %cst_36 : f32 to vector<1x8x128xf32>
      %c0_37 = arith.constant 0 : index
      %c0_38 = arith.constant 0 : index
      %c0_39 = arith.constant 0 : index
      %49 = vector.load %arg19[%c0_37, %c0_38, %c0_39] : memref<1x8x128xf32, #tpu.memory_space<vmem>>, vector<1x8x128xf32>
      tpu.vector_store %arg19[%c0_37, %c0_38, %c0_39], %48 {strides = array<i32>} : memref<1x8x128xf32, #tpu.memory_space<vmem>>, vector<1x8x128xf32>,
    } else {
    }
    %c0_i32_30 = arith.constant 0 : i32
    %41 = arith.cmpi ne, %arg1, %c0_i32_30 : i32
    %42 = arith.extui %41 : i1 to i32
    %c0_i32_31 = arith.constant 0 : i32
    %43 = arith.cmpi ne, %42, %c0_i32_31 : i32
    scf.if %43 {
      %c0_34 = arith.constant 0 : index
      %c0_35 = arith.constant 0 : index
      %47 = vector.load %arg20[%c0_34, %c0_35] : memref<8x1024xf32, #tpu.memory_space<vmem>>, vector<8x1024xf32>
      %48 = arith.maximumf %47, %37 : vector<8x1024xf32>
      %c0_36 = arith.constant 0 : index
      %c0_37 = arith.constant 0 : index
      %49 = vector.load %arg20[%c0_36, %c0_37] : memref<8x1024xf32, #tpu.memory_space<vmem>>, vector<8x1024xf32>
      tpu.vector_store %arg20[%c0_36, %c0_37], %48 {strides = array<i32>} : memref<8x1024xf32, #tpu.memory_space<vmem>>, vector<8x1024xf32>,
    } else {
    }
    %c0_i32_32 = arith.constant 0 : i32
    %44 = arith.cmpi eq, %arg1, %c0_i32_32 : i32
    %45 = arith.extui %44 : i1 to i32
    %c0_i32_33 = arith.constant 0 : i32
    %46 = arith.cmpi ne, %45, %c0_i32_33 : i32
    scf.if %46 {
      %c0_34 = arith.constant 0 : index
      %c0_35 = arith.constant 0 : index
      %47 = vector.load %arg20[%c0_34, %c0_35] : memref<8x1024xf32, #tpu.memory_space<vmem>>, vector<8x1024xf32>
      %cst_36 = arith.constant dense<0xFF800000> : vector<1024xf32>
      %48 = vector.multi_reduction <maximumf>, %47, %cst_36 [0] : vector<8x1024xf32> to vector<1024xf32>
      %49 = vector.shape_cast %48 : vector<1024xf32> to vector<1x1024xf32>
      %c0_37 = arith.constant 0 : index
      %c0_38 = arith.constant 0 : index
      %50 = vector.load %arg12[%c0_37, %c0_38] : memref<1x1024xf32, #tpu.memory_space<vmem>>, vector<1x1024xf32>
      %51 = arith.addf %49, %50 : vector<1x1024xf32>
      %cst_39 = arith.constant 0.000000e+00 : f32
      %52 = vector.broadcast %cst_39 : f32 to vector<1x1024xf32>
      %53 = arith.maximumf %51, %52 : vector<1x1024xf32>
      %54 = vector.shape_cast %53 : vector<1x1024xf32> to vector<1x1024xf32>
      %55 = vector.broadcast %54 : vector<1x1024xf32> to vector<8x1024xf32>
      %56 = arith.truncf %55 : vector<8x1024xf32> to vector<8x1024xbf16>
      %c0_40 = arith.constant 0 : index
      %c0_41 = arith.constant 0 : index
      %57 = vector.load %arg13[%c0_40, %c0_41] : memref<1024x512xbf16, #tpu.memory_space<vmem>>, vector<1024x512xbf16>
      %cst_42 = arith.constant dense<0.000000e+00> : vector<8x512xf32>
      %58 = tpu.matmul %56, %57, %cst_42 {dimension_numbers = #tpu.dot_dimension_numbers<[1], [0], [0], [1], [0, 0, 1, 1], [], []>} : vector<8x1024xbf16>, vector<1024x512xbf16>, vector<8x512xf32> -> vector<8x512xf32>
      %c0_43 = arith.constant 0 : index
      %c0_44 = arith.constant 0 : index
      %59 = vector.load %arg14[%c0_43, %c0_44] : memref<1x512xf32, #tpu.memory_space<vmem>>, vector<1x512xf32>
      %60 = vector.broadcast %59 : vector<1x512xf32> to vector<8x512xf32>
      %61 = arith.addf %58, %60 : vector<8x512xf32>
      %cst_45 = arith.constant 0.000000e+00 : f32
      %62 = vector.broadcast %cst_45 : f32 to vector<8x512xf32>
      %63 = arith.maximumf %61, %62 : vector<8x512xf32>
      %64 = arith.truncf %63 : vector<8x512xf32> to vector<8x512xbf16>
      %c0_46 = arith.constant 0 : index
      %c0_47 = arith.constant 0 : index
      %65 = vector.load %arg15[%c0_46, %c0_47] : memref<512x256xbf16, #tpu.memory_space<vmem>>, vector<512x256xbf16>
      %cst_48 = arith.constant dense<0.000000e+00> : vector<8x256xf32>
      %66 = tpu.matmul %64, %65, %cst_48 {dimension_numbers = #tpu.dot_dimension_numbers<[1], [0], [0], [1], [0, 0, 1, 1], [], []>} : vector<8x512xbf16>, vector<512x256xbf16>, vector<8x256xf32> -> vector<8x256xf32>
      %c0_49 = arith.constant 0 : index
      %c0_50 = arith.constant 0 : index
      %67 = vector.load %arg16[%c0_49, %c0_50] : memref<1x256xf32, #tpu.memory_space<vmem>>, vector<1x256xf32>
      %68 = vector.broadcast %67 : vector<1x256xf32> to vector<8x256xf32>
      %69 = arith.addf %66, %68 : vector<8x256xf32>
      %cst_51 = arith.constant 0.000000e+00 : f32
      %70 = vector.broadcast %cst_51 : f32 to vector<8x256xf32>
      %71 = arith.maximumf %69, %70 : vector<8x256xf32>
      %72 = arith.truncf %71 : vector<8x256xf32> to vector<8x256xbf16>
      %c0_52 = arith.constant 0 : index
      %c0_53 = arith.constant 0 : index
      %73 = vector.load %arg17[%c0_52, %c0_53] : memref<256x128xbf16, #tpu.memory_space<vmem>>, vector<256x128xbf16>
      %cst_54 = arith.constant dense<0.000000e+00> : vector<8x128xf32>
      %74 = tpu.matmul %72, %73, %cst_54 {dimension_numbers = #tpu.dot_dimension_numbers<[1], [0], [0], [1], [0, 0, 1, 1], [], []>} : vector<8x256xbf16>, vector<256x128xbf16>, vector<8x128xf32> -> vector<8x128xf32>
      %c0_55 = arith.constant 0 : index
      %c0_56 = arith.constant 0 : index
      %75 = vector.load %arg18[%c0_55, %c0_56] : memref<1x128xf32, #tpu.memory_space<vmem>>, vector<1x128xf32>
      %76 = vector.broadcast %75 : vector<1x128xf32> to vector<8x128xf32>
      %77 = arith.addf %74, %76 : vector<8x128xf32>
      %78 = vector.shape_cast %77 : vector<8x128xf32> to vector<1x8x128xf32>
      %c0_57 = arith.constant 0 : index
      %c0_58 = arith.constant 0 : index
      %c0_59 = arith.constant 0 : index
      %79 = vector.load %arg19[%c0_57, %c0_58, %c0_59] : memref<1x8x128xf32, #tpu.memory_space<vmem>>, vector<1x8x128xf32>
      tpu.vector_store %arg19[%c0_57, %c0_58, %c0_59], %78 {strides = array<i32>} : memref<1x8x128xf32, #tpu.memory_space<vmem>>, vector<1x8x128xf32>,
    } else {
    }
    return
  }
  func.func @transform_0(%arg0: i32, %arg1: i32) -> (i32, i32, i32) {
    %c0_i32 = arith.constant 0 : i32
    %c0_i32_0 = arith.constant 0 : i32
    return %arg0, %arg1, %c0_i32 : i32, i32, i32
  }
  func.func @transform_1(%arg0: i32, %arg1: i32) -> (i32, i32) {
    %c0_i32 = arith.constant 0 : i32
    %c0_i32_0 = arith.constant 0 : i32
    %c0_i32_1 = arith.constant 0 : i32
    return %c0_i32, %c0_i32_0 : i32, i32
  }
  func.func @transform_2(%arg0: i32, %arg1: i32) -> (i32, i32) {
    %c0_i32 = arith.constant 0 : i32
    %c0_i32_0 = arith.constant 0 : i32
    %c0_i32_1 = arith.constant 0 : i32
    return %c0_i32, %c0_i32_0 : i32, i32
  }
  func.func @transform_3(%arg0: i32, %arg1: i32) -> (i32, i32) {
    %c0_i32 = arith.constant 0 : i32
    %c0_i32_0 = arith.constant 0 : i32
    %c0_i32_1 = arith.constant 0 : i32
    return %c0_i32, %c0_i32_0 : i32, i32
  }
  func.func @transform_4(%arg0: i32, %arg1: i32) -> (i32, i32) {
    %c0_i32 = arith.constant 0 : i32
    %c0_i32_0 = arith.constant 0 : i32
    %c0_i32_1 = arith.constant 0 : i32
    return %c0_i32, %c0_i32_0 : i32, i32
  }
  func.func @transform_5(%arg0: i32, %arg1: i32) -> (i32, i32) {
    %c0_i32 = arith.constant 0 : i32
    %c0_i32_0 = arith.constant 0 : i32
    %c0_i32_1 = arith.constant 0 : i32
    return %c0_i32, %c0_i32_0 : i32, i32
  }
  func.func @transform_6(%arg0: i32, %arg1: i32) -> (i32, i32) {
    %c0_i32 = arith.constant 0 : i32
    %c0_i32_0 = arith.constant 0 : i32
    %c0_i32_1 = arith.constant 0 : i32
    return %c0_i32, %c0_i32_0 : i32, i32
  }
  func.func @transform_7(%arg0: i32, %arg1: i32) -> (i32, i32) {
    %c0_i32 = arith.constant 0 : i32
    %c0_i32_0 = arith.constant 0 : i32
    %c0_i32_1 = arith.constant 0 : i32
    return %c0_i32, %c0_i32_0 : i32, i32
  }
  func.func @transform_8(%arg0: i32, %arg1: i32) -> (i32, i32) {
    %c0_i32 = arith.constant 0 : i32
    %c0_i32_0 = arith.constant 0 : i32
    %c0_i32_1 = arith.constant 0 : i32
    return %c0_i32, %c0_i32_0 : i32, i32
  }
  func.func @transform_9(%arg0: i32, %arg1: i32) -> (i32, i32) {
    %c0_i32 = arith.constant 0 : i32
    %c0_i32_0 = arith.constant 0 : i32
    %c0_i32_1 = arith.constant 0 : i32
    return %c0_i32, %c0_i32_0 : i32, i32
  }
  func.func @transform_10(%arg0: i32, %arg1: i32) -> (i32, i32) {
    %c0_i32 = arith.constant 0 : i32
    %c0_i32_0 = arith.constant 0 : i32
    %c0_i32_1 = arith.constant 0 : i32
    return %c0_i32, %c0_i32_0 : i32, i32
  }
  func.func @transform_11(%arg0: i32, %arg1: i32) -> (i32, i32) {
    %c0_i32 = arith.constant 0 : i32
    %c0_i32_0 = arith.constant 0 : i32
    %c0_i32_1 = arith.constant 0 : i32
    return %c0_i32, %c0_i32_0 : i32, i32
  }
  func.func @transform_12(%arg0: i32, %arg1: i32) -> (i32, i32) {
    %c0_i32 = arith.constant 0 : i32
    %c0_i32_0 = arith.constant 0 : i32
    %c0_i32_1 = arith.constant 0 : i32
    return %c0_i32, %c0_i32_0 : i32, i32
  }
  func.func @transform_13(%arg0: i32, %arg1: i32) -> (i32, i32) {
    %c0_i32 = arith.constant 0 : i32
    %c0_i32_0 = arith.constant 0 : i32
    %c0_i32_1 = arith.constant 0 : i32
    return %c0_i32, %c0_i32_0 : i32, i32
  }
  func.func @transform_14(%arg0: i32, %arg1: i32) -> (i32, i32) {
    %c0_i32 = arith.constant 0 : i32
    %c0_i32_0 = arith.constant 0 : i32
    %c0_i32_1 = arith.constant 0 : i32
    return %c0_i32, %c0_i32_0 : i32, i32
  }
  func.func @transform_15(%arg0: i32, %arg1: i32) -> (i32, i32) {
    %c0_i32 = arith.constant 0 : i32
    %c0_i32_0 = arith.constant 0 : i32
    %c0_i32_1 = arith.constant 0 : i32
    return %c0_i32, %c0_i32_0 : i32, i32
  }
  func.func @transform_16(%arg0: i32, %arg1: i32) -> (i32, i32) {
    %c0_i32 = arith.constant 0 : i32
    %c0_i32_0 = arith.constant 0 : i32
    %c0_i32_1 = arith.constant 0 : i32
    return %c0_i32, %c0_i32_0 : i32, i32
  }
  func.func @transform_17(%arg0: i32, %arg1: i32) -> (i32, i32, i32) {
    %c0_i32 = arith.constant 0 : i32
    %c0_i32_0 = arith.constant 0 : i32
    %c0_i32_1 = arith.constant 0 : i32
    return %arg0, %c0_i32, %c0_i32_0 : i32, i32, i32
  }
}

</mosaic_0001>

<llo_original>
// kernel: pointnet_forward.1
$region0: #{pointnet_forward.1}
  #allocation0 [shape = 'u32[]', space=smem, size = 0x4, offset = 0x4, fixed_abs, tag = 'smem constant byte address 0x4 - core index']
  #allocation1 [shape = 'u32[144,128]{1,0:T(1,128)}', space=vmem, size = 0x12000, scoped, tag = 'internal scratch']
  #allocation2 [shape = 'f32[8,1024]{1,0:T(8,128)}', space=vmem, size = 0x8000, scoped, tag = 'scratch operand']
  %s0 = inlined_call_operand.vmem [shape: bf16[2,1024,8], index: 0, kind: input, shape index: {}]
  %s1 = inlined_call_operand.vmem [shape: bf16[8,64], index: 1, kind: input, shape index: {}]
  %s2 = inlined_call_operand.hbm [shape: f32[1,64], index: 2, kind: input, shape index: {}]
  %s3 = inlined_call_operand.hbm [shape: bf16[64,64], index: 3, kind: input, shape index: {}]
  %s4 = inlined_call_operand.hbm [shape: f32[1,64], index: 4, kind: input, shape index: {}]
  %s5 = inlined_call_operand.hbm [shape: bf16[64,64], index: 5, kind: input, shape index: {}]
  %s6 = inlined_call_operand.hbm [shape: f32[1,64], index: 6, kind: input, shape index: {}]
  %s7 = inlined_call_operand.hbm [shape: bf16[64,128], index: 7, kind: input, shape index: {}]
  %s8 = inlined_call_operand.hbm [shape: f32[1,128], index: 8, kind: input, shape index: {}]
  %s9 = inlined_call_operand.vmem [shape: bf16[128,1024], index: 9, kind: input, shape index: {}]
  %s10 = inlined_call_operand.vmem [shape: f32[1,1024], index: 10, kind: input, shape index: {}]
  %s11 = inlined_call_operand.vmem [shape: bf16[1024,512], index: 11, kind: input, shape index: {}]
  %s12 = inlined_call_operand.hbm [shape: f32[1,512], index: 12, kind: input, shape index: {}]
  %s13 = inlined_call_operand.vmem [shape: bf16[512,256], index: 13, kind: input, shape index: {}]
  %s14 = inlined_call_operand.vmem [shape: f32[1,256], index: 14, kind: input, shape index: {}]
  %s15 = inlined_call_operand.vmem [shape: bf16[256,128], index: 15, kind: input, shape index: {}]
  %s16 = inlined_call_operand.hbm [shape: f32[1,128], index: 16, kind: input, shape index: {}]
  %s17 = inlined_call_operand.vmem [shape: f32[2,8,128], index: 17, kind: output, shape index: {}]
  %s18 = sld [smem:[#allocation0]]
  $region149: #{pointnet_forward.1} parent=0
    _
  %s20 = ssub.s32 1, %s18
  %s21 = scalar_select 0, %s20, %s18
  $region1: #{pointnet_forward.1} parent=0
    #allocation3 [shape = 'u8[512]{0}', space=vmem, size = 0x400, scoped, tag = 'input window, operand 2, single buffered']
    #allocation4 [shape = 's32[2]{0}', space=sflag, size = 0x8, scoped, tag = 'scoped memory for pointnet_forward.1']
    #allocation5 [shape = 'u8[16384]{0}', space=vmem, size = 0x4000, scoped, tag = 'input window, operand 3, single buffered']
    #allocation6 [shape = 's32[1]{0}', space=sflag, size = 0x4, scoped, tag = 'scoped memory for pointnet_forward.1']
    #allocation7 [shape = 'u8[512]{0}', space=vmem, size = 0x400, scoped, tag = 'input window, operand 4, single buffered']
    #allocation8 [shape = 'u8[16384]{0}', space=vmem, size = 0x4000, scoped, tag = 'input window, operand 5, single buffered']
    #allocation9 [shape = 's32[1]{0}', space=sflag, size = 0x4, scoped, tag = 'scoped memory for pointnet_forward.1']
    #allocation10 [shape = 'u8[512]{0}', space=vmem, size = 0x400, scoped, tag = 'input window, operand 6, single buffered']
    #allocation11 [shape = 'u8[16384]{0}', space=vmem, size = 0x4000, scoped, tag = 'input window, operand 7, single buffered']
    #allocation12 [shape = 's32[1]{0}', space=sflag, size = 0x4, scoped, tag = 'scoped memory for pointnet_forward.1']
    #allocation13 [shape = 'u8[512]{0}', space=vmem, size = 0x400, scoped, tag = 'input window, operand 8, single buffered']
    #allocation14 [shape = 'u8[2048]{0}', space=vmem, size = 0x800, scoped, tag = 'input window, operand 12, single buffered']
    #allocation15 [shape = 's32[1]{0}', space=sflag, size = 0x4, scoped, tag = 'scoped memory for pointnet_forward.1']
    #allocation16 [shape = 'u8[512]{0}', space=vmem, size = 0x400, scoped, tag = 'input window, operand 16, single buffered']
    %22 = vsyncpa [#allocation4], 0
    %23 = vsyncpa [#allocation6], 0
    %24 = vsyncpa [#allocation9], 0
    %25 = vsyncpa [#allocation12], 0
    %26 = vsyncpa [#allocation15], 0
    loop: start=0, step=1, limit=4
    $region2: #{pointnet_forward.1} parent=1 // loop_pre_header
      _
    $region3: #{pointnet_forward.1} parent=1 // loop_header
      %s28 = sphi 0, %s32
      %p29 = scmp.ge.s32.totalorder %s28, 4
      %s35 = sphi 0, %s47
      %s36 = sphi 0, %s43
      %s37 = sphi 0, %s35
      %s38 = sphi 0, %s36
      %s39 = sphi 0, %s37
      %s40 = sphi 0, %s38
      %s52 = sphi 0, %s54
      %s55 = sphi 0, %s52
      %s56 = sphi 0, %s55
      %s72 = sphi 0, %s56
      %s76 = sphi 0, %s76
      %s78 = sphi 0, %s76
      %s79 = sphi 0, %s78
      %s93 = sphi 0, %s79
      %s97 = sphi 0, %s97
      %s99 = sphi 0, %s97
      %s100 = sphi 0, %s99
      %s114 = sphi 0, %s100
      %s118 = sphi 0, %s118
      %s120 = sphi 0, %s118
      %s121 = sphi 0, %s120
      %s135 = sphi 0, %s121
      %s139 = sphi 0, %s139
      %s141 = sphi 0, %s139
      %s142 = sphi 0, %s141
      %s156 = sphi 0, %s142
      %s160 = sphi 0, %s160
      %s162 = sphi 0, %s160
      %s163 = sphi 0, %s162
      %s177 = sphi 0, %s163
      %s181 = sphi 0, %s181
      %s183 = sphi 0, %s181
      %s184 = sphi 0, %s183
      %s198 = sphi 0, %s184
      %s202 = sphi 0, %s202
      %s204 = sphi 0, %s202
      %s205 = sphi 0, %s204
      %s219 = sphi 0, %s205
      %s223 = sphi 0, %s223
      %s225 = sphi 0, %s223
      %s226 = sphi 0, %s225
      %s240 = sphi 0, %s226
      %s244 = sphi 0, %s244
      %s246 = sphi 0, %s244
      %s247 = sphi 0, %s246
      %s261 = sphi 0, %s247
      %s265 = sphi 0, %s265
      %s267 = sphi 0, %s265
      %s268 = sphi 0, %s267
      %s282 = sphi 0, %s268
      %s286 = sphi 0, %s286
      %s288 = sphi 0, %s286
      %s289 = sphi 0, %s288
      %s303 = sphi 0, %s289
      %s307 = sphi 0, %s307
      %s309 = sphi 0, %s307
      %s310 = sphi 0, %s309
      %s324 = sphi 0, %s310
      %s328 = sphi 0, %s328
      %s330 = sphi 0, %s328
      %s331 = sphi 0, %s330
      %s345 = sphi 0, %s331
      %s349 = sphi 0, %s349
      %s351 = sphi 0, %s349
      %s352 = sphi 0, %s351
      %s366 = sphi 0, %s352
      %s370 = sphi 0, %s370
      %s372 = sphi 0, %s370
      %s373 = sphi 0, %s372
      %s387 = sphi 0, %s373
      %s391 = sphi 0, %s391
      %s393 = sphi 0, %s391
      %s394 = sphi 0, %s393
      %s408 = sphi 0, %s394
      %s414 = sphi 0, %s416
      %s417 = sphi 0, %s414
      %s418 = sphi 0, %s417
      %s434 = sphi 0, %s418
    $region4: #{pointnet_forward.1} parent=1 // loop_header_branch
      %31 = sbr.rel (%p29) target = $region8
    $region5: #{pointnet_forward.1} parent=1 // loop_body
      %s33 = ssub.s32 %s28, 1
      %s34 = ssub.s32 %s28, 2
      %s41 = sadd.s32 1, %s36
      %p42 = scmp.ge.s32.totalorder %s41, 1
      %s43 = scalar_select %p42, 0, %s41
      %s44 = sadd.s32 1, %s35
      %s45 = scalar_select %p42, %s44, %s35
      %p46 = scmp.ge.s32.totalorder %s45, 2
      %s47 = scalar_select %p46, 0, %s45
      %s48 = ssub.s32 %s35, %s47
      %s49 = ssub.s32 %s36, %s43
      %s50 = sor.u32 %s48, %s49
      %p51 = scmp.eq.s32.totalorder %s50, 0
      %s53 = sadd.s32 %s52, 1
      %s54 = scalar_select %p51, %s52, %s53
      %p57 = pneg %p51
      %p58 = scmp.eq.s32.totalorder %s28, 1
      %p59 = por %p57, %p58
      %p60 = scmp.ne.s32.totalorder %s52, %s55
      %p61 = scmp.eq.s32.totalorder %s28, 0
      %p62 = por %p60, %p61
      %p63 = scmp.ne.s32.totalorder %s52, %s55
      %p64 = scmp.eq.s32.totalorder %s33, 1
      %p65 = por %p63, %p64
      %p66 = scmp.ne.s32.totalorder %s55, %s56
      %p67 = scmp.eq.s32.totalorder %s33, 0
      %p68 = por %p66, %p67
      %p69 = scmp.ne.s32.totalorder %s55, %s56
      %p70 = scmp.eq.s32.totalorder %s34, 1
      %p71 = por %p69, %p70
      %p73 = scmp.ne.s32.totalorder %s56, %s72
      %p74 = scmp.eq.s32.totalorder %s34, 0
      %p75 = por %p73, %p74
      %s77 = sadd.s32 %s76, 1
      %p80 = scmp.eq.s32.totalorder %s28, 1
      %p81 = scmp.ne.s32.totalorder %s76, %s78
      %p82 = scmp.eq.s32.totalorder %s28, 0
      %p83 = por %p81, %p82
      %p84 = scmp.ne.s32.totalorder %s76, %s78
      %p85 = scmp.eq.s32.totalorder %s33, 1
      %p86 = por %p84, %p85
      %p87 = scmp.ne.s32.totalorder %s78, %s79
      %p88 = scmp.eq.s32.totalorder %s33, 0
      %p89 = por %p87, %p88
      %p90 = scmp.ne.s32.totalorder %s78, %s79
      %p91 = scmp.eq.s32.totalorder %s34, 1
      %p92 = por %p90, %p91
      %p94 = scmp.ne.s32.totalorder %s79, %s93
      %p95 = scmp.eq.s32.totalorder %s34, 0
      %p96 = por %p94, %p95
      %s98 = sadd.s32 %s97, 1
      %p101 = scmp.eq.s32.totalorder %s28, 1
      %p102 = scmp.ne.s32.totalorder %s97, %s99
      %p103 = scmp.eq.s32.totalorder %s28, 0
      %p104 = por %p102, %p103
      %p105 = scmp.ne.s32.totalorder %s97, %s99
      %p106 = scmp.eq.s32.totalorder %s33, 1
      %p107 = por %p105, %p106
      %p108 = scmp.ne.s32.totalorder %s99, %s100
      %p109 = scmp.eq.s32.totalorder %s33, 0
      %p110 = por %p108, %p109
      %p111 = scmp.ne.s32.totalorder %s99, %s100
      %p112 = scmp.eq.s32.totalorder %s34, 1
      %p113 = por %p111, %p112
      %p115 = scmp.ne.s32.totalorder %s100, %s114
      %p116 = scmp.eq.s32.totalorder %s34, 0
      %p117 = por %p115, %p116
      %s119 = sadd.s32 %s118, 1
      %p122 = scmp.eq.s32.totalorder %s28, 1
      %p123 = scmp.ne.s32.totalorder %s118, %s120
      %p124 = scmp.eq.s32.totalorder %s28, 0
      %p125 = por %p123, %p124
      %p126 = scmp.ne.s32.totalorder %s118, %s120
      %p127 = scmp.eq.s32.totalorder %s33, 1
      %p128 = por %p126, %p127
      %p129 = scmp.ne.s32.totalorder %s120, %s121
      %p130 = scmp.eq.s32.totalorder %s33, 0
      %p131 = por %p129, %p130
      %p132 = scmp.ne.s32.totalorder %s120, %s121
      %p133 = scmp.eq.s32.totalorder %s34, 1
      %p134 = por %p132, %p133
      %p136 = scmp.ne.s32.totalorder %s121, %s135
      %p137 = scmp.eq.s32.totalorder %s34, 0
      %p138 = por %p136, %p137
      %s140 = sadd.s32 %s139, 1
      %p143 = scmp.eq.s32.totalorder %s28, 1
      %p144 = scmp.ne.s32.totalorder %s139, %s141
      %p145 = scmp.eq.s32.totalorder %s28, 0
      %p146 = por %p144, %p145
      %p147 = scmp.ne.s32.totalorder %s139, %s141
      %p148 = scmp.eq.s32.totalorder %s33, 1
      %p149 = por %p147, %p148
      %p150 = scmp.ne.s32.totalorder %s141, %s142
      %p151 = scmp.eq.s32.totalorder %s33, 0
      %p152 = por %p150, %p151
      %p153 = scmp.ne.s32.totalorder %s141, %s142
      %p154 = scmp.eq.s32.totalorder %s34, 1
      %p155 = por %p153, %p154
      %p157 = scmp.ne.s32.totalorder %s142, %s156
      %p158 = scmp.eq.s32.totalorder %s34, 0
      %p159 = por %p157, %p158
      %s161 = sadd.s32 %s160, 1
      %p164 = scmp.eq.s32.totalorder %s28, 1
      %p165 = scmp.ne.s32.totalorder %s160, %s162
      %p166 = scmp.eq.s32.totalorder %s28, 0
      %p167 = por %p165, %p166
      %p168 = scmp.ne.s32.totalorder %s160, %s162
      %p169 = scmp.eq.s32.totalorder %s33, 1
      %p170 = por %p168, %p169
      %p171 = scmp.ne.s32.totalorder %s162, %s163
      %p172 = scmp.eq.s32.totalorder %s33, 0
      %p173 = por %p171, %p172
      %p174 = scmp.ne.s32.totalorder %s162, %s163
      %p175 = scmp.eq.s32.totalorder %s34, 1
      %p176 = por %p174, %p175
      %p178 = scmp.ne.s32.totalorder %s163, %s177
      %p179 = scmp.eq.s32.totalorder %s34, 0
      %p180 = por %p178, %p179
      %s182 = sadd.s32 %s181, 1
      %p185 = scmp.eq.s32.totalorder %s28, 1
      %p186 = scmp.ne.s32.totalorder %s181, %s183
      %p187 = scmp.eq.s32.totalorder %s28, 0
      %p188 = por %p186, %p187
      %p189 = scmp.ne.s32.totalorder %s181, %s183
      %p190 = scmp.eq.s32.totalorder %s33, 1
      %p191 = por %p189, %p190
      %p192 = scmp.ne.s32.totalorder %s183, %s184
      %p193 = scmp.eq.s32.totalorder %s33, 0
      %p194 = por %p192, %p193
      %p195 = scmp.ne.s32.totalorder %s183, %s184
      %p196 = scmp.eq.s32.totalorder %s34, 1
      %p197 = por %p195, %p196
      %p199 = scmp.ne.s32.totalorder %s184, %s198
      %p200 = scmp.eq.s32.totalorder %s34, 0
      %p201 = por %p199, %p200
      %s203 = sadd.s32 %s202, 1
      %p206 = scmp.eq.s32.totalorder %s28, 1
      %p207 = scmp.ne.s32.totalorder %s202, %s204
      %p208 = scmp.eq.s32.totalorder %s28, 0
      %p209 = por %p207, %p208
      %p210 = scmp.ne.s32.totalorder %s202, %s204
      %p211 = scmp.eq.s32.totalorder %s33, 1
      %p212 = por %p210, %p211
      %p213 = scmp.ne.s32.totalorder %s204, %s205
      %p214 = scmp.eq.s32.totalorder %s33, 0
      %p215 = por %p213, %p214
      %p216 = scmp.ne.s32.totalorder %s204, %s205
      %p217 = scmp.eq.s32.totalorder %s34, 1
      %p218 = por %p216, %p217
      %p220 = scmp.ne.s32.totalorder %s205, %s219
      %p221 = scmp.eq.s32.totalorder %s34, 0
      %p222 = por %p220, %p221
      %s224 = sadd.s32 %s223, 1
      %p227 = scmp.eq.s32.totalorder %s28, 1
      %p228 = scmp.ne.s32.totalorder %s223, %s225
      %p229 = scmp.eq.s32.totalorder %s28, 0
      %p230 = por %p228, %p229
      %p231 = scmp.ne.s32.totalorder %s223, %s225
      %p232 = scmp.eq.s32.totalorder %s33, 1
      %p233 = por %p231, %p232
      %p234 = scmp.ne.s32.totalorder %s225, %s226
      %p235 = scmp.eq.s32.totalorder %s33, 0
      %p236 = por %p234, %p235
      %p237 = scmp.ne.s32.totalorder %s225, %s226
      %p238 = scmp.eq.s32.totalorder %s34, 1
      %p239 = por %p237, %p238
      %p241 = scmp.ne.s32.totalorder %s226, %s240
      %p242 = scmp.eq.s32.totalorder %s34, 0
      %p243 = por %p241, %p242
      %s245 = sadd.s32 %s244, 1
      %p248 = scmp.eq.s32.totalorder %s28, 1
      %p249 = scmp.ne.s32.totalorder %s244, %s246
      %p250 = scmp.eq.s32.totalorder %s28, 0
      %p251 = por %p249, %p250
      %p252 = scmp.ne.s32.totalorder %s244, %s246
      %p253 = scmp.eq.s32.totalorder %s33, 1
      %p254 = por %p252, %p253
      %p255 = scmp.ne.s32.totalorder %s246, %s247
      %p256 = scmp.eq.s32.totalorder %s33, 0
      %p257 = por %p255, %p256
      %p258 = scmp.ne.s32.totalorder %s246, %s247
      %p259 = scmp.eq.s32.totalorder %s34, 1
      %p260 = por %p258, %p259
      %p262 = scmp.ne.s32.totalorder %s247, %s261
      %p263 = scmp.eq.s32.totalorder %s34, 0
      %p264 = por %p262, %p263
      %s266 = sadd.s32 %s265, 1
      %p269 = scmp.eq.s32.totalorder %s28, 1
      %p270 = scmp.ne.s32.totalorder %s265, %s267
      %p271 = scmp.eq.s32.totalorder %s28, 0
      %p272 = por %p270, %p271
      %p273 = scmp.ne.s32.totalorder %s265, %s267
      %p274 = scmp.eq.s32.totalorder %s33, 1
      %p275 = por %p273, %p274
      %p276 = scmp.ne.s32.totalorder %s267, %s268
      %p277 = scmp.eq.s32.totalorder %s33, 0
      %p278 = por %p276, %p277
      %p279 = scmp.ne.s32.totalorder %s267, %s268
      %p280 = scmp.eq.s32.totalorder %s34, 1
      %p281 = por %p279, %p280
      %p283 = scmp.ne.s32.totalorder %s268, %s282
      %p284 = scmp.eq.s32.totalorder %s34, 0
      %p285 = por %p283, %p284
      %s287 = sadd.s32 %s286, 1
      %p290 = scmp.eq.s32.totalorder %s28, 1
      %p291 = scmp.ne.s32.totalorder %s286, %s288
      %p292 = scmp.eq.s32.totalorder %s28, 0
      %p293 = por %p291, %p292
      %p294 = scmp.ne.s32.totalorder %s286, %s288
      %p295 = scmp.eq.s32.totalorder %s33, 1
      %p296 = por %p294, %p295
      %p297 = scmp.ne.s32.totalorder %s288, %s289
      %p298 = scmp.eq.s32.totalorder %s33, 0
      %p299 = por %p297, %p298
      %p300 = scmp.ne.s32.totalorder %s288, %s289
      %p301 = scmp.eq.s32.totalorder %s34, 1
      %p302 = por %p300, %p301
      %p304 = scmp.ne.s32.totalorder %s289, %s303
      %p305 = scmp.eq.s32.totalorder %s34, 0
      %p306 = por %p304, %p305
      %s308 = sadd.s32 %s307, 1
      %p311 = scmp.eq.s32.totalorder %s28, 1
      %p312 = scmp.ne.s32.totalorder %s307, %s309
      %p313 = scmp.eq.s32.totalorder %s28, 0
      %p314 = por %p312, %p313
      %p315 = scmp.ne.s32.totalorder %s307, %s309
      %p316 = scmp.eq.s32.totalorder %s33, 1
      %p317 = por %p315, %p316
      %p318 = scmp.ne.s32.totalorder %s309, %s310
      %p319 = scmp.eq.s32.totalorder %s33, 0
      %p320 = por %p318, %p319
      %p321 = scmp.ne.s32.totalorder %s309, %s310
      %p322 = scmp.eq.s32.totalorder %s34, 1
      %p323 = por %p321, %p322
      %p325 = scmp.ne.s32.totalorder %s310, %s324
      %p326 = scmp.eq.s32.totalorder %s34, 0
      %p327 = por %p325, %p326
      %s329 = sadd.s32 %s328, 1
      %p332 = scmp.eq.s32.totalorder %s28, 1
      %p333 = scmp.ne.s32.totalorder %s328, %s330
      %p334 = scmp.eq.s32.totalorder %s28, 0
      %p335 = por %p333, %p334
      %p336 = scmp.ne.s32.totalorder %s328, %s330
      %p337 = scmp.eq.s32.totalorder %s33, 1
      %p338 = por %p336, %p337
      %p339 = scmp.ne.s32.totalorder %s330, %s331
      %p340 = scmp.eq.s32.totalorder %s33, 0
      %p341 = por %p339, %p340
      %p342 = scmp.ne.s32.totalorder %s330, %s331
      %p343 = scmp.eq.s32.totalorder %s34, 1
      %p344 = por %p342, %p343
      %p346 = scmp.ne.s32.totalorder %s331, %s345
      %p347 = scmp.eq.s32.totalorder %s34, 0
      %p348 = por %p346, %p347
      %s350 = sadd.s32 %s349, 1
      %p353 = scmp.eq.s32.totalorder %s28, 1
      %p354 = scmp.ne.s32.totalorder %s349, %s351
      %p355 = scmp.eq.s32.totalorder %s28, 0
      %p356 = por %p354, %p355
      %p357 = scmp.ne.s32.totalorder %s349, %s351
      %p358 = scmp.eq.s32.totalorder %s33, 1
      %p359 = por %p357, %p358
      %p360 = scmp.ne.s32.totalorder %s351, %s352
      %p361 = scmp.eq.s32.totalorder %s33, 0
      %p362 = por %p360, %p361
      %p363 = scmp.ne.s32.totalorder %s351, %s352
      %p364 = scmp.eq.s32.totalorder %s34, 1
      %p365 = por %p363, %p364
      %p367 = scmp.ne.s32.totalorder %s352, %s366
      %p368 = scmp.eq.s32.totalorder %s34, 0
      %p369 = por %p367, %p368
      %s371 = sadd.s32 %s370, 1
      %p374 = scmp.eq.s32.totalorder %s28, 1
      %p375 = scmp.ne.s32.totalorder %s370, %s372
      %p376 = scmp.eq.s32.totalorder %s28, 0
      %p377 = por %p375, %p376
      %p378 = scmp.ne.s32.totalorder %s370, %s372
      %p379 = scmp.eq.s32.totalorder %s33, 1
      %p380 = por %p378, %p379
      %p381 = scmp.ne.s32.totalorder %s372, %s373
      %p382 = scmp.eq.s32.totalorder %s33, 0
      %p383 = por %p381, %p382
      %p384 = scmp.ne.s32.totalorder %s372, %s373
      %p385 = scmp.eq.s32.totalorder %s34, 1
      %p386 = por %p384, %p385
      %p388 = scmp.ne.s32.totalorder %s373, %s387
      %p389 = scmp.eq.s32.totalorder %s34, 0
      %p390 = por %p388, %p389
      %s392 = sadd.s32 %s391, 1
      %p395 = scmp.eq.s32.totalorder %s28, 1
      %p396 = scmp.ne.s32.totalorder %s391, %s393
      %p397 = scmp.eq.s32.totalorder %s28, 0
      %p398 = por %p396, %p397
      %p399 = scmp.ne.s32.totalorder %s391, %s393
      %p400 = scmp.eq.s32.totalorder %s33, 1
      %p401 = por %p399, %p400
      %p402 = scmp.ne.s32.totalorder %s393, %s394
      %p403 = scmp.eq.s32.totalorder %s33, 0
      %p404 = por %p402, %p403
      %p405 = scmp.ne.s32.totalorder %s393, %s394
      %p406 = scmp.eq.s32.totalorder %s34, 1
      %p407 = por %p405, %p406
      %p409 = scmp.ne.s32.totalorder %s394, %s408
      %p410 = scmp.eq.s32.totalorder %s34, 0
      %p411 = por %p409, %p410
      %s412 = ssub.s32 %s35, %s47
      %p413 = scmp.eq.s32.totalorder %s412, 0
      %s415 = sadd.s32 %s414, 1
      %s416 = scalar_select %p413, %s414, %s415
      %p419 = pneg %p413
      %p420 = scmp.eq.s32.totalorder %s28, 1
      %p421 = por %p419, %p420
      %p422 = scmp.ne.s32.totalorder %s414, %s417
      %p423 = scmp.eq.s32.totalorder %s28, 0
      %p424 = por %p422, %p423
      %p425 = scmp.ne.s32.totalorder %s414, %s417
      %p426 = scmp.eq.s32.totalorder %s33, 1
      %p427 = por %p425, %p426
      %p428 = scmp.ne.s32.totalorder %s417, %s418
      %p429 = scmp.eq.s32.totalorder %s33, 0
      %p430 = por %p428, %p429
      %p431 = scmp.ne.s32.totalorder %s417, %s418
      %p432 = scmp.eq.s32.totalorder %s34, 1
      %p433 = por %p431, %p432
      %p435 = scmp.ne.s32.totalorder %s418, %s434
      %p436 = scmp.eq.s32.totalorder %s34, 0
      %p437 = por %p435, %p436
      %p438 = scmp.le.s32.totalorder 1, %s28
      %p439 = scmp.lt.s32.totalorder %s28, 3
      %p440 = pnand %p438, %p439
      %p441 = pneg %p440
      // Predicated region
      $region9: #{pointnet_forward.1} parent=5 // pred_check
        _
      $region10: #{pointnet_forward.1} parent=5 // pred_check_branch
        %443 = sbr.rel (%p440) target = $region12
      $region11: #{pointnet_forward.1} parent=5 // pred_region
        %s444 = ssub.s32 %s28, 1
        // Predicated region
        $region13: #{pointnet_forward.1} parent=11 // pred_check
          %p445 = pneg %p89
        $region14: #{pointnet_forward.1} parent=11 // pred_check_branch
          %447 = sbr.rel (%p445) target = $region16
        $region15: #{pointnet_forward.1} parent=11 // pred_region
          _
        $region16: #{pointnet_forward.1} parent=11 // pred_fallthru
          _
        // Predicated region
        $region17: #{pointnet_forward.1} parent=11 // pred_check
          %p448 = pneg %p110
        $region18: #{pointnet_forward.1} parent=11 // pred_check_branch
          %450 = sbr.rel (%p448) target = $region20
        $region19: #{pointnet_forward.1} parent=11 // pred_region
          %s452 = ssub.s32 16, 16
          %453 = vsyncadd [#allocation4], %s452
          %s455 = sshll.u32 [#allocation3], 4
          %s456 = int_to_ptr.vmem [resolvable:$true] %s455
          %458 = dma.hbm_to_vmem [thread:$0]  %s2, 16, %s456, [#allocation4]
        $region20: #{pointnet_forward.1} parent=11 // pred_fallthru
          _
        // Predicated region
        $region21: #{pointnet_forward.1} parent=11 // pred_check
          %p459 = pneg %p131
        $region22: #{pointnet_forward.1} parent=11 // pred_check_branch
          %461 = sbr.rel (%p459) target = $region24
        $region23: #{pointnet_forward.1} parent=11 // pred_region
          %s463 = ssub.s32 512, 512
          %464 = vsyncadd [#allocation6], %s463
          %s465 = sshll.u32 [#allocation5], 4
          %s466 = int_to_ptr.vmem [resolvable:$true] %s465
          %471 = dma.hbm_to_vmem [thread:$0]  %s3, 512, %s466, [#allocation6], 64, 64, 4
        $region24: #{pointnet_forward.1} parent=11 // pred_fallthru
          _
        // Predicated region
        $region25: #{pointnet_forward.1} parent=11 // pred_check
          %p472 = pneg %p152
        $region26: #{pointnet_forward.1} parent=11 // pred_check_branch
          %474 = sbr.rel (%p472) target = $region28
        $region27: #{pointnet_forward.1} parent=11 // pred_region
          %s476 = ssub.s32 16, 16
          %477 = vsyncadd [#allocation6], %s476
          %s479 = sshll.u32 [#allocation7], 4
          %s480 = int_to_ptr.vmem [resolvable:$true] %s479
          %482 = dma.hbm_to_vmem [thread:$0]  %s4, 16, %s480, [#allocation6]
        $region28: #{pointnet_forward.1} parent=11 // pred_fallthru
          _
        // Predicated region
        $region29: #{pointnet_forward.1} parent=11 // pred_check
          %p483 = pneg %p173
        $region30: #{pointnet_forward.1} parent=11 // pred_check_branch
          %485 = sbr.rel (%p483) target = $region32
        $region31: #{pointnet_forward.1} parent=11 // pred_region
          %s487 = ssub.s32 512, 512
          %488 = vsyncadd [#allocation9], %s487
          %s489 = sshll.u32 [#allocation8], 4
          %s490 = int_to_ptr.vmem [resolvable:$true] %s489
          %495 = dma.hbm_to_vmem [thread:$0]  %s5, 512, %s490, [#allocation9], 64, 64, 4
        $region32: #{pointnet_forward.1} parent=11 // pred_fallthru
          _
        // Predicated region
        $region33: #{pointnet_forward.1} parent=11 // pred_check
          %p496 = pneg %p194
        $region34: #{pointnet_forward.1} parent=11 // pred_check_branch
          %498 = sbr.rel (%p496) target = $region36
        $region35: #{pointnet_forward.1} parent=11 // pred_region
          %s500 = ssub.s32 16, 16
          %501 = vsyncadd [#allocation9], %s500
          %s503 = sshll.u32 [#allocation10], 4
          %s504 = int_to_ptr.vmem [resolvable:$true] %s503
          %506 = dma.hbm_to_vmem [thread:$0]  %s6, 16, %s504, [#allocation9]
        $region36: #{pointnet_forward.1} parent=11 // pred_fallthru
          _
        // Predicated region
        $region37: #{pointnet_forward.1} parent=11 // pred_check
          %p507 = pneg %p215
        $region38: #{pointnet_forward.1} parent=11 // pred_check_branch
          %509 = sbr.rel (%p507) target = $region40
        $region39: #{pointnet_forward.1} parent=11 // pred_region
          %s511 = ssub.s32 512, 512
          %512 = vsyncadd [#allocation12], %s511
          %s513 = sshll.u32 [#allocation11], 4
          %s514 = int_to_ptr.vmem [resolvable:$true] %s513
          %519 = dma.hbm_to_vmem [thread:$0]  %s7, 512, %s514, [#allocation12], 64, 64, 4
        $region40: #{pointnet_forward.1} parent=11 // pred_fallthru
          _
        // Predicated region
        $region41: #{pointnet_forward.1} parent=11 // pred_check
          %p520 = pneg %p236
        $region42: #{pointnet_forward.1} parent=11 // pred_check_branch
          %522 = sbr.rel (%p520) target = $region44
        $region43: #{pointnet_forward.1} parent=11 // pred_region
          %s524 = ssub.s32 16, 16
          %525 = vsyncadd [#allocation12], %s524
          %s527 = sshll.u32 [#allocation13], 4
          %s528 = int_to_ptr.vmem [resolvable:$true] %s527
          %530 = dma.hbm_to_vmem [thread:$0]  %s8, 16, %s528, [#allocation12]
        $region44: #{pointnet_forward.1} parent=11 // pred_fallthru
          _
        // Predicated region
        $region45: #{pointnet_forward.1} parent=11 // pred_check
          %p531 = pneg %p257
        $region46: #{pointnet_forward.1} parent=11 // pred_check_branch
          %533 = sbr.rel (%p531) target = $region48
        $region47: #{pointnet_forward.1} parent=11 // pred_region
          _
        $region48: #{pointnet_forward.1} parent=11 // pred_fallthru
          _
        // Predicated region
        $region49: #{pointnet_forward.1} parent=11 // pred_check
          %p534 = pneg %p278
        $region50: #{pointnet_forward.1} parent=11 // pred_check_branch
          %536 = sbr.rel (%p534) target = $region52
        $region51: #{pointnet_forward.1} parent=11 // pred_region
          _
        $region52: #{pointnet_forward.1} parent=11 // pred_fallthru
          _
        // Predicated region
        $region53: #{pointnet_forward.1} parent=11 // pred_check
          %p537 = pneg %p299
        $region54: #{pointnet_forward.1} parent=11 // pred_check_branch
          %539 = sbr.rel (%p537) target = $region56
        $region55: #{pointnet_forward.1} parent=11 // pred_region
          _
        $region56: #{pointnet_forward.1} parent=11 // pred_fallthru
          _
        // Predicated region
        $region57: #{pointnet_forward.1} parent=11 // pred_check
          %p540 = pneg %p320
        $region58: #{pointnet_forward.1} parent=11 // pred_check_branch
          %542 = sbr.rel (%p540) target = $region60
        $region59: #{pointnet_forward.1} parent=11 // pred_region
          %s544 = ssub.s32 64, 64
          %545 = vsyncadd [#allocation15], %s544
          %s547 = sshll.u32 [#allocation14], 4
          %s548 = int_to_ptr.vmem [resolvable:$true] %s547
          %550 = dma.hbm_to_vmem [thread:$0]  %s12, 64, %s548, [#allocation15]
        $region60: #{pointnet_forward.1} parent=11 // pred_fallthru
          _
        // Predicated region
        $region61: #{pointnet_forward.1} parent=11 // pred_check
          %p551 = pneg %p341
        $region62: #{pointnet_forward.1} parent=11 // pred_check_branch
          %553 = sbr.rel (%p551) target = $region64
        $region63: #{pointnet_forward.1} parent=11 // pred_region
          _
        $region64: #{pointnet_forward.1} parent=11 // pred_fallthru
          _
        // Predicated region
        $region65: #{pointnet_forward.1} parent=11 // pred_check
          %p554 = pneg %p362
        $region66: #{pointnet_forward.1} parent=11 // pred_check_branch
          %556 = sbr.rel (%p554) target = $region68
        $region67: #{pointnet_forward.1} parent=11 // pred_region
          _
        $region68: #{pointnet_forward.1} parent=11 // pred_fallthru
          _
        // Predicated region
        $region69: #{pointnet_forward.1} parent=11 // pred_check
          %p557 = pneg %p383
        $region70: #{pointnet_forward.1} parent=11 // pred_check_branch
          %559 = sbr.rel (%p557) target = $region72
        $region71: #{pointnet_forward.1} parent=11 // pred_region
          _
        $region72: #{pointnet_forward.1} parent=11 // pred_fallthru
          _
        // Predicated region
        $region73: #{pointnet_forward.1} parent=11 // pred_check
          %p560 = pneg %p404
        $region74: #{pointnet_forward.1} parent=11 // pred_check_branch
          %562 = sbr.rel (%p560) target = $region76
        $region75: #{pointnet_forward.1} parent=11 // pred_region
          %s564 = ssub.s32 16, 16
          %565 = vsyncadd [#allocation15], %s564
          %s567 = sshll.u32 [#allocation16], 4
          %s568 = int_to_ptr.vmem [resolvable:$true] %s567
          %570 = dma.hbm_to_vmem [thread:$0]  %s16, 16, %s568, [#allocation15]
        $region76: #{pointnet_forward.1} parent=11 // pred_fallthru
          _
      $region12: #{pointnet_forward.1} parent=5 // pred_fallthru
        _
      %p571 = scmp.lt.s32.totalorder %s28, 2
      // Predicated region
      $region77: #{pointnet_forward.1} parent=5 // pred_check
        %p572 = pneg %p571
      $region78: #{pointnet_forward.1} parent=5 // pred_check_branch
        %574 = sbr.rel (%p572) target = $region80
      $region79: #{pointnet_forward.1} parent=5 // pred_region
        // Predicated region
        $region81: #{pointnet_forward.1} parent=79 // pred_check
          %p575 = pneg %p62
        $region82: #{pointnet_forward.1} parent=79 // pred_check_branch
          %577 = sbr.rel (%p575) target = $region84
        $region83: #{pointnet_forward.1} parent=79 // pred_region
          %s578 = smul.u32 128, %s36
          %p579 = scmp.lt.s32.totalorder %s35, 1
          %s580 = scalar_select %p579, %s35, 1
          %p581 = scmp.lt.s32.totalorder %s578, 127
          %s582 = scalar_select %p581, %s578, 127
          %s583 = smul.addr %s580, 128
          %s584 = sadd.s32 %s582, %s583
          %s585 = smul.addr %s584, 4
          %s586 = scalar_lea.vmem %s0, %s585
          %s587 = smul.u32 128, %s36
        $region84: #{pointnet_forward.1} parent=79 // pred_fallthru
          _
      $region80: #{pointnet_forward.1} parent=5 // pred_fallthru
        _
      %p588 = scmp.le.s32.totalorder 1, %s28
      %p589 = scmp.lt.s32.totalorder %s28, 3
      %p590 = pnand %p588, %p589
      %p591 = pneg %p590
      // Predicated region
      $region85: #{pointnet_forward.1} parent=5 // pred_check
        _
      $region86: #{pointnet_forward.1} parent=5 // pred_check_branch
        %593 = sbr.rel (%p590) target = $region88
      $region87: #{pointnet_forward.1} parent=5 // pred_region
        %s594 = ssub.s32 %s28, 1
        // Predicated region
        $region89: #{pointnet_forward.1} parent=87 // pred_check
          %p595 = pneg %p110
        $region90: #{pointnet_forward.1} parent=87 // pred_check_branch
          %597 = sbr.rel (%p595) target = $region92
        $region91: #{pointnet_forward.1} parent=87 // pred_region
          %598 = dma.done [#allocation4], 16
        $region92: #{pointnet_forward.1} parent=87 // pred_fallthru
          _
        // Predicated region
        $region93: #{pointnet_forward.1} parent=87 // pred_check
          %p599 = pneg %p131
        $region94: #{pointnet_forward.1} parent=87 // pred_check_branch
          %601 = sbr.rel (%p599) target = $region96
        $region95: #{pointnet_forward.1} parent=87 // pred_region
          %602 = dma.done [#allocation6], 512
        $region96: #{pointnet_forward.1} parent=87 // pred_fallthru
          _
        // Predicated region
        $region97: #{pointnet_forward.1} parent=87 // pred_check
          %p603 = pneg %p152
        $region98: #{pointnet_forward.1} parent=87 // pred_check_branch
          %605 = sbr.rel (%p603) target = $region100
        $region99: #{pointnet_forward.1} parent=87 // pred_region
          %606 = dma.done [#allocation6], 16
        $region100: #{pointnet_forward.1} parent=87 // pred_fallthru
          _
        // Predicated region
        $region101: #{pointnet_forward.1} parent=87 // pred_check
          %p607 = pneg %p173
        $region102: #{pointnet_forward.1} parent=87 // pred_check_branch
          %609 = sbr.rel (%p607) target = $region104
        $region103: #{pointnet_forward.1} parent=87 // pred_region
          %610 = dma.done [#allocation9], 512
        $region104: #{pointnet_forward.1} parent=87 // pred_fallthru
          _
        // Predicated region
        $region105: #{pointnet_forward.1} parent=87 // pred_check
          %p611 = pneg %p194
        $region106: #{pointnet_forward.1} parent=87 // pred_check_branch
          %613 = sbr.rel (%p611) target = $region108
        $region107: #{pointnet_forward.1} parent=87 // pred_region
          %614 = dma.done [#allocation9], 16
        $region108: #{pointnet_forward.1} parent=87 // pred_fallthru
          _
        // Predicated region
        $region109: #{pointnet_forward.1} parent=87 // pred_check
          %p615 = pneg %p215
        $region110: #{pointnet_forward.1} parent=87 // pred_check_branch
          %617 = sbr.rel (%p615) target = $region112
        $region111: #{pointnet_forward.1} parent=87 // pred_region
          %618 = dma.done [#allocation12], 512
        $region112: #{pointnet_forward.1} parent=87 // pred_fallthru
          _
        // Predicated region
        $region113: #{pointnet_forward.1} parent=87 // pred_check
          %p619 = pneg %p236
        $region114: #{pointnet_forward.1} parent=87 // pred_check_branch
          %621 = sbr.rel (%p619) target = $region116
        $region115: #{pointnet_forward.1} parent=87 // pred_region
          %622 = dma.done [#allocation12], 16
        $region116: #{pointnet_forward.1} parent=87 // pred_fallthru
          _
        // Predicated region
        $region117: #{pointnet_forward.1} parent=87 // pred_check
          %p623 = pneg %p320
        $region118: #{pointnet_forward.1} parent=87 // pred_check_branch
          %625 = sbr.rel (%p623) target = $region120
        $region119: #{pointnet_forward.1} parent=87 // pred_region
          %626 = dma.done [#allocation15], 64
        $region120: #{pointnet_forward.1} parent=87 // pred_fallthru
          _
        // Predicated region
        $region121: #{pointnet_forward.1} parent=87 // pred_check
          %p627 = pneg %p404
        $region122: #{pointnet_forward.1} parent=87 // pred_check_branch
          %629 = sbr.rel (%p627) target = $region124
        $region123: #{pointnet_forward.1} parent=87 // pred_region
          %630 = dma.done [#allocation15], 16
        $region124: #{pointnet_forward.1} parent=87 // pred_fallthru
          _
        %s631 = smul.u32 128, %s38
        %p632 = scmp.lt.s32.totalorder %s37, 1
        %s633 = scalar_select %p632, %s37, 1
        %p634 = scmp.lt.s32.totalorder %s631, 127
        %s635 = scalar_select %p634, %s631, 127
        %s636 = smul.addr %s633, 128
        %s637 = sadd.s32 %s635, %s636
        %s638 = smul.addr %s637, 4
        %s639 = scalar_lea.vmem %s0, %s638
        %p640 = pneg %p68
        %p641 = pneg %p65
        %p642 = pneg %p89
        %p643 = pneg %p86
        %p644 = pneg %p110
        %p645 = pneg %p107
        %p646 = pneg %p131
        %p647 = pneg %p128
        %p648 = pneg %p152
        %p649 = pneg %p149
        %p650 = pneg %p173
        %p651 = pneg %p170
        %p652 = pneg %p194
        %p653 = pneg %p191
        %p654 = pneg %p215
        %p655 = pneg %p212
        %p656 = pneg %p236
        %p657 = pneg %p233
        %p658 = pneg %p257
        %p659 = pneg %p254
        %p660 = pneg %p278
        %p661 = pneg %p275
        %p662 = pneg %p299
        %p663 = pneg %p296
        %p664 = pneg %p320
        %p665 = pneg %p317
        %p666 = pneg %p341
        %p667 = pneg %p338
        %p668 = pneg %p362
        %p669 = pneg %p359
        %p670 = pneg %p383
        %p671 = pneg %p380
        %p672 = pneg %p404
        %p673 = pneg %p401
        %p674 = pneg %p430
        %p675 = pneg %p427
        %p676 = scmp.lt.s32.totalorder %s37, 1
        %s677 = scalar_select %p676, %s37, 1
        %s678 = smul.addr %s677, 8
        %s679 = scalar_lea.vmem %s17, %s678
        %s680 = smul.u32 128, %s38
        %p681 = scmp.lt.s32.totalorder %s37, 1
        %s682 = scalar_select %p681, %s37, 1
        %p683 = scmp.lt.s32.totalorder %s680, 127
        %s684 = scalar_select %p683, %s680, 127
        %s685 = smul.addr %s682, 128
        %s686 = sadd.s32 %s684, %s685
        %s687 = smul.addr %s686, 4
        %s688 = scalar_lea.vmem %s0, %s687
        %s689 = smul.u32 128, %s38
        %p690 = scmp.lt.s32.totalorder %s37, 1
        %s691 = scalar_select %p690, %s37, 1
        %s692 = smul.addr %s691, 8
        %s693 = scalar_lea.vmem %s17, %s692
        %v695 = vld [vmem:[%s688] sm:$0xf]
        %v696 = vld [vmem:[%s688 + $0x4] sm:$0xf]
        %v697 = vld [vmem:[%s688 + $0x8] sm:$0xf]
        %v698 = vld [vmem:[%s688 + $0xc] sm:$0xf]
        %v699 = vld [vmem:[%s688 + $0x10] sm:$0xf]
        %v700 = vld [vmem:[%s688 + $0x14] sm:$0xf]
        %v701 = vld [vmem:[%s688 + $0x18] sm:$0xf]
        %v702 = vld [vmem:[%s688 + $0x1c] sm:$0xf]
        %v703 = vld [vmem:[%s688 + $0x20] sm:$0xf]
        %v704 = vld [vmem:[%s688 + $0x24] sm:$0xf]
        %v705 = vld [vmem:[%s688 + $0x28] sm:$0xf]
        %v706 = vld [vmem:[%s688 + $0x2c] sm:$0xf]
        %v707 = vld [vmem:[%s688 + $0x30] sm:$0xf]
        %v708 = vld [vmem:[%s688 + $0x34] sm:$0xf]
        %v709 = vld [vmem:[%s688 + $0x38] sm:$0xf]
        %v710 = vld [vmem:[%s688 + $0x3c] sm:$0xf]
        %v711 = vld [vmem:[%s688 + $0x40] sm:$0xf]
        %v712 = vld [vmem:[%s688 + $0x44] sm:$0xf]
        %v713 = vld [vmem:[%s688 + $0x48] sm:$0xf]
        %v714 = vld [vmem:[%s688 + $0x4c] sm:$0xf]
        %v715 = vld [vmem:[%s688 + $0x50] sm:$0xf]
        %v716 = vld [vmem:[%s688 + $0x54] sm:$0xf]
        %v717 = vld [vmem:[%s688 + $0x58] sm:$0xf]
        %v718 = vld [vmem:[%s688 + $0x5c] sm:$0xf]
        %v719 = vld [vmem:[%s688 + $0x60] sm:$0xf]
        %v720 = vld [vmem:[%s688 + $0x64] sm:$0xf]
        %v721 = vld [vmem:[%s688 + $0x68] sm:$0xf]
        %v722 = vld [vmem:[%s688 + $0x6c] sm:$0xf]
        %v723 = vld [vmem:[%s688 + $0x70] sm:$0xf]
        %v724 = vld [vmem:[%s688 + $0x74] sm:$0xf]
        %v725 = vld [vmem:[%s688 + $0x78] sm:$0xf]
        %v726 = vld [vmem:[%s688 + $0x7c] sm:$0xf]
        %v727 = vld [vmem:[%s688 + $0x80] sm:$0xf]
        %v728 = vld [vmem:[%s688 + $0x84] sm:$0xf]
        %v729 = vld [vmem:[%s688 + $0x88] sm:$0xf]
        %v730 = vld [vmem:[%s688 + $0x8c] sm:$0xf]
        %v731 = vld [vmem:[%s688 + $0x90] sm:$0xf]
        %v732 = vld [vmem:[%s688 + $0x94] sm:$0xf]
        %v733 = vld [vmem:[%s688 + $0x98] sm:$0xf]
        %v734 = vld [vmem:[%s688 + $0x9c] sm:$0xf]
        %v735 = vld [vmem:[%s688 + $0xa0] sm:$0xf]
        %v736 = vld [vmem:[%s688 + $0xa4] sm:$0xf]
        %v737 = vld [vmem:[%s688 + $0xa8] sm:$0xf]
        %v738 = vld [vmem:[%s688 + $0xac] sm:$0xf]
        %v739 = vld [vmem:[%s688 + $0xb0] sm:$0xf]
        %v740 = vld [vmem:[%s688 + $0xb4] sm:$0xf]
        %v741 = vld [vmem:[%s688 + $0xb8] sm:$0xf]
        %v742 = vld [vmem:[%s688 + $0xbc] sm:$0xf]
        %v743 = vld [vmem:[%s688 + $0xc0] sm:$0xf]
        %v744 = vld [vmem:[%s688 + $0xc4] sm:$0xf]
        %v745 = vld [vmem:[%s688 + $0xc8] sm:$0xf]
        %v746 = vld [vmem:[%s688 + $0xcc] sm:$0xf]
        %v747 = vld [vmem:[%s688 + $0xd0] sm:$0xf]
        %v748 = vld [vmem:[%s688 + $0xd4] sm:$0xf]
        %v749 = vld [vmem:[%s688 + $0xd8] sm:$0xf]
        %v750 = vld [vmem:[%s688 + $0xdc] sm:$0xf]
        %v751 = vld [vmem:[%s688 + $0xe0] sm:$0xf]
        %v752 = vld [vmem:[%s688 + $0xe4] sm:$0xf]
        %v753 = vld [vmem:[%s688 + $0xe8] sm:$0xf]
        %v754 = vld [vmem:[%s688 + $0xec] sm:$0xf]
        %v755 = vld [vmem:[%s688 + $0xf0] sm:$0xf]
        %v756 = vld [vmem:[%s688 + $0xf4] sm:$0xf]
        %v757 = vld [vmem:[%s688 + $0xf8] sm:$0xf]
        %v758 = vld [vmem:[%s688 + $0xfc] sm:$0xf]
        %v759 = vld [vmem:[%s688 + $0x100] sm:$0xf]
        %v760 = vld [vmem:[%s688 + $0x104] sm:$0xf]
        %v761 = vld [vmem:[%s688 + $0x108] sm:$0xf]
        %v762 = vld [vmem:[%s688 + $0x10c] sm:$0xf]
        %v763 = vld [vmem:[%s688 + $0x110] sm:$0xf]
        %v764 = vld [vmem:[%s688 + $0x114] sm:$0xf]
        %v765 = vld [vmem:[%s688 + $0x118] sm:$0xf]
        %v766 = vld [vmem:[%s688 + $0x11c] sm:$0xf]
        %v767 = vld [vmem:[%s688 + $0x120] sm:$0xf]
        %v768 = vld [vmem:[%s688 + $0x124] sm:$0xf]
        %v769 = vld [vmem:[%s688 + $0x128] sm:$0xf]
        %v770 = vld [vmem:[%s688 + $0x12c] sm:$0xf]
        %v771 = vld [vmem:[%s688 + $0x130] sm:$0xf]
        %v772 = vld [vmem:[%s688 + $0x134] sm:$0xf]
        %v773 = vld [vmem:[%s688 + $0x138] sm:$0xf]
        %v774 = vld [vmem:[%s688 + $0x13c] sm:$0xf]
        %v775 = vld [vmem:[%s688 + $0x140] sm:$0xf]
        %v776 = vld [vmem:[%s688 + $0x144] sm:$0xf]
        %v777 = vld [vmem:[%s688 + $0x148] sm:$0xf]
        %v778 = vld [vmem:[%s688 + $0x14c] sm:$0xf]
        %v779 = vld [vmem:[%s688 + $0x150] sm:$0xf]
        %v780 = vld [vmem:[%s688 + $0x154] sm:$0xf]
        %v781 = vld [vmem:[%s688 + $0x158] sm:$0xf]
        %v782 = vld [vmem:[%s688 + $0x15c] sm:$0xf]
        %v783 = vld [vmem:[%s688 + $0x160] sm:$0xf]
        %v784 = vld [vmem:[%s688 + $0x164] sm:$0xf]
        %v785 = vld [vmem:[%s688 + $0x168] sm:$0xf]
        %v786 = vld [vmem:[%s688 + $0x16c] sm:$0xf]
        %v787 = vld [vmem:[%s688 + $0x170] sm:$0xf]
        %v788 = vld [vmem:[%s688 + $0x174] sm:$0xf]
        %v789 = vld [vmem:[%s688 + $0x178] sm:$0xf]
        %v790 = vld [vmem:[%s688 + $0x17c] sm:$0xf]
        %v791 = vld [vmem:[%s688 + $0x180] sm:$0xf]
        %v792 = vld [vmem:[%s688 + $0x184] sm:$0xf]
        %v793 = vld [vmem:[%s688 + $0x188] sm:$0xf]
        %v794 = vld [vmem:[%s688 + $0x18c] sm:$0xf]
        %v795 = vld [vmem:[%s688 + $0x190] sm:$0xf]
        %v796 = vld [vmem:[%s688 + $0x194] sm:$0xf]
        %v797 = vld [vmem:[%s688 + $0x198] sm:$0xf]
        %v798 = vld [vmem:[%s688 + $0x19c] sm:$0xf]
        %v799 = vld [vmem:[%s688 + $0x1a0] sm:$0xf]
        %v800 = vld [vmem:[%s688 + $0x1a4] sm:$0xf]
        %v801 = vld [vmem:[%s688 + $0x1a8] sm:$0xf]
        %v802 = vld [vmem:[%s688 + $0x1ac] sm:$0xf]
        %v803 = vld [vmem:[%s688 + $0x1b0] sm:$0xf]
        %v804 = vld [vmem:[%s688 + $0x1b4] sm:$0xf]
        %v805 = vld [vmem:[%s688 + $0x1b8] sm:$0xf]
        %v806 = vld [vmem:[%s688 + $0x1bc] sm:$0xf]
        %v807 = vld [vmem:[%s688 + $0x1c0] sm:$0xf]
        %v808 = vld [vmem:[%s688 + $0x1c4] sm:$0xf]
        %v809 = vld [vmem:[%s688 + $0x1c8] sm:$0xf]
        %v810 = vld [vmem:[%s688 + $0x1cc] sm:$0xf]
        %v811 = vld [vmem:[%s688 + $0x1d0] sm:$0xf]
        %v812 = vld [vmem:[%s688 + $0x1d4] sm:$0xf]
        %v813 = vld [vmem:[%s688 + $0x1d8] sm:$0xf]
        %v814 = vld [vmem:[%s688 + $0x1dc] sm:$0xf]
        %v815 = vld [vmem:[%s688 + $0x1e0] sm:$0xf]
        %v816 = vld [vmem:[%s688 + $0x1e4] sm:$0xf]
        %v817 = vld [vmem:[%s688 + $0x1e8] sm:$0xf]
        %v818 = vld [vmem:[%s688 + $0x1ec] sm:$0xf]
        %v819 = vld [vmem:[%s688 + $0x1f0] sm:$0xf]
        %v820 = vld [vmem:[%s688 + $0x1f4] sm:$0xf]
        %v821 = vld [vmem:[%s688 + $0x1f8] sm:$0xf]
        %v822 = vld [vmem:[%s688 + $0x1fc] sm:$0xf]
        %v823 = vld [vmem:[%s1] sm:$0xf]
        %v824 = vld [vmem:[#allocation3] sm:$0x1]
        %v826 = vlaneseq
        %v827 = vshrl.u32 %v826, 7
        %v828 = vsub.s32 0, %v827
        %v829 = vrot.slane %v824, %v828
        %v959 = vunpack.c.l.b16 %v695
        %v960 = vunpack.c.l.b16 %v696
        %v961 = vunpack.c.l.b16 %v697
        %v962 = vunpack.c.l.b16 %v698
        %v963 = vunpack.c.l.b16 %v699
        %v964 = vunpack.c.l.b16 %v700
        %v965 = vunpack.c.l.b16 %v701
        %v966 = vunpack.c.l.b16 %v702
        %v967 = vunpack.c.l.b16 %v703
        %v968 = vunpack.c.l.b16 %v704
        %v969 = vunpack.c.l.b16 %v705
        %v970 = vunpack.c.l.b16 %v706
        %v971 = vunpack.c.l.b16 %v707
        %v972 = vunpack.c.l.b16 %v708
        %v973 = vunpack.c.l.b16 %v709
        %v974 = vunpack.c.l.b16 %v710
        %v975 = vunpack.c.l.b16 %v711
        %v976 = vunpack.c.l.b16 %v712
        %v977 = vunpack.c.l.b16 %v713
        %v978 = vunpack.c.l.b16 %v714
        %v979 = vunpack.c.l.b16 %v715
        %v980 = vunpack.c.l.b16 %v716
        %v981 = vunpack.c.l.b16 %v717
        %v982 = vunpack.c.l.b16 %v718
        %v983 = vunpack.c.l.b16 %v719
        %v984 = vunpack.c.l.b16 %v720
        %v985 = vunpack.c.l.b16 %v721
        %v986 = vunpack.c.l.b16 %v722
        %v987 = vunpack.c.l.b16 %v723
        %v988 = vunpack.c.l.b16 %v724
        %v989 = vunpack.c.l.b16 %v725
        %v990 = vunpack.c.l.b16 %v726
        %v991 = vunpack.c.l.b16 %v727
        %v992 = vunpack.c.l.b16 %v728
        %v993 = vunpack.c.l.b16 %v729
        %v994 = vunpack.c.l.b16 %v730
        %v995 = vunpack.c.l.b16 %v731
        %v996 = vunpack.c.l.b16 %v732
        %v997 = vunpack.c.l.b16 %v733
        %v998 = vunpack.c.l.b16 %v734
        %v999 = vunpack.c.l.b16 %v735
        %v1000 = vunpack.c.l.b16 %v736
        %v1001 = vunpack.c.l.b16 %v737
        %v1002 = vunpack.c.l.b16 %v738
        %v1003 = vunpack.c.l.b16 %v739
        %v1004 = vunpack.c.l.b16 %v740
        %v1005 = vunpack.c.l.b16 %v741
        %v1006 = vunpack.c.l.b16 %v742
        %v1007 = vunpack.c.l.b16 %v743
        %v1008 = vunpack.c.l.b16 %v744
        %v1009 = vunpack.c.l.b16 %v745
        %v1010 = vunpack.c.l.b16 %v746
        %v1011 = vunpack.c.l.b16 %v747
        %v1012 = vunpack.c.l.b16 %v748
        %v1013 = vunpack.c.l.b16 %v749
        %v1014 = vunpack.c.l.b16 %v750
        %v1015 = vunpack.c.l.b16 %v751
        %v1016 = vunpack.c.l.b16 %v752
        %v1017 = vunpack.c.l.b16 %v753
        %v1018 = vunpack.c.l.b16 %v754
        %v1019 = vunpack.c.l.b16 %v755
        %v1020 = vunpack.c.l.b16 %v756
        %v1021 = vunpack.c.l.b16 %v757
        %v1022 = vunpack.c.l.b16 %v758
        %v1023 = vunpack.c.l.b16 %v759
        %v1024 = vunpack.c.l.b16 %v760
        %v1025 = vunpack.c.l.b16 %v761
        %v1026 = vunpack.c.l.b16 %v762
        %v1027 = vunpack.c.l.b16 %v763
        %v1028 = vunpack.c.l.b16 %v764
        %v1029 = vunpack.c.l.b16 %v765
        %v1030 = vunpack.c.l.b16 %v766
        %v1031 = vunpack.c.l.b16 %v767
        %v1032 = vunpack.c.l.b16 %v768
        %v1033 = vunpack.c.l.b16 %v769
        %v1034 = vunpack.c.l.b16 %v770
        %v1035 = vunpack.c.l.b16 %v771
        %v1036 = vunpack.c.l.b16 %v772
        %v1037 = vunpack.c.l.b16 %v773
        %v1038 = vunpack.c.l.b16 %v774
        %v1039 = vunpack.c.l.b16 %v775
        %v1040 = vunpack.c.l.b16 %v776
        %v1041 = vunpack.c.l.b16 %v777
        %v1042 = vunpack.c.l.b16 %v778
        %v1043 = vunpack.c.l.b16 %v779
        %v1044 = vunpack.c.l.b16 %v780
        %v1045 = vunpack.c.l.b16 %v781
        %v1046 = vunpack.c.l.b16 %v782
        %v1047 = vunpack.c.l.b16 %v783
        %v1048 = vunpack.c.l.b16 %v784
        %v1049 = vunpack.c.l.b16 %v785
        %v1050 = vunpack.c.l.b16 %v786
        %v1051 = vunpack.c.l.b16 %v787
        %v1052 = vunpack.c.l.b16 %v788
        %v1053 = vunpack.c.l.b16 %v789
        %v1054 = vunpack.c.l.b16 %v790
        %v1055 = vunpack.c.l.b16 %v791
        %v1056 = vunpack.c.l.b16 %v792
        %v1057 = vunpack.c.l.b16 %v793
        %v1058 = vunpack.c.l.b16 %v794
        %v1059 = vunpack.c.l.b16 %v795
        %v1060 = vunpack.c.l.b16 %v796
        %v1061 = vunpack.c.l.b16 %v797
        %v1062 = vunpack.c.l.b16 %v798
        %v1063 = vunpack.c.l.b16 %v799
        %v1064 = vunpack.c.l.b16 %v800
        %v1065 = vunpack.c.l.b16 %v801
        %v1066 = vunpack.c.l.b16 %v802
        %v1067 = vunpack.c.l.b16 %v803
        %v1068 = vunpack.c.l.b16 %v804
        %v1069 = vunpack.c.l.b16 %v805
        %v1070 = vunpack.c.l.b16 %v806
        %v1071 = vunpack.c.l.b16 %v807
        %v1072 = vunpack.c.l.b16 %v808
        %v1073 = vunpack.c.l.b16 %v809
        %v1074 = vunpack.c.l.b16 %v810
        %v1075 = vunpack.c.l.b16 %v811
        %v1076 = vunpack.c.l.b16 %v812
        %v1077 = vunpack.c.l.b16 %v813
        %v1078 = vunpack.c.l.b16 %v814
        %v1079 = vunpack.c.l.b16 %v815
        %v1080 = vunpack.c.l.b16 %v816
        %v1081 = vunpack.c.l.b16 %v817
        %v1082 = vunpack.c.l.b16 %v818
        %v1083 = vunpack.c.l.b16 %v819
        %v1084 = vunpack.c.l.b16 %v820
        %v1085 = vunpack.c.l.b16 %v821
        %v1086 = vunpack.c.l.b16 %v822
        %v1087 = vpack.c.b16 %v960, %v959
        %v1088 = vpack.c.b16 %v962, %v961
        %v1089 = vpack.c.b16 %v964, %v963
        %v1090 = vpack.c.b16 %v966, %v965
        %v1091 = vpack.c.b16 %v968, %v967
        %v1092 = vpack.c.b16 %v970, %v969
        %v1093 = vpack.c.b16 %v972, %v971
        %v1094 = vpack.c.b16 %v974, %v973
        %v1095 = vpack.c.b16 %v976, %v975
        %v1096 = vpack.c.b16 %v978, %v977
        %v1097 = vpack.c.b16 %v980, %v979
        %v1098 = vpack.c.b16 %v982, %v981
        %v1099 = vpack.c.b16 %v984, %v983
        %v1100 = vpack.c.b16 %v986, %v985
        %v1101 = vpack.c.b16 %v988, %v987
        %v1102 = vpack.c.b16 %v990, %v989
        %v1103 = vpack.c.b16 %v992, %v991
        %v1104 = vpack.c.b16 %v994, %v993
        %v1105 = vpack.c.b16 %v996, %v995
        %v1106 = vpack.c.b16 %v998, %v997
        %v1107 = vpack.c.b16 %v1000, %v999
        %v1108 = vpack.c.b16 %v1002, %v1001
        %v1109 = vpack.c.b16 %v1004, %v1003
        %v1110 = vpack.c.b16 %v1006, %v1005
        %v1111 = vpack.c.b16 %v1008, %v1007
        %v1112 = vpack.c.b16 %v1010, %v1009
        %v1113 = vpack.c.b16 %v1012, %v1011
        %v1114 = vpack.c.b16 %v1014, %v1013
        %v1115 = vpack.c.b16 %v1016, %v1015
        %v1116 = vpack.c.b16 %v1018, %v1017
        %v1117 = vpack.c.b16 %v1020, %v1019
        %v1118 = vpack.c.b16 %v1022, %v1021
        %v1119 = vpack.c.b16 %v1024, %v1023
        %v1120 = vpack.c.b16 %v1026, %v1025
        %v1121 = vpack.c.b16 %v1028, %v1027
        %v1122 = vpack.c.b16 %v1030, %v1029
        %v1123 = vpack.c.b16 %v1032, %v1031
        %v1124 = vpack.c.b16 %v1034, %v1033
        %v1125 = vpack.c.b16 %v1036, %v1035
        %v1126 = vpack.c.b16 %v1038, %v1037
        %v1127 = vpack.c.b16 %v1040, %v1039
        %v1128 = vpack.c.b16 %v1042, %v1041
        %v1129 = vpack.c.b16 %v1044, %v1043
        %v1130 = vpack.c.b16 %v1046, %v1045
        %v1131 = vpack.c.b16 %v1048, %v1047
        %v1132 = vpack.c.b16 %v1050, %v1049
        %v1133 = vpack.c.b16 %v1052, %v1051
        %v1134 = vpack.c.b16 %v1054, %v1053
        %v1135 = vpack.c.b16 %v1056, %v1055
        %v1136 = vpack.c.b16 %v1058, %v1057
        %v1137 = vpack.c.b16 %v1060, %v1059
        %v1138 = vpack.c.b16 %v1062, %v1061
        %v1139 = vpack.c.b16 %v1064, %v1063
        %v1140 = vpack.c.b16 %v1066, %v1065
        %v1141 = vpack.c.b16 %v1068, %v1067
        %v1142 = vpack.c.b16 %v1070, %v1069
        %v1143 = vpack.c.b16 %v1072, %v1071
        %v1144 = vpack.c.b16 %v1074, %v1073
        %v1145 = vpack.c.b16 %v1076, %v1075
        %v1146 = vpack.c.b16 %v1078, %v1077
        %v1147 = vpack.c.b16 %v1080, %v1079
        %v1148 = vpack.c.b16 %v1082, %v1081
        %v1149 = vpack.c.b16 %v1084, %v1083
        %v1150 = vpack.c.b16 %v1086, %v1085
        %vm1151 = vcmask 64512
        %v1153 = vsel %vm1151, %v1087, 0
        %v1156 = vsel %vm1151, %v1088, 0
        %v1159 = vsel %vm1151, %v1089, 0
        %v1162 = vsel %vm1151, %v1090, 0
        %v1165 = vsel %vm1151, %v1091, 0
        %v1168 = vsel %vm1151, %v1092, 0
        %v1171 = vsel %vm1151, %v1093, 0
        %v1174 = vsel %vm1151, %v1094, 0
        %v1177 = vsel %vm1151, %v1095, 0
        %v1180 = vsel %vm1151, %v1096, 0
        %v1183 = vsel %vm1151, %v1097, 0
        %v1186 = vsel %vm1151, %v1098, 0
        %v1189 = vsel %vm1151, %v1099, 0
        %v1192 = vsel %vm1151, %v1100, 0
        %v1195 = vsel %vm1151, %v1101, 0
        %v1198 = vsel %vm1151, %v1102, 0
        %v1201 = vsel %vm1151, %v1103, 0
        %v1204 = vsel %vm1151, %v1104, 0
        %v1207 = vsel %vm1151, %v1105, 0
        %v1210 = vsel %vm1151, %v1106, 0
        %v1213 = vsel %vm1151, %v1107, 0
        %v1216 = vsel %vm1151, %v1108, 0
        %v1219 = vsel %vm1151, %v1109, 0
        %v1222 = vsel %vm1151, %v1110, 0
        %v1225 = vsel %vm1151, %v1111, 0
        %v1228 = vsel %vm1151, %v1112, 0
        %v1231 = vsel %vm1151, %v1113, 0
        %v1234 = vsel %vm1151, %v1114, 0
        %v1237 = vsel %vm1151, %v1115, 0
        %v1240 = vsel %vm1151, %v1116, 0
        %v1243 = vsel %vm1151, %v1117, 0
        %v1246 = vsel %vm1151, %v1118, 0
        %v1249 = vsel %vm1151, %v1119, 0
        %v1252 = vsel %vm1151, %v1120, 0
        %v1255 = vsel %vm1151, %v1121, 0
        %v1258 = vsel %vm1151, %v1122, 0
        %v1261 = vsel %vm1151, %v1123, 0
        %v1264 = vsel %vm1151, %v1124, 0
        %v1267 = vsel %vm1151, %v1125, 0
        %v1270 = vsel %vm1151, %v1126, 0
        %v1273 = vsel %vm1151, %v1127, 0
        %v1276 = vsel %vm1151, %v1128, 0
        %v1279 = vsel %vm1151, %v1129, 0
        %v1282 = vsel %vm1151, %v1130, 0
        %v1285 = vsel %vm1151, %v1131, 0
        %v1288 = vsel %vm1151, %v1132, 0
        %v1291 = vsel %vm1151, %v1133, 0
        %v1294 = vsel %vm1151, %v1134, 0
        %v1297 = vsel %vm1151, %v1135, 0
        %v1300 = vsel %vm1151, %v1136, 0
        %v1303 = vsel %vm1151, %v1137, 0
        %v1306 = vsel %vm1151, %v1138, 0
        %v1309 = vsel %vm1151, %v1139, 0
        %v1312 = vsel %vm1151, %v1140, 0
        %v1315 = vsel %vm1151, %v1141, 0
        %v1318 = vsel %vm1151, %v1142, 0
        %v1321 = vsel %vm1151, %v1143, 0
        %v1324 = vsel %vm1151, %v1144, 0
        %v1327 = vsel %vm1151, %v1145, 0
        %v1330 = vsel %vm1151, %v1146, 0
        %v1333 = vsel %vm1151, %v1147, 0
        %v1336 = vsel %vm1151, %v1148, 0
        %v1339 = vsel %vm1151, %v1149, 0
        %v1342 = vsel %vm1151, %v1150, 0
        %vm1344 = vcmask 1043456
        %v1346 = vsel %vm1344, %v823, 0
        %1348 = vmatprep.subr.bf16.mxu0 0
        %1349 = vmatpush1.bf16.msra.mxu0 %v1346
        %1350 = vmatprep.subr.bf16.mxu0 0
        %1351 = vmatpush1.bf16.msra.mxu0 0
        %1352 = vmatprep.subr.bf16.mxu0 0
        %1353 = vmatpush1.bf16.msra.mxu0 0
        %1354 = vmatprep.subr.bf16.mxu0 0
        %1355 = vmatpush1.bf16.msra.mxu0 0
        %1356 = vmatprep.subr.bf16.mxu0 0
        %1357 = vmatpush1.bf16.msra.mxu0 0
        %1358 = vmatprep.subr.bf16.mxu0 0
        %1359 = vmatpush1.bf16.msra.mxu0 0
        %1360 = vmatprep.subr.bf16.mxu0 0
        %1361 = vmatpush1.bf16.msra.mxu0 0
        %1362 = vmatprep.subr.bf16.mxu0 0
        %1363 = vmatpush1.bf16.msra.mxu0 0
        %1364 = vmatprep.subr.bf16.mxu0 0
        %1365 = vmatpush1.bf16.msra.mxu0 0
        %1366 = vmatprep.subr.bf16.mxu0 0
        %1367 = vmatpush1.bf16.msra.mxu0 0
        %1368 = vmatprep.subr.bf16.mxu0 0
        %1369 = vmatpush1.bf16.msra.mxu0 0
        %1370 = vmatprep.subr.bf16.mxu0 0
        %1371 = vmatpush1.bf16.msra.mxu0 0
        %1372 = vmatprep.subr.bf16.mxu0 0
        %1373 = vmatpush1.bf16.msra.mxu0 0
        %1374 = vmatprep.subr.bf16.mxu0 0
        %1375 = vmatpush1.bf16.msra.mxu0 0
        %1376 = vmatprep.subr.bf16.mxu0 0
        %1377 = vmatpush1.bf16.msra.mxu0 0
        %1378 = vmatprep.subr.bf16.mxu0 0
        %1379 = vmatpush1.bf16.msra.mxu0 0
        %1380 = vmatprep.mubr.bf16.mxu0 0
        %1381 = vmatmul.mubr.bf16.gmra.mrb[0].mxu0 %v1153
        %v1382 = vpop.f32.mrb[0].mxu0
        %v1383 = vadd.f32 %v829, %v1382
        %v1384 = vpop.f32.mrb[0].mxu0
        %v1385 = vpop.f32.mrb[0].mxu0
        %v1386 = vadd.f32 %v829, %v1385
        %v1387 = vpop.f32.mrb[0].mxu0
        %1388 = vmatprep.mubr.bf16.mxu0 0
        %1389 = vmatmul.mubr.bf16.gmra.mrb[0].mxu0 %v1156
        %v1390 = vpop.f32.mrb[0].mxu0
        %v1391 = vadd.f32 %v829, %v1390
        %v1392 = vpop.f32.mrb[0].mxu0
        %v1393 = vpop.f32.mrb[0].mxu0
        %v1394 = vadd.f32 %v829, %v1393
        %v1395 = vpop.f32.mrb[0].mxu0
        %1396 = vmatprep.mubr.bf16.mxu0 0
        %1397 = vmatmul.mubr.bf16.gmra.mrb[0].mxu0 %v1159
        %v1398 = vpop.f32.mrb[0].mxu0
        %v1399 = vadd.f32 %v829, %v1398
        %v1400 = vpop.f32.mrb[0].mxu0
        %v1401 = vpop.f32.mrb[0].mxu0
        %v1402 = vadd.f32 %v829, %v1401
        %v1403 = vpop.f32.mrb[0].mxu0
        %1404 = vmatprep.mubr.bf16.mxu0 0
        %1405 = vmatmul.mubr.bf16.gmra.mrb[0].mxu0 %v1162
        %v1406 = vpop.f32.mrb[0].mxu0
        %v1407 = vadd.f32 %v829, %v1406
        %v1408 = vpop.f32.mrb[0].mxu0
        %v1409 = vpop.f32.mrb[0].mxu0
        %v1410 = vadd.f32 %v829, %v1409
        %v1411 = vpop.f32.mrb[0].mxu0
        %1412 = vmatprep.mubr.bf16.mxu0 0
        %1413 = vmatmul.mubr.bf16.gmra.mrb[0].mxu0 %v1165
        %v1414 = vpop.f32.mrb[0].mxu0
        %v1415 = vadd.f32 %v829, %v1414
        %v1416 = vpop.f32.mrb[0].mxu0
        %v1417 = vpop.f32.mrb[0].mxu0
        %v1418 = vadd.f32 %v829, %v1417
        %v1419 = vpop.f32.mrb[0].mxu0
        %1420 = vmatprep.mubr.bf16.mxu0 0
        %1421 = vmatmul.mubr.bf16.gmra.mrb[0].mxu0 %v1168
        %v1422 = vpop.f32.mrb[0].mxu0
        %v1423 = vadd.f32 %v829, %v1422
        %v1424 = vpop.f32.mrb[0].mxu0
        %v1425 = vpop.f32.mrb[0].mxu0
        %v1426 = vadd.f32 %v829, %v1425
        %v1427 = vpop.f32.mrb[0].mxu0
        %1428 = vmatprep.mubr.bf16.mxu0 0
        %1429 = vmatmul.mubr.bf16.gmra.mrb[0].mxu0 %v1171
        %v1430 = vpop.f32.mrb[0].mxu0
        %v1431 = vadd.f32 %v829, %v1430
        %v1432 = vpop.f32.mrb[0].mxu0
        %v1433 = vpop.f32.mrb[0].mxu0
        %v1434 = vadd.f32 %v829, %v1433
        %v1435 = vpop.f32.mrb[0].mxu0
        %1436 = vmatprep.mubr.bf16.mxu0 0
        %1437 = vmatmul.mubr.bf16.gmra.mrb[0].mxu0 %v1174
        %v1438 = vpop.f32.mrb[0].mxu0
        %v1439 = vadd.f32 %v829, %v1438
        %v1440 = vpop.f32.mrb[0].mxu0
        %v1441 = vpop.f32.mrb[0].mxu0
        %v1442 = vadd.f32 %v829, %v1441
        %v1443 = vpop.f32.mrb[0].mxu0
        %1444 = vmatprep.mubr.bf16.mxu0 0
        %1445 = vmatmul.mubr.bf16.gmra.mrb[0].mxu0 %v1177
        %v1446 = vpop.f32.mrb[0].mxu0
        %v1447 = vadd.f32 %v829, %v1446
        %v1448 = vpop.f32.mrb[0].mxu0
        %v1449 = vpop.f32.mrb[0].mxu0
        %v1450 = vadd.f32 %v829, %v1449
        %v1451 = vpop.f32.mrb[0].mxu0
        %1452 = vmatprep.mubr.bf16.mxu0 0
        %1453 = vmatmul.mubr.bf16.gmra.mrb[0].mxu0 %v1180
        %v1454 = vpop.f32.mrb[0].mxu0
        %v1455 = vadd.f32 %v829, %v1454
        %v1456 = vpop.f32.mrb[0].mxu0
        %v1457 = vpop.f32.mrb[0].mxu0
        %v1458 = vadd.f32 %v829, %v1457
        %v1459 = vpop.f32.mrb[0].mxu0
        %1460 = vmatprep.mubr.bf16.mxu0 0
        %1461 = vmatmul.mubr.bf16.gmra.mrb[0].mxu0 %v1183
        %v1462 = vpop.f32.mrb[0].mxu0
        %v1463 = vadd.f32 %v829, %v1462
        %v1464 = vpop.f32.mrb[0].mxu0
        %v1465 = vpop.f32.mrb[0].mxu0
        %v1466 = vadd.f32 %v829, %v1465
        %v1467 = vpop.f32.mrb[0].mxu0
        %1468 = vmatprep.mubr.bf16.mxu0 0
        %1469 = vmatmul.mubr.bf16.gmra.mrb[0].mxu0 %v1186
        %v1470 = vpop.f32.mrb[0].mxu0
        %v1471 = vadd.f32 %v829, %v1470
        %v1472 = vpop.f32.mrb[0].mxu0
        %v1473 = vpop.f32.mrb[0].mxu0
        %v1474 = vadd.f32 %v829, %v1473
        %v1475 = vpop.f32.mrb[0].mxu0
        %1476 = vmatprep.mubr.bf16.mxu0 0
        %1477 = vmatmul.mubr.bf16.gmra.mrb[0].mxu0 %v1189
        %v1478 = vpop.f32.mrb[0].mxu0
        %v1479 = vadd.f32 %v829, %v1478
        %v1480 = vpop.f32.mrb[0].mxu0
        %v1481 = vpop.f32.mrb[0].mxu0
        %v1482 = vadd.f32 %v829, %v1481
        %v1483 = vpop.f32.mrb[0].mxu0
        %1484 = vmatprep.mubr.bf16.mxu0 0
        %1485 = vmatmul.mubr.bf16.gmra.mrb[0].mxu0 %v1192
        %v1486 = vpop.f32.mrb[0].mxu0
        %v1487 = vadd.f32 %v829, %v1486
        %v1488 = vpop.f32.mrb[0].mxu0
        %v1489 = vpop.f32.mrb[0].mxu0
        %v1490 = vadd.f32 %v829, %v1489
        %v1491 = vpop.f32.mrb[0].mxu0
        %1492 = vmatprep.mubr.bf16.mxu0 0
        %1493 = vmatmul.mubr.bf16.gmra.mrb[0].mxu0 %v1195
        %v1494 = vpop.f32.mrb[0].mxu0
        %v1495 = vadd.f32 %v829, %v1494
        %v1496 = vpop.f32.mrb[0].mxu0
        %v1497 = vpop.f32.mrb[0].mxu0
        %v1498 = vadd.f32 %v829, %v1497
        %v1499 = vpop.f32.mrb[0].mxu0
        %1500 = vmatprep.mubr.bf16.mxu0 0
        %1501 = vmatmul.mubr.bf16.gmra.mrb[0].mxu0 %v1198
        %v1502 = vpop.f32.mrb[0].mxu0
        %v1503 = vadd.f32 %v829, %v1502
        %v1504 = vpop.f32.mrb[0].mxu0
        %v1505 = vpop.f32.mrb[0].mxu0
        %v1506 = vadd.f32 %v829, %v1505
        %v1507 = vpop.f32.mrb[0].mxu0
        %1508 = vmatprep.mubr.bf16.mxu0 0
        %1509 = vmatmul.mubr.bf16.gmra.mrb[0].mxu0 %v1201
        %v1510 = vpop.f32.mrb[0].mxu0
        %v1511 = vadd.f32 %v829, %v1510
        %v1512 = vpop.f32.mrb[0].mxu0
        %v1513 = vpop.f32.mrb[0].mxu0
        %v1514 = vadd.f32 %v829, %v1513
        %v1515 = vpop.f32.mrb[0].mxu0
        %1516 = vmatprep.mubr.bf16.mxu0 0
        %1517 = vmatmul.mubr.bf16.gmra.mrb[0].mxu0 %v1204
        %v1518 = vpop.f32.mrb[0].mxu0
        %v1519 = vadd.f32 %v829, %v1518
        %v1520 = vpop.f32.mrb[0].mxu0
        %v1521 = vpop.f32.mrb[0].mxu0
        %v1522 = vadd.f32 %v829, %v1521
        %v1523 = vpop.f32.mrb[0].mxu0
        %1524 = vmatprep.mubr.bf16.mxu0 0
        %1525 = vmatmul.mubr.bf16.gmra.mrb[0].mxu0 %v1207
        %v1526 = vpop.f32.mrb[0].mxu0
        %v1527 = vadd.f32 %v829, %v1526
        %v1528 = vpop.f32.mrb[0].mxu0
        %v1529 = vpop.f32.mrb[0].mxu0
        %v1530 = vadd.f32 %v829, %v1529
        %v1531 = vpop.f32.mrb[0].mxu0
        %1532 = vmatprep.mubr.bf16.mxu0 0
        %1533 = vmatmul.mubr.bf16.gmra.mrb[0].mxu0 %v1210
        %v1534 = vpop.f32.mrb[0].mxu0
        %v1535 = vadd.f32 %v829, %v1534
        %v1536 = vpop.f32.mrb[0].mxu0
        %v1537 = vpop.f32.mrb[0].mxu0
        %v1538 = vadd.f32 %v829, %v1537
        %v1539 = vpop.f32.mrb[0].mxu0
        %1540 = vmatprep.mubr.bf16.mxu0 0
        %1541 = vmatmul.mubr.bf16.gmra.mrb[0].mxu0 %v1213
        %v1542 = vpop.f32.mrb[0].mxu0
        %v1543 = vadd.f32 %v829, %v1542
        %v1544 = vpop.f32.mrb[0].mxu0
        %v1545 = vpop.f32.mrb[0].mxu0
        %v1546 = vadd.f32 %v829, %v1545
        %v1547 = vpop.f32.mrb[0].mxu0
        %1548 = vmatprep.mubr.bf16.mxu0 0
        %1549 = vmatmul.mubr.bf16.gmra.mrb[0].mxu0 %v1216
        %v1550 = vpop.f32.mrb[0].mxu0
        %v1551 = vadd.f32 %v829, %v1550
        %v1552 = vpop.f32.mrb[0].mxu0
        %v1553 = vpop.f32.mrb[0].mxu0
        %v1554 = vadd.f32 %v829, %v1553
        %v1555 = vpop.f32.mrb[0].mxu0
        %1556 = vmatprep.mubr.bf16.mxu0 0
        %1557 = vmatmul.mubr.bf16.gmra.mrb[0].mxu0 %v1219
        %v1558 = vpop.f32.mrb[0].mxu0
        %v1559 = vadd.f32 %v829, %v1558
        %v1560 = vpop.f32.mrb[0].mxu0
        %v1561 = vpop.f32.mrb[0].mxu0
        %v1562 = vadd.f32 %v829, %v1561
        %v1563 = vpop.f32.mrb[0].mxu0
        %1564 = vmatprep.mubr.bf16.mxu0 0
        %1565 = vmatmul.mubr.bf16.gmra.mrb[0].mxu0 %v1222
        %v1566 = vpop.f32.mrb[0].mxu0
        %v1567 = vadd.f32 %v829, %v1566
        %v1568 = vpop.f32.mrb[0].mxu0
        %v1569 = vpop.f32.mrb[0].mxu0
        %v1570 = vadd.f32 %v829, %v1569
        %v1571 = vpop.f32.mrb[0].mxu0
        %1572 = vmatprep.mubr.bf16.mxu0 0
        %1573 = vmatmul.mubr.bf16.gmra.mrb[0].mxu0 %v1225
        %v1574 = vpop.f32.mrb[0].mxu0
        %v1575 = vadd.f32 %v829, %v1574
        %v1576 = vpop.f32.mrb[0].mxu0
        %v1577 = vpop.f32.mrb[0].mxu0
        %v1578 = vadd.f32 %v829, %v1577
        %v1579 = vpop.f32.mrb[0].mxu0
        %1580 = vmatprep.mubr.bf16.mxu0 0
        %1581 = vmatmul.mubr.bf16.gmra.mrb[0].mxu0 %v1228
        %v1582 = vpop.f32.mrb[0].mxu0
        %v1583 = vadd.f32 %v829, %v1582
        %v1584 = vpop.f32.mrb[0].mxu0
        %v1585 = vpop.f32.mrb[0].mxu0
        %v1586 = vadd.f32 %v829, %v1585
        %v1587 = vpop.f32.mrb[0].mxu0
        %1588 = vmatprep.mubr.bf16.mxu0 0
        %1589 = vmatmul.mubr.bf16.gmra.mrb[0].mxu0 %v1231
        %v1590 = vpop.f32.mrb[0].mxu0
        %v1591 = vadd.f32 %v829, %v1590
        %v1592 = vpop.f32.mrb[0].mxu0
        %v1593 = vpop.f32.mrb[0].mxu0
        %v1594 = vadd.f32 %v829, %v1593
        %v1595 = vpop.f32.mrb[0].mxu0
        %1596 = vmatprep.mubr.bf16.mxu0 0
        %1597 = vmatmul.mubr.bf16.gmra.mrb[0].mxu0 %v1234
        %v1598 = vpop.f32.mrb[0].mxu0
        %v1599 = vadd.f32 %v829, %v1598
        %v1600 = vpop.f32.mrb[0].mxu0
        %v1601 = vpop.f32.mrb[0].mxu0
        %v1602 = vadd.f32 %v829, %v1601
        %v1603 = vpop.f32.mrb[0].mxu0
        %1604 = vmatprep.mubr.bf16.mxu0 0
        %1605 = vmatmul.mubr.bf16.gmra.mrb[0].mxu0 %v1237
        %v1606 = vpop.f32.mrb[0].mxu0
        %v1607 = vadd.f32 %v829, %v1606
        %v1608 = vpop.f32.mrb[0].mxu0
        %v1609 = vpop.f32.mrb[0].mxu0
        %v1610 = vadd.f32 %v829, %v1609
        %v1611 = vpop.f32.mrb[0].mxu0
        %1612 = vmatprep.mubr.bf16.mxu0 0
        %1613 = vmatmul.mubr.bf16.gmra.mrb[0].mxu0 %v1240
        %v1614 = vpop.f32.mrb[0].mxu0
        %v1615 = vadd.f32 %v829, %v1614
        %v1616 = vpop.f32.mrb[0].mxu0
        %v1617 = vpop.f32.mrb[0].mxu0
        %v1618 = vadd.f32 %v829, %v1617
        %v1619 = vpop.f32.mrb[0].mxu0
        %1620 = vmatprep.mubr.bf16.mxu0 0
        %1621 = vmatmul.mubr.bf16.gmra.mrb[0].mxu0 %v1243
        %v1622 = vpop.f32.mrb[0].mxu0
        %v1623 = vadd.f32 %v829, %v1622
        %v1624 = vpop.f32.mrb[0].mxu0
        %v1625 = vpop.f32.mrb[0].mxu0
        %v1626 = vadd.f32 %v829, %v1625
        %v1627 = vpop.f32.mrb[0].mxu0
        %1628 = vmatprep.mubr.bf16.mxu0 0
        %1629 = vmatmul.mubr.bf16.gmra.mrb[0].mxu0 %v1246
        %v1630 = vpop.f32.mrb[0].mxu0
        %v1631 = vadd.f32 %v829, %v1630
        %v1632 = vpop.f32.mrb[0].mxu0
        %v1633 = vpop.f32.mrb[0].mxu0
        %v1634 = vadd.f32 %v829, %v1633
        %v1635 = vpop.f32.mrb[0].mxu0
        %1636 = vmatprep.mubr.bf16.mxu0 0
        %1637 = vmatmul.mubr.bf16.gmra.mrb[0].mxu0 %v1249
        %v1638 = vpop.f32.mrb[0].mxu0
        %v1639 = vadd.f32 %v829, %v1638
        %v1640 = vpop.f32.mrb[0].mxu0
        %v1641 = vpop.f32.mrb[0].mxu0
        %v1642 = vadd.f32 %v829, %v1641
        %v1643 = vpop.f32.mrb[0].mxu0
        %1644 = vmatprep.mubr.bf16.mxu0 0
        %1645 = vmatmul.mubr.bf16.gmra.mrb[0].mxu0 %v1252
        %v1646 = vpop.f32.mrb[0].mxu0
        %v1647 = vadd.f32 %v829, %v1646
        %v1648 = vpop.f32.mrb[0].mxu0
        %v1649 = vpop.f32.mrb[0].mxu0
        %v1650 = vadd.f32 %v829, %v1649
        %v1651 = vpop.f32.mrb[0].mxu0
        %1652 = vmatprep.mubr.bf16.mxu0 0
        %1653 = vmatmul.mubr.bf16.gmra.mrb[0].mxu0 %v1255
        %v1654 = vpop.f32.mrb[0].mxu0
        %v1655 = vadd.f32 %v829, %v1654
        %v1656 = vpop.f32.mrb[0].mxu0
        %v1657 = vpop.f32.mrb[0].mxu0
        %v1658 = vadd.f32 %v829, %v1657
        %v1659 = vpop.f32.mrb[0].mxu0
        %1660 = vmatprep.mubr.bf16.mxu0 0
        %1661 = vmatmul.mubr.bf16.gmra.mrb[0].mxu0 %v1258
        %v1662 = vpop.f32.mrb[0].mxu0
        %v1663 = vadd.f32 %v829, %v1662
        %v1664 = vpop.f32.mrb[0].mxu0
        %v1665 = vpop.f32.mrb[0].mxu0
        %v1666 = vadd.f32 %v829, %v1665
        %v1667 = vpop.f32.mrb[0].mxu0
        %1668 = vmatprep.mubr.bf16.mxu0 0
        %1669 = vmatmul.mubr.bf16.gmra.mrb[0].mxu0 %v1261
        %v1670 = vpop.f32.mrb[0].mxu0
        %v1671 = vadd.f32 %v829, %v1670
        %v1672 = vpop.f32.mrb[0].mxu0
        %v1673 = vpop.f32.mrb[0].mxu0
        %v1674 = vadd.f32 %v829, %v1673
        %v1675 = vpop.f32.mrb[0].mxu0
        %1676 = vmatprep.mubr.bf16.mxu0 0
        %1677 = vmatmul.mubr.bf16.gmra.mrb[0].mxu0 %v1264
        %v1678 = vpop.f32.mrb[0].mxu0
        %v1679 = vadd.f32 %v829, %v1678
        %v1680 = vpop.f32.mrb[0].mxu0
        %v1681 = vpop.f32.mrb[0].mxu0
        %v1682 = vadd.f32 %v829, %v1681
        %v1683 = vpop.f32.mrb[0].mxu0
        %1684 = vmatprep.mubr.bf16.mxu0 0
        %1685 = vmatmul.mubr.bf16.gmra.mrb[0].mxu0 %v1267
        %v1686 = vpop.f32.mrb[0].mxu0
        %v1687 = vadd.f32 %v829, %v1686
        %v1688 = vpop.f32.mrb[0].mxu0
        %v1689 = vpop.f32.mrb[0].mxu0
        %v1690 = vadd.f32 %v829, %v1689
        %v1691 = vpop.f32.mrb[0].mxu0
        %1692 = vmatprep.mubr.bf16.mxu0 0
        %1693 = vmatmul.mubr.bf16.gmra.mrb[0].mxu0 %v1270
        %v1694 = vpop.f32.mrb[0].mxu0
        %v1695 = vadd.f32 %v829, %v1694
        %v1696 = vpop.f32.mrb[0].mxu0
        %v1697 = vpop.f32.mrb[0].mxu0
        %v1698 = vadd.f32 %v829, %v1697
        %v1699 = vpop.f32.mrb[0].mxu0
        %1700 = vmatprep.mubr.bf16.mxu0 0
        %1701 = vmatmul.mubr.bf16.gmra.mrb[0].mxu0 %v1273
        %v1702 = vpop.f32.mrb[0].mxu0
        %v1703 = vadd.f32 %v829, %v1702
        %v1704 = vpop.f32.mrb[0].mxu0
        %v1705 = vpop.f32.mrb[0].mxu0
        %v1706 = vadd.f32 %v829, %v1705
        %v1707 = vpop.f32.mrb[0].mxu0
        %1708 = vmatprep.mubr.bf16.mxu0 0
        %1709 = vmatmul.mubr.bf16.gmra.mrb[0].mxu0 %v1276
        %v1710 = vpop.f32.mrb[0].mxu0
        %v1711 = vadd.f32 %v829, %v1710
        %v1712 = vpop.f32.mrb[0].mxu0
        %v1713 = vpop.f32.mrb[0].mxu0
        %v1714 = vadd.f32 %v829, %v1713
        %v1715 = vpop.f32.mrb[0].mxu0
        %1716 = vmatprep.mubr.bf16.mxu0 0
        %1717 = vmatmul.mubr.bf16.gmra.mrb[0].mxu0 %v1279
        %v1718 = vpop.f32.mrb[0].mxu0
        %v1719 = vadd.f32 %v829, %v1718
        %v1720 = vpop.f32.mrb[0].mxu0
        %v1721 = vpop.f32.mrb[0].mxu0
        %v1722 = vadd.f32 %v829, %v1721
        %v1723 = vpop.f32.mrb[0].mxu0
        %1724 = vmatprep.mubr.bf16.mxu0 0
        %1725 = vmatmul.mubr.bf16.gmra.mrb[0].mxu0 %v1282
        %v1726 = vpop.f32.mrb[0].mxu0
        %v1727 = vadd.f32 %v829, %v1726
        %v1728 = vpop.f32.mrb[0].mxu0
        %v1729 = vpop.f32.mrb[0].mxu0
        %v1730 = vadd.f32 %v829, %v1729
        %v1731 = vpop.f32.mrb[0].mxu0
        %1732 = vmatprep.mubr.bf16.mxu0 0
        %1733 = vmatmul.mubr.bf16.gmra.mrb[0].mxu0 %v1285
        %v1734 = vpop.f32.mrb[0].mxu0
        %v1735 = vadd.f32 %v829, %v1734
        %v1736 = vpop.f32.mrb[0].mxu0
        %v1737 = vpop.f32.mrb[0].mxu0
        %v1738 = vadd.f32 %v829, %v1737
        %v1739 = vpop.f32.mrb[0].mxu0
        %1740 = vmatprep.mubr.bf16.mxu0 0
        %1741 = vmatmul.mubr.bf16.gmra.mrb[0].mxu0 %v1288
        %v1742 = vpop.f32.mrb[0].mxu0
        %v1743 = vadd.f32 %v829, %v1742
        %v1744 = vpop.f32.mrb[0].mxu0
        %v1745 = vpop.f32.mrb[0].mxu0
        %v1746 = vadd.f32 %v829, %v1745
        %v1747 = vpop.f32.mrb[0].mxu0
        %1748 = vmatprep.mubr.bf16.mxu0 0
        %1749 = vmatmul.mubr.bf16.gmra.mrb[0].mxu0 %v1291
        %v1750 = vpop.f32.mrb[0].mxu0
        %v1751 = vadd.f32 %v829, %v1750
        %v1752 = vpop.f32.mrb[0].mxu0
        %v1753 = vpop.f32.mrb[0].mxu0
        %v1754 = vadd.f32 %v829, %v1753
        %v1755 = vpop.f32.mrb[0].mxu0
        %1756 = vmatprep.mubr.bf16.mxu0 0
        %1757 = vmatmul.mubr.bf16.gmra.mrb[0].mxu0 %v1294
        %v1758 = vpop.f32.mrb[0].mxu0
        %v1759 = vadd.f32 %v829, %v1758
        %v1760 = vpop.f32.mrb[0].mxu0
        %v1761 = vpop.f32.mrb[0].mxu0
        %v1762 = vadd.f32 %v829, %v1761
        %v1763 = vpop.f32.mrb[0].mxu0
        %1764 = vmatprep.mubr.bf16.mxu0 0
        %1765 = vmatmul.mubr.bf16.gmra.mrb[0].mxu0 %v1297
        %v1766 = vpop.f32.mrb[0].mxu0
        %v1767 = vadd.f32 %v829, %v1766
        %v1768 = vpop.f32.mrb[0].mxu0
        %v1769 = vpop.f32.mrb[0].mxu0
        %v1770 = vadd.f32 %v829, %v1769
        %v1771 = vpop.f32.mrb[0].mxu0
        %1772 = vmatprep.mubr.bf16.mxu0 0
        %1773 = vmatmul.mubr.bf16.gmra.mrb[0].mxu0 %v1300
        %v1774 = vpop.f32.mrb[0].mxu0
        %v1775 = vadd.f32 %v829, %v1774
        %v1776 = vpop.f32.mrb[0].mxu0
        %v1777 = vpop.f32.mrb[0].mxu0
        %v1778 = vadd.f32 %v829, %v1777
        %v1779 = vpop.f32.mrb[0].mxu0
        %1780 = vmatprep.mubr.bf16.mxu0 0
        %1781 = vmatmul.mubr.bf16.gmra.mrb[0].mxu0 %v1303
        %v1782 = vpop.f32.mrb[0].mxu0
        %v1783 = vadd.f32 %v829, %v1782
        %v1784 = vpop.f32.mrb[0].mxu0
        %v1785 = vpop.f32.mrb[0].mxu0
        %v1786 = vadd.f32 %v829, %v1785
        %v1787 = vpop.f32.mrb[0].mxu0
        %1788 = vmatprep.mubr.bf16.mxu0 0
        %1789 = vmatmul.mubr.bf16.gmra.mrb[0].mxu0 %v1306
        %v1790 = vpop.f32.mrb[0].mxu0
        %v1791 = vadd.f32 %v829, %v1790
        %v1792 = vpop.f32.mrb[0].mxu0
        %v1793 = vpop.f32.mrb[0].mxu0
        %v1794 = vadd.f32 %v829, %v1793
        %v1795 = vpop.f32.mrb[0].mxu0
        %1796 = vmatprep.mubr.bf16.mxu0 0
        %1797 = vmatmul.mubr.bf16.gmra.mrb[0].mxu0 %v1309
        %v1798 = vpop.f32.mrb[0].mxu0
        %v1799 = vadd.f32 %v829, %v1798
        %v1800 = vpop.f32.mrb[0].mxu0
        %v1801 = vpop.f32.mrb[0].mxu0
        %v1802 = vadd.f32 %v829, %v1801
        %v1803 = vpop.f32.mrb[0].mxu0
        %1804 = vmatprep.mubr.bf16.mxu0 0
        %1805 = vmatmul.mubr.bf16.gmra.mrb[0].mxu0 %v1312
        %v1806 = vpop.f32.mrb[0].mxu0
        %v1807 = vadd.f32 %v829, %v1806
        %v1808 = vpop.f32.mrb[0].mxu0
        %v1809 = vpop.f32.mrb[0].mxu0
        %v1810 = vadd.f32 %v829, %v1809
        %v1811 = vpop.f32.mrb[0].mxu0
        %1812 = vmatprep.mubr.bf16.mxu0 0
        %1813 = vmatmul.mubr.bf16.gmra.mrb[0].mxu0 %v1315
        %v1814 = vpop.f32.mrb[0].mxu0
        %v1815 = vadd.f32 %v829, %v1814
        %v1816 = vpop.f32.mrb[0].mxu0
        %v1817 = vpop.f32.mrb[0].mxu0
        %v1818 = vadd.f32 %v829, %v1817
        %v1819 = vpop.f32.mrb[0].mxu0
        %1820 = vmatprep.mubr.bf16.mxu0 0
        %1821 = vmatmul.mubr.bf16.gmra.mrb[0].mxu0 %v1318
        %v1822 = vpop.f32.mrb[0].mxu0
        %v1823 = vadd.f32 %v829, %v1822
        %v1824 = vpop.f32.mrb[0].mxu0
        %v1825 = vpop.f32.mrb[0].mxu0
        %v1826 = vadd.f32 %v829, %v1825
        %v1827 = vpop.f32.mrb[0].mxu0
        %1828 = vmatprep.mubr.bf16.mxu0 0
        %1829 = vmatmul.mubr.bf16.gmra.mrb[0].mxu0 %v1321
        %v1830 = vpop.f32.mrb[0].mxu0
        %v1831 = vadd.f32 %v829, %v1830
        %v1832 = vpop.f32.mrb[0].mxu0
        %v1833 = vpop.f32.mrb[0].mxu0
        %v1834 = vadd.f32 %v829, %v1833
        %v1835 = vpop.f32.mrb[0].mxu0
        %1836 = vmatprep.mubr.bf16.mxu0 0
        %1837 = vmatmul.mubr.bf16.gmra.mrb[0].mxu0 %v1324
        %v1838 = vpop.f32.mrb[0].mxu0
        %v1839 = vadd.f32 %v829, %v1838
        %v1840 = vpop.f32.mrb[0].mxu0
        %v1841 = vpop.f32.mrb[0].mxu0
        %v1842 = vadd.f32 %v829, %v1841
        %v1843 = vpop.f32.mrb[0].mxu0
        %1844 = vmatprep.mubr.bf16.mxu0 0
        %1845 = vmatmul.mubr.bf16.gmra.mrb[0].mxu0 %v1327
        %v1846 = vpop.f32.mrb[0].mxu0
        %v1847 = vadd.f32 %v829, %v1846
        %v1848 = vpop.f32.mrb[0].mxu0
        %v1849 = vpop.f32.mrb[0].mxu0
        %v1850 = vadd.f32 %v829, %v1849
        %v1851 = vpop.f32.mrb[0].mxu0
        %1852 = vmatprep.mubr.bf16.mxu0 0
        %1853 = vmatmul.mubr.bf16.gmra.mrb[0].mxu0 %v1330
        %v1854 = vpop.f32.mrb[0].mxu0
        %v1855 = vadd.f32 %v829, %v1854
        %v1856 = vpop.f32.mrb[0].mxu0
        %v1857 = vpop.f32.mrb[0].mxu0
        %v1858 = vadd.f32 %v829, %v1857
        %v1859 = vpop.f32.mrb[0].mxu0
        %1860 = vmatprep.mubr.bf16.mxu0 0
        %1861 = vmatmul.mubr.bf16.gmra.mrb[0].mxu0 %v1333
        %v1862 = vpop.f32.mrb[0].mxu0
        %v1863 = vadd.f32 %v829, %v1862
        %v1864 = vpop.f32.mrb[0].mxu0
        %v1865 = vpop.f32.mrb[0].mxu0
        %v1866 = vadd.f32 %v829, %v1865
        %v1867 = vpop.f32.mrb[0].mxu0
        %1868 = vmatprep.mubr.bf16.mxu0 0
        %1869 = vmatmul.mubr.bf16.gmra.mrb[0].mxu0 %v1336
        %v1870 = vpop.f32.mrb[0].mxu0
        %v1871 = vadd.f32 %v829, %v1870
        %v1872 = vpop.f32.mrb[0].mxu0
        %v1873 = vpop.f32.mrb[0].mxu0
        %v1874 = vadd.f32 %v829, %v1873
        %v1875 = vpop.f32.mrb[0].mxu0
        %1876 = vmatprep.mubr.bf16.mxu0 0
        %1877 = vmatmul.mubr.bf16.gmra.mrb[0].mxu0 %v1339
        %v1878 = vpop.f32.mrb[0].mxu0
        %v1879 = vadd.f32 %v829, %v1878
        %v1880 = vpop.f32.mrb[0].mxu0
        %v1881 = vpop.f32.mrb[0].mxu0
        %v1882 = vadd.f32 %v829, %v1881
        %v1883 = vpop.f32.mrb[0].mxu0
        %1884 = vmatprep.mubr.bf16.mxu0 0
        %1885 = vmatmul.mubr.bf16.gmra.mrb[0].mxu0 %v1342
        %v1886 = vpop.f32.mrb[0].mxu0
        %v1887 = vadd.f32 %v829, %v1886
        %v1888 = vpop.f32.mrb[0].mxu0
        %v1889 = vpop.f32.mrb[0].mxu0
        %v1890 = vadd.f32 %v829, %v1889
        %v1891 = vpop.f32.mrb[0].mxu0
        %1892 = vdwg.mxu0
        %v1893 = vmax.f32 %v1383, 0.0
        %v1894 = vmax.f32 %v1386, 0.0
        %v1895 = vmax.f32 %v1391, 0.0
        %v1896 = vmax.f32 %v1394, 0.0
        %v1897 = vmax.f32 %v1399, 0.0
        %v1898 = vmax.f32 %v1402, 0.0
        %v1899 = vmax.f32 %v1407, 0.0
        %v1900 = vmax.f32 %v1410, 0.0
        %v1901 = vmax.f32 %v1415, 0.0
        %v1902 = vmax.f32 %v1418, 0.0
        %v1903 = vmax.f32 %v1423, 0.0
        %v1904 = vmax.f32 %v1426, 0.0
        %v1905 = vmax.f32 %v1431, 0.0
        %v1906 = vmax.f32 %v1434, 0.0
        %v1907 = vmax.f32 %v1439, 0.0
        %v1908 = vmax.f32 %v1442, 0.0
        %v1909 = vmax.f32 %v1447, 0.0
        %v1910 = vmax.f32 %v1450, 0.0
        %v1911 = vmax.f32 %v1455, 0.0
        %v1912 = vmax.f32 %v1458, 0.0
        %v1913 = vmax.f32 %v1463, 0.0
        %v1914 = vmax.f32 %v1466, 0.0
        %v1915 = vmax.f32 %v1471, 0.0
        %v1916 = vmax.f32 %v1474, 0.0
        %v1917 = vmax.f32 %v1479, 0.0
        %v1918 = vmax.f32 %v1482, 0.0
        %v1919 = vmax.f32 %v1487, 0.0
        %v1920 = vmax.f32 %v1490, 0.0
        %v1921 = vmax.f32 %v1495, 0.0
        %v1922 = vmax.f32 %v1498, 0.0
        %v1923 = vmax.f32 %v1503, 0.0
        %v1924 = vmax.f32 %v1506, 0.0
        %v1925 = vmax.f32 %v1511, 0.0
        %v1926 = vmax.f32 %v1514, 0.0
        %v1927 = vmax.f32 %v1519, 0.0
        %v1928 = vmax.f32 %v1522, 0.0
        %v1929 = vmax.f32 %v1527, 0.0
        %v1930 = vmax.f32 %v1530, 0.0
        %v1931 = vmax.f32 %v1535, 0.0
        %v1932 = vmax.f32 %v1538, 0.0
        %v1933 = vmax.f32 %v1543, 0.0
        %v1934 = vmax.f32 %v1546, 0.0
        %v1935 = vmax.f32 %v1551, 0.0
        %v1936 = vmax.f32 %v1554, 0.0
        %v1937 = vmax.f32 %v1559, 0.0
        %v1938 = vmax.f32 %v1562, 0.0
        %v1939 = vmax.f32 %v1567, 0.0
        %v1940 = vmax.f32 %v1570, 0.0
        %v1941 = vmax.f32 %v1575, 0.0
        %v1942 = vmax.f32 %v1578, 0.0
        %v1943 = vmax.f32 %v1583, 0.0
        %v1944 = vmax.f32 %v1586, 0.0
        %v1945 = vmax.f32 %v1591, 0.0
        %v1946 = vmax.f32 %v1594, 0.0
        %v1947 = vmax.f32 %v1599, 0.0
        %v1948 = vmax.f32 %v1602, 0.0
        %v1949 = vmax.f32 %v1607, 0.0
        %v1950 = vmax.f32 %v1610, 0.0
        %v1951 = vmax.f32 %v1615, 0.0
        %v1952 = vmax.f32 %v1618, 0.0
        %v1953 = vmax.f32 %v1623, 0.0
        %v1954 = vmax.f32 %v1626, 0.0
        %v1955 = vmax.f32 %v1631, 0.0
        %v1956 = vmax.f32 %v1634, 0.0
        %v1957 = vmax.f32 %v1639, 0.0
        %v1958 = vmax.f32 %v1642, 0.0
        %v1959 = vmax.f32 %v1647, 0.0
        %v1960 = vmax.f32 %v1650, 0.0
        %v1961 = vmax.f32 %v1655, 0.0
        %v1962 = vmax.f32 %v1658, 0.0
        %v1963 = vmax.f32 %v1663, 0.0
        %v1964 = vmax.f32 %v1666, 0.0
        %v1965 = vmax.f32 %v1671, 0.0
        %v1966 = vmax.f32 %v1674, 0.0
        %v1967 = vmax.f32 %v1679, 0.0
        %v1968 = vmax.f32 %v1682, 0.0
        %v1969 = vmax.f32 %v1687, 0.0
        %v1970 = vmax.f32 %v1690, 0.0
        %v1971 = vmax.f32 %v1695, 0.0
        %v1972 = vmax.f32 %v1698, 0.0
        %v1973 = vmax.f32 %v1703, 0.0
        %v1974 = vmax.f32 %v1706, 0.0
        %v1975 = vmax.f32 %v1711, 0.0
        %v1976 = vmax.f32 %v1714, 0.0
        %v1977 = vmax.f32 %v1719, 0.0
        %v1978 = vmax.f32 %v1722, 0.0
        %v1979 = vmax.f32 %v1727, 0.0
        %v1980 = vmax.f32 %v1730, 0.0
        %v1981 = vmax.f32 %v1735, 0.0
        %v1982 = vmax.f32 %v1738, 0.0
        %v1983 = vmax.f32 %v1743, 0.0
        %v1984 = vmax.f32 %v1746, 0.0
        %v1985 = vmax.f32 %v1751, 0.0
        %v1986 = vmax.f32 %v1754, 0.0
        %v1987 = vmax.f32 %v1759, 0.0
        %v1988 = vmax.f32 %v1762, 0.0
        %v1989 = vmax.f32 %v1767, 0.0
        %v1990 = vmax.f32 %v1770, 0.0
        %v1991 = vmax.f32 %v1775, 0.0
        %v1992 = vmax.f32 %v1778, 0.0
        %v1993 = vmax.f32 %v1783, 0.0
        %v1994 = vmax.f32 %v1786, 0.0
        %v1995 = vmax.f32 %v1791, 0.0
        %v1996 = vmax.f32 %v1794, 0.0
        %v1997 = vmax.f32 %v1799, 0.0
        %v1998 = vmax.f32 %v1802, 0.0
        %v1999 = vmax.f32 %v1807, 0.0
        %v2000 = vmax.f32 %v1810, 0.0
        %v2001 = vmax.f32 %v1815, 0.0
        %v2002 = vmax.f32 %v1818, 0.0
        %v2003 = vmax.f32 %v1823, 0.0
        %v2004 = vmax.f32 %v1826, 0.0
        %v2005 = vmax.f32 %v1831, 0.0
        %v2006 = vmax.f32 %v1834, 0.0
        %v2007 = vmax.f32 %v1839, 0.0
        %v2008 = vmax.f32 %v1842, 0.0
        %v2009 = vmax.f32 %v1847, 0.0
        %v2010 = vmax.f32 %v1850, 0.0
        %v2011 = vmax.f32 %v1855, 0.0
        %v2012 = vmax.f32 %v1858, 0.0
        %v2013 = vmax.f32 %v1863, 0.0
        %v2014 = vmax.f32 %v1866, 0.0
        %v2015 = vmax.f32 %v1871, 0.0
        %v2016 = vmax.f32 %v1874, 0.0
        %v2017 = vmax.f32 %v1879, 0.0
        %v2018 = vmax.f32 %v1882, 0.0
        %v2019 = vmax.f32 %v1887, 0.0
        %v2020 = vmax.f32 %v1890, 0.0
        %v2021 = vpack.c.bf16 %v1894, %v1893
        %v2022 = vpack.c.bf16 %v1896, %v1895
        %v2023 = vpack.c.bf16 %v1898, %v1897
        %v2024 = vpack.c.bf16 %v1900, %v1899
        %v2025 = vpack.c.bf16 %v1902, %v1901
        %v2026 = vpack.c.bf16 %v1904, %v1903
        %v2027 = vpack.c.bf16 %v1906, %v1905
        %v2028 = vpack.c.bf16 %v1908, %v1907
        %v2029 = vpack.c.bf16 %v1910, %v1909
        %v2030 = vpack.c.bf16 %v1912, %v1911
        %v2031 = vpack.c.bf16 %v1914, %v1913
        %v2032 = vpack.c.bf16 %v1916, %v1915
        %v2033 = vpack.c.bf16 %v1918, %v1917
        %v2034 = vpack.c.bf16 %v1920, %v1919
        %v2035 = vpack.c.bf16 %v1922, %v1921
        %v2036 = vpack.c.bf16 %v1924, %v1923
        %v2037 = vpack.c.bf16 %v1926, %v1925
        %v2038 = vpack.c.bf16 %v1928, %v1927
        %v2039 = vpack.c.bf16 %v1930, %v1929
        %v2040 = vpack.c.bf16 %v1932, %v1931
        %v2041 = vpack.c.bf16 %v1934, %v1933
        %v2042 = vpack.c.bf16 %v1936, %v1935
        %v2043 = vpack.c.bf16 %v1938, %v1937
        %v2044 = vpack.c.bf16 %v1940, %v1939
        %v2045 = vpack.c.bf16 %v1942, %v1941
        %v2046 = vpack.c.bf16 %v1944, %v1943
        %v2047 = vpack.c.bf16 %v1946, %v1945
        %v2048 = vpack.c.bf16 %v1948, %v1947
        %v2049 = vpack.c.bf16 %v1950, %v1949
        %v2050 = vpack.c.bf16 %v1952, %v1951
        %v2051 = vpack.c.bf16 %v1954, %v1953
        %v2052 = vpack.c.bf16 %v1956, %v1955
        %v2053 = vpack.c.bf16 %v1958, %v1957
        %v2054 = vpack.c.bf16 %v1960, %v1959
        %v2055 = vpack.c.bf16 %v1962, %v1961
        %v2056 = vpack.c.bf16 %v1964, %v1963
        %v2057 = vpack.c.bf16 %v1966, %v1965
        %v2058 = vpack.c.bf16 %v1968, %v1967
        %v2059 = vpack.c.bf16 %v1970, %v1969
        %v2060 = vpack.c.bf16 %v1972, %v1971
        %v2061 = vpack.c.bf16 %v1974, %v1973
        %v2062 = vpack.c.bf16 %v1976, %v1975
        %v2063 = vpack.c.bf16 %v1978, %v1977
        %v2064 = vpack.c.bf16 %v1980, %v1979
        %v2065 = vpack.c.bf16 %v1982, %v1981
        %v2066 = vpack.c.bf16 %v1984, %v1983
        %v2067 = vpack.c.bf16 %v1986, %v1985
        %v2068 = vpack.c.bf16 %v1988, %v1987
        %v2069 = vpack.c.bf16 %v1990, %v1989
        %v2070 = vpack.c.bf16 %v1992, %v1991
        %v2071 = vpack.c.bf16 %v1994, %v1993
        %v2072 = vpack.c.bf16 %v1996, %v1995
        %v2073 = vpack.c.bf16 %v1998, %v1997
        %v2074 = vpack.c.bf16 %v2000, %v1999
        %v2075 = vpack.c.bf16 %v2002, %v2001
        %v2076 = vpack.c.bf16 %v2004, %v2003
        %v2077 = vpack.c.bf16 %v2006, %v2005
        %v2078 = vpack.c.bf16 %v2008, %v2007
        %v2079 = vpack.c.bf16 %v2010, %v2009
        %v2080 = vpack.c.bf16 %v2012, %v2011
        %v2081 = vpack.c.bf16 %v2014, %v2013
        %v2082 = vpack.c.bf16 %v2016, %v2015
        %v2083 = vpack.c.bf16 %v2018, %v2017
        %v2084 = vpack.c.bf16 %v2020, %v2019
        %v2085 = vld [vmem:[#allocation5] sm:$0xf]
        %v2086 = vld [vmem:[#allocation5 + $0x4] sm:$0xf]
        %v2087 = vld [vmem:[#allocation5 + $0x8] sm:$0xf]
        %v2088 = vld [vmem:[#allocation5 + $0xc] sm:$0xf]
        %v2089 = vld [vmem:[#allocation5 + $0x10] sm:$0xf]
        %v2090 = vld [vmem:[#allocation5 + $0x14] sm:$0xf]
        %v2091 = vld [vmem:[#allocation5 + $0x18] sm:$0xf]
        %v2092 = vld [vmem:[#allocation5 + $0x1c] sm:$0xf]
        %v2093 = vld [vmem:[#allocation7] sm:$0x1]
        %v2095 = vlaneseq
        %v2096 = vshrl.u32 %v2095, 7
        %v2097 = vsub.s32 0, %v2096
        %v2098 = vrot.slane %v2093, %v2097
        %v2108 = vunpack.c.l.b16 %v2085
        %v2109 = vunpack.c.l.b16 %v2086
        %v2110 = vunpack.c.l.b16 %v2087
        %v2111 = vunpack.c.l.b16 %v2088
        %v2112 = vunpack.c.l.b16 %v2089
        %v2113 = vunpack.c.l.b16 %v2090
        %v2114 = vunpack.c.l.b16 %v2091
        %v2115 = vunpack.c.l.b16 %v2092
        %v2116 = vpack.c.b16 %v2109, %v2108
        %v2117 = vpack.c.b16 %v2111, %v2110
        %v2118 = vpack.c.b16 %v2113, %v2112
        %v2119 = vpack.c.b16 %v2115, %v2114
        %vm2124 = vcmask 523264
        %v2126 = vsel %vm2124, %v2021, 0
        %v2129 = vsel %vm2124, %v2022, 0
        %v2132 = vsel %vm2124, %v2023, 0
        %v2135 = vsel %vm2124, %v2024, 0
        %v2138 = vsel %vm2124, %v2025, 0
        %v2141 = vsel %vm2124, %v2026, 0
        %v2144 = vsel %vm2124, %v2027, 0
        %v2147 = vsel %vm2124, %v2028, 0
        %v2150 = vsel %vm2124, %v2029, 0
        %v2153 = vsel %vm2124, %v2030, 0
        %v2156 = vsel %vm2124, %v2031, 0
        %v2159 = vsel %vm2124, %v2032, 0
        %v2162 = vsel %vm2124, %v2033, 0
        %v2165 = vsel %vm2124, %v2034, 0
        %v2168 = vsel %vm2124, %v2035, 0
        %v2171 = vsel %vm2124, %v2036, 0
        %v2174 = vsel %vm2124, %v2037, 0
        %v2177 = vsel %vm2124, %v2038, 0
        %v2180 = vsel %vm2124, %v2039, 0
        %v2183 = vsel %vm2124, %v2040, 0
        %v2186 = vsel %vm2124, %v2041, 0
        %v2189 = vsel %vm2124, %v2042, 0
        %v2192 = vsel %vm2124, %v2043, 0
        %v2195 = vsel %vm2124, %v2044, 0
        %v2198 = vsel %vm2124, %v2045, 0
        %v2201 = vsel %vm2124, %v2046, 0
        %v2204 = vsel %vm2124, %v2047, 0
        %v2207 = vsel %vm2124, %v2048, 0
        %v2210 = vsel %vm2124, %v2049, 0
        %v2213 = vsel %vm2124, %v2050, 0
        %v2216 = vsel %vm2124, %v2051, 0
        %v2219 = vsel %vm2124, %v2052, 0
        %v2222 = vsel %vm2124, %v2053, 0
        %v2225 = vsel %vm2124, %v2054, 0
        %v2228 = vsel %vm2124, %v2055, 0
        %v2231 = vsel %vm2124, %v2056, 0
        %v2234 = vsel %vm2124, %v2057, 0
        %v2237 = vsel %vm2124, %v2058, 0
        %v2240 = vsel %vm2124, %v2059, 0
        %v2243 = vsel %vm2124, %v2060, 0
        %v2246 = vsel %vm2124, %v2061, 0
        %v2249 = vsel %vm2124, %v2062, 0
        %v2252 = vsel %vm2124, %v2063, 0
        %v2255 = vsel %vm2124, %v2064, 0
        %v2258 = vsel %vm2124, %v2065, 0
        %v2261 = vsel %vm2124, %v2066, 0
        %v2264 = vsel %vm2124, %v2067, 0
        %v2267 = vsel %vm2124, %v2068, 0
        %v2270 = vsel %vm2124, %v2069, 0
        %v2273 = vsel %vm2124, %v2070, 0
        %v2276 = vsel %vm2124, %v2071, 0
        %v2279 = vsel %vm2124, %v2072, 0
        %v2282 = vsel %vm2124, %v2073, 0
        %v2285 = vsel %vm2124, %v2074, 0
        %v2288 = vsel %vm2124, %v2075, 0
        %v2291 = vsel %vm2124, %v2076, 0
        %v2294 = vsel %vm2124, %v2077, 0
        %v2297 = vsel %vm2124, %v2078, 0
        %v2300 = vsel %vm2124, %v2079, 0
        %v2303 = vsel %vm2124, %v2080, 0
        %v2306 = vsel %vm2124, %v2081, 0
        %v2309 = vsel %vm2124, %v2082, 0
        %v2312 = vsel %vm2124, %v2083, 0
        %v2315 = vsel %vm2124, %v2084, 0
        %2317 = vmatprep.subr.bf16.mxu0 0
        %2318 = vmatpush1.bf16.msra.mxu0 %v2116
        %2319 = vmatprep.subr.bf16.mxu0 0
        %2320 = vmatpush1.bf16.msra.mxu0 %v2117
        %2321 = vmatprep.subr.bf16.mxu0 0
        %2322 = vmatpush1.bf16.msra.mxu0 %v2118
        %2323 = vmatprep.subr.bf16.mxu0 0
        %2324 = vmatpush1.bf16.msra.mxu0 %v2119
        %2325 = vmatprep.subr.bf16.mxu0 0
        %2326 = vmatpush1.bf16.msra.mxu0 0
        %2327 = vmatprep.subr.bf16.mxu0 0
        %2328 = vmatpush1.bf16.msra.mxu0 0
        %2329 = vmatprep.subr.bf16.mxu0 0
        %2330 = vmatpush1.bf16.msra.mxu0 0
        %2331 = vmatprep.subr.bf16.mxu0 0
        %2332 = vmatpush1.bf16.msra.mxu0 0
        %2333 = vmatprep.subr.bf16.mxu0 0
        %2334 = vmatpush1.bf16.msra.mxu0 0
        %2335 = vmatprep.subr.bf16.mxu0 0
        %2336 = vmatpush1.bf16.msra.mxu0 0
        %2337 = vmatprep.subr.bf16.mxu0 0
        %2338 = vmatpush1.bf16.msra.mxu0 0
        %2339 = vmatprep.subr.bf16.mxu0 0
        %2340 = vmatpush1.bf16.msra.mxu0 0
        %2341 = vmatprep.subr.bf16.mxu0 0
        %2342 = vmatpush1.bf16.msra.mxu0 0
        %2343 = vmatprep.subr.bf16.mxu0 0
        %2344 = vmatpush1.bf16.msra.mxu0 0
        %2345 = vmatprep.subr.bf16.mxu0 0
        %2346 = vmatpush1.bf16.msra.mxu0 0
        %2347 = vmatprep.subr.bf16.mxu0 0
        %2348 = vmatpush1.bf16.msra.mxu0 0
        %2349 = vmatprep.mubr.bf16.mxu0 0
        %2350 = vmatmul.mubr.bf16.gmra.mrb[0].mxu0 %v2126
        %v2351 = vpop.f32.mrb[0].mxu0
        %v2352 = vadd.f32 %v2098, %v2351
        %v2353 = vpop.f32.mrb[0].mxu0
        %v2354 = vpop.f32.mrb[0].mxu0
        %v2355 = vadd.f32 %v2098, %v2354
        %v2356 = vpop.f32.mrb[0].mxu0
        %2357 = vmatprep.mubr.bf16.mxu0 0
        %2358 = vmatmul.mubr.bf16.gmra.mrb[0].mxu0 %v2129
        %v2359 = vpop.f32.mrb[0].mxu0
        %v2360 = vadd.f32 %v2098, %v2359
        %v2361 = vpop.f32.mrb[0].mxu0
        %v2362 = vpop.f32.mrb[0].mxu0
        %v2363 = vadd.f32 %v2098, %v2362
        %v2364 = vpop.f32.mrb[0].mxu0
        %2365 = vmatprep.mubr.bf16.mxu0 0
        %2366 = vmatmul.mubr.bf16.gmra.mrb[0].mxu0 %v2132
        %v2367 = vpop.f32.mrb[0].mxu0
        %v2368 = vadd.f32 %v2098, %v2367
        %v2369 = vpop.f32.mrb[0].mxu0
        %v2370 = vpop.f32.mrb[0].mxu0
        %v2371 = vadd.f32 %v2098, %v2370
        %v2372 = vpop.f32.mrb[0].mxu0
        %2373 = vmatprep.mubr.bf16.mxu0 0
        %2374 = vmatmul.mubr.bf16.gmra.mrb[0].mxu0 %v2135
        %v2375 = vpop.f32.mrb[0].mxu0
        %v2376 = vadd.f32 %v2098, %v2375
        %v2377 = vpop.f32.mrb[0].mxu0
        %v2378 = vpop.f32.mrb[0].mxu0
        %v2379 = vadd.f32 %v2098, %v2378
        %v2380 = vpop.f32.mrb[0].mxu0
        %2381 = vmatprep.mubr.bf16.mxu0 0
        %2382 = vmatmul.mubr.bf16.gmra.mrb[0].mxu0 %v2138
        %v2383 = vpop.f32.mrb[0].mxu0
        %v2384 = vadd.f32 %v2098, %v2383
        %v2385 = vpop.f32.mrb[0].mxu0
        %v2386 = vpop.f32.mrb[0].mxu0
        %v2387 = vadd.f32 %v2098, %v2386
        %v2388 = vpop.f32.mrb[0].mxu0
        %2389 = vmatprep.mubr.bf16.mxu0 0
        %2390 = vmatmul.mubr.bf16.gmra.mrb[0].mxu0 %v2141
        %v2391 = vpop.f32.mrb[0].mxu0
        %v2392 = vadd.f32 %v2098, %v2391
        %v2393 = vpop.f32.mrb[0].mxu0
        %v2394 = vpop.f32.mrb[0].mxu0
        %v2395 = vadd.f32 %v2098, %v2394
        %v2396 = vpop.f32.mrb[0].mxu0
        %2397 = vmatprep.mubr.bf16.mxu0 0
        %2398 = vmatmul.mubr.bf16.gmra.mrb[0].mxu0 %v2144
        %v2399 = vpop.f32.mrb[0].mxu0
        %v2400 = vadd.f32 %v2098, %v2399
        %v2401 = vpop.f32.mrb[0].mxu0
        %v2402 = vpop.f32.mrb[0].mxu0
        %v2403 = vadd.f32 %v2098, %v2402
        %v2404 = vpop.f32.mrb[0].mxu0
        %2405 = vmatprep.mubr.bf16.mxu0 0
        %2406 = vmatmul.mubr.bf16.gmra.mrb[0].mxu0 %v2147
        %v2407 = vpop.f32.mrb[0].mxu0
        %v2408 = vadd.f32 %v2098, %v2407
        %v2409 = vpop.f32.mrb[0].mxu0
        %v2410 = vpop.f32.mrb[0].mxu0
        %v2411 = vadd.f32 %v2098, %v2410
        %v2412 = vpop.f32.mrb[0].mxu0
        %2413 = vmatprep.mubr.bf16.mxu0 0
        %2414 = vmatmul.mubr.bf16.gmra.mrb[0].mxu0 %v2150
        %v2415 = vpop.f32.mrb[0].mxu0
        %v2416 = vadd.f32 %v2098, %v2415
        %v2417 = vpop.f32.mrb[0].mxu0
        %v2418 = vpop.f32.mrb[0].mxu0
        %v2419 = vadd.f32 %v2098, %v2418
        %v2420 = vpop.f32.mrb[0].mxu0
        %2421 = vmatprep.mubr.bf16.mxu0 0
        %2422 = vmatmul.mubr.bf16.gmra.mrb[0].mxu0 %v2153
        %v2423 = vpop.f32.mrb[0].mxu0
        %v2424 = vadd.f32 %v2098, %v2423
        %v2425 = vpop.f32.mrb[0].mxu0
        %v2426 = vpop.f32.mrb[0].mxu0
        %v2427 = vadd.f32 %v2098, %v2426
        %v2428 = vpop.f32.mrb[0].mxu0
        %2429 = vmatprep.mubr.bf16.mxu0 0
        %2430 = vmatmul.mubr.bf16.gmra.mrb[0].mxu0 %v2156
        %v2431 = vpop.f32.mrb[0].mxu0
        %v2432 = vadd.f32 %v2098, %v2431
        %v2433 = vpop.f32.mrb[0].mxu0
        %v2434 = vpop.f32.mrb[0].mxu0
        %v2435 = vadd.f32 %v2098, %v2434
        %v2436 = vpop.f32.mrb[0].mxu0
        %2437 = vmatprep.mubr.bf16.mxu0 0
        %2438 = vmatmul.mubr.bf16.gmra.mrb[0].mxu0 %v2159
        %v2439 = vpop.f32.mrb[0].mxu0
        %v2440 = vadd.f32 %v2098, %v2439
        %v2441 = vpop.f32.mrb[0].mxu0
        %v2442 = vpop.f32.mrb[0].mxu0
        %v2443 = vadd.f32 %v2098, %v2442
        %v2444 = vpop.f32.mrb[0].mxu0
        %2445 = vmatprep.mubr.bf16.mxu0 0
        %2446 = vmatmul.mubr.bf16.gmra.mrb[0].mxu0 %v2162
        %v2447 = vpop.f32.mrb[0].mxu0
        %v2448 = vadd.f32 %v2098, %v2447
        %v2449 = vpop.f32.mrb[0].mxu0
        %v2450 = vpop.f32.mrb[0].mxu0
        %v2451 = vadd.f32 %v2098, %v2450
        %v2452 = vpop.f32.mrb[0].mxu0
        %2453 = vmatprep.mubr.bf16.mxu0 0
        %2454 = vmatmul.mubr.bf16.gmra.mrb[0].mxu0 %v2165
        %v2455 = vpop.f32.mrb[0].mxu0
        %v2456 = vadd.f32 %v2098, %v2455
        %v2457 = vpop.f32.mrb[0].mxu0
        %v2458 = vpop.f32.mrb[0].mxu0
        %v2459 = vadd.f32 %v2098, %v2458
        %v2460 = vpop.f32.mrb[0].mxu0
        %2461 = vmatprep.mubr.bf16.mxu0 0
        %2462 = vmatmul.mubr.bf16.gmra.mrb[0].mxu0 %v2168
        %v2463 = vpop.f32.mrb[0].mxu0
        %v2464 = vadd.f32 %v2098, %v2463
        %v2465 = vpop.f32.mrb[0].mxu0
        %v2466 = vpop.f32.mrb[0].mxu0
        %v2467 = vadd.f32 %v2098, %v2466
        %v2468 = vpop.f32.mrb[0].mxu0
        %2469 = vmatprep.mubr.bf16.mxu0 0
        %2470 = vmatmul.mubr.bf16.gmra.mrb[0].mxu0 %v2171
        %v2471 = vpop.f32.mrb[0].mxu0
        %v2472 = vadd.f32 %v2098, %v2471
        %v2473 = vpop.f32.mrb[0].mxu0
        %v2474 = vpop.f32.mrb[0].mxu0
        %v2475 = vadd.f32 %v2098, %v2474
        %v2476 = vpop.f32.mrb[0].mxu0
        %2477 = vmatprep.mubr.bf16.mxu0 0
        %2478 = vmatmul.mubr.bf16.gmra.mrb[0].mxu0 %v2174
        %v2479 = vpop.f32.mrb[0].mxu0
        %v2480 = vadd.f32 %v2098, %v2479
        %v2481 = vpop.f32.mrb[0].mxu0
        %v2482 = vpop.f32.mrb[0].mxu0
        %v2483 = vadd.f32 %v2098, %v2482
        %v2484 = vpop.f32.mrb[0].mxu0
        %2485 = vmatprep.mubr.bf16.mxu0 0
        %2486 = vmatmul.mubr.bf16.gmra.mrb[0].mxu0 %v2177
        %v2487 = vpop.f32.mrb[0].mxu0
        %v2488 = vadd.f32 %v2098, %v2487
        %v2489 = vpop.f32.mrb[0].mxu0
        %v2490 = vpop.f32.mrb[0].mxu0
        %v2491 = vadd.f32 %v2098, %v2490
        %v2492 = vpop.f32.mrb[0].mxu0
        %2493 = vmatprep.mubr.bf16.mxu0 0
        %2494 = vmatmul.mubr.bf16.gmra.mrb[0].mxu0 %v2180
        %v2495 = vpop.f32.mrb[0].mxu0
        %v2496 = vadd.f32 %v2098, %v2495
        %v2497 = vpop.f32.mrb[0].mxu0
        %v2498 = vpop.f32.mrb[0].mxu0
        %v2499 = vadd.f32 %v2098, %v2498
        %v2500 = vpop.f32.mrb[0].mxu0
        %2501 = vmatprep.mubr.bf16.mxu0 0
        %2502 = vmatmul.mubr.bf16.gmra.mrb[0].mxu0 %v2183
        %v2503 = vpop.f32.mrb[0].mxu0
        %v2504 = vadd.f32 %v2098, %v2503
        %v2505 = vpop.f32.mrb[0].mxu0
        %v2506 = vpop.f32.mrb[0].mxu0
        %v2507 = vadd.f32 %v2098, %v2506
        %v2508 = vpop.f32.mrb[0].mxu0
        %2509 = vmatprep.mubr.bf16.mxu0 0
        %2510 = vmatmul.mubr.bf16.gmra.mrb[0].mxu0 %v2186
        %v2511 = vpop.f32.mrb[0].mxu0
        %v2512 = vadd.f32 %v2098, %v2511
        %v2513 = vpop.f32.mrb[0].mxu0
        %v2514 = vpop.f32.mrb[0].mxu0
        %v2515 = vadd.f32 %v2098, %v2514
        %v2516 = vpop.f32.mrb[0].mxu0
        %2517 = vmatprep.mubr.bf16.mxu0 0
        %2518 = vmatmul.mubr.bf16.gmra.mrb[0].mxu0 %v2189
        %v2519 = vpop.f32.mrb[0].mxu0
        %v2520 = vadd.f32 %v2098, %v2519
        %v2521 = vpop.f32.mrb[0].mxu0
        %v2522 = vpop.f32.mrb[0].mxu0
        %v2523 = vadd.f32 %v2098, %v2522
        %v2524 = vpop.f32.mrb[0].mxu0
        %2525 = vmatprep.mubr.bf16.mxu0 0
        %2526 = vmatmul.mubr.bf16.gmra.mrb[0].mxu0 %v2192
        %v2527 = vpop.f32.mrb[0].mxu0
        %v2528 = vadd.f32 %v2098, %v2527
        %v2529 = vpop.f32.mrb[0].mxu0
        %v2530 = vpop.f32.mrb[0].mxu0
        %v2531 = vadd.f32 %v2098, %v2530
        %v2532 = vpop.f32.mrb[0].mxu0
        %2533 = vmatprep.mubr.bf16.mxu0 0
        %2534 = vmatmul.mubr.bf16.gmra.mrb[0].mxu0 %v2195
        %v2535 = vpop.f32.mrb[0].mxu0
        %v2536 = vadd.f32 %v2098, %v2535
        %v2537 = vpop.f32.mrb[0].mxu0
        %v2538 = vpop.f32.mrb[0].mxu0
        %v2539 = vadd.f32 %v2098, %v2538
        %v2540 = vpop.f32.mrb[0].mxu0
        %2541 = vmatprep.mubr.bf16.mxu0 0
        %2542 = vmatmul.mubr.bf16.gmra.mrb[0].mxu0 %v2198
        %v2543 = vpop.f32.mrb[0].mxu0
        %v2544 = vadd.f32 %v2098, %v2543
        %v2545 = vpop.f32.mrb[0].mxu0
        %v2546 = vpop.f32.mrb[0].mxu0
        %v2547 = vadd.f32 %v2098, %v2546
        %v2548 = vpop.f32.mrb[0].mxu0
        %2549 = vmatprep.mubr.bf16.mxu0 0
        %2550 = vmatmul.mubr.bf16.gmra.mrb[0].mxu0 %v2201
        %v2551 = vpop.f32.mrb[0].mxu0
        %v2552 = vadd.f32 %v2098, %v2551
        %v2553 = vpop.f32.mrb[0].mxu0
        %v2554 = vpop.f32.mrb[0].mxu0
        %v2555 = vadd.f32 %v2098, %v2554
        %v2556 = vpop.f32.mrb[0].mxu0
        %2557 = vmatprep.mubr.bf16.mxu0 0
        %2558 = vmatmul.mubr.bf16.gmra.mrb[0].mxu0 %v2204
        %v2559 = vpop.f32.mrb[0].mxu0
        %v2560 = vadd.f32 %v2098, %v2559
        %v2561 = vpop.f32.mrb[0].mxu0
        %v2562 = vpop.f32.mrb[0].mxu0
        %v2563 = vadd.f32 %v2098, %v2562
        %v2564 = vpop.f32.mrb[0].mxu0
        %2565 = vmatprep.mubr.bf16.mxu0 0
        %2566 = vmatmul.mubr.bf16.gmra.mrb[0].mxu0 %v2207
        %v2567 = vpop.f32.mrb[0].mxu0
        %v2568 = vadd.f32 %v2098, %v2567
        %v2569 = vpop.f32.mrb[0].mxu0
        %v2570 = vpop.f32.mrb[0].mxu0
        %v2571 = vadd.f32 %v2098, %v2570
        %v2572 = vpop.f32.mrb[0].mxu0
        %2573 = vmatprep.mubr.bf16.mxu0 0
        %2574 = vmatmul.mubr.bf16.gmra.mrb[0].mxu0 %v2210
        %v2575 = vpop.f32.mrb[0].mxu0
        %v2576 = vadd.f32 %v2098, %v2575
        %v2577 = vpop.f32.mrb[0].mxu0
        %v2578 = vpop.f32.mrb[0].mxu0
        %v2579 = vadd.f32 %v2098, %v2578
        %v2580 = vpop.f32.mrb[0].mxu0
        %2581 = vmatprep.mubr.bf16.mxu0 0
        %2582 = vmatmul.mubr.bf16.gmra.mrb[0].mxu0 %v2213
        %v2583 = vpop.f32.mrb[0].mxu0
        %v2584 = vadd.f32 %v2098, %v2583
        %v2585 = vpop.f32.mrb[0].mxu0
        %v2586 = vpop.f32.mrb[0].mxu0
        %v2587 = vadd.f32 %v2098, %v2586
        %v2588 = vpop.f32.mrb[0].mxu0
        %2589 = vmatprep.mubr.bf16.mxu0 0
        %2590 = vmatmul.mubr.bf16.gmra.mrb[0].mxu0 %v2216
        %v2591 = vpop.f32.mrb[0].mxu0
        %v2592 = vadd.f32 %v2098, %v2591
        %v2593 = vpop.f32.mrb[0].mxu0
        %v2594 = vpop.f32.mrb[0].mxu0
        %v2595 = vadd.f32 %v2098, %v2594
        %v2596 = vpop.f32.mrb[0].mxu0
        %2597 = vmatprep.mubr.bf16.mxu0 0
        %2598 = vmatmul.mubr.bf16.gmra.mrb[0].mxu0 %v2219
        %v2599 = vpop.f32.mrb[0].mxu0
        %v2600 = vadd.f32 %v2098, %v2599
        %v2601 = vpop.f32.mrb[0].mxu0
        %v2602 = vpop.f32.mrb[0].mxu0
        %v2603 = vadd.f32 %v2098, %v2602
        %v2604 = vpop.f32.mrb[0].mxu0
        %2605 = vmatprep.mubr.bf16.mxu0 0
        %2606 = vmatmul.mubr.bf16.gmra.mrb[0].mxu0 %v2222
        %v2607 = vpop.f32.mrb[0].mxu0
        %v2608 = vadd.f32 %v2098, %v2607
        %v2609 = vpop.f32.mrb[0].mxu0
        %v2610 = vpop.f32.mrb[0].mxu0
        %v2611 = vadd.f32 %v2098, %v2610
        %v2612 = vpop.f32.mrb[0].mxu0
        %2613 = vmatprep.mubr.bf16.mxu0 0
        %2614 = vmatmul.mubr.bf16.gmra.mrb[0].mxu0 %v2225
        %v2615 = vpop.f32.mrb[0].mxu0
        %v2616 = vadd.f32 %v2098, %v2615
        %v2617 = vpop.f32.mrb[0].mxu0
        %v2618 = vpop.f32.mrb[0].mxu0
        %v2619 = vadd.f32 %v2098, %v2618
        %v2620 = vpop.f32.mrb[0].mxu0
        %2621 = vmatprep.mubr.bf16.mxu0 0
        %2622 = vmatmul.mubr.bf16.gmra.mrb[0].mxu0 %v2228
        %v2623 = vpop.f32.mrb[0].mxu0
        %v2624 = vadd.f32 %v2098, %v2623
        %v2625 = vpop.f32.mrb[0].mxu0
        %v2626 = vpop.f32.mrb[0].mxu0
        %v2627 = vadd.f32 %v2098, %v2626
        %v2628 = vpop.f32.mrb[0].mxu0
        %2629 = vmatprep.mubr.bf16.mxu0 0
        %2630 = vmatmul.mubr.bf16.gmra.mrb[0].mxu0 %v2231
        %v2631 = vpop.f32.mrb[0].mxu0
        %v2632 = vadd.f32 %v2098, %v2631
        %v2633 = vpop.f32.mrb[0].mxu0
        %v2634 = vpop.f32.mrb[0].mxu0
        %v2635 = vadd.f32 %v2098, %v2634
        %v2636 = vpop.f32.mrb[0].mxu0
        %2637 = vmatprep.mubr.bf16.mxu0 0
        %2638 = vmatmul.mubr.bf16.gmra.mrb[0].mxu0 %v2234
        %v2639 = vpop.f32.mrb[0].mxu0
        %v2640 = vadd.f32 %v2098, %v2639
        %v2641 = vpop.f32.mrb[0].mxu0
        %v2642 = vpop.f32.mrb[0].mxu0
        %v2643 = vadd.f32 %v2098, %v2642
        %v2644 = vpop.f32.mrb[0].mxu0
        %2645 = vmatprep.mubr.bf16.mxu0 0
        %2646 = vmatmul.mubr.bf16.gmra.mrb[0].mxu0 %v2237
        %v2647 = vpop.f32.mrb[0].mxu0
        %v2648 = vadd.f32 %v2098, %v2647
        %v2649 = vpop.f32.mrb[0].mxu0
        %v2650 = vpop.f32.mrb[0].mxu0
        %v2651 = vadd.f32 %v2098, %v2650
        %v2652 = vpop.f32.mrb[0].mxu0
        %2653 = vmatprep.mubr.bf16.mxu0 0
        %2654 = vmatmul.mubr.bf16.gmra.mrb[0].mxu0 %v2240
        %v2655 = vpop.f32.mrb[0].mxu0
        %v2656 = vadd.f32 %v2098, %v2655
        %v2657 = vpop.f32.mrb[0].mxu0
        %v2658 = vpop.f32.mrb[0].mxu0
        %v2659 = vadd.f32 %v2098, %v2658
        %v2660 = vpop.f32.mrb[0].mxu0
        %2661 = vmatprep.mubr.bf16.mxu0 0
        %2662 = vmatmul.mubr.bf16.gmra.mrb[0].mxu0 %v2243
        %v2663 = vpop.f32.mrb[0].mxu0
        %v2664 = vadd.f32 %v2098, %v2663
        %v2665 = vpop.f32.mrb[0].mxu0
        %v2666 = vpop.f32.mrb[0].mxu0
        %v2667 = vadd.f32 %v2098, %v2666
        %v2668 = vpop.f32.mrb[0].mxu0
        %2669 = vmatprep.mubr.bf16.mxu0 0
        %2670 = vmatmul.mubr.bf16.gmra.mrb[0].mxu0 %v2246
        %v2671 = vpop.f32.mrb[0].mxu0
        %v2672 = vadd.f32 %v2098, %v2671
        %v2673 = vpop.f32.mrb[0].mxu0
        %v2674 = vpop.f32.mrb[0].mxu0
        %v2675 = vadd.f32 %v2098, %v2674
        %v2676 = vpop.f32.mrb[0].mxu0
        %2677 = vmatprep.mubr.bf16.mxu0 0
        %2678 = vmatmul.mubr.bf16.gmra.mrb[0].mxu0 %v2249
        %v2679 = vpop.f32.mrb[0].mxu0
        %v2680 = vadd.f32 %v2098, %v2679
        %v2681 = vpop.f32.mrb[0].mxu0
        %v2682 = vpop.f32.mrb[0].mxu0
        %v2683 = vadd.f32 %v2098, %v2682
        %v2684 = vpop.f32.mrb[0].mxu0
        %2685 = vmatprep.mubr.bf16.mxu0 0
        %2686 = vmatmul.mubr.bf16.gmra.mrb[0].mxu0 %v2252
        %v2687 = vpop.f32.mrb[0].mxu0
        %v2688 = vadd.f32 %v2098, %v2687
        %v2689 = vpop.f32.mrb[0].mxu0
        %v2690 = vpop.f32.mrb[0].mxu0
        %v2691 = vadd.f32 %v2098, %v2690
        %v2692 = vpop.f32.mrb[0].mxu0
        %2693 = vmatprep.mubr.bf16.mxu0 0
        %2694 = vmatmul.mubr.bf16.gmra.mrb[0].mxu0 %v2255
        %v2695 = vpop.f32.mrb[0].mxu0
        %v2696 = vadd.f32 %v2098, %v2695
        %v2697 = vpop.f32.mrb[0].mxu0
        %v2698 = vpop.f32.mrb[0].mxu0
        %v2699 = vadd.f32 %v2098, %v2698
        %v2700 = vpop.f32.mrb[0].mxu0
        %2701 = vmatprep.mubr.bf16.mxu0 0
        %2702 = vmatmul.mubr.bf16.gmra.mrb[0].mxu0 %v2258
        %v2703 = vpop.f32.mrb[0].mxu0
        %v2704 = vadd.f32 %v2098, %v2703
        %v2705 = vpop.f32.mrb[0].mxu0
        %v2706 = vpop.f32.mrb[0].mxu0
        %v2707 = vadd.f32 %v2098, %v2706
        %v2708 = vpop.f32.mrb[0].mxu0
        %2709 = vmatprep.mubr.bf16.mxu0 0
        %2710 = vmatmul.mubr.bf16.gmra.mrb[0].mxu0 %v2261
        %v2711 = vpop.f32.mrb[0].mxu0
        %v2712 = vadd.f32 %v2098, %v2711
        %v2713 = vpop.f32.mrb[0].mxu0
        %v2714 = vpop.f32.mrb[0].mxu0
        %v2715 = vadd.f32 %v2098, %v2714
        %v2716 = vpop.f32.mrb[0].mxu0
        %2717 = vmatprep.mubr.bf16.mxu0 0
        %2718 = vmatmul.mubr.bf16.gmra.mrb[0].mxu0 %v2264
        %v2719 = vpop.f32.mrb[0].mxu0
        %v2720 = vadd.f32 %v2098, %v2719
        %v2721 = vpop.f32.mrb[0].mxu0
        %v2722 = vpop.f32.mrb[0].mxu0
        %v2723 = vadd.f32 %v2098, %v2722
        %v2724 = vpop.f32.mrb[0].mxu0
        %2725 = vmatprep.mubr.bf16.mxu0 0
        %2726 = vmatmul.mubr.bf16.gmra.mrb[0].mxu0 %v2267
        %v2727 = vpop.f32.mrb[0].mxu0
        %v2728 = vadd.f32 %v2098, %v2727
        %v2729 = vpop.f32.mrb[0].mxu0
        %v2730 = vpop.f32.mrb[0].mxu0
        %v2731 = vadd.f32 %v2098, %v2730
        %v2732 = vpop.f32.mrb[0].mxu0
        %2733 = vmatprep.mubr.bf16.mxu0 0
        %2734 = vmatmul.mubr.bf16.gmra.mrb[0].mxu0 %v2270
        %v2735 = vpop.f32.mrb[0].mxu0
        %v2736 = vadd.f32 %v2098, %v2735
        %v2737 = vpop.f32.mrb[0].mxu0
        %v2738 = vpop.f32.mrb[0].mxu0
        %v2739 = vadd.f32 %v2098, %v2738
        %v2740 = vpop.f32.mrb[0].mxu0
        %2741 = vmatprep.mubr.bf16.mxu0 0
        %2742 = vmatmul.mubr.bf16.gmra.mrb[0].mxu0 %v2273
        %v2743 = vpop.f32.mrb[0].mxu0
        %v2744 = vadd.f32 %v2098, %v2743
        %v2745 = vpop.f32.mrb[0].mxu0
        %v2746 = vpop.f32.mrb[0].mxu0
        %v2747 = vadd.f32 %v2098, %v2746
        %v2748 = vpop.f32.mrb[0].mxu0
        %2749 = vmatprep.mubr.bf16.mxu0 0
        %2750 = vmatmul.mubr.bf16.gmra.mrb[0].mxu0 %v2276
        %v2751 = vpop.f32.mrb[0].mxu0
        %v2752 = vadd.f32 %v2098, %v2751
        %v2753 = vpop.f32.mrb[0].mxu0
        %v2754 = vpop.f32.mrb[0].mxu0
        %v2755 = vadd.f32 %v2098, %v2754
        %v2756 = vpop.f32.mrb[0].mxu0
        %2757 = vmatprep.mubr.bf16.mxu0 0
        %2758 = vmatmul.mubr.bf16.gmra.mrb[0].mxu0 %v2279
        %v2759 = vpop.f32.mrb[0].mxu0
        %v2760 = vadd.f32 %v2098, %v2759
        %v2761 = vpop.f32.mrb[0].mxu0
        %v2762 = vpop.f32.mrb[0].mxu0
        %v2763 = vadd.f32 %v2098, %v2762
        %v2764 = vpop.f32.mrb[0].mxu0
        %2765 = vmatprep.mubr.bf16.mxu0 0
        %2766 = vmatmul.mubr.bf16.gmra.mrb[0].mxu0 %v2282
        %v2767 = vpop.f32.mrb[0].mxu0
        %v2768 = vadd.f32 %v2098, %v2767
        %v2769 = vpop.f32.mrb[0].mxu0
        %v2770 = vpop.f32.mrb[0].mxu0
        %v2771 = vadd.f32 %v2098, %v2770
        %v2772 = vpop.f32.mrb[0].mxu0
        %2773 = vmatprep.mubr.bf16.mxu0 0
        %2774 = vmatmul.mubr.bf16.gmra.mrb[0].mxu0 %v2285
        %v2775 = vpop.f32.mrb[0].mxu0
        %v2776 = vadd.f32 %v2098, %v2775
        %v2777 = vpop.f32.mrb[0].mxu0
        %v2778 = vpop.f32.mrb[0].mxu0
        %v2779 = vadd.f32 %v2098, %v2778
        %v2780 = vpop.f32.mrb[0].mxu0
        %2781 = vmatprep.mubr.bf16.mxu0 0
        %2782 = vmatmul.mubr.bf16.gmra.mrb[0].mxu0 %v2288
        %v2783 = vpop.f32.mrb[0].mxu0
        %v2784 = vadd.f32 %v2098, %v2783
        %v2785 = vpop.f32.mrb[0].mxu0
        %v2786 = vpop.f32.mrb[0].mxu0
        %v2787 = vadd.f32 %v2098, %v2786
        %v2788 = vpop.f32.mrb[0].mxu0
        %2789 = vmatprep.mubr.bf16.mxu0 0
        %2790 = vmatmul.mubr.bf16.gmra.mrb[0].mxu0 %v2291
        %v2791 = vpop.f32.mrb[0].mxu0
        %v2792 = vadd.f32 %v2098, %v2791
        %v2793 = vpop.f32.mrb[0].mxu0
        %v2794 = vpop.f32.mrb[0].mxu0
        %v2795 = vadd.f32 %v2098, %v2794
        %v2796 = vpop.f32.mrb[0].mxu0
        %2797 = vmatprep.mubr.bf16.mxu0 0
        %2798 = vmatmul.mubr.bf16.gmra.mrb[0].mxu0 %v2294
        %v2799 = vpop.f32.mrb[0].mxu0
        %v2800 = vadd.f32 %v2098, %v2799
        %v2801 = vpop.f32.mrb[0].mxu0
        %v2802 = vpop.f32.mrb[0].mxu0
        %v2803 = vadd.f32 %v2098, %v2802
        %v2804 = vpop.f32.mrb[0].mxu0
        %2805 = vmatprep.mubr.bf16.mxu0 0
        %2806 = vmatmul.mubr.bf16.gmra.mrb[0].mxu0 %v2297
        %v2807 = vpop.f32.mrb[0].mxu0
        %v2808 = vadd.f32 %v2098, %v2807
        %v2809 = vpop.f32.mrb[0].mxu0
        %v2810 = vpop.f32.mrb[0].mxu0
        %v2811 = vadd.f32 %v2098, %v2810
        %v2812 = vpop.f32.mrb[0].mxu0
        %2813 = vmatprep.mubr.bf16.mxu0 0
        %2814 = vmatmul.mubr.bf16.gmra.mrb[0].mxu0 %v2300
        %v2815 = vpop.f32.mrb[0].mxu0
        %v2816 = vadd.f32 %v2098, %v2815
        %v2817 = vpop.f32.mrb[0].mxu0
        %v2818 = vpop.f32.mrb[0].mxu0
        %v2819 = vadd.f32 %v2098, %v2818
        %v2820 = vpop.f32.mrb[0].mxu0
        %2821 = vmatprep.mubr.bf16.mxu0 0
        %2822 = vmatmul.mubr.bf16.gmra.mrb[0].mxu0 %v2303
        %v2823 = vpop.f32.mrb[0].mxu0
        %v2824 = vadd.f32 %v2098, %v2823
        %v2825 = vpop.f32.mrb[0].mxu0
        %v2826 = vpop.f32.mrb[0].mxu0
        %v2827 = vadd.f32 %v2098, %v2826
        %v2828 = vpop.f32.mrb[0].mxu0
        %2829 = vmatprep.mubr.bf16.mxu0 0
        %2830 = vmatmul.mubr.bf16.gmra.mrb[0].mxu0 %v2306
        %v2831 = vpop.f32.mrb[0].mxu0
        %v2832 = vadd.f32 %v2098, %v2831
        %v2833 = vpop.f32.mrb[0].mxu0
        %v2834 = vpop.f32.mrb[0].mxu0
        %v2835 = vadd.f32 %v2098, %v2834
        %v2836 = vpop.f32.mrb[0].mxu0
        %2837 = vmatprep.mubr.bf16.mxu0 0
        %2838 = vmatmul.mubr.bf16.gmra.mrb[0].mxu0 %v2309
        %v2839 = vpop.f32.mrb[0].mxu0
        %v2840 = vadd.f32 %v2098, %v2839
        %v2841 = vpop.f32.mrb[0].mxu0
        %v2842 = vpop.f32.mrb[0].mxu0
        %v2843 = vadd.f32 %v2098, %v2842
        %v2844 = vpop.f32.mrb[0].mxu0
        %2845 = vmatprep.mubr.bf16.mxu0 0
        %2846 = vmatmul.mubr.bf16.gmra.mrb[0].mxu0 %v2312
        %v2847 = vpop.f32.mrb[0].mxu0
        %v2848 = vadd.f32 %v2098, %v2847
        %v2849 = vpop.f32.mrb[0].mxu0
        %v2850 = vpop.f32.mrb[0].mxu0
        %v2851 = vadd.f32 %v2098, %v2850
        %v2852 = vpop.f32.mrb[0].mxu0
        %2853 = vmatprep.mubr.bf16.mxu0 0
        %2854 = vmatmul.mubr.bf16.gmra.mrb[0].mxu0 %v2315
        %v2855 = vpop.f32.mrb[0].mxu0
        %v2856 = vadd.f32 %v2098, %v2855
        %v2857 = vpop.f32.mrb[0].mxu0
        %v2858 = vpop.f32.mrb[0].mxu0
        %v2859 = vadd.f32 %v2098, %v2858
        %v2860 = vpop.f32.mrb[0].mxu0
        %2861 = vdwg.mxu0
        %v2862 = vmax.f32 %v2352, 0.0
        %v2863 = vmax.f32 %v2355, 0.0
        %v2864 = vmax.f32 %v2360, 0.0
        %v2865 = vmax.f32 %v2363, 0.0
        %v2866 = vmax.f32 %v2368, 0.0
        %v2867 = vmax.f32 %v2371, 0.0
        %v2868 = vmax.f32 %v2376, 0.0
        %v2869 = vmax.f32 %v2379, 0.0
        %v2870 = vmax.f32 %v2384, 0.0
        %v2871 = vmax.f32 %v2387, 0.0
        %v2872 = vmax.f32 %v2392, 0.0
        %v2873 = vmax.f32 %v2395, 0.0
        %v2874 = vmax.f32 %v2400, 0.0
        %v2875 = vmax.f32 %v2403, 0.0
        %v2876 = vmax.f32 %v2408, 0.0
        %v2877 = vmax.f32 %v2411, 0.0
        %v2878 = vmax.f32 %v2416, 0.0
        %v2879 = vmax.f32 %v2419, 0.0
        %v2880 = vmax.f32 %v2424, 0.0
        %v2881 = vmax.f32 %v2427, 0.0
        %v2882 = vmax.f32 %v2432, 0.0
        %v2883 = vmax.f32 %v2435, 0.0
        %v2884 = vmax.f32 %v2440, 0.0
        %v2885 = vmax.f32 %v2443, 0.0
        %v2886 = vmax.f32 %v2448, 0.0
        %v2887 = vmax.f32 %v2451, 0.0
        %v2888 = vmax.f32 %v2456, 0.0
        %v2889 = vmax.f32 %v2459, 0.0
        %v2890 = vmax.f32 %v2464, 0.0
        %v2891 = vmax.f32 %v2467, 0.0
        %v2892 = vmax.f32 %v2472, 0.0
        %v2893 = vmax.f32 %v2475, 0.0
        %v2894 = vmax.f32 %v2480, 0.0
        %v2895 = vmax.f32 %v2483, 0.0
        %v2896 = vmax.f32 %v2488, 0.0
        %v2897 = vmax.f32 %v2491, 0.0
        %v2898 = vmax.f32 %v2496, 0.0
        %v2899 = vmax.f32 %v2499, 0.0
        %v2900 = vmax.f32 %v2504, 0.0
        %v2901 = vmax.f32 %v2507, 0.0
        %v2902 = vmax.f32 %v2512, 0.0
        %v2903 = vmax.f32 %v2515, 0.0
        %v2904 = vmax.f32 %v2520, 0.0
        %v2905 = vmax.f32 %v2523, 0.0
        %v2906 = vmax.f32 %v2528, 0.0
        %v2907 = vmax.f32 %v2531, 0.0
        %v2908 = vmax.f32 %v2536, 0.0
        %v2909 = vmax.f32 %v2539, 0.0
        %v2910 = vmax.f32 %v2544, 0.0
        %v2911 = vmax.f32 %v2547, 0.0
        %v2912 = vmax.f32 %v2552, 0.0
        %v2913 = vmax.f32 %v2555, 0.0
        %v2914 = vmax.f32 %v2560, 0.0
        %v2915 = vmax.f32 %v2563, 0.0
        %v2916 = vmax.f32 %v2568, 0.0
        %v2917 = vmax.f32 %v2571, 0.0
        %v2918 = vmax.f32 %v2576, 0.0
        %v2919 = vmax.f32 %v2579, 0.0
        %v2920 = vmax.f32 %v2584, 0.0
        %v2921 = vmax.f32 %v2587, 0.0
        %v2922 = vmax.f32 %v2592, 0.0
        %v2923 = vmax.f32 %v2595, 0.0
        %v2924 = vmax.f32 %v2600, 0.0
        %v2925 = vmax.f32 %v2603, 0.0
        %v2926 = vmax.f32 %v2608, 0.0
        %v2927 = vmax.f32 %v2611, 0.0
        %v2928 = vmax.f32 %v2616, 0.0
        %v2929 = vmax.f32 %v2619, 0.0
        %v2930 = vmax.f32 %v2624, 0.0
        %v2931 = vmax.f32 %v2627, 0.0
        %v2932 = vmax.f32 %v2632, 0.0
        %v2933 = vmax.f32 %v2635, 0.0
        %v2934 = vmax.f32 %v2640, 0.0
        %v2935 = vmax.f32 %v2643, 0.0
        %v2936 = vmax.f32 %v2648, 0.0
        %v2937 = vmax.f32 %v2651, 0.0
        %v2938 = vmax.f32 %v2656, 0.0
        %v2939 = vmax.f32 %v2659, 0.0
        %v2940 = vmax.f32 %v2664, 0.0
        %v2941 = vmax.f32 %v2667, 0.0
        %v2942 = vmax.f32 %v2672, 0.0
        %v2943 = vmax.f32 %v2675, 0.0
        %v2944 = vmax.f32 %v2680, 0.0
        %v2945 = vmax.f32 %v2683, 0.0
        %v2946 = vmax.f32 %v2688, 0.0
        %v2947 = vmax.f32 %v2691, 0.0
        %v2948 = vmax.f32 %v2696, 0.0
        %v2949 = vmax.f32 %v2699, 0.0
        %v2950 = vmax.f32 %v2704, 0.0
        %v2951 = vmax.f32 %v2707, 0.0
        %v2952 = vmax.f32 %v2712, 0.0
        %v2953 = vmax.f32 %v2715, 0.0
        %v2954 = vmax.f32 %v2720, 0.0
        %v2955 = vmax.f32 %v2723, 0.0
        %v2956 = vmax.f32 %v2728, 0.0
        %v2957 = vmax.f32 %v2731, 0.0
        %v2958 = vmax.f32 %v2736, 0.0
        %v2959 = vmax.f32 %v2739, 0.0
        %v2960 = vmax.f32 %v2744, 0.0
        %v2961 = vmax.f32 %v2747, 0.0
        %v2962 = vmax.f32 %v2752, 0.0
        %v2963 = vmax.f32 %v2755, 0.0
        %v2964 = vmax.f32 %v2760, 0.0
        %v2965 = vmax.f32 %v2763, 0.0
        %v2966 = vmax.f32 %v2768, 0.0
        %v2967 = vmax.f32 %v2771, 0.0
        %v2968 = vmax.f32 %v2776, 0.0
        %v2969 = vmax.f32 %v2779, 0.0
        %v2970 = vmax.f32 %v2784, 0.0
        %v2971 = vmax.f32 %v2787, 0.0
        %v2972 = vmax.f32 %v2792, 0.0
        %v2973 = vmax.f32 %v2795, 0.0
        %v2974 = vmax.f32 %v2800, 0.0
        %v2975 = vmax.f32 %v2803, 0.0
        %v2976 = vmax.f32 %v2808, 0.0
        %v2977 = vmax.f32 %v2811, 0.0
        %v2978 = vmax.f32 %v2816, 0.0
        %v2979 = vmax.f32 %v2819, 0.0
        %v2980 = vmax.f32 %v2824, 0.0
        %v2981 = vmax.f32 %v2827, 0.0
        %v2982 = vmax.f32 %v2832, 0.0
        %v2983 = vmax.f32 %v2835, 0.0
        %v2984 = vmax.f32 %v2840, 0.0
        %v2985 = vmax.f32 %v2843, 0.0
        %v2986 = vmax.f32 %v2848, 0.0
        %v2987 = vmax.f32 %v2851, 0.0
        %v2988 = vmax.f32 %v2856, 0.0
        %v2989 = vmax.f32 %v2859, 0.0
        %v2990 = vpack.c.bf16 %v2863, %v2862
        %v2991 = vpack.c.bf16 %v2865, %v2864
        %v2992 = vpack.c.bf16 %v2867, %v2866
        %v2993 = vpack.c.bf16 %v2869, %v2868
        %v2994 = vpack.c.bf16 %v2871, %v2870
        %v2995 = vpack.c.bf16 %v2873, %v2872
        %v2996 = vpack.c.bf16 %v2875, %v2874
        %v2997 = vpack.c.bf16 %v2877, %v2876
        %v2998 = vpack.c.bf16 %v2879, %v2878
        %v2999 = vpack.c.bf16 %v2881, %v2880
        %v3000 = vpack.c.bf16 %v2883, %v2882
        %v3001 = vpack.c.bf16 %v2885, %v2884
        %v3002 = vpack.c.bf16 %v2887, %v2886
        %v3003 = vpack.c.bf16 %v2889, %v2888
        %v3004 = vpack.c.bf16 %v2891, %v2890
        %v3005 = vpack.c.bf16 %v2893, %v2892
        %v3006 = vpack.c.bf16 %v2895, %v2894
        %v3007 = vpack.c.bf16 %v2897, %v2896
        %v3008 = vpack.c.bf16 %v2899, %v2898
        %v3009 = vpack.c.bf16 %v2901, %v2900
        %v3010 = vpack.c.bf16 %v2903, %v2902
        %v3011 = vpack.c.bf16 %v2905, %v2904
        %v3012 = vpack.c.bf16 %v2907, %v2906
        %v3013 = vpack.c.bf16 %v2909, %v2908
        %v3014 = vpack.c.bf16 %v2911, %v2910
        %v3015 = vpack.c.bf16 %v2913, %v2912
        %v3016 = vpack.c.bf16 %v2915, %v2914
        %v3017 = vpack.c.bf16 %v2917, %v2916
        %v3018 = vpack.c.bf16 %v2919, %v2918
        %v3019 = vpack.c.bf16 %v2921, %v2920
        %v3020 = vpack.c.bf16 %v2923, %v2922
        %v3021 = vpack.c.bf16 %v2925, %v2924
        %v3022 = vpack.c.bf16 %v2927, %v2926
        %v3023 = vpack.c.bf16 %v2929, %v2928
        %v3024 = vpack.c.bf16 %v2931, %v2930
        %v3025 = vpack.c.bf16 %v2933, %v2932
        %v3026 = vpack.c.bf16 %v2935, %v2934
        %v3027 = vpack.c.bf16 %v2937, %v2936
        %v3028 = vpack.c.bf16 %v2939, %v2938
        %v3029 = vpack.c.bf16 %v2941, %v2940
        %v3030 = vpack.c.bf16 %v2943, %v2942
        %v3031 = vpack.c.bf16 %v2945, %v2944
        %v3032 = vpack.c.bf16 %v2947, %v2946
        %v3033 = vpack.c.bf16 %v2949, %v2948
        %v3034 = vpack.c.bf16 %v2951, %v2950
        %v3035 = vpack.c.bf16 %v2953, %v2952
        %v3036 = vpack.c.bf16 %v2955, %v2954
        %v3037 = vpack.c.bf16 %v2957, %v2956
        %v3038 = vpack.c.bf16 %v2959, %v2958
        %v3039 = vpack.c.bf16 %v2961, %v2960
        %v3040 = vpack.c.bf16 %v2963, %v2962
        %v3041 = vpack.c.bf16 %v2965, %v2964
        %v3042 = vpack.c.bf16 %v2967, %v2966
        %v3043 = vpack.c.bf16 %v2969, %v2968
        %v3044 = vpack.c.bf16 %v2971, %v2970
        %v3045 = vpack.c.bf16 %v2973, %v2972
        %v3046 = vpack.c.bf16 %v2975, %v2974
        %v3047 = vpack.c.bf16 %v2977, %v2976
        %v3048 = vpack.c.bf16 %v2979, %v2978
        %v3049 = vpack.c.bf16 %v2981, %v2980
        %v3050 = vpack.c.bf16 %v2983, %v2982
        %v3051 = vpack.c.bf16 %v2985, %v2984
        %v3052 = vpack.c.bf16 %v2987, %v2986
        %v3053 = vpack.c.bf16 %v2989, %v2988
        %v3054 = vld [vmem:[#allocation8] sm:$0xf]
        %v3055 = vld [vmem:[#allocation8 + $0x4] sm:$0xf]
        %v3056 = vld [vmem:[#allocation8 + $0x8] sm:$0xf]
        %v3057 = vld [vmem:[#allocation8 + $0xc] sm:$0xf]
        %v3058 = vld [vmem:[#allocation8 + $0x10] sm:$0xf]
        %v3059 = vld [vmem:[#allocation8 + $0x14] sm:$0xf]
        %v3060 = vld [vmem:[#allocation8 + $0x18] sm:$0xf]
        %v3061 = vld [vmem:[#allocation8 + $0x1c] sm:$0xf]
        %v3062 = vld [vmem:[#allocation10] sm:$0x1]
        %v3064 = vlaneseq
        %v3065 = vshrl.u32 %v3064, 7
        %v3066 = vsub.s32 0, %v3065
        %v3067 = vrot.slane %v3062, %v3066
        %v3077 = vunpack.c.l.b16 %v3054
        %v3078 = vunpack.c.l.b16 %v3055
        %v3079 = vunpack.c.l.b16 %v3056
        %v3080 = vunpack.c.l.b16 %v3057
        %v3081 = vunpack.c.l.b16 %v3058
        %v3082 = vunpack.c.l.b16 %v3059
        %v3083 = vunpack.c.l.b16 %v3060
        %v3084 = vunpack.c.l.b16 %v3061
        %v3085 = vpack.c.b16 %v3078, %v3077
        %v3086 = vpack.c.b16 %v3080, %v3079
        %v3087 = vpack.c.b16 %v3082, %v3081
        %v3088 = vpack.c.b16 %v3084, %v3083
        %v3094 = vsel %vm2124, %v2990, 0
        %v3097 = vsel %vm2124, %v2991, 0
        %v3100 = vsel %vm2124, %v2992, 0
        %v3103 = vsel %vm2124, %v2993, 0
        %v3106 = vsel %vm2124, %v2994, 0
        %v3109 = vsel %vm2124, %v2995, 0
        %v3112 = vsel %vm2124, %v2996, 0
        %v3115 = vsel %vm2124, %v2997, 0
        %v3118 = vsel %vm2124, %v2998, 0
        %v3121 = vsel %vm2124, %v2999, 0
        %v3124 = vsel %vm2124, %v3000, 0
        %v3127 = vsel %vm2124, %v3001, 0
        %v3130 = vsel %vm2124, %v3002, 0
        %v3133 = vsel %vm2124, %v3003, 0
        %v3136 = vsel %vm2124, %v3004, 0
        %v3139 = vsel %vm2124, %v3005, 0
        %v3142 = vsel %vm2124, %v3006, 0
        %v3145 = vsel %vm2124, %v3007, 0
        %v3148 = vsel %vm2124, %v3008, 0
        %v3151 = vsel %vm2124, %v3009, 0
        %v3154 = vsel %vm2124, %v3010, 0
        %v3157 = vsel %vm2124, %v3011, 0
        %v3160 = vsel %vm2124, %v3012, 0
        %v3163 = vsel %vm2124, %v3013, 0
        %v3166 = vsel %vm2124, %v3014, 0
        %v3169 = vsel %vm2124, %v3015, 0
        %v3172 = vsel %vm2124, %v3016, 0
        %v3175 = vsel %vm2124, %v3017, 0
        %v3178 = vsel %vm2124, %v3018, 0
        %v3181 = vsel %vm2124, %v3019, 0
        %v3184 = vsel %vm2124, %v3020, 0
        %v3187 = vsel %vm2124, %v3021, 0
        %v3190 = vsel %vm2124, %v3022, 0
        %v3193 = vsel %vm2124, %v3023, 0
        %v3196 = vsel %vm2124, %v3024, 0
        %v3199 = vsel %vm2124, %v3025, 0
        %v3202 = vsel %vm2124, %v3026, 0
        %v3205 = vsel %vm2124, %v3027, 0
        %v3208 = vsel %vm2124, %v3028, 0
        %v3211 = vsel %vm2124, %v3029, 0
        %v3214 = vsel %vm2124, %v3030, 0
        %v3217 = vsel %vm2124, %v3031, 0
        %v3220 = vsel %vm2124, %v3032, 0
        %v3223 = vsel %vm2124, %v3033, 0
        %v3226 = vsel %vm2124, %v3034, 0
        %v3229 = vsel %vm2124, %v3035, 0
        %v3232 = vsel %vm2124, %v3036, 0
        %v3235 = vsel %vm2124, %v3037, 0
        %v3238 = vsel %vm2124, %v3038, 0
        %v3241 = vsel %vm2124, %v3039, 0
        %v3244 = vsel %vm2124, %v3040, 0
        %v3247 = vsel %vm2124, %v3041, 0
        %v3250 = vsel %vm2124, %v3042, 0
        %v3253 = vsel %vm2124, %v3043, 0
        %v3256 = vsel %vm2124, %v3044, 0
        %v3259 = vsel %vm2124, %v3045, 0
        %v3262 = vsel %vm2124, %v3046, 0
        %v3265 = vsel %vm2124, %v3047, 0
        %v3268 = vsel %vm2124, %v3048, 0
        %v3271 = vsel %vm2124, %v3049, 0
        %v3274 = vsel %vm2124, %v3050, 0
        %v3277 = vsel %vm2124, %v3051, 0
        %v3280 = vsel %vm2124, %v3052, 0
        %v3283 = vsel %vm2124, %v3053, 0
        %3285 = vmatprep.subr.bf16.mxu0 0
        %3286 = vmatpush1.bf16.msra.mxu0 %v3085
        %3287 = vmatprep.subr.bf16.mxu0 0
        %3288 = vmatpush1.bf16.msra.mxu0 %v3086
        %3289 = vmatprep.subr.bf16.mxu0 0
        %3290 = vmatpush1.bf16.msra.mxu0 %v3087
        %3291 = vmatprep.subr.bf16.mxu0 0
        %3292 = vmatpush1.bf16.msra.mxu0 %v3088
        %3293 = vmatprep.subr.bf16.mxu0 0
        %3294 = vmatpush1.bf16.msra.mxu0 0
        %3295 = vmatprep.subr.bf16.mxu0 0
        %3296 = vmatpush1.bf16.msra.mxu0 0
        %3297 = vmatprep.subr.bf16.mxu0 0
        %3298 = vmatpush1.bf16.msra.mxu0 0
        %3299 = vmatprep.subr.bf16.mxu0 0
        %3300 = vmatpush1.bf16.msra.mxu0 0
        %3301 = vmatprep.subr.bf16.mxu0 0
        %3302 = vmatpush1.bf16.msra.mxu0 0
        %3303 = vmatprep.subr.bf16.mxu0 0
        %3304 = vmatpush1.bf16.msra.mxu0 0
        %3305 = vmatprep.subr.bf16.mxu0 0
        %3306 = vmatpush1.bf16.msra.mxu0 0
        %3307 = vmatprep.subr.bf16.mxu0 0
        %3308 = vmatpush1.bf16.msra.mxu0 0
        %3309 = vmatprep.subr.bf16.mxu0 0
        %3310 = vmatpush1.bf16.msra.mxu0 0
        %3311 = vmatprep.subr.bf16.mxu0 0
        %3312 = vmatpush1.bf16.msra.mxu0 0
        %3313 = vmatprep.subr.bf16.mxu0 0
        %3314 = vmatpush1.bf16.msra.mxu0 0
        %3315 = vmatprep.subr.bf16.mxu0 0
        %3316 = vmatpush1.bf16.msra.mxu0 0
        %3317 = vmatprep.mubr.bf16.mxu0 0
        %3318 = vmatmul.mubr.bf16.gmra.mrb[0].mxu0 %v3094
        %v3319 = vpop.f32.mrb[0].mxu0
        %v3320 = vadd.f32 %v3067, %v3319
        %v3321 = vpop.f32.mrb[0].mxu0
        %v3322 = vpop.f32.mrb[0].mxu0
        %v3323 = vadd.f32 %v3067, %v3322
        %v3324 = vpop.f32.mrb[0].mxu0
        %3325 = vmatprep.mubr.bf16.mxu0 0
        %3326 = vmatmul.mubr.bf16.gmra.mrb[0].mxu0 %v3097
        %v3327 = vpop.f32.mrb[0].mxu0
        %v3328 = vadd.f32 %v3067, %v3327
        %v3329 = vpop.f32.mrb[0].mxu0
        %v3330 = vpop.f32.mrb[0].mxu0
        %v3331 = vadd.f32 %v3067, %v3330
        %v3332 = vpop.f32.mrb[0].mxu0
        %3333 = vmatprep.mubr.bf16.mxu0 0
        %3334 = vmatmul.mubr.bf16.gmra.mrb[0].mxu0 %v3100
        %v3335 = vpop.f32.mrb[0].mxu0
        %v3336 = vadd.f32 %v3067, %v3335
        %v3337 = vpop.f32.mrb[0].mxu0
        %v3338 = vpop.f32.mrb[0].mxu0
        %v3339 = vadd.f32 %v3067, %v3338
        %v3340 = vpop.f32.mrb[0].mxu0
        %3341 = vmatprep.mubr.bf16.mxu0 0
        %3342 = vmatmul.mubr.bf16.gmra.mrb[0].mxu0 %v3103
        %v3343 = vpop.f32.mrb[0].mxu0
        %v3344 = vadd.f32 %v3067, %v3343
        %v3345 = vpop.f32.mrb[0].mxu0
        %v3346 = vpop.f32.mrb[0].mxu0
        %v3347 = vadd.f32 %v3067, %v3346
        %v3348 = vpop.f32.mrb[0].mxu0
        %3349 = vmatprep.mubr.bf16.mxu0 0
        %3350 = vmatmul.mubr.bf16.gmra.mrb[0].mxu0 %v3106
        %v3351 = vpop.f32.mrb[0].mxu0
        %v3352 = vadd.f32 %v3067, %v3351
        %v3353 = vpop.f32.mrb[0].mxu0
        %v3354 = vpop.f32.mrb[0].mxu0
        %v3355 = vadd.f32 %v3067, %v3354
        %v3356 = vpop.f32.mrb[0].mxu0
        %3357 = vmatprep.mubr.bf16.mxu0 0
        %3358 = vmatmul.mubr.bf16.gmra.mrb[0].mxu0 %v3109
        %v3359 = vpop.f32.mrb[0].mxu0
        %v3360 = vadd.f32 %v3067, %v3359
        %v3361 = vpop.f32.mrb[0].mxu0
        %v3362 = vpop.f32.mrb[0].mxu0
        %v3363 = vadd.f32 %v3067, %v3362
        %v3364 = vpop.f32.mrb[0].mxu0
        %3365 = vmatprep.mubr.bf16.mxu0 0
        %3366 = vmatmul.mubr.bf16.gmra.mrb[0].mxu0 %v3112
        %v3367 = vpop.f32.mrb[0].mxu0
        %v3368 = vadd.f32 %v3067, %v3367
        %v3369 = vpop.f32.mrb[0].mxu0
        %v3370 = vpop.f32.mrb[0].mxu0
        %v3371 = vadd.f32 %v3067, %v3370
        %v3372 = vpop.f32.mrb[0].mxu0
        %3373 = vmatprep.mubr.bf16.mxu0 0
        %3374 = vmatmul.mubr.bf16.gmra.mrb[0].mxu0 %v3115
        %v3375 = vpop.f32.mrb[0].mxu0
        %v3376 = vadd.f32 %v3067, %v3375
        %v3377 = vpop.f32.mrb[0].mxu0
        %v3378 = vpop.f32.mrb[0].mxu0
        %v3379 = vadd.f32 %v3067, %v3378
        %v3380 = vpop.f32.mrb[0].mxu0
        %3381 = vmatprep.mubr.bf16.mxu0 0
        %3382 = vmatmul.mubr.bf16.gmra.mrb[0].mxu0 %v3118
        %v3383 = vpop.f32.mrb[0].mxu0
        %v3384 = vadd.f32 %v3067, %v3383
        %v3385 = vpop.f32.mrb[0].mxu0
        %v3386 = vpop.f32.mrb[0].mxu0
        %v3387 = vadd.f32 %v3067, %v3386
        %v3388 = vpop.f32.mrb[0].mxu0
        %3389 = vmatprep.mubr.bf16.mxu0 0
        %3390 = vmatmul.mubr.bf16.gmra.mrb[0].mxu0 %v3121
        %v3391 = vpop.f32.mrb[0].mxu0
        %v3392 = vadd.f32 %v3067, %v3391
        %v3393 = vpop.f32.mrb[0].mxu0
        %v3394 = vpop.f32.mrb[0].mxu0
        %v3395 = vadd.f32 %v3067, %v3394
        %v3396 = vpop.f32.mrb[0].mxu0
        %3397 = vmatprep.mubr.bf16.mxu0 0
        %3398 = vmatmul.mubr.bf16.gmra.mrb[0].mxu0 %v3124
        %v3399 = vpop.f32.mrb[0].mxu0
        %v3400 = vadd.f32 %v3067, %v3399
        %v3401 = vpop.f32.mrb[0].mxu0
        %v3402 = vpop.f32.mrb[0].mxu0
        %v3403 = vadd.f32 %v3067, %v3402
        %v3404 = vpop.f32.mrb[0].mxu0
        %3405 = vmatprep.mubr.bf16.mxu0 0
        %3406 = vmatmul.mubr.bf16.gmra.mrb[0].mxu0 %v3127
        %v3407 = vpop.f32.mrb[0].mxu0
        %v3408 = vadd.f32 %v3067, %v3407
        %v3409 = vpop.f32.mrb[0].mxu0
        %v3410 = vpop.f32.mrb[0].mxu0
        %v3411 = vadd.f32 %v3067, %v3410
        %v3412 = vpop.f32.mrb[0].mxu0
        %3413 = vmatprep.mubr.bf16.mxu0 0
        %3414 = vmatmul.mubr.bf16.gmra.mrb[0].mxu0 %v3130
        %v3415 = vpop.f32.mrb[0].mxu0
        %v3416 = vadd.f32 %v3067, %v3415
        %v3417 = vpop.f32.mrb[0].mxu0
        %v3418 = vpop.f32.mrb[0].mxu0
        %v3419 = vadd.f32 %v3067, %v3418
        %v3420 = vpop.f32.mrb[0].mxu0
        %3421 = vmatprep.mubr.bf16.mxu0 0
        %3422 = vmatmul.mubr.bf16.gmra.mrb[0].mxu0 %v3133
        %v3423 = vpop.f32.mrb[0].mxu0
        %v3424 = vadd.f32 %v3067, %v3423
        %v3425 = vpop.f32.mrb[0].mxu0
        %v3426 = vpop.f32.mrb[0].mxu0
        %v3427 = vadd.f32 %v3067, %v3426
        %v3428 = vpop.f32.mrb[0].mxu0
        %3429 = vmatprep.mubr.bf16.mxu0 0
        %3430 = vmatmul.mubr.bf16.gmra.mrb[0].mxu0 %v3136
        %v3431 = vpop.f32.mrb[0].mxu0
        %v3432 = vadd.f32 %v3067, %v3431
        %v3433 = vpop.f32.mrb[0].mxu0
        %v3434 = vpop.f32.mrb[0].mxu0
        %v3435 = vadd.f32 %v3067, %v3434
        %v3436 = vpop.f32.mrb[0].mxu0
        %3437 = vmatprep.mubr.bf16.mxu0 0
        %3438 = vmatmul.mubr.bf16.gmra.mrb[0].mxu0 %v3139
        %v3439 = vpop.f32.mrb[0].mxu0
        %v3440 = vadd.f32 %v3067, %v3439
        %v3441 = vpop.f32.mrb[0].mxu0
        %v3442 = vpop.f32.mrb[0].mxu0
        %v3443 = vadd.f32 %v3067, %v3442
        %v3444 = vpop.f32.mrb[0].mxu0
        %3445 = vmatprep.mubr.bf16.mxu0 0
        %3446 = vmatmul.mubr.bf16.gmra.mrb[0].mxu0 %v3142
        %v3447 = vpop.f32.mrb[0].mxu0
        %v3448 = vadd.f32 %v3067, %v3447
        %v3449 = vpop.f32.mrb[0].mxu0
        %v3450 = vpop.f32.mrb[0].mxu0
        %v3451 = vadd.f32 %v3067, %v3450
        %v3452 = vpop.f32.mrb[0].mxu0
        %3453 = vmatprep.mubr.bf16.mxu0 0
        %3454 = vmatmul.mubr.bf16.gmra.mrb[0].mxu0 %v3145
        %v3455 = vpop.f32.mrb[0].mxu0
        %v3456 = vadd.f32 %v3067, %v3455
        %v3457 = vpop.f32.mrb[0].mxu0
        %v3458 = vpop.f32.mrb[0].mxu0
        %v3459 = vadd.f32 %v3067, %v3458
        %v3460 = vpop.f32.mrb[0].mxu0
        %3461 = vmatprep.mubr.bf16.mxu0 0
        %3462 = vmatmul.mubr.bf16.gmra.mrb[0].mxu0 %v3148
        %v3463 = vpop.f32.mrb[0].mxu0
        %v3464 = vadd.f32 %v3067, %v3463
        %v3465 = vpop.f32.mrb[0].mxu0
        %v3466 = vpop.f32.mrb[0].mxu0
        %v3467 = vadd.f32 %v3067, %v3466
        %v3468 = vpop.f32.mrb[0].mxu0
        %3469 = vmatprep.mubr.bf16.mxu0 0
        %3470 = vmatmul.mubr.bf16.gmra.mrb[0].mxu0 %v3151
        %v3471 = vpop.f32.mrb[0].mxu0
        %v3472 = vadd.f32 %v3067, %v3471
        %v3473 = vpop.f32.mrb[0].mxu0
        %v3474 = vpop.f32.mrb[0].mxu0
        %v3475 = vadd.f32 %v3067, %v3474
        %v3476 = vpop.f32.mrb[0].mxu0
        %3477 = vmatprep.mubr.bf16.mxu0 0
        %3478 = vmatmul.mubr.bf16.gmra.mrb[0].mxu0 %v3154
        %v3479 = vpop.f32.mrb[0].mxu0
        %v3480 = vadd.f32 %v3067, %v3479
        %v3481 = vpop.f32.mrb[0].mxu0
        %v3482 = vpop.f32.mrb[0].mxu0
        %v3483 = vadd.f32 %v3067, %v3482
        %v3484 = vpop.f32.mrb[0].mxu0
        %3485 = vmatprep.mubr.bf16.mxu0 0
        %3486 = vmatmul.mubr.bf16.gmra.mrb[0].mxu0 %v3157
        %v3487 = vpop.f32.mrb[0].mxu0
        %v3488 = vadd.f32 %v3067, %v3487
        %v3489 = vpop.f32.mrb[0].mxu0
        %v3490 = vpop.f32.mrb[0].mxu0
        %v3491 = vadd.f32 %v3067, %v3490
        %v3492 = vpop.f32.mrb[0].mxu0
        %3493 = vmatprep.mubr.bf16.mxu0 0
        %3494 = vmatmul.mubr.bf16.gmra.mrb[0].mxu0 %v3160
        %v3495 = vpop.f32.mrb[0].mxu0
        %v3496 = vadd.f32 %v3067, %v3495
        %v3497 = vpop.f32.mrb[0].mxu0
        %v3498 = vpop.f32.mrb[0].mxu0
        %v3499 = vadd.f32 %v3067, %v3498
        %v3500 = vpop.f32.mrb[0].mxu0
        %3501 = vmatprep.mubr.bf16.mxu0 0
        %3502 = vmatmul.mubr.bf16.gmra.mrb[0].mxu0 %v3163
        %v3503 = vpop.f32.mrb[0].mxu0
        %v3504 = vadd.f32 %v3067, %v3503
        %v3505 = vpop.f32.mrb[0].mxu0
        %v3506 = vpop.f32.mrb[0].mxu0
        %v3507 = vadd.f32 %v3067, %v3506
        %v3508 = vpop.f32.mrb[0].mxu0
        %3509 = vmatprep.mubr.bf16.mxu0 0
        %3510 = vmatmul.mubr.bf16.gmra.mrb[0].mxu0 %v3166
        %v3511 = vpop.f32.mrb[0].mxu0
        %v3512 = vadd.f32 %v3067, %v3511
        %v3513 = vpop.f32.mrb[0].mxu0
        %v3514 = vpop.f32.mrb[0].mxu0
        %v3515 = vadd.f32 %v3067, %v3514
        %v3516 = vpop.f32.mrb[0].mxu0
        %3517 = vmatprep.mubr.bf16.mxu0 0
        %3518 = vmatmul.mubr.bf16.gmra.mrb[0].mxu0 %v3169
        %v3519 = vpop.f32.mrb[0].mxu0
        %v3520 = vadd.f32 %v3067, %v3519
        %v3521 = vpop.f32.mrb[0].mxu0
        %v3522 = vpop.f32.mrb[0].mxu0
        %v3523 = vadd.f32 %v3067, %v3522
        %v3524 = vpop.f32.mrb[0].mxu0
        %3525 = vmatprep.mubr.bf16.mxu0 0
        %3526 = vmatmul.mubr.bf16.gmra.mrb[0].mxu0 %v3172
        %v3527 = vpop.f32.mrb[0].mxu0
        %v3528 = vadd.f32 %v3067, %v3527
        %v3529 = vpop.f32.mrb[0].mxu0
        %v3530 = vpop.f32.mrb[0].mxu0
        %v3531 = vadd.f32 %v3067, %v3530
        %v3532 = vpop.f32.mrb[0].mxu0
        %3533 = vmatprep.mubr.bf16.mxu0 0
        %3534 = vmatmul.mubr.bf16.gmra.mrb[0].mxu0 %v3175
        %v3535 = vpop.f32.mrb[0].mxu0
        %v3536 = vadd.f32 %v3067, %v3535
        %v3537 = vpop.f32.mrb[0].mxu0
        %v3538 = vpop.f32.mrb[0].mxu0
        %v3539 = vadd.f32 %v3067, %v3538
        %v3540 = vpop.f32.mrb[0].mxu0
        %3541 = vmatprep.mubr.bf16.mxu0 0
        %3542 = vmatmul.mubr.bf16.gmra.mrb[0].mxu0 %v3178
        %v3543 = vpop.f32.mrb[0].mxu0
        %v3544 = vadd.f32 %v3067, %v3543
        %v3545 = vpop.f32.mrb[0].mxu0
        %v3546 = vpop.f32.mrb[0].mxu0
        %v3547 = vadd.f32 %v3067, %v3546
        %v3548 = vpop.f32.mrb[0].mxu0
        %3549 = vmatprep.mubr.bf16.mxu0 0
        %3550 = vmatmul.mubr.bf16.gmra.mrb[0].mxu0 %v3181
        %v3551 = vpop.f32.mrb[0].mxu0
        %v3552 = vadd.f32 %v3067, %v3551
        %v3553 = vpop.f32.mrb[0].mxu0
        %v3554 = vpop.f32.mrb[0].mxu0
        %v3555 = vadd.f32 %v3067, %v3554
        %v3556 = vpop.f32.mrb[0].mxu0
        %3557 = vmatprep.mubr.bf16.mxu0 0
        %3558 = vmatmul.mubr.bf16.gmra.mrb[0].mxu0 %v3184
        %v3559 = vpop.f32.mrb[0].mxu0
        %v3560 = vadd.f32 %v3067, %v3559
        %v3561 = vpop.f32.mrb[0].mxu0
        %v3562 = vpop.f32.mrb[0].mxu0
        %v3563 = vadd.f32 %v3067, %v3562
        %v3564 = vpop.f32.mrb[0].mxu0
        %3565 = vmatprep.mubr.bf16.mxu0 0
        %3566 = vmatmul.mubr.bf16.gmra.mrb[0].mxu0 %v3187
        %v3567 = vpop.f32.mrb[0].mxu0
        %v3568 = vadd.f32 %v3067, %v3567
        %v3569 = vpop.f32.mrb[0].mxu0
        %v3570 = vpop.f32.mrb[0].mxu0
        %v3571 = vadd.f32 %v3067, %v3570
        %v3572 = vpop.f32.mrb[0].mxu0
        %3573 = vmatprep.mubr.bf16.mxu0 0
        %3574 = vmatmul.mubr.bf16.gmra.mrb[0].mxu0 %v3190
        %v3575 = vpop.f32.mrb[0].mxu0
        %v3576 = vadd.f32 %v3067, %v3575
        %v3577 = vpop.f32.mrb[0].mxu0
        %v3578 = vpop.f32.mrb[0].mxu0
        %v3579 = vadd.f32 %v3067, %v3578
        %v3580 = vpop.f32.mrb[0].mxu0
        %3581 = vmatprep.mubr.bf16.mxu0 0
        %3582 = vmatmul.mubr.bf16.gmra.mrb[0].mxu0 %v3193
        %v3583 = vpop.f32.mrb[0].mxu0
        %v3584 = vadd.f32 %v3067, %v3583
        %v3585 = vpop.f32.mrb[0].mxu0
        %v3586 = vpop.f32.mrb[0].mxu0
        %v3587 = vadd.f32 %v3067, %v3586
        %v3588 = vpop.f32.mrb[0].mxu0
        %3589 = vmatprep.mubr.bf16.mxu0 0
        %3590 = vmatmul.mubr.bf16.gmra.mrb[0].mxu0 %v3196
        %v3591 = vpop.f32.mrb[0].mxu0
        %v3592 = vadd.f32 %v3067, %v3591
        %v3593 = vpop.f32.mrb[0].mxu0
        %v3594 = vpop.f32.mrb[0].mxu0
        %v3595 = vadd.f32 %v3067, %v3594
        %v3596 = vpop.f32.mrb[0].mxu0
        %3597 = vmatprep.mubr.bf16.mxu0 0
        %3598 = vmatmul.mubr.bf16.gmra.mrb[0].mxu0 %v3199
        %v3599 = vpop.f32.mrb[0].mxu0
        %v3600 = vadd.f32 %v3067, %v3599
        %v3601 = vpop.f32.mrb[0].mxu0
        %v3602 = vpop.f32.mrb[0].mxu0
        %v3603 = vadd.f32 %v3067, %v3602
        %v3604 = vpop.f32.mrb[0].mxu0
        %3605 = vmatprep.mubr.bf16.mxu0 0
        %3606 = vmatmul.mubr.bf16.gmra.mrb[0].mxu0 %v3202
        %v3607 = vpop.f32.mrb[0].mxu0
        %v3608 = vadd.f32 %v3067, %v3607
        %v3609 = vpop.f32.mrb[0].mxu0
        %v3610 = vpop.f32.mrb[0].mxu0
        %v3611 = vadd.f32 %v3067, %v3610
        %v3612 = vpop.f32.mrb[0].mxu0
        %3613 = vmatprep.mubr.bf16.mxu0 0
        %3614 = vmatmul.mubr.bf16.gmra.mrb[0].mxu0 %v3205
        %v3615 = vpop.f32.mrb[0].mxu0
        %v3616 = vadd.f32 %v3067, %v3615
        %v3617 = vpop.f32.mrb[0].mxu0
        %v3618 = vpop.f32.mrb[0].mxu0
        %v3619 = vadd.f32 %v3067, %v3618
        %v3620 = vpop.f32.mrb[0].mxu0
        %3621 = vmatprep.mubr.bf16.mxu0 0
        %3622 = vmatmul.mubr.bf16.gmra.mrb[0].mxu0 %v3208
        %v3623 = vpop.f32.mrb[0].mxu0
        %v3624 = vadd.f32 %v3067, %v3623
        %v3625 = vpop.f32.mrb[0].mxu0
        %v3626 = vpop.f32.mrb[0].mxu0
        %v3627 = vadd.f32 %v3067, %v3626
        %v3628 = vpop.f32.mrb[0].mxu0
        %3629 = vmatprep.mubr.bf16.mxu0 0
        %3630 = vmatmul.mubr.bf16.gmra.mrb[0].mxu0 %v3211
        %v3631 = vpop.f32.mrb[0].mxu0
        %v3632 = vadd.f32 %v3067, %v3631
        %v3633 = vpop.f32.mrb[0].mxu0
        %v3634 = vpop.f32.mrb[0].mxu0
        %v3635 = vadd.f32 %v3067, %v3634
        %v3636 = vpop.f32.mrb[0].mxu0
        %3637 = vmatprep.mubr.bf16.mxu0 0
        %3638 = vmatmul.mubr.bf16.gmra.mrb[0].mxu0 %v3214
        %v3639 = vpop.f32.mrb[0].mxu0
        %v3640 = vadd.f32 %v3067, %v3639
        %v3641 = vpop.f32.mrb[0].mxu0
        %v3642 = vpop.f32.mrb[0].mxu0
        %v3643 = vadd.f32 %v3067, %v3642
        %v3644 = vpop.f32.mrb[0].mxu0
        %3645 = vmatprep.mubr.bf16.mxu0 0
        %3646 = vmatmul.mubr.bf16.gmra.mrb[0].mxu0 %v3217
        %v3647 = vpop.f32.mrb[0].mxu0
        %v3648 = vadd.f32 %v3067, %v3647
        %v3649 = vpop.f32.mrb[0].mxu0
        %v3650 = vpop.f32.mrb[0].mxu0
        %v3651 = vadd.f32 %v3067, %v3650
        %v3652 = vpop.f32.mrb[0].mxu0
        %3653 = vmatprep.mubr.bf16.mxu0 0
        %3654 = vmatmul.mubr.bf16.gmra.mrb[0].mxu0 %v3220
        %v3655 = vpop.f32.mrb[0].mxu0
        %v3656 = vadd.f32 %v3067, %v3655
        %v3657 = vpop.f32.mrb[0].mxu0
        %v3658 = vpop.f32.mrb[0].mxu0
        %v3659 = vadd.f32 %v3067, %v3658
        %v3660 = vpop.f32.mrb[0].mxu0
        %3661 = vmatprep.mubr.bf16.mxu0 0
        %3662 = vmatmul.mubr.bf16.gmra.mrb[0].mxu0 %v3223
        %v3663 = vpop.f32.mrb[0].mxu0
        %v3664 = vadd.f32 %v3067, %v3663
        %v3665 = vpop.f32.mrb[0].mxu0
        %v3666 = vpop.f32.mrb[0].mxu0
        %v3667 = vadd.f32 %v3067, %v3666
        %v3668 = vpop.f32.mrb[0].mxu0
        %3669 = vmatprep.mubr.bf16.mxu0 0
        %3670 = vmatmul.mubr.bf16.gmra.mrb[0].mxu0 %v3226
        %v3671 = vpop.f32.mrb[0].mxu0
        %v3672 = vadd.f32 %v3067, %v3671
        %v3673 = vpop.f32.mrb[0].mxu0
        %v3674 = vpop.f32.mrb[0].mxu0
        %v3675 = vadd.f32 %v3067, %v3674
        %v3676 = vpop.f32.mrb[0].mxu0
        %3677 = vmatprep.mubr.bf16.mxu0 0
        %3678 = vmatmul.mubr.bf16.gmra.mrb[0].mxu0 %v3229
        %v3679 = vpop.f32.mrb[0].mxu0
        %v3680 = vadd.f32 %v3067, %v3679
        %v3681 = vpop.f32.mrb[0].mxu0
        %v3682 = vpop.f32.mrb[0].mxu0
        %v3683 = vadd.f32 %v3067, %v3682
        %v3684 = vpop.f32.mrb[0].mxu0
        %3685 = vmatprep.mubr.bf16.mxu0 0
        %3686 = vmatmul.mubr.bf16.gmra.mrb[0].mxu0 %v3232
        %v3687 = vpop.f32.mrb[0].mxu0
        %v3688 = vadd.f32 %v3067, %v3687
        %v3689 = vpop.f32.mrb[0].mxu0
        %v3690 = vpop.f32.mrb[0].mxu0
        %v3691 = vadd.f32 %v3067, %v3690
        %v3692 = vpop.f32.mrb[0].mxu0
        %3693 = vmatprep.mubr.bf16.mxu0 0
        %3694 = vmatmul.mubr.bf16.gmra.mrb[0].mxu0 %v3235
        %v3695 = vpop.f32.mrb[0].mxu0
        %v3696 = vadd.f32 %v3067, %v3695
        %v3697 = vpop.f32.mrb[0].mxu0
        %v3698 = vpop.f32.mrb[0].mxu0
        %v3699 = vadd.f32 %v3067, %v3698
        %v3700 = vpop.f32.mrb[0].mxu0
        %3701 = vmatprep.mubr.bf16.mxu0 0
        %3702 = vmatmul.mubr.bf16.gmra.mrb[0].mxu0 %v3238
        %v3703 = vpop.f32.mrb[0].mxu0
        %v3704 = vadd.f32 %v3067, %v3703
        %v3705 = vpop.f32.mrb[0].mxu0
        %v3706 = vpop.f32.mrb[0].mxu0
        %v3707 = vadd.f32 %v3067, %v3706
        %v3708 = vpop.f32.mrb[0].mxu0
        %3709 = vmatprep.mubr.bf16.mxu0 0
        %3710 = vmatmul.mubr.bf16.gmra.mrb[0].mxu0 %v3241
        %v3711 = vpop.f32.mrb[0].mxu0
        %v3712 = vadd.f32 %v3067, %v3711
        %v3713 = vpop.f32.mrb[0].mxu0
        %v3714 = vpop.f32.mrb[0].mxu0
        %v3715 = vadd.f32 %v3067, %v3714
        %v3716 = vpop.f32.mrb[0].mxu0
        %3717 = vmatprep.mubr.bf16.mxu0 0
        %3718 = vmatmul.mubr.bf16.gmra.mrb[0].mxu0 %v3244
        %v3719 = vpop.f32.mrb[0].mxu0
        %v3720 = vadd.f32 %v3067, %v3719
        %v3721 = vpop.f32.mrb[0].mxu0
        %v3722 = vpop.f32.mrb[0].mxu0
        %v3723 = vadd.f32 %v3067, %v3722
        %v3724 = vpop.f32.mrb[0].mxu0
        %3725 = vmatprep.mubr.bf16.mxu0 0
        %3726 = vmatmul.mubr.bf16.gmra.mrb[0].mxu0 %v3247
        %v3727 = vpop.f32.mrb[0].mxu0
        %v3728 = vadd.f32 %v3067, %v3727
        %v3729 = vpop.f32.mrb[0].mxu0
        %v3730 = vpop.f32.mrb[0].mxu0
        %v3731 = vadd.f32 %v3067, %v3730
        %v3732 = vpop.f32.mrb[0].mxu0
        %3733 = vmatprep.mubr.bf16.mxu0 0
        %3734 = vmatmul.mubr.bf16.gmra.mrb[0].mxu0 %v3250
        %v3735 = vpop.f32.mrb[0].mxu0
        %v3736 = vadd.f32 %v3067, %v3735
        %v3737 = vpop.f32.mrb[0].mxu0
        %v3738 = vpop.f32.mrb[0].mxu0
        %v3739 = vadd.f32 %v3067, %v3738
        %v3740 = vpop.f32.mrb[0].mxu0
        %3741 = vmatprep.mubr.bf16.mxu0 0
        %3742 = vmatmul.mubr.bf16.gmra.mrb[0].mxu0 %v3253
        %v3743 = vpop.f32.mrb[0].mxu0
        %v3744 = vadd.f32 %v3067, %v3743
        %v3745 = vpop.f32.mrb[0].mxu0
        %v3746 = vpop.f32.mrb[0].mxu0
        %v3747 = vadd.f32 %v3067, %v3746
        %v3748 = vpop.f32.mrb[0].mxu0
        %3749 = vmatprep.mubr.bf16.mxu0 0
        %3750 = vmatmul.mubr.bf16.gmra.mrb[0].mxu0 %v3256
        %v3751 = vpop.f32.mrb[0].mxu0
        %v3752 = vadd.f32 %v3067, %v3751
        %v3753 = vpop.f32.mrb[0].mxu0
        %v3754 = vpop.f32.mrb[0].mxu0
        %v3755 = vadd.f32 %v3067, %v3754
        %v3756 = vpop.f32.mrb[0].mxu0
        %3757 = vmatprep.mubr.bf16.mxu0 0
        %3758 = vmatmul.mubr.bf16.gmra.mrb[0].mxu0 %v3259
        %v3759 = vpop.f32.mrb[0].mxu0
        %v3760 = vadd.f32 %v3067, %v3759
        %v3761 = vpop.f32.mrb[0].mxu0
        %v3762 = vpop.f32.mrb[0].mxu0
        %v3763 = vadd.f32 %v3067, %v3762
        %v3764 = vpop.f32.mrb[0].mxu0
        %3765 = vmatprep.mubr.bf16.mxu0 0
        %3766 = vmatmul.mubr.bf16.gmra.mrb[0].mxu0 %v3262
        %v3767 = vpop.f32.mrb[0].mxu0
        %v3768 = vadd.f32 %v3067, %v3767
        %v3769 = vpop.f32.mrb[0].mxu0
        %v3770 = vpop.f32.mrb[0].mxu0
        %v3771 = vadd.f32 %v3067, %v3770
        %v3772 = vpop.f32.mrb[0].mxu0
        %3773 = vmatprep.mubr.bf16.mxu0 0
        %3774 = vmatmul.mubr.bf16.gmra.mrb[0].mxu0 %v3265
        %v3775 = vpop.f32.mrb[0].mxu0
        %v3776 = vadd.f32 %v3067, %v3775
        %v3777 = vpop.f32.mrb[0].mxu0
        %v3778 = vpop.f32.mrb[0].mxu0
        %v3779 = vadd.f32 %v3067, %v3778
        %v3780 = vpop.f32.mrb[0].mxu0
        %3781 = vmatprep.mubr.bf16.mxu0 0
        %3782 = vmatmul.mubr.bf16.gmra.mrb[0].mxu0 %v3268
        %v3783 = vpop.f32.mrb[0].mxu0
        %v3784 = vadd.f32 %v3067, %v3783
        %v3785 = vpop.f32.mrb[0].mxu0
        %v3786 = vpop.f32.mrb[0].mxu0
        %v3787 = vadd.f32 %v3067, %v3786
        %v3788 = vpop.f32.mrb[0].mxu0
        %3789 = vmatprep.mubr.bf16.mxu0 0
        %3790 = vmatmul.mubr.bf16.gmra.mrb[0].mxu0 %v3271
        %v3791 = vpop.f32.mrb[0].mxu0
        %v3792 = vadd.f32 %v3067, %v3791
        %v3793 = vpop.f32.mrb[0].mxu0
        %v3794 = vpop.f32.mrb[0].mxu0
        %v3795 = vadd.f32 %v3067, %v3794
        %v3796 = vpop.f32.mrb[0].mxu0
        %3797 = vmatprep.mubr.bf16.mxu0 0
        %3798 = vmatmul.mubr.bf16.gmra.mrb[0].mxu0 %v3274
        %v3799 = vpop.f32.mrb[0].mxu0
        %v3800 = vadd.f32 %v3067, %v3799
        %v3801 = vpop.f32.mrb[0].mxu0
        %v3802 = vpop.f32.mrb[0].mxu0
        %v3803 = vadd.f32 %v3067, %v3802
        %v3804 = vpop.f32.mrb[0].mxu0
        %3805 = vmatprep.mubr.bf16.mxu0 0
        %3806 = vmatmul.mubr.bf16.gmra.mrb[0].mxu0 %v3277
        %v3807 = vpop.f32.mrb[0].mxu0
        %v3808 = vadd.f32 %v3067, %v3807
        %v3809 = vpop.f32.mrb[0].mxu0
        %v3810 = vpop.f32.mrb[0].mxu0
        %v3811 = vadd.f32 %v3067, %v3810
        %v3812 = vpop.f32.mrb[0].mxu0
        %3813 = vmatprep.mubr.bf16.mxu0 0
        %3814 = vmatmul.mubr.bf16.gmra.mrb[0].mxu0 %v3280
        %v3815 = vpop.f32.mrb[0].mxu0
        %v3816 = vadd.f32 %v3067, %v3815
        %v3817 = vpop.f32.mrb[0].mxu0
        %v3818 = vpop.f32.mrb[0].mxu0
        %v3819 = vadd.f32 %v3067, %v3818
        %v3820 = vpop.f32.mrb[0].mxu0
        %3821 = vmatprep.mubr.bf16.mxu0 0
        %3822 = vmatmul.mubr.bf16.gmra.mrb[0].mxu0 %v3283
        %v3823 = vpop.f32.mrb[0].mxu0
        %v3824 = vadd.f32 %v3067, %v3823
        %v3825 = vpop.f32.mrb[0].mxu0
        %v3826 = vpop.f32.mrb[0].mxu0
        %v3827 = vadd.f32 %v3067, %v3826
        %v3828 = vpop.f32.mrb[0].mxu0
        %3829 = vdwg.mxu0
        %v3830 = vmax.f32 %v3320, 0.0
        %v3831 = vmax.f32 %v3323, 0.0
        %v3832 = vmax.f32 %v3328, 0.0
        %v3833 = vmax.f32 %v3331, 0.0
        %v3834 = vmax.f32 %v3336, 0.0
        %v3835 = vmax.f32 %v3339, 0.0
        %v3836 = vmax.f32 %v3344, 0.0
        %v3837 = vmax.f32 %v3347, 0.0
        %v3838 = vmax.f32 %v3352, 0.0
        %v3839 = vmax.f32 %v3355, 0.0
        %v3840 = vmax.f32 %v3360, 0.0
        %v3841 = vmax.f32 %v3363, 0.0
        %v3842 = vmax.f32 %v3368, 0.0
        %v3843 = vmax.f32 %v3371, 0.0
        %v3844 = vmax.f32 %v3376, 0.0
        %v3845 = vmax.f32 %v3379, 0.0
        %v3846 = vmax.f32 %v3384, 0.0
        %v3847 = vmax.f32 %v3387, 0.0
        %v3848 = vmax.f32 %v3392, 0.0
        %v3849 = vmax.f32 %v3395, 0.0
        %v3850 = vmax.f32 %v3400, 0.0
        %v3851 = vmax.f32 %v3403, 0.0
        %v3852 = vmax.f32 %v3408, 0.0
        %v3853 = vmax.f32 %v3411, 0.0
        %v3854 = vmax.f32 %v3416, 0.0
        %v3855 = vmax.f32 %v3419, 0.0
        %v3856 = vmax.f32 %v3424, 0.0
        %v3857 = vmax.f32 %v3427, 0.0
        %v3858 = vmax.f32 %v3432, 0.0
        %v3859 = vmax.f32 %v3435, 0.0
        %v3860 = vmax.f32 %v3440, 0.0
        %v3861 = vmax.f32 %v3443, 0.0
        %v3862 = vmax.f32 %v3448, 0.0
        %v3863 = vmax.f32 %v3451, 0.0
        %v3864 = vmax.f32 %v3456, 0.0
        %v3865 = vmax.f32 %v3459, 0.0
        %v3866 = vmax.f32 %v3464, 0.0
        %v3867 = vmax.f32 %v3467, 0.0
        %v3868 = vmax.f32 %v3472, 0.0
        %v3869 = vmax.f32 %v3475, 0.0
        %v3870 = vmax.f32 %v3480, 0.0
        %v3871 = vmax.f32 %v3483, 0.0
        %v3872 = vmax.f32 %v3488, 0.0
        %v3873 = vmax.f32 %v3491, 0.0
        %v3874 = vmax.f32 %v3496, 0.0
        %v3875 = vmax.f32 %v3499, 0.0
        %v3876 = vmax.f32 %v3504, 0.0
        %v3877 = vmax.f32 %v3507, 0.0
        %v3878 = vmax.f32 %v3512, 0.0
        %v3879 = vmax.f32 %v3515, 0.0
        %v3880 = vmax.f32 %v3520, 0.0
        %v3881 = vmax.f32 %v3523, 0.0
        %v3882 = vmax.f32 %v3528, 0.0
        %v3883 = vmax.f32 %v3531, 0.0
        %v3884 = vmax.f32 %v3536, 0.0
        %v3885 = vmax.f32 %v3539, 0.0
        %v3886 = vmax.f32 %v3544, 0.0
        %v3887 = vmax.f32 %v3547, 0.0
        %v3888 = vmax.f32 %v3552, 0.0
        %v3889 = vmax.f32 %v3555, 0.0
        %v3890 = vmax.f32 %v3560, 0.0
        %v3891 = vmax.f32 %v3563, 0.0
        %v3892 = vmax.f32 %v3568, 0.0
        %v3893 = vmax.f32 %v3571, 0.0
        %v3894 = vmax.f32 %v3576, 0.0
        %v3895 = vmax.f32 %v3579, 0.0
        %v3896 = vmax.f32 %v3584, 0.0
        %v3897 = vmax.f32 %v3587, 0.0
        %v3898 = vmax.f32 %v3592, 0.0
        %v3899 = vmax.f32 %v3595, 0.0
        %v3900 = vmax.f32 %v3600, 0.0
        %v3901 = vmax.f32 %v3603, 0.0
        %v3902 = vmax.f32 %v3608, 0.0
        %v3903 = vmax.f32 %v3611, 0.0
        %v3904 = vmax.f32 %v3616, 0.0
        %v3905 = vmax.f32 %v3619, 0.0
        %v3906 = vmax.f32 %v3624, 0.0
        %v3907 = vmax.f32 %v3627, 0.0
        %v3908 = vmax.f32 %v3632, 0.0
        %v3909 = vmax.f32 %v3635, 0.0
        %v3910 = vmax.f32 %v3640, 0.0
        %v3911 = vmax.f32 %v3643, 0.0
        %v3912 = vmax.f32 %v3648, 0.0
        %v3913 = vmax.f32 %v3651, 0.0
        %v3914 = vmax.f32 %v3656, 0.0
        %v3915 = vmax.f32 %v3659, 0.0
        %v3916 = vmax.f32 %v3664, 0.0
        %v3917 = vmax.f32 %v3667, 0.0
        %v3918 = vmax.f32 %v3672, 0.0
        %v3919 = vmax.f32 %v3675, 0.0
        %v3920 = vmax.f32 %v3680, 0.0
        %v3921 = vmax.f32 %v3683, 0.0
        %v3922 = vmax.f32 %v3688, 0.0
        %v3923 = vmax.f32 %v3691, 0.0
        %v3924 = vmax.f32 %v3696, 0.0
        %v3925 = vmax.f32 %v3699, 0.0
        %v3926 = vmax.f32 %v3704, 0.0
        %v3927 = vmax.f32 %v3707, 0.0
        %v3928 = vmax.f32 %v3712, 0.0
        %v3929 = vmax.f32 %v3715, 0.0
        %v3930 = vmax.f32 %v3720, 0.0
        %v3931 = vmax.f32 %v3723, 0.0
        %v3932 = vmax.f32 %v3728, 0.0
        %v3933 = vmax.f32 %v3731, 0.0
        %v3934 = vmax.f32 %v3736, 0.0
        %v3935 = vmax.f32 %v3739, 0.0
        %v3936 = vmax.f32 %v3744, 0.0
        %v3937 = vmax.f32 %v3747, 0.0
        %v3938 = vmax.f32 %v3752, 0.0
        %v3939 = vmax.f32 %v3755, 0.0
        %v3940 = vmax.f32 %v3760, 0.0
        %v3941 = vmax.f32 %v3763, 0.0
        %v3942 = vmax.f32 %v3768, 0.0
        %v3943 = vmax.f32 %v3771, 0.0
        %v3944 = vmax.f32 %v3776, 0.0
        %v3945 = vmax.f32 %v3779, 0.0
        %v3946 = vmax.f32 %v3784, 0.0
        %v3947 = vmax.f32 %v3787, 0.0
        %v3948 = vmax.f32 %v3792, 0.0
        %v3949 = vmax.f32 %v3795, 0.0
        %v3950 = vmax.f32 %v3800, 0.0
        %v3951 = vmax.f32 %v3803, 0.0
        %v3952 = vmax.f32 %v3808, 0.0
        %v3953 = vmax.f32 %v3811, 0.0
        %v3954 = vmax.f32 %v3816, 0.0
        %v3955 = vmax.f32 %v3819, 0.0
        %v3956 = vmax.f32 %v3824, 0.0
        %v3957 = vmax.f32 %v3827, 0.0
        %v3958 = vpack.c.bf16 %v3831, %v3830
        %v3959 = vpack.c.bf16 %v3833, %v3832
        %v3960 = vpack.c.bf16 %v3835, %v3834
        %v3961 = vpack.c.bf16 %v3837, %v3836
        %v3962 = vpack.c.bf16 %v3839, %v3838
        %v3963 = vpack.c.bf16 %v3841, %v3840
        %v3964 = vpack.c.bf16 %v3843, %v3842
        %v3965 = vpack.c.bf16 %v3845, %v3844
        %v3966 = vpack.c.bf16 %v3847, %v3846
        %v3967 = vpack.c.bf16 %v3849, %v3848
        %v3968 = vpack.c.bf16 %v3851, %v3850
        %v3969 = vpack.c.bf16 %v3853, %v3852
        %v3970 = vpack.c.bf16 %v3855, %v3854
        %v3971 = vpack.c.bf16 %v3857, %v3856
        %v3972 = vpack.c.bf16 %v3859, %v3858
        %v3973 = vpack.c.bf16 %v3861, %v3860
        %v3974 = vpack.c.bf16 %v3863, %v3862
        %v3975 = vpack.c.bf16 %v3865, %v3864
        %v3976 = vpack.c.bf16 %v3867, %v3866
        %v3977 = vpack.c.bf16 %v3869, %v3868
        %v3978 = vpack.c.bf16 %v3871, %v3870
        %v3979 = vpack.c.bf16 %v3873, %v3872
        %v3980 = vpack.c.bf16 %v3875, %v3874
        %v3981 = vpack.c.bf16 %v3877, %v3876
        %v3982 = vpack.c.bf16 %v3879, %v3878
        %v3983 = vpack.c.bf16 %v3881, %v3880
        %v3984 = vpack.c.bf16 %v3883, %v3882
        %v3985 = vpack.c.bf16 %v3885, %v3884
        %v3986 = vpack.c.bf16 %v3887, %v3886
        %v3987 = vpack.c.bf16 %v3889, %v3888
        %v3988 = vpack.c.bf16 %v3891, %v3890
        %v3989 = vpack.c.bf16 %v3893, %v3892
        %v3990 = vpack.c.bf16 %v3895, %v3894
        %v3991 = vpack.c.bf16 %v3897, %v3896
        %v3992 = vpack.c.bf16 %v3899, %v3898
        %v3993 = vpack.c.bf16 %v3901, %v3900
        %v3994 = vpack.c.bf16 %v3903, %v3902
        %v3995 = vpack.c.bf16 %v3905, %v3904
        %v3996 = vpack.c.bf16 %v3907, %v3906
        %v3997 = vpack.c.bf16 %v3909, %v3908
        %v3998 = vpack.c.bf16 %v3911, %v3910
        %v3999 = vpack.c.bf16 %v3913, %v3912
        %v4000 = vpack.c.bf16 %v3915, %v3914
        %v4001 = vpack.c.bf16 %v3917, %v3916
        %v4002 = vpack.c.bf16 %v3919, %v3918
        %v4003 = vpack.c.bf16 %v3921, %v3920
        %v4004 = vpack.c.bf16 %v3923, %v3922
        %v4005 = vpack.c.bf16 %v3925, %v3924
        %v4006 = vpack.c.bf16 %v3927, %v3926
        %v4007 = vpack.c.bf16 %v3929, %v3928
        %v4008 = vpack.c.bf16 %v3931, %v3930
        %v4009 = vpack.c.bf16 %v3933, %v3932
        %v4010 = vpack.c.bf16 %v3935, %v3934
        %v4011 = vpack.c.bf16 %v3937, %v3936
        %v4012 = vpack.c.bf16 %v3939, %v3938
        %v4013 = vpack.c.bf16 %v3941, %v3940
        %v4014 = vpack.c.bf16 %v3943, %v3942
        %v4015 = vpack.c.bf16 %v3945, %v3944
        %v4016 = vpack.c.bf16 %v3947, %v3946
        %v4017 = vpack.c.bf16 %v3949, %v3948
        %v4018 = vpack.c.bf16 %v3951, %v3950
        %v4019 = vpack.c.bf16 %v3953, %v3952
        %v4020 = vpack.c.bf16 %v3955, %v3954
        %v4021 = vpack.c.bf16 %v3957, %v3956
        %v4022 = vld [vmem:[#allocation11] sm:$0xf]
        %v4023 = vld [vmem:[#allocation11 + $0x4] sm:$0xf]
        %v4024 = vld [vmem:[#allocation11 + $0x8] sm:$0xf]
        %v4025 = vld [vmem:[#allocation11 + $0xc] sm:$0xf]
        %v4026 = vld [vmem:[#allocation11 + $0x10] sm:$0xf]
        %v4027 = vld [vmem:[#allocation11 + $0x14] sm:$0xf]
        %v4028 = vld [vmem:[#allocation11 + $0x18] sm:$0xf]
        %v4029 = vld [vmem:[#allocation11 + $0x1c] sm:$0xf]
        %v4030 = vld [vmem:[#allocation13] sm:$0x1]
        %v4032 = vlaneseq
        %v4033 = vshrl.u32 %v4032, 7
        %v4034 = vsub.s32 0, %v4033
        %v4035 = vrot.slane %v4030, %v4034
        %v4045 = vunpack.c.l.b16 %v4022
        %v4046 = vunpack.c.l.b16 %v4023
        %v4047 = vunpack.c.l.b16 %v4024
        %v4048 = vunpack.c.l.b16 %v4025
        %v4049 = vunpack.c.l.b16 %v4026
        %v4050 = vunpack.c.l.b16 %v4027
        %v4051 = vunpack.c.l.b16 %v4028
        %v4052 = vunpack.c.l.b16 %v4029
        %v4053 = vpack.c.b16 %v4046, %v4045
        %v4054 = vpack.c.b16 %v4048, %v4047
        %v4055 = vpack.c.b16 %v4050, %v4049
        %v4056 = vpack.c.b16 %v4052, %v4051
        %v4062 = vsel %vm2124, %v3958, 0
        %v4065 = vsel %vm2124, %v3959, 0
        %v4068 = vsel %vm2124, %v3960, 0
        %v4071 = vsel %vm2124, %v3961, 0
        %v4074 = vsel %vm2124, %v3962, 0
        %v4077 = vsel %vm2124, %v3963, 0
        %v4080 = vsel %vm2124, %v3964, 0
        %v4083 = vsel %vm2124, %v3965, 0
        %v4086 = vsel %vm2124, %v3966, 0
        %v4089 = vsel %vm2124, %v3967, 0
        %v4092 = vsel %vm2124, %v3968, 0
        %v4095 = vsel %vm2124, %v3969, 0
        %v4098 = vsel %vm2124, %v3970, 0
        %v4101 = vsel %vm2124, %v3971, 0
        %v4104 = vsel %vm2124, %v3972, 0
        %v4107 = vsel %vm2124, %v3973, 0
        %v4110 = vsel %vm2124, %v3974, 0
        %v4113 = vsel %vm2124, %v3975, 0
        %v4116 = vsel %vm2124, %v3976, 0
        %v4119 = vsel %vm2124, %v3977, 0
        %v4122 = vsel %vm2124, %v3978, 0
        %v4125 = vsel %vm2124, %v3979, 0
        %v4128 = vsel %vm2124, %v3980, 0
        %v4131 = vsel %vm2124, %v3981, 0
        %v4134 = vsel %vm2124, %v3982, 0
        %v4137 = vsel %vm2124, %v3983, 0
        %v4140 = vsel %vm2124, %v3984, 0
        %v4143 = vsel %vm2124, %v3985, 0
        %v4146 = vsel %vm2124, %v3986, 0
        %v4149 = vsel %vm2124, %v3987, 0
        %v4152 = vsel %vm2124, %v3988, 0
        %v4155 = vsel %vm2124, %v3989, 0
        %v4158 = vsel %vm2124, %v3990, 0
        %v4161 = vsel %vm2124, %v3991, 0
        %v4164 = vsel %vm2124, %v3992, 0
        %v4167 = vsel %vm2124, %v3993, 0
        %v4170 = vsel %vm2124, %v3994, 0
        %v4173 = vsel %vm2124, %v3995, 0
        %v4176 = vsel %vm2124, %v3996, 0
        %v4179 = vsel %vm2124, %v3997, 0
        %v4182 = vsel %vm2124, %v3998, 0
        %v4185 = vsel %vm2124, %v3999, 0
        %v4188 = vsel %vm2124, %v4000, 0
        %v4191 = vsel %vm2124, %v4001, 0
        %v4194 = vsel %vm2124, %v4002, 0
        %v4197 = vsel %vm2124, %v4003, 0
        %v4200 = vsel %vm2124, %v4004, 0
        %v4203 = vsel %vm2124, %v4005, 0
        %v4206 = vsel %vm2124, %v4006, 0
        %v4209 = vsel %vm2124, %v4007, 0
        %v4212 = vsel %vm2124, %v4008, 0
        %v4215 = vsel %vm2124, %v4009, 0
        %v4218 = vsel %vm2124, %v4010, 0
        %v4221 = vsel %vm2124, %v4011, 0
        %v4224 = vsel %vm2124, %v4012, 0
        %v4227 = vsel %vm2124, %v4013, 0
        %v4230 = vsel %vm2124, %v4014, 0
        %v4233 = vsel %vm2124, %v4015, 0
        %v4236 = vsel %vm2124, %v4016, 0
        %v4239 = vsel %vm2124, %v4017, 0
        %v4242 = vsel %vm2124, %v4018, 0
        %v4245 = vsel %vm2124, %v4019, 0
        %v4248 = vsel %vm2124, %v4020, 0
        %v4251 = vsel %vm2124, %v4021, 0
        %4253 = vmatprep.subr.bf16.mxu0 0
        %4254 = vmatpush1.bf16.msra.mxu0 %v4053
        %4255 = vmatprep.subr.bf16.mxu0 0
        %4256 = vmatpush1.bf16.msra.mxu0 %v4054
        %4257 = vmatprep.subr.bf16.mxu0 0
        %4258 = vmatpush1.bf16.msra.mxu0 %v4055
        %4259 = vmatprep.subr.bf16.mxu0 0
        %4260 = vmatpush1.bf16.msra.mxu0 %v4056
        %4261 = vmatprep.subr.bf16.mxu0 0
        %4262 = vmatpush1.bf16.msra.mxu0 0
        %4263 = vmatprep.subr.bf16.mxu0 0
        %4264 = vmatpush1.bf16.msra.mxu0 0
        %4265 = vmatprep.subr.bf16.mxu0 0
        %4266 = vmatpush1.bf16.msra.mxu0 0
        %4267 = vmatprep.subr.bf16.mxu0 0
        %4268 = vmatpush1.bf16.msra.mxu0 0
        %4269 = vmatprep.subr.bf16.mxu0 0
        %4270 = vmatpush1.bf16.msra.mxu0 0
        %4271 = vmatprep.subr.bf16.mxu0 0
        %4272 = vmatpush1.bf16.msra.mxu0 0
        %4273 = vmatprep.subr.bf16.mxu0 0
        %4274 = vmatpush1.bf16.msra.mxu0 0
        %4275 = vmatprep.subr.bf16.mxu0 0
        %4276 = vmatpush1.bf16.msra.mxu0 0
        %4277 = vmatprep.subr.bf16.mxu0 0
        %4278 = vmatpush1.bf16.msra.mxu0 0
        %4279 = vmatprep.subr.bf16.mxu0 0
        %4280 = vmatpush1.bf16.msra.mxu0 0
        %4281 = vmatprep.subr.bf16.mxu0 0
        %4282 = vmatpush1.bf16.msra.mxu0 0
        %4283 = vmatprep.subr.bf16.mxu0 0
        %4284 = vmatpush1.bf16.msra.mxu0 0
        %4285 = vmatprep.mubr.bf16.mxu0 0
        %4286 = vmatmul.mubr.bf16.gmra.mrb[0].mxu0 %v4062
        %v4287 = vpop.f32.mrb[0].mxu0
        %v4288 = vadd.f32 %v4035, %v4287
        %v4289 = vpop.f32.mrb[0].mxu0
        %v4290 = vpop.f32.mrb[0].mxu0
        %v4291 = vadd.f32 %v4035, %v4290
        %v4292 = vpop.f32.mrb[0].mxu0
        %4293 = vmatprep.mubr.bf16.mxu0 0
        %4294 = vmatmul.mubr.bf16.gmra.mrb[0].mxu0 %v4065
        %v4295 = vpop.f32.mrb[0].mxu0
        %v4296 = vadd.f32 %v4035, %v4295
        %v4297 = vpop.f32.mrb[0].mxu0
        %v4298 = vpop.f32.mrb[0].mxu0
        %v4299 = vadd.f32 %v4035, %v4298
        %v4300 = vpop.f32.mrb[0].mxu0
        %4301 = vmatprep.mubr.bf16.mxu0 0
        %4302 = vmatmul.mubr.bf16.gmra.mrb[0].mxu0 %v4068
        %v4303 = vpop.f32.mrb[0].mxu0
        %v4304 = vadd.f32 %v4035, %v4303
        %v4305 = vpop.f32.mrb[0].mxu0
        %v4306 = vpop.f32.mrb[0].mxu0
        %v4307 = vadd.f32 %v4035, %v4306
        %v4308 = vpop.f32.mrb[0].mxu0
        %4309 = vmatprep.mubr.bf16.mxu0 0
        %4310 = vmatmul.mubr.bf16.gmra.mrb[0].mxu0 %v4071
        %v4311 = vpop.f32.mrb[0].mxu0
        %v4312 = vadd.f32 %v4035, %v4311
        %v4313 = vpop.f32.mrb[0].mxu0
        %v4314 = vpop.f32.mrb[0].mxu0
        %v4315 = vadd.f32 %v4035, %v4314
        %v4316 = vpop.f32.mrb[0].mxu0
        %4317 = vmatprep.mubr.bf16.mxu0 0
        %4318 = vmatmul.mubr.bf16.gmra.mrb[0].mxu0 %v4074
        %v4319 = vpop.f32.mrb[0].mxu0
        %v4320 = vadd.f32 %v4035, %v4319
        %v4321 = vpop.f32.mrb[0].mxu0
        %v4322 = vpop.f32.mrb[0].mxu0
        %v4323 = vadd.f32 %v4035, %v4322
        %v4324 = vpop.f32.mrb[0].mxu0
        %4325 = vmatprep.mubr.bf16.mxu0 0
        %4326 = vmatmul.mubr.bf16.gmra.mrb[0].mxu0 %v4077
        %v4327 = vpop.f32.mrb[0].mxu0
        %v4328 = vadd.f32 %v4035, %v4327
        %v4329 = vpop.f32.mrb[0].mxu0
        %v4330 = vpop.f32.mrb[0].mxu0
        %v4331 = vadd.f32 %v4035, %v4330
        %v4332 = vpop.f32.mrb[0].mxu0
        %4333 = vmatprep.mubr.bf16.mxu0 0
        %4334 = vmatmul.mubr.bf16.gmra.mrb[0].mxu0 %v4080
        %v4335 = vpop.f32.mrb[0].mxu0
        %v4336 = vadd.f32 %v4035, %v4335
        %v4337 = vpop.f32.mrb[0].mxu0
        %v4338 = vpop.f32.mrb[0].mxu0
        %v4339 = vadd.f32 %v4035, %v4338
        %v4340 = vpop.f32.mrb[0].mxu0
        %4341 = vmatprep.mubr.bf16.mxu0 0
        %4342 = vmatmul.mubr.bf16.gmra.mrb[0].mxu0 %v4083
        %v4343 = vpop.f32.mrb[0].mxu0
        %v4344 = vadd.f32 %v4035, %v4343
        %v4345 = vpop.f32.mrb[0].mxu0
        %v4346 = vpop.f32.mrb[0].mxu0
        %v4347 = vadd.f32 %v4035, %v4346
        %v4348 = vpop.f32.mrb[0].mxu0
        %4349 = vmatprep.mubr.bf16.mxu0 0
        %4350 = vmatmul.mubr.bf16.gmra.mrb[0].mxu0 %v4086
        %v4351 = vpop.f32.mrb[0].mxu0
        %v4352 = vadd.f32 %v4035, %v4351
        %v4353 = vpop.f32.mrb[0].mxu0
        %v4354 = vpop.f32.mrb[0].mxu0
        %v4355 = vadd.f32 %v4035, %v4354
        %v4356 = vpop.f32.mrb[0].mxu0
        %4357 = vmatprep.mubr.bf16.mxu0 0
        %4358 = vmatmul.mubr.bf16.gmra.mrb[0].mxu0 %v4089
        %v4359 = vpop.f32.mrb[0].mxu0
        %v4360 = vadd.f32 %v4035, %v4359
        %v4361 = vpop.f32.mrb[0].mxu0
        %v4362 = vpop.f32.mrb[0].mxu0
        %v4363 = vadd.f32 %v4035, %v4362
        %v4364 = vpop.f32.mrb[0].mxu0
        %4365 = vmatprep.mubr.bf16.mxu0 0
        %4366 = vmatmul.mubr.bf16.gmra.mrb[0].mxu0 %v4092
        %v4367 = vpop.f32.mrb[0].mxu0
        %v4368 = vadd.f32 %v4035, %v4367
        %v4369 = vpop.f32.mrb[0].mxu0
        %v4370 = vpop.f32.mrb[0].mxu0
        %v4371 = vadd.f32 %v4035, %v4370
        %v4372 = vpop.f32.mrb[0].mxu0
        %4373 = vmatprep.mubr.bf16.mxu0 0
        %4374 = vmatmul.mubr.bf16.gmra.mrb[0].mxu0 %v4095
        %v4375 = vpop.f32.mrb[0].mxu0
        %v4376 = vadd.f32 %v4035, %v4375
        %v4377 = vpop.f32.mrb[0].mxu0
        %v4378 = vpop.f32.mrb[0].mxu0
        %v4379 = vadd.f32 %v4035, %v4378
        %v4380 = vpop.f32.mrb[0].mxu0
        %4381 = vmatprep.mubr.bf16.mxu0 0
        %4382 = vmatmul.mubr.bf16.gmra.mrb[0].mxu0 %v4098
        %v4383 = vpop.f32.mrb[0].mxu0
        %v4384 = vadd.f32 %v4035, %v4383
        %v4385 = vpop.f32.mrb[0].mxu0
        %v4386 = vpop.f32.mrb[0].mxu0
        %v4387 = vadd.f32 %v4035, %v4386
        %v4388 = vpop.f32.mrb[0].mxu0
        %4389 = vmatprep.mubr.bf16.mxu0 0
        %4390 = vmatmul.mubr.bf16.gmra.mrb[0].mxu0 %v4101
        %v4391 = vpop.f32.mrb[0].mxu0
        %v4392 = vadd.f32 %v4035, %v4391
        %v4393 = vpop.f32.mrb[0].mxu0
        %v4394 = vpop.f32.mrb[0].mxu0
        %v4395 = vadd.f32 %v4035, %v4394
        %v4396 = vpop.f32.mrb[0].mxu0
        %4397 = vmatprep.mubr.bf16.mxu0 0
        %4398 = vmatmul.mubr.bf16.gmra.mrb[0].mxu0 %v4104
        %v4399 = vpop.f32.mrb[0].mxu0
        %v4400 = vadd.f32 %v4035, %v4399
        %v4401 = vpop.f32.mrb[0].mxu0
        %v4402 = vpop.f32.mrb[0].mxu0
        %v4403 = vadd.f32 %v4035, %v4402
        %v4404 = vpop.f32.mrb[0].mxu0
        %4405 = vmatprep.mubr.bf16.mxu0 0
        %4406 = vmatmul.mubr.bf16.gmra.mrb[0].mxu0 %v4107
        %v4407 = vpop.f32.mrb[0].mxu0
        %v4408 = vadd.f32 %v4035, %v4407
        %v4409 = vpop.f32.mrb[0].mxu0
        %v4410 = vpop.f32.mrb[0].mxu0
        %v4411 = vadd.f32 %v4035, %v4410
        %v4412 = vpop.f32.mrb[0].mxu0
        %4413 = vmatprep.mubr.bf16.mxu0 0
        %4414 = vmatmul.mubr.bf16.gmra.mrb[0].mxu0 %v4110
        %v4415 = vpop.f32.mrb[0].mxu0
        %v4416 = vadd.f32 %v4035, %v4415
        %v4417 = vpop.f32.mrb[0].mxu0
        %v4418 = vpop.f32.mrb[0].mxu0
        %v4419 = vadd.f32 %v4035, %v4418
        %v4420 = vpop.f32.mrb[0].mxu0
        %4421 = vmatprep.mubr.bf16.mxu0 0
        %4422 = vmatmul.mubr.bf16.gmra.mrb[0].mxu0 %v4113
        %v4423 = vpop.f32.mrb[0].mxu0
        %v4424 = vadd.f32 %v4035, %v4423
        %v4425 = vpop.f32.mrb[0].mxu0
        %v4426 = vpop.f32.mrb[0].mxu0
        %v4427 = vadd.f32 %v4035, %v4426
        %v4428 = vpop.f32.mrb[0].mxu0
        %4429 = vmatprep.mubr.bf16.mxu0 0
        %4430 = vmatmul.mubr.bf16.gmra.mrb[0].mxu0 %v4116
        %v4431 = vpop.f32.mrb[0].mxu0
        %v4432 = vadd.f32 %v4035, %v4431
        %v4433 = vpop.f32.mrb[0].mxu0
        %v4434 = vpop.f32.mrb[0].mxu0
        %v4435 = vadd.f32 %v4035, %v4434
        %v4436 = vpop.f32.mrb[0].mxu0
        %4437 = vmatprep.mubr.bf16.mxu0 0
        %4438 = vmatmul.mubr.bf16.gmra.mrb[0].mxu0 %v4119
        %v4439 = vpop.f32.mrb[0].mxu0
        %v4440 = vadd.f32 %v4035, %v4439
        %v4441 = vpop.f32.mrb[0].mxu0
        %v4442 = vpop.f32.mrb[0].mxu0
        %v4443 = vadd.f32 %v4035, %v4442
        %v4444 = vpop.f32.mrb[0].mxu0
        %4445 = vmatprep.mubr.bf16.mxu0 0
        %4446 = vmatmul.mubr.bf16.gmra.mrb[0].mxu0 %v4122
        %v4447 = vpop.f32.mrb[0].mxu0
        %v4448 = vadd.f32 %v4035, %v4447
        %v4449 = vpop.f32.mrb[0].mxu0
        %v4450 = vpop.f32.mrb[0].mxu0
        %v4451 = vadd.f32 %v4035, %v4450
        %v4452 = vpop.f32.mrb[0].mxu0
        %4453 = vmatprep.mubr.bf16.mxu0 0
        %4454 = vmatmul.mubr.bf16.gmra.mrb[0].mxu0 %v4125
        %v4455 = vpop.f32.mrb[0].mxu0
        %v4456 = vadd.f32 %v4035, %v4455
        %v4457 = vpop.f32.mrb[0].mxu0
        %v4458 = vpop.f32.mrb[0].mxu0
        %v4459 = vadd.f32 %v4035, %v4458
        %v4460 = vpop.f32.mrb[0].mxu0
        %4461 = vmatprep.mubr.bf16.mxu0 0
        %4462 = vmatmul.mubr.bf16.gmra.mrb[0].mxu0 %v4128
        %v4463 = vpop.f32.mrb[0].mxu0
        %v4464 = vadd.f32 %v4035, %v4463
        %v4465 = vpop.f32.mrb[0].mxu0
        %v4466 = vpop.f32.mrb[0].mxu0
        %v4467 = vadd.f32 %v4035, %v4466
        %v4468 = vpop.f32.mrb[0].mxu0
        %4469 = vmatprep.mubr.bf16.mxu0 0
        %4470 = vmatmul.mubr.bf16.gmra.mrb[0].mxu0 %v4131
        %v4471 = vpop.f32.mrb[0].mxu0
        %v4472 = vadd.f32 %v4035, %v4471
        %v4473 = vpop.f32.mrb[0].mxu0
        %v4474 = vpop.f32.mrb[0].mxu0
        %v4475 = vadd.f32 %v4035, %v4474
        %v4476 = vpop.f32.mrb[0].mxu0
        %4477 = vmatprep.mubr.bf16.mxu0 0
        %4478 = vmatmul.mubr.bf16.gmra.mrb[0].mxu0 %v4134
        %v4479 = vpop.f32.mrb[0].mxu0
        %v4480 = vadd.f32 %v4035, %v4479
        %v4481 = vpop.f32.mrb[0].mxu0
        %v4482 = vpop.f32.mrb[0].mxu0
        %v4483 = vadd.f32 %v4035, %v4482
        %v4484 = vpop.f32.mrb[0].mxu0
        %4485 = vmatprep.mubr.bf16.mxu0 0
        %4486 = vmatmul.mubr.bf16.gmra.mrb[0].mxu0 %v4137
        %v4487 = vpop.f32.mrb[0].mxu0
        %v4488 = vadd.f32 %v4035, %v4487
        %v4489 = vpop.f32.mrb[0].mxu0
        %v4490 = vpop.f32.mrb[0].mxu0
        %v4491 = vadd.f32 %v4035, %v4490
        %v4492 = vpop.f32.mrb[0].mxu0
        %4493 = vmatprep.mubr.bf16.mxu0 0
        %4494 = vmatmul.mubr.bf16.gmra.mrb[0].mxu0 %v4140
        %v4495 = vpop.f32.mrb[0].mxu0
        %v4496 = vadd.f32 %v4035, %v4495
        %v4497 = vpop.f32.mrb[0].mxu0
        %v4498 = vpop.f32.mrb[0].mxu0
        %v4499 = vadd.f32 %v4035, %v4498
        %v4500 = vpop.f32.mrb[0].mxu0
        %4501 = vmatprep.mubr.bf16.mxu0 0
        %4502 = vmatmul.mubr.bf16.gmra.mrb[0].mxu0 %v4143
        %v4503 = vpop.f32.mrb[0].mxu0
        %v4504 = vadd.f32 %v4035, %v4503
        %v4505 = vpop.f32.mrb[0].mxu0
        %v4506 = vpop.f32.mrb[0].mxu0
        %v4507 = vadd.f32 %v4035, %v4506
        %v4508 = vpop.f32.mrb[0].mxu0
        %4509 = vmatprep.mubr.bf16.mxu0 0
        %4510 = vmatmul.mubr.bf16.gmra.mrb[0].mxu0 %v4146
        %v4511 = vpop.f32.mrb[0].mxu0
        %v4512 = vadd.f32 %v4035, %v4511
        %v4513 = vpop.f32.mrb[0].mxu0
        %v4514 = vpop.f32.mrb[0].mxu0
        %v4515 = vadd.f32 %v4035, %v4514
        %v4516 = vpop.f32.mrb[0].mxu0
        %4517 = vmatprep.mubr.bf16.mxu0 0
        %4518 = vmatmul.mubr.bf16.gmra.mrb[0].mxu0 %v4149
        %v4519 = vpop.f32.mrb[0].mxu0
        %v4520 = vadd.f32 %v4035, %v4519
        %v4521 = vpop.f32.mrb[0].mxu0
        %v4522 = vpop.f32.mrb[0].mxu0
        %v4523 = vadd.f32 %v4035, %v4522
        %v4524 = vpop.f32.mrb[0].mxu0
        %4525 = vmatprep.mubr.bf16.mxu0 0
        %4526 = vmatmul.mubr.bf16.gmra.mrb[0].mxu0 %v4152
        %v4527 = vpop.f32.mrb[0].mxu0
        %v4528 = vadd.f32 %v4035, %v4527
        %v4529 = vpop.f32.mrb[0].mxu0
        %v4530 = vpop.f32.mrb[0].mxu0
        %v4531 = vadd.f32 %v4035, %v4530
        %v4532 = vpop.f32.mrb[0].mxu0
        %4533 = vmatprep.mubr.bf16.mxu0 0
        %4534 = vmatmul.mubr.bf16.gmra.mrb[0].mxu0 %v4155
        %v4535 = vpop.f32.mrb[0].mxu0
        %v4536 = vadd.f32 %v4035, %v4535
        %v4537 = vpop.f32.mrb[0].mxu0
        %v4538 = vpop.f32.mrb[0].mxu0
        %v4539 = vadd.f32 %v4035, %v4538
        %v4540 = vpop.f32.mrb[0].mxu0
        %4541 = vmatprep.mubr.bf16.mxu0 0
        %4542 = vmatmul.mubr.bf16.gmra.mrb[0].mxu0 %v4158
        %v4543 = vpop.f32.mrb[0].mxu0
        %v4544 = vadd.f32 %v4035, %v4543
        %v4545 = vpop.f32.mrb[0].mxu0
        %v4546 = vpop.f32.mrb[0].mxu0
        %v4547 = vadd.f32 %v4035, %v4546
        %v4548 = vpop.f32.mrb[0].mxu0
        %4549 = vmatprep.mubr.bf16.mxu0 0
        %4550 = vmatmul.mubr.bf16.gmra.mrb[0].mxu0 %v4161
        %v4551 = vpop.f32.mrb[0].mxu0
        %v4552 = vadd.f32 %v4035, %v4551
        %v4553 = vpop.f32.mrb[0].mxu0
        %v4554 = vpop.f32.mrb[0].mxu0
        %v4555 = vadd.f32 %v4035, %v4554
        %v4556 = vpop.f32.mrb[0].mxu0
        %4557 = vmatprep.mubr.bf16.mxu0 0
        %4558 = vmatmul.mubr.bf16.gmra.mrb[0].mxu0 %v4164
        %v4559 = vpop.f32.mrb[0].mxu0
        %v4560 = vadd.f32 %v4035, %v4559
        %v4561 = vpop.f32.mrb[0].mxu0
        %v4562 = vpop.f32.mrb[0].mxu0
        %v4563 = vadd.f32 %v4035, %v4562
        %v4564 = vpop.f32.mrb[0].mxu0
        %4565 = vmatprep.mubr.bf16.mxu0 0
        %4566 = vmatmul.mubr.bf16.gmra.mrb[0].mxu0 %v4167
        %v4567 = vpop.f32.mrb[0].mxu0
        %v4568 = vadd.f32 %v4035, %v4567
        %v4569 = vpop.f32.mrb[0].mxu0
        %v4570 = vpop.f32.mrb[0].mxu0
        %v4571 = vadd.f32 %v4035, %v4570
        %v4572 = vpop.f32.mrb[0].mxu0
        %4573 = vmatprep.mubr.bf16.mxu0 0
        %4574 = vmatmul.mubr.bf16.gmra.mrb[0].mxu0 %v4170
        %v4575 = vpop.f32.mrb[0].mxu0
        %v4576 = vadd.f32 %v4035, %v4575
        %v4577 = vpop.f32.mrb[0].mxu0
        %v4578 = vpop.f32.mrb[0].mxu0
        %v4579 = vadd.f32 %v4035, %v4578
        %v4580 = vpop.f32.mrb[0].mxu0
        %4581 = vmatprep.mubr.bf16.mxu0 0
        %4582 = vmatmul.mubr.bf16.gmra.mrb[0].mxu0 %v4173
        %v4583 = vpop.f32.mrb[0].mxu0
        %v4584 = vadd.f32 %v4035, %v4583
        %v4585 = vpop.f32.mrb[0].mxu0
        %v4586 = vpop.f32.mrb[0].mxu0
        %v4587 = vadd.f32 %v4035, %v4586
        %v4588 = vpop.f32.mrb[0].mxu0
        %4589 = vmatprep.mubr.bf16.mxu0 0
        %4590 = vmatmul.mubr.bf16.gmra.mrb[0].mxu0 %v4176
        %v4591 = vpop.f32.mrb[0].mxu0
        %v4592 = vadd.f32 %v4035, %v4591
        %v4593 = vpop.f32.mrb[0].mxu0
        %v4594 = vpop.f32.mrb[0].mxu0
        %v4595 = vadd.f32 %v4035, %v4594
        %v4596 = vpop.f32.mrb[0].mxu0
        %4597 = vmatprep.mubr.bf16.mxu0 0
        %4598 = vmatmul.mubr.bf16.gmra.mrb[0].mxu0 %v4179
        %v4599 = vpop.f32.mrb[0].mxu0
        %v4600 = vadd.f32 %v4035, %v4599
        %v4601 = vpop.f32.mrb[0].mxu0
        %v4602 = vpop.f32.mrb[0].mxu0
        %v4603 = vadd.f32 %v4035, %v4602
        %v4604 = vpop.f32.mrb[0].mxu0
        %4605 = vmatprep.mubr.bf16.mxu0 0
        %4606 = vmatmul.mubr.bf16.gmra.mrb[0].mxu0 %v4182
        %v4607 = vpop.f32.mrb[0].mxu0
        %v4608 = vadd.f32 %v4035, %v4607
        %v4609 = vpop.f32.mrb[0].mxu0
        %v4610 = vpop.f32.mrb[0].mxu0
        %v4611 = vadd.f32 %v4035, %v4610
        %v4612 = vpop.f32.mrb[0].mxu0
        %4613 = vmatprep.mubr.bf16.mxu0 0
        %4614 = vmatmul.mubr.bf16.gmra.mrb[0].mxu0 %v4185
        %v4615 = vpop.f32.mrb[0].mxu0
        %v4616 = vadd.f32 %v4035, %v4615
        %v4617 = vpop.f32.mrb[0].mxu0
        %v4618 = vpop.f32.mrb[0].mxu0
        %v4619 = vadd.f32 %v4035, %v4618
        %v4620 = vpop.f32.mrb[0].mxu0
        %4621 = vmatprep.mubr.bf16.mxu0 0
        %4622 = vmatmul.mubr.bf16.gmra.mrb[0].mxu0 %v4188
        %v4623 = vpop.f32.mrb[0].mxu0
        %v4624 = vadd.f32 %v4035, %v4623
        %v4625 = vpop.f32.mrb[0].mxu0
        %v4626 = vpop.f32.mrb[0].mxu0
        %v4627 = vadd.f32 %v4035, %v4626
        %v4628 = vpop.f32.mrb[0].mxu0
        %4629 = vmatprep.mubr.bf16.mxu0 0
        %4630 = vmatmul.mubr.bf16.gmra.mrb[0].mxu0 %v4191
        %v4631 = vpop.f32.mrb[0].mxu0
        %v4632 = vadd.f32 %v4035, %v4631
        %v4633 = vpop.f32.mrb[0].mxu0
        %v4634 = vpop.f32.mrb[0].mxu0
        %v4635 = vadd.f32 %v4035, %v4634
        %v4636 = vpop.f32.mrb[0].mxu0
        %4637 = vmatprep.mubr.bf16.mxu0 0
        %4638 = vmatmul.mubr.bf16.gmra.mrb[0].mxu0 %v4194
        %v4639 = vpop.f32.mrb[0].mxu0
        %v4640 = vadd.f32 %v4035, %v4639
        %v4641 = vpop.f32.mrb[0].mxu0
        %v4642 = vpop.f32.mrb[0].mxu0
        %v4643 = vadd.f32 %v4035, %v4642
        %v4644 = vpop.f32.mrb[0].mxu0
        %4645 = vmatprep.mubr.bf16.mxu0 0
        %4646 = vmatmul.mubr.bf16.gmra.mrb[0].mxu0 %v4197
        %v4647 = vpop.f32.mrb[0].mxu0
        %v4648 = vadd.f32 %v4035, %v4647
        %v4649 = vpop.f32.mrb[0].mxu0
        %v4650 = vpop.f32.mrb[0].mxu0
        %v4651 = vadd.f32 %v4035, %v4650
        %v4652 = vpop.f32.mrb[0].mxu0
        %4653 = vmatprep.mubr.bf16.mxu0 0
        %4654 = vmatmul.mubr.bf16.gmra.mrb[0].mxu0 %v4200
        %v4655 = vpop.f32.mrb[0].mxu0
        %v4656 = vadd.f32 %v4035, %v4655
        %v4657 = vpop.f32.mrb[0].mxu0
        %v4658 = vpop.f32.mrb[0].mxu0
        %v4659 = vadd.f32 %v4035, %v4658
        %v4660 = vpop.f32.mrb[0].mxu0
        %4661 = vmatprep.mubr.bf16.mxu0 0
        %4662 = vmatmul.mubr.bf16.gmra.mrb[0].mxu0 %v4203
        %v4663 = vpop.f32.mrb[0].mxu0
        %v4664 = vadd.f32 %v4035, %v4663
        %v4665 = vpop.f32.mrb[0].mxu0
        %v4666 = vpop.f32.mrb[0].mxu0
        %v4667 = vadd.f32 %v4035, %v4666
        %v4668 = vpop.f32.mrb[0].mxu0
        %4669 = vmatprep.mubr.bf16.mxu0 0
        %4670 = vmatmul.mubr.bf16.gmra.mrb[0].mxu0 %v4206
        %v4671 = vpop.f32.mrb[0].mxu0
        %v4672 = vadd.f32 %v4035, %v4671
        %v4673 = vpop.f32.mrb[0].mxu0
        %v4674 = vpop.f32.mrb[0].mxu0
        %v4675 = vadd.f32 %v4035, %v4674
        %v4676 = vpop.f32.mrb[0].mxu0
        %4677 = vmatprep.mubr.bf16.mxu0 0
        %4678 = vmatmul.mubr.bf16.gmra.mrb[0].mxu0 %v4209
        %v4679 = vpop.f32.mrb[0].mxu0
        %v4680 = vadd.f32 %v4035, %v4679
        %v4681 = vpop.f32.mrb[0].mxu0
        %v4682 = vpop.f32.mrb[0].mxu0
        %v4683 = vadd.f32 %v4035, %v4682
        %v4684 = vpop.f32.mrb[0].mxu0
        %4685 = vmatprep.mubr.bf16.mxu0 0
        %4686 = vmatmul.mubr.bf16.gmra.mrb[0].mxu0 %v4212
        %v4687 = vpop.f32.mrb[0].mxu0
        %v4688 = vadd.f32 %v4035, %v4687
        %v4689 = vpop.f32.mrb[0].mxu0
        %v4690 = vpop.f32.mrb[0].mxu0
        %v4691 = vadd.f32 %v4035, %v4690
        %v4692 = vpop.f32.mrb[0].mxu0
        %4693 = vmatprep.mubr.bf16.mxu0 0
        %4694 = vmatmul.mubr.bf16.gmra.mrb[0].mxu0 %v4215
        %v4695 = vpop.f32.mrb[0].mxu0
        %v4696 = vadd.f32 %v4035, %v4695
        %v4697 = vpop.f32.mrb[0].mxu0
        %v4698 = vpop.f32.mrb[0].mxu0
        %v4699 = vadd.f32 %v4035, %v4698
        %v4700 = vpop.f32.mrb[0].mxu0
        %4701 = vmatprep.mubr.bf16.mxu0 0
        %4702 = vmatmul.mubr.bf16.gmra.mrb[0].mxu0 %v4218
        %v4703 = vpop.f32.mrb[0].mxu0
        %v4704 = vadd.f32 %v4035, %v4703
        %v4705 = vpop.f32.mrb[0].mxu0
        %v4706 = vpop.f32.mrb[0].mxu0
        %v4707 = vadd.f32 %v4035, %v4706
        %v4708 = vpop.f32.mrb[0].mxu0
        %4709 = vmatprep.mubr.bf16.mxu0 0
        %4710 = vmatmul.mubr.bf16.gmra.mrb[0].mxu0 %v4221
        %v4711 = vpop.f32.mrb[0].mxu0
        %v4712 = vadd.f32 %v4035, %v4711
        %v4713 = vpop.f32.mrb[0].mxu0
        %v4714 = vpop.f32.mrb[0].mxu0
        %v4715 = vadd.f32 %v4035, %v4714
        %v4716 = vpop.f32.mrb[0].mxu0
        %4717 = vmatprep.mubr.bf16.mxu0 0
        %4718 = vmatmul.mubr.bf16.gmra.mrb[0].mxu0 %v4224
        %v4719 = vpop.f32.mrb[0].mxu0
        %v4720 = vadd.f32 %v4035, %v4719
        %v4721 = vpop.f32.mrb[0].mxu0
        %v4722 = vpop.f32.mrb[0].mxu0
        %v4723 = vadd.f32 %v4035, %v4722
        %v4724 = vpop.f32.mrb[0].mxu0
        %4725 = vmatprep.mubr.bf16.mxu0 0
        %4726 = vmatmul.mubr.bf16.gmra.mrb[0].mxu0 %v4227
        %v4727 = vpop.f32.mrb[0].mxu0
        %v4728 = vadd.f32 %v4035, %v4727
        %v4729 = vpop.f32.mrb[0].mxu0
        %v4730 = vpop.f32.mrb[0].mxu0
        %v4731 = vadd.f32 %v4035, %v4730
        %v4732 = vpop.f32.mrb[0].mxu0
        %4733 = vmatprep.mubr.bf16.mxu0 0
        %4734 = vmatmul.mubr.bf16.gmra.mrb[0].mxu0 %v4230
        %v4735 = vpop.f32.mrb[0].mxu0
        %v4736 = vadd.f32 %v4035, %v4735
        %v4737 = vpop.f32.mrb[0].mxu0
        %v4738 = vpop.f32.mrb[0].mxu0
        %v4739 = vadd.f32 %v4035, %v4738
        %v4740 = vpop.f32.mrb[0].mxu0
        %4741 = vmatprep.mubr.bf16.mxu0 0
        %4742 = vmatmul.mubr.bf16.gmra.mrb[0].mxu0 %v4233
        %v4743 = vpop.f32.mrb[0].mxu0
        %v4744 = vadd.f32 %v4035, %v4743
        %v4745 = vpop.f32.mrb[0].mxu0
        %v4746 = vpop.f32.mrb[0].mxu0
        %v4747 = vadd.f32 %v4035, %v4746
        %v4748 = vpop.f32.mrb[0].mxu0
        %4749 = vmatprep.mubr.bf16.mxu0 0
        %4750 = vmatmul.mubr.bf16.gmra.mrb[0].mxu0 %v4236
        %v4751 = vpop.f32.mrb[0].mxu0
        %v4752 = vadd.f32 %v4035, %v4751
        %v4753 = vpop.f32.mrb[0].mxu0
        %v4754 = vpop.f32.mrb[0].mxu0
        %v4755 = vadd.f32 %v4035, %v4754
        %v4756 = vpop.f32.mrb[0].mxu0
        %4757 = vmatprep.mubr.bf16.mxu0 0
        %4758 = vmatmul.mubr.bf16.gmra.mrb[0].mxu0 %v4239
        %v4759 = vpop.f32.mrb[0].mxu0
        %v4760 = vadd.f32 %v4035, %v4759
        %v4761 = vpop.f32.mrb[0].mxu0
        %v4762 = vpop.f32.mrb[0].mxu0
        %v4763 = vadd.f32 %v4035, %v4762
        %v4764 = vpop.f32.mrb[0].mxu0
        %4765 = vmatprep.mubr.bf16.mxu0 0
        %4766 = vmatmul.mubr.bf16.gmra.mrb[0].mxu0 %v4242
        %v4767 = vpop.f32.mrb[0].mxu0
        %v4768 = vadd.f32 %v4035, %v4767
        %v4769 = vpop.f32.mrb[0].mxu0
        %v4770 = vpop.f32.mrb[0].mxu0
        %v4771 = vadd.f32 %v4035, %v4770
        %v4772 = vpop.f32.mrb[0].mxu0
        %4773 = vmatprep.mubr.bf16.mxu0 0
        %4774 = vmatmul.mubr.bf16.gmra.mrb[0].mxu0 %v4245
        %v4775 = vpop.f32.mrb[0].mxu0
        %v4776 = vadd.f32 %v4035, %v4775
        %v4777 = vpop.f32.mrb[0].mxu0
        %v4778 = vpop.f32.mrb[0].mxu0
        %v4779 = vadd.f32 %v4035, %v4778
        %v4780 = vpop.f32.mrb[0].mxu0
        %4781 = vmatprep.mubr.bf16.mxu0 0
        %4782 = vmatmul.mubr.bf16.gmra.mrb[0].mxu0 %v4248
        %v4783 = vpop.f32.mrb[0].mxu0
        %v4784 = vadd.f32 %v4035, %v4783
        %v4785 = vpop.f32.mrb[0].mxu0
        %v4786 = vpop.f32.mrb[0].mxu0
        %v4787 = vadd.f32 %v4035, %v4786
        %v4788 = vpop.f32.mrb[0].mxu0
        %4789 = vmatprep.mubr.bf16.mxu0 0
        %4790 = vmatmul.mubr.bf16.gmra.mrb[0].mxu0 %v4251
        %v4791 = vpop.f32.mrb[0].mxu0
        %v4792 = vadd.f32 %v4035, %v4791
        %v4793 = vpop.f32.mrb[0].mxu0
        %v4794 = vpop.f32.mrb[0].mxu0
        %v4795 = vadd.f32 %v4035, %v4794
        %v4796 = vpop.f32.mrb[0].mxu0
        %4797 = vdwg.mxu0
        %v4798 = vmax.f32 %v4288, 0.0
        %v4799 = vmax.f32 %v4291, 0.0
        %v4800 = vmax.f32 %v4296, 0.0
        %v4801 = vmax.f32 %v4299, 0.0
        %v4802 = vmax.f32 %v4304, 0.0
        %v4803 = vmax.f32 %v4307, 0.0
        %v4804 = vmax.f32 %v4312, 0.0
        %v4805 = vmax.f32 %v4315, 0.0
        %v4806 = vmax.f32 %v4320, 0.0
        %v4807 = vmax.f32 %v4323, 0.0
        %v4808 = vmax.f32 %v4328, 0.0
        %v4809 = vmax.f32 %v4331, 0.0
        %v4810 = vmax.f32 %v4336, 0.0
        %v4811 = vmax.f32 %v4339, 0.0
        %v4812 = vmax.f32 %v4344, 0.0
        %v4813 = vmax.f32 %v4347, 0.0
        %v4814 = vmax.f32 %v4352, 0.0
        %v4815 = vmax.f32 %v4355, 0.0
        %v4816 = vmax.f32 %v4360, 0.0
        %v4817 = vmax.f32 %v4363, 0.0
        %v4818 = vmax.f32 %v4368, 0.0
        %v4819 = vmax.f32 %v4371, 0.0
        %v4820 = vmax.f32 %v4376, 0.0
        %v4821 = vmax.f32 %v4379, 0.0
        %v4822 = vmax.f32 %v4384, 0.0
        %v4823 = vmax.f32 %v4387, 0.0
        %v4824 = vmax.f32 %v4392, 0.0
        %v4825 = vmax.f32 %v4395, 0.0
        %v4826 = vmax.f32 %v4400, 0.0
        %v4827 = vmax.f32 %v4403, 0.0
        %v4828 = vmax.f32 %v4408, 0.0
        %v4829 = vmax.f32 %v4411, 0.0
        %v4830 = vmax.f32 %v4416, 0.0
        %v4831 = vmax.f32 %v4419, 0.0
        %v4832 = vmax.f32 %v4424, 0.0
        %v4833 = vmax.f32 %v4427, 0.0
        %v4834 = vmax.f32 %v4432, 0.0
        %v4835 = vmax.f32 %v4435, 0.0
        %v4836 = vmax.f32 %v4440, 0.0
        %v4837 = vmax.f32 %v4443, 0.0
        %v4838 = vmax.f32 %v4448, 0.0
        %v4839 = vmax.f32 %v4451, 0.0
        %v4840 = vmax.f32 %v4456, 0.0
        %v4841 = vmax.f32 %v4459, 0.0
        %v4842 = vmax.f32 %v4464, 0.0
        %v4843 = vmax.f32 %v4467, 0.0
        %v4844 = vmax.f32 %v4472, 0.0
        %v4845 = vmax.f32 %v4475, 0.0
        %v4846 = vmax.f32 %v4480, 0.0
        %v4847 = vmax.f32 %v4483, 0.0
        %v4848 = vmax.f32 %v4488, 0.0
        %v4849 = vmax.f32 %v4491, 0.0
        %v4850 = vmax.f32 %v4496, 0.0
        %v4851 = vmax.f32 %v4499, 0.0
        %v4852 = vmax.f32 %v4504, 0.0
        %v4853 = vmax.f32 %v4507, 0.0
        %v4854 = vmax.f32 %v4512, 0.0
        %v4855 = vmax.f32 %v4515, 0.0
        %v4856 = vmax.f32 %v4520, 0.0
        %v4857 = vmax.f32 %v4523, 0.0
        %v4858 = vmax.f32 %v4528, 0.0
        %v4859 = vmax.f32 %v4531, 0.0
        %v4860 = vmax.f32 %v4536, 0.0
        %v4861 = vmax.f32 %v4539, 0.0
        %v4862 = vmax.f32 %v4544, 0.0
        %v4863 = vmax.f32 %v4547, 0.0
        %v4864 = vmax.f32 %v4552, 0.0
        %v4865 = vmax.f32 %v4555, 0.0
        %v4866 = vmax.f32 %v4560, 0.0
        %v4867 = vmax.f32 %v4563, 0.0
        %v4868 = vmax.f32 %v4568, 0.0
        %v4869 = vmax.f32 %v4571, 0.0
        %v4870 = vmax.f32 %v4576, 0.0
        %v4871 = vmax.f32 %v4579, 0.0
        %v4872 = vmax.f32 %v4584, 0.0
        %v4873 = vmax.f32 %v4587, 0.0
        %v4874 = vmax.f32 %v4592, 0.0
        %v4875 = vmax.f32 %v4595, 0.0
        %v4876 = vmax.f32 %v4600, 0.0
        %v4877 = vmax.f32 %v4603, 0.0
        %v4878 = vmax.f32 %v4608, 0.0
        %v4879 = vmax.f32 %v4611, 0.0
        %v4880 = vmax.f32 %v4616, 0.0
        %v4881 = vmax.f32 %v4619, 0.0
        %v4882 = vmax.f32 %v4624, 0.0
        %v4883 = vmax.f32 %v4627, 0.0
        %v4884 = vmax.f32 %v4632, 0.0
        %v4885 = vmax.f32 %v4635, 0.0
        %v4886 = vmax.f32 %v4640, 0.0
        %v4887 = vmax.f32 %v4643, 0.0
        %v4888 = vmax.f32 %v4648, 0.0
        %v4889 = vmax.f32 %v4651, 0.0
        %v4890 = vmax.f32 %v4656, 0.0
        %v4891 = vmax.f32 %v4659, 0.0
        %v4892 = vmax.f32 %v4664, 0.0
        %v4893 = vmax.f32 %v4667, 0.0
        %v4894 = vmax.f32 %v4672, 0.0
        %v4895 = vmax.f32 %v4675, 0.0
        %v4896 = vmax.f32 %v4680, 0.0
        %v4897 = vmax.f32 %v4683, 0.0
        %v4898 = vmax.f32 %v4688, 0.0
        %v4899 = vmax.f32 %v4691, 0.0
        %v4900 = vmax.f32 %v4696, 0.0
        %v4901 = vmax.f32 %v4699, 0.0
        %v4902 = vmax.f32 %v4704, 0.0
        %v4903 = vmax.f32 %v4707, 0.0
        %v4904 = vmax.f32 %v4712, 0.0
        %v4905 = vmax.f32 %v4715, 0.0
        %v4906 = vmax.f32 %v4720, 0.0
        %v4907 = vmax.f32 %v4723, 0.0
        %v4908 = vmax.f32 %v4728, 0.0
        %v4909 = vmax.f32 %v4731, 0.0
        %v4910 = vmax.f32 %v4736, 0.0
        %v4911 = vmax.f32 %v4739, 0.0
        %v4912 = vmax.f32 %v4744, 0.0
        %v4913 = vmax.f32 %v4747, 0.0
        %v4914 = vmax.f32 %v4752, 0.0
        %v4915 = vmax.f32 %v4755, 0.0
        %v4916 = vmax.f32 %v4760, 0.0
        %v4917 = vmax.f32 %v4763, 0.0
        %v4918 = vmax.f32 %v4768, 0.0
        %v4919 = vmax.f32 %v4771, 0.0
        %v4920 = vmax.f32 %v4776, 0.0
        %v4921 = vmax.f32 %v4779, 0.0
        %v4922 = vmax.f32 %v4784, 0.0
        %v4923 = vmax.f32 %v4787, 0.0
        %v4924 = vmax.f32 %v4792, 0.0
        %v4925 = vmax.f32 %v4795, 0.0
        %v4926 = vpack.c.bf16 %v4799, %v4798
        %v4927 = vpack.c.bf16 %v4801, %v4800
        %v4928 = vpack.c.bf16 %v4803, %v4802
        %v4929 = vpack.c.bf16 %v4805, %v4804
        %v4930 = vpack.c.bf16 %v4807, %v4806
        %v4931 = vpack.c.bf16 %v4809, %v4808
        %v4932 = vpack.c.bf16 %v4811, %v4810
        %v4933 = vpack.c.bf16 %v4813, %v4812
        %v4934 = vpack.c.bf16 %v4815, %v4814
        %v4935 = vpack.c.bf16 %v4817, %v4816
        %v4936 = vpack.c.bf16 %v4819, %v4818
        %v4937 = vpack.c.bf16 %v4821, %v4820
        %v4938 = vpack.c.bf16 %v4823, %v4822
        %v4939 = vpack.c.bf16 %v4825, %v4824
        %v4940 = vpack.c.bf16 %v4827, %v4826
        %v4941 = vpack.c.bf16 %v4829, %v4828
        %v4942 = vpack.c.bf16 %v4831, %v4830
        %v4943 = vpack.c.bf16 %v4833, %v4832
        %v4944 = vpack.c.bf16 %v4835, %v4834
        %v4945 = vpack.c.bf16 %v4837, %v4836
        %v4946 = vpack.c.bf16 %v4839, %v4838
        %v4947 = vpack.c.bf16 %v4841, %v4840
        %v4948 = vpack.c.bf16 %v4843, %v4842
        %v4949 = vpack.c.bf16 %v4845, %v4844
        %v4950 = vpack.c.bf16 %v4847, %v4846
        %v4951 = vpack.c.bf16 %v4849, %v4848
        %v4952 = vpack.c.bf16 %v4851, %v4850
        %v4953 = vpack.c.bf16 %v4853, %v4852
        %v4954 = vpack.c.bf16 %v4855, %v4854
        %v4955 = vpack.c.bf16 %v4857, %v4856
        %v4956 = vpack.c.bf16 %v4859, %v4858
        %v4957 = vpack.c.bf16 %v4861, %v4860
        %v4958 = vpack.c.bf16 %v4863, %v4862
        %v4959 = vpack.c.bf16 %v4865, %v4864
        %v4960 = vpack.c.bf16 %v4867, %v4866
        %v4961 = vpack.c.bf16 %v4869, %v4868
        %v4962 = vpack.c.bf16 %v4871, %v4870
        %v4963 = vpack.c.bf16 %v4873, %v4872
        %v4964 = vpack.c.bf16 %v4875, %v4874
        %v4965 = vpack.c.bf16 %v4877, %v4876
        %v4966 = vpack.c.bf16 %v4879, %v4878
        %v4967 = vpack.c.bf16 %v4881, %v4880
        %v4968 = vpack.c.bf16 %v4883, %v4882
        %v4969 = vpack.c.bf16 %v4885, %v4884
        %v4970 = vpack.c.bf16 %v4887, %v4886
        %v4971 = vpack.c.bf16 %v4889, %v4888
        %v4972 = vpack.c.bf16 %v4891, %v4890
        %v4973 = vpack.c.bf16 %v4893, %v4892
        %v4974 = vpack.c.bf16 %v4895, %v4894
        %v4975 = vpack.c.bf16 %v4897, %v4896
        %v4976 = vpack.c.bf16 %v4899, %v4898
        %v4977 = vpack.c.bf16 %v4901, %v4900
        %v4978 = vpack.c.bf16 %v4903, %v4902
        %v4979 = vpack.c.bf16 %v4905, %v4904
        %v4980 = vpack.c.bf16 %v4907, %v4906
        %v4981 = vpack.c.bf16 %v4909, %v4908
        %v4982 = vpack.c.bf16 %v4911, %v4910
        %v4983 = vpack.c.bf16 %v4913, %v4912
        %v4984 = vpack.c.bf16 %v4915, %v4914
        %v4985 = vpack.c.bf16 %v4917, %v4916
        %v4986 = vpack.c.bf16 %v4919, %v4918
        %v4987 = vpack.c.bf16 %v4921, %v4920
        %v4988 = vpack.c.bf16 %v4923, %v4922
        %v4989 = vpack.c.bf16 %v4925, %v4924
        %v4990 = vld [vmem:[%s9] sm:$0xff]
        %v4991 = vld [vmem:[%s9 + $0x8] sm:$0xff]
        %v4992 = vld [vmem:[%s9 + $0x10] sm:$0xff]
        %v4993 = vld [vmem:[%s9 + $0x18] sm:$0xff]
        %v4994 = vld [vmem:[%s9 + $0x20] sm:$0xff]
        %v4995 = vld [vmem:[%s9 + $0x28] sm:$0xff]
        %v4996 = vld [vmem:[%s9 + $0x30] sm:$0xff]
        %v4997 = vld [vmem:[%s9 + $0x38] sm:$0xff]
        %v4998 = vld [vmem:[%s9 + $0x40] sm:$0xff]
        %v4999 = vld [vmem:[%s9 + $0x48] sm:$0xff]
        %v5000 = vld [vmem:[%s9 + $0x50] sm:$0xff]
        %v5001 = vld [vmem:[%s9 + $0x58] sm:$0xff]
        %v5002 = vld [vmem:[%s9 + $0x60] sm:$0xff]
        %v5003 = vld [vmem:[%s9 + $0x68] sm:$0xff]
        %v5004 = vld [vmem:[%s9 + $0x70] sm:$0xff]
        %v5005 = vld [vmem:[%s9 + $0x78] sm:$0xff]
        %v5006 = vld [vmem:[%s9 + $0x80] sm:$0xff]
        %v5007 = vld [vmem:[%s9 + $0x88] sm:$0xff]
        %v5008 = vld [vmem:[%s9 + $0x90] sm:$0xff]
        %v5009 = vld [vmem:[%s9 + $0x98] sm:$0xff]
        %v5010 = vld [vmem:[%s9 + $0xa0] sm:$0xff]
        %v5011 = vld [vmem:[%s9 + $0xa8] sm:$0xff]
        %v5012 = vld [vmem:[%s9 + $0xb0] sm:$0xff]
        %v5013 = vld [vmem:[%s9 + $0xb8] sm:$0xff]
        %v5014 = vld [vmem:[%s9 + $0xc0] sm:$0xff]
        %v5015 = vld [vmem:[%s9 + $0xc8] sm:$0xff]
        %v5016 = vld [vmem:[%s9 + $0xd0] sm:$0xff]
        %v5017 = vld [vmem:[%s9 + $0xd8] sm:$0xff]
        %v5018 = vld [vmem:[%s9 + $0xe0] sm:$0xff]
        %v5019 = vld [vmem:[%s9 + $0xe8] sm:$0xff]
        %v5020 = vld [vmem:[%s9 + $0xf0] sm:$0xff]
        %v5021 = vld [vmem:[%s9 + $0xf8] sm:$0xff]
        %v5022 = vld [vmem:[%s9 + $0x100] sm:$0xff]
        %v5023 = vld [vmem:[%s9 + $0x108] sm:$0xff]
        %v5024 = vld [vmem:[%s9 + $0x110] sm:$0xff]
        %v5025 = vld [vmem:[%s9 + $0x118] sm:$0xff]
        %v5026 = vld [vmem:[%s9 + $0x120] sm:$0xff]
        %v5027 = vld [vmem:[%s9 + $0x128] sm:$0xff]
        %v5028 = vld [vmem:[%s9 + $0x130] sm:$0xff]
        %v5029 = vld [vmem:[%s9 + $0x138] sm:$0xff]
        %v5030 = vld [vmem:[%s9 + $0x140] sm:$0xff]
        %v5031 = vld [vmem:[%s9 + $0x148] sm:$0xff]
        %v5032 = vld [vmem:[%s9 + $0x150] sm:$0xff]
        %v5033 = vld [vmem:[%s9 + $0x158] sm:$0xff]
        %v5034 = vld [vmem:[%s9 + $0x160] sm:$0xff]
        %v5035 = vld [vmem:[%s9 + $0x168] sm:$0xff]
        %v5036 = vld [vmem:[%s9 + $0x170] sm:$0xff]
        %v5037 = vld [vmem:[%s9 + $0x178] sm:$0xff]
        %v5038 = vld [vmem:[%s9 + $0x180] sm:$0xff]
        %v5039 = vld [vmem:[%s9 + $0x188] sm:$0xff]
        %v5040 = vld [vmem:[%s9 + $0x190] sm:$0xff]
        %v5041 = vld [vmem:[%s9 + $0x198] sm:$0xff]
        %v5042 = vld [vmem:[%s9 + $0x1a0] sm:$0xff]
        %v5043 = vld [vmem:[%s9 + $0x1a8] sm:$0xff]
        %v5044 = vld [vmem:[%s9 + $0x1b0] sm:$0xff]
        %v5045 = vld [vmem:[%s9 + $0x1b8] sm:$0xff]
        %v5046 = vld [vmem:[%s9 + $0x1c0] sm:$0xff]
        %v5047 = vld [vmem:[%s9 + $0x1c8] sm:$0xff]
        %v5048 = vld [vmem:[%s9 + $0x1d0] sm:$0xff]
        %v5049 = vld [vmem:[%s9 + $0x1d8] sm:$0xff]
        %v5050 = vld [vmem:[%s9 + $0x1e0] sm:$0xff]
        %v5051 = vld [vmem:[%s9 + $0x1e8] sm:$0xff]
        %v5052 = vld [vmem:[%s9 + $0x1f0] sm:$0xff]
        %v5053 = vld [vmem:[%s9 + $0x1f8] sm:$0xff]
        %v5118 = vunpack.c.l.b16 %v4990
        %v5119 = vunpack.c.h.b16 %v4990
        %v5120 = vunpack.c.l.b16 %v4991
        %v5121 = vunpack.c.h.b16 %v4991
        %v5122 = vunpack.c.l.b16 %v4992
        %v5123 = vunpack.c.h.b16 %v4992
        %v5124 = vunpack.c.l.b16 %v4993
        %v5125 = vunpack.c.h.b16 %v4993
        %v5126 = vunpack.c.l.b16 %v4994
        %v5127 = vunpack.c.h.b16 %v4994
        %v5128 = vunpack.c.l.b16 %v4995
        %v5129 = vunpack.c.h.b16 %v4995
        %v5130 = vunpack.c.l.b16 %v4996
        %v5131 = vunpack.c.h.b16 %v4996
        %v5132 = vunpack.c.l.b16 %v4997
        %v5133 = vunpack.c.h.b16 %v4997
        %v5134 = vunpack.c.l.b16 %v4998
        %v5135 = vunpack.c.h.b16 %v4998
        %v5136 = vunpack.c.l.b16 %v4999
        %v5137 = vunpack.c.h.b16 %v4999
        %v5138 = vunpack.c.l.b16 %v5000
        %v5139 = vunpack.c.h.b16 %v5000
        %v5140 = vunpack.c.l.b16 %v5001
        %v5141 = vunpack.c.h.b16 %v5001
        %v5142 = vunpack.c.l.b16 %v5002
        %v5143 = vunpack.c.h.b16 %v5002
        %v5144 = vunpack.c.l.b16 %v5003
        %v5145 = vunpack.c.h.b16 %v5003
        %v5146 = vunpack.c.l.b16 %v5004
        %v5147 = vunpack.c.h.b16 %v5004
        %v5148 = vunpack.c.l.b16 %v5005
        %v5149 = vunpack.c.h.b16 %v5005
        %v5150 = vunpack.c.l.b16 %v5006
        %v5151 = vunpack.c.h.b16 %v5006
        %v5152 = vunpack.c.l.b16 %v5007
        %v5153 = vunpack.c.h.b16 %v5007
        %v5154 = vunpack.c.l.b16 %v5008
        %v5155 = vunpack.c.h.b16 %v5008
        %v5156 = vunpack.c.l.b16 %v5009
        %v5157 = vunpack.c.h.b16 %v5009
        %v5158 = vunpack.c.l.b16 %v5010
        %v5159 = vunpack.c.h.b16 %v5010
        %v5160 = vunpack.c.l.b16 %v5011
        %v5161 = vunpack.c.h.b16 %v5011
        %v5162 = vunpack.c.l.b16 %v5012
        %v5163 = vunpack.c.h.b16 %v5012
        %v5164 = vunpack.c.l.b16 %v5013
        %v5165 = vunpack.c.h.b16 %v5013
        %v5166 = vunpack.c.l.b16 %v5014
        %v5167 = vunpack.c.h.b16 %v5014
        %v5168 = vunpack.c.l.b16 %v5015
        %v5169 = vunpack.c.h.b16 %v5015
        %v5170 = vunpack.c.l.b16 %v5016
        %v5171 = vunpack.c.h.b16 %v5016
        %v5172 = vunpack.c.l.b16 %v5017
        %v5173 = vunpack.c.h.b16 %v5017
        %v5174 = vunpack.c.l.b16 %v5018
        %v5175 = vunpack.c.h.b16 %v5018
        %v5176 = vunpack.c.l.b16 %v5019
        %v5177 = vunpack.c.h.b16 %v5019
        %v5178 = vunpack.c.l.b16 %v5020
        %v5179 = vunpack.c.h.b16 %v5020
        %v5180 = vunpack.c.l.b16 %v5021
        %v5181 = vunpack.c.h.b16 %v5021
        %v5182 = vunpack.c.l.b16 %v5022
        %v5183 = vunpack.c.h.b16 %v5022
        %v5184 = vunpack.c.l.b16 %v5023
        %v5185 = vunpack.c.h.b16 %v5023
        %v5186 = vunpack.c.l.b16 %v5024
        %v5187 = vunpack.c.h.b16 %v5024
        %v5188 = vunpack.c.l.b16 %v5025
        %v5189 = vunpack.c.h.b16 %v5025
        %v5190 = vunpack.c.l.b16 %v5026
        %v5191 = vunpack.c.h.b16 %v5026
        %v5192 = vunpack.c.l.b16 %v5027
        %v5193 = vunpack.c.h.b16 %v5027
        %v5194 = vunpack.c.l.b16 %v5028
        %v5195 = vunpack.c.h.b16 %v5028
        %v5196 = vunpack.c.l.b16 %v5029
        %v5197 = vunpack.c.h.b16 %v5029
        %v5198 = vunpack.c.l.b16 %v5030
        %v5199 = vunpack.c.h.b16 %v5030
        %v5200 = vunpack.c.l.b16 %v5031
        %v5201 = vunpack.c.h.b16 %v5031
        %v5202 = vunpack.c.l.b16 %v5032
        %v5203 = vunpack.c.h.b16 %v5032
        %v5204 = vunpack.c.l.b16 %v5033
        %v5205 = vunpack.c.h.b16 %v5033
        %v5206 = vunpack.c.l.b16 %v5034
        %v5207 = vunpack.c.h.b16 %v5034
        %v5208 = vunpack.c.l.b16 %v5035
        %v5209 = vunpack.c.h.b16 %v5035
        %v5210 = vunpack.c.l.b16 %v5036
        %v5211 = vunpack.c.h.b16 %v5036
        %v5212 = vunpack.c.l.b16 %v5037
        %v5213 = vunpack.c.h.b16 %v5037
        %v5214 = vunpack.c.l.b16 %v5038
        %v5215 = vunpack.c.h.b16 %v5038
        %v5216 = vunpack.c.l.b16 %v5039
        %v5217 = vunpack.c.h.b16 %v5039
        %v5218 = vunpack.c.l.b16 %v5040
        %v5219 = vunpack.c.h.b16 %v5040
        %v5220 = vunpack.c.l.b16 %v5041
        %v5221 = vunpack.c.h.b16 %v5041
        %v5222 = vunpack.c.l.b16 %v5042
        %v5223 = vunpack.c.h.b16 %v5042
        %v5224 = vunpack.c.l.b16 %v5043
        %v5225 = vunpack.c.h.b16 %v5043
        %v5226 = vunpack.c.l.b16 %v5044
        %v5227 = vunpack.c.h.b16 %v5044
        %v5228 = vunpack.c.l.b16 %v5045
        %v5229 = vunpack.c.h.b16 %v5045
        %v5230 = vunpack.c.l.b16 %v5046
        %v5231 = vunpack.c.h.b16 %v5046
        %v5232 = vunpack.c.l.b16 %v5047
        %v5233 = vunpack.c.h.b16 %v5047
        %v5234 = vunpack.c.l.b16 %v5048
        %v5235 = vunpack.c.h.b16 %v5048
        %v5236 = vunpack.c.l.b16 %v5049
        %v5237 = vunpack.c.h.b16 %v5049
        %v5238 = vunpack.c.l.b16 %v5050
        %v5239 = vunpack.c.h.b16 %v5050
        %v5240 = vunpack.c.l.b16 %v5051
        %v5241 = vunpack.c.h.b16 %v5051
        %v5242 = vunpack.c.l.b16 %v5052
        %v5243 = vunpack.c.h.b16 %v5052
        %v5244 = vunpack.c.l.b16 %v5053
        %v5245 = vunpack.c.h.b16 %v5053
        %v5246 = vpack.c.b16 %v5126, %v5118
        %v5247 = vpack.c.b16 %v5127, %v5119
        %v5248 = vpack.c.b16 %v5128, %v5120
        %v5249 = vpack.c.b16 %v5129, %v5121
        %v5250 = vpack.c.b16 %v5130, %v5122
        %v5251 = vpack.c.b16 %v5131, %v5123
        %v5252 = vpack.c.b16 %v5132, %v5124
        %v5253 = vpack.c.b16 %v5133, %v5125
        %v5254 = vpack.c.b16 %v5142, %v5134
        %v5255 = vpack.c.b16 %v5143, %v5135
        %v5256 = vpack.c.b16 %v5144, %v5136
        %v5257 = vpack.c.b16 %v5145, %v5137
        %v5258 = vpack.c.b16 %v5146, %v5138
        %v5259 = vpack.c.b16 %v5147, %v5139
        %v5260 = vpack.c.b16 %v5148, %v5140
        %v5261 = vpack.c.b16 %v5149, %v5141
        %v5262 = vpack.c.b16 %v5158, %v5150
        %v5263 = vpack.c.b16 %v5159, %v5151
        %v5264 = vpack.c.b16 %v5160, %v5152
        %v5265 = vpack.c.b16 %v5161, %v5153
        %v5266 = vpack.c.b16 %v5162, %v5154
        %v5267 = vpack.c.b16 %v5163, %v5155
        %v5268 = vpack.c.b16 %v5164, %v5156
        %v5269 = vpack.c.b16 %v5165, %v5157
        %v5270 = vpack.c.b16 %v5174, %v5166
        %v5271 = vpack.c.b16 %v5175, %v5167
        %v5272 = vpack.c.b16 %v5176, %v5168
        %v5273 = vpack.c.b16 %v5177, %v5169
        %v5274 = vpack.c.b16 %v5178, %v5170
        %v5275 = vpack.c.b16 %v5179, %v5171
        %v5276 = vpack.c.b16 %v5180, %v5172
        %v5277 = vpack.c.b16 %v5181, %v5173
        %v5278 = vpack.c.b16 %v5190, %v5182
        %v5279 = vpack.c.b16 %v5191, %v5183
        %v5280 = vpack.c.b16 %v5192, %v5184
        %v5281 = vpack.c.b16 %v5193, %v5185
        %v5282 = vpack.c.b16 %v5194, %v5186
        %v5283 = vpack.c.b16 %v5195, %v5187
        %v5284 = vpack.c.b16 %v5196, %v5188
        %v5285 = vpack.c.b16 %v5197, %v5189
        %v5286 = vpack.c.b16 %v5206, %v5198
        %v5287 = vpack.c.b16 %v5207, %v5199
        %v5288 = vpack.c.b16 %v5208, %v5200
        %v5289 = vpack.c.b16 %v5209, %v5201
        %v5290 = vpack.c.b16 %v5210, %v5202
        %v5291 = vpack.c.b16 %v5211, %v5203
        %v5292 = vpack.c.b16 %v5212, %v5204
        %v5293 = vpack.c.b16 %v5213, %v5205
        %v5294 = vpack.c.b16 %v5222, %v5214
        %v5295 = vpack.c.b16 %v5223, %v5215
        %v5296 = vpack.c.b16 %v5224, %v5216
        %v5297 = vpack.c.b16 %v5225, %v5217
        %v5298 = vpack.c.b16 %v5226, %v5218
        %v5299 = vpack.c.b16 %v5227, %v5219
        %v5300 = vpack.c.b16 %v5228, %v5220
        %v5301 = vpack.c.b16 %v5229, %v5221
        %v5302 = vpack.c.b16 %v5238, %v5230
        %v5303 = vpack.c.b16 %v5239, %v5231
        %v5304 = vpack.c.b16 %v5240, %v5232
        %v5305 = vpack.c.b16 %v5241, %v5233
        %v5306 = vpack.c.b16 %v5242, %v5234
        %v5307 = vpack.c.b16 %v5243, %v5235
        %v5308 = vpack.c.b16 %v5244, %v5236
        %v5309 = vpack.c.b16 %v5245, %v5237
        %5374 = vmatprep.subr.bf16.mxu0 %v5247
        %5375 = vmatpush1.bf16.msra.mxu0 %v5246
        %5376 = vmatprep.subr.bf16.mxu0 %v5255
        %5377 = vmatpush1.bf16.msra.mxu0 %v5254
        %5378 = vmatprep.subr.bf16.mxu0 %v5263
        %5379 = vmatpush1.bf16.msra.mxu0 %v5262
        %5380 = vmatprep.subr.bf16.mxu0 %v5271
        %5381 = vmatpush1.bf16.msra.mxu0 %v5270
        %5382 = vmatprep.subr.bf16.mxu0 %v5279
        %5383 = vmatpush1.bf16.msra.mxu0 %v5278
        %5384 = vmatprep.subr.bf16.mxu0 %v5287
        %5385 = vmatpush1.bf16.msra.mxu0 %v5286
        %5386 = vmatprep.subr.bf16.mxu0 %v5295
        %5387 = vmatpush1.bf16.msra.mxu0 %v5294
        %5388 = vmatprep.subr.bf16.mxu0 %v5303
        %5389 = vmatpush1.bf16.msra.mxu0 %v5302
        %5390 = vmatprep.subr.bf16.mxu0 0
        %5391 = vmatpush1.bf16.msra.mxu0 0
        %5392 = vmatprep.subr.bf16.mxu0 0
        %5393 = vmatpush1.bf16.msra.mxu0 0
        %5394 = vmatprep.subr.bf16.mxu0 0
        %5395 = vmatpush1.bf16.msra.mxu0 0
        %5396 = vmatprep.subr.bf16.mxu0 0
        %5397 = vmatpush1.bf16.msra.mxu0 0
        %5398 = vmatprep.subr.bf16.mxu0 0
        %5399 = vmatpush1.bf16.msra.mxu0 0
        %5400 = vmatprep.subr.bf16.mxu0 0
        %5401 = vmatpush1.bf16.msra.mxu0 0
        %5402 = vmatprep.subr.bf16.mxu0 0
        %5403 = vmatpush1.bf16.msra.mxu0 0
        %5404 = vmatprep.subr.bf16.mxu0 0
        %5405 = vmatpush1.bf16.msra.mxu0 0
        %5406 = vmatprep.mubr.bf16.mxu0 0
        %5407 = vmatmul.mubr.bf16.gmra.mrb[0].mxu0 %v4926
        %v5408 = vpop.f32.mrb[0].mxu0
        %v5409 = vadd.f32 0.0, %v5408
        %v5410 = vpop.f32.mrb[0].mxu0
        %v5411 = vadd.f32 0.0, %v5410
        %v5412 = vpop.f32.mrb[0].mxu0
        %v5413 = vadd.f32 0.0, %v5412
        %v5414 = vpop.f32.mrb[0].mxu0
        %v5415 = vadd.f32 0.0, %v5414
        %5416 = vmatprep.mubr.bf16.mxu0 0
        %5417 = vmatmul.mubr.bf16.gmra.mrb[0].mxu0 %v4927
        %v5418 = vpop.f32.mrb[0].mxu0
        %v5419 = vadd.f32 0.0, %v5418
        %v5420 = vpop.f32.mrb[0].mxu0
        %v5421 = vadd.f32 0.0, %v5420
        %v5422 = vpop.f32.mrb[0].mxu0
        %v5423 = vadd.f32 0.0, %v5422
        %v5424 = vpop.f32.mrb[0].mxu0
        %v5425 = vadd.f32 0.0, %v5424
        %5426 = vmatprep.mubr.bf16.mxu0 0
        %5427 = vmatmul.mubr.bf16.gmra.mrb[0].mxu0 %v4928
        %v5428 = vpop.f32.mrb[0].mxu0
        %v5429 = vadd.f32 0.0, %v5428
        %v5430 = vpop.f32.mrb[0].mxu0
        %v5431 = vadd.f32 0.0, %v5430
        %v5432 = vpop.f32.mrb[0].mxu0
        %v5433 = vadd.f32 0.0, %v5432
        %v5434 = vpop.f32.mrb[0].mxu0
        %v5435 = vadd.f32 0.0, %v5434
        %5436 = vmatprep.mubr.bf16.mxu0 0
        %5437 = vmatmul.mubr.bf16.gmra.mrb[0].mxu0 %v4929
        %v5438 = vpop.f32.mrb[0].mxu0
        %v5439 = vadd.f32 0.0, %v5438
        %v5440 = vpop.f32.mrb[0].mxu0
        %v5441 = vadd.f32 0.0, %v5440
        %v5442 = vpop.f32.mrb[0].mxu0
        %v5443 = vadd.f32 0.0, %v5442
        %v5444 = vpop.f32.mrb[0].mxu0
        %v5445 = vadd.f32 0.0, %v5444
        %5446 = vmatprep.mubr.bf16.mxu0 0
        %5447 = vmatmul.mubr.bf16.gmra.mrb[0].mxu0 %v4930
        %v5448 = vpop.f32.mrb[0].mxu0
        %v5449 = vadd.f32 0.0, %v5448
        %v5450 = vpop.f32.mrb[0].mxu0
        %v5451 = vadd.f32 0.0, %v5450
        %v5452 = vpop.f32.mrb[0].mxu0
        %v5453 = vadd.f32 0.0, %v5452
        %v5454 = vpop.f32.mrb[0].mxu0
        %v5455 = vadd.f32 0.0, %v5454
        %5456 = vmatprep.mubr.bf16.mxu0 0
        %5457 = vmatmul.mubr.bf16.gmra.mrb[0].mxu0 %v4931
        %v5458 = vpop.f32.mrb[0].mxu0
        %v5459 = vadd.f32 0.0, %v5458
        %v5460 = vpop.f32.mrb[0].mxu0
        %v5461 = vadd.f32 0.0, %v5460
        %v5462 = vpop.f32.mrb[0].mxu0
        %v5463 = vadd.f32 0.0, %v5462
        %v5464 = vpop.f32.mrb[0].mxu0
        %v5465 = vadd.f32 0.0, %v5464
        %5466 = vmatprep.mubr.bf16.mxu0 0
        %5467 = vmatmul.mubr.bf16.gmra.mrb[0].mxu0 %v4932
        %v5468 = vpop.f32.mrb[0].mxu0
        %v5469 = vadd.f32 0.0, %v5468
        %v5470 = vpop.f32.mrb[0].mxu0
        %v5471 = vadd.f32 0.0, %v5470
        %v5472 = vpop.f32.mrb[0].mxu0
        %v5473 = vadd.f32 0.0, %v5472
        %v5474 = vpop.f32.mrb[0].mxu0
        %v5475 = vadd.f32 0.0, %v5474
        %5476 = vmatprep.mubr.bf16.mxu0 0
        %5477 = vmatmul.mubr.bf16.gmra.mrb[0].mxu0 %v4933
        %v5478 = vpop.f32.mrb[0].mxu0
        %v5479 = vadd.f32 0.0, %v5478
        %v5480 = vpop.f32.mrb[0].mxu0
        %v5481 = vadd.f32 0.0, %v5480
        %v5482 = vpop.f32.mrb[0].mxu0
        %v5483 = vadd.f32 0.0, %v5482
        %v5484 = vpop.f32.mrb[0].mxu0
        %v5485 = vadd.f32 0.0, %v5484
        %5486 = vmatprep.mubr.bf16.mxu0 0
        %5487 = vmatmul.mubr.bf16.gmra.mrb[0].mxu0 %v4934
        %v5488 = vpop.f32.mrb[0].mxu0
        %v5489 = vadd.f32 0.0, %v5488
        %v5490 = vpop.f32.mrb[0].mxu0
        %v5491 = vadd.f32 0.0, %v5490
        %v5492 = vpop.f32.mrb[0].mxu0
        %v5493 = vadd.f32 0.0, %v5492
        %v5494 = vpop.f32.mrb[0].mxu0
        %v5495 = vadd.f32 0.0, %v5494
        %5496 = vmatprep.mubr.bf16.mxu0 0
        %5497 = vmatmul.mubr.bf16.gmra.mrb[0].mxu0 %v4935
        %v5498 = vpop.f32.mrb[0].mxu0
        %v5499 = vadd.f32 0.0, %v5498
        %v5500 = vpop.f32.mrb[0].mxu0
        %v5501 = vadd.f32 0.0, %v5500
        %v5502 = vpop.f32.mrb[0].mxu0
        %v5503 = vadd.f32 0.0, %v5502
        %v5504 = vpop.f32.mrb[0].mxu0
        %v5505 = vadd.f32 0.0, %v5504
        %5506 = vmatprep.mubr.bf16.mxu0 0
        %5507 = vmatmul.mubr.bf16.gmra.mrb[0].mxu0 %v4936
        %v5508 = vpop.f32.mrb[0].mxu0
        %v5509 = vadd.f32 0.0, %v5508
        %v5510 = vpop.f32.mrb[0].mxu0
        %v5511 = vadd.f32 0.0, %v5510
        %v5512 = vpop.f32.mrb[0].mxu0
        %v5513 = vadd.f32 0.0, %v5512
        %v5514 = vpop.f32.mrb[0].mxu0
        %v5515 = vadd.f32 0.0, %v5514
        %5516 = vmatprep.mubr.bf16.mxu0 0
        %5517 = vmatmul.mubr.bf16.gmra.mrb[0].mxu0 %v4937
        %v5518 = vpop.f32.mrb[0].mxu0
        %v5519 = vadd.f32 0.0, %v5518
        %v5520 = vpop.f32.mrb[0].mxu0
        %v5521 = vadd.f32 0.0, %v5520
        %v5522 = vpop.f32.mrb[0].mxu0
        %v5523 = vadd.f32 0.0, %v5522
        %v5524 = vpop.f32.mrb[0].mxu0
        %v5525 = vadd.f32 0.0, %v5524
        %5526 = vmatprep.mubr.bf16.mxu0 0
        %5527 = vmatmul.mubr.bf16.gmra.mrb[0].mxu0 %v4938
        %v5528 = vpop.f32.mrb[0].mxu0
        %v5529 = vadd.f32 0.0, %v5528
        %v5530 = vpop.f32.mrb[0].mxu0
        %v5531 = vadd.f32 0.0, %v5530
        %v5532 = vpop.f32.mrb[0].mxu0
        %v5533 = vadd.f32 0.0, %v5532
        %v5534 = vpop.f32.mrb[0].mxu0
        %v5535 = vadd.f32 0.0, %v5534
        %5536 = vmatprep.mubr.bf16.mxu0 0
        %5537 = vmatmul.mubr.bf16.gmra.mrb[0].mxu0 %v4939
        %v5538 = vpop.f32.mrb[0].mxu0
        %v5539 = vadd.f32 0.0, %v5538
        %v5540 = vpop.f32.mrb[0].mxu0
        %v5541 = vadd.f32 0.0, %v5540
        %v5542 = vpop.f32.mrb[0].mxu0
        %v5543 = vadd.f32 0.0, %v5542
        %v5544 = vpop.f32.mrb[0].mxu0
        %v5545 = vadd.f32 0.0, %v5544
        %5546 = vmatprep.mubr.bf16.mxu0 0
        %5547 = vmatmul.mubr.bf16.gmra.mrb[0].mxu0 %v4940
        %v5548 = vpop.f32.mrb[0].mxu0
        %v5549 = vadd.f32 0.0, %v5548
        %v5550 = vpop.f32.mrb[0].mxu0
        %v5551 = vadd.f32 0.0, %v5550
        %v5552 = vpop.f32.mrb[0].mxu0
        %v5553 = vadd.f32 0.0, %v5552
        %v5554 = vpop.f32.mrb[0].mxu0
        %v5555 = vadd.f32 0.0, %v5554
        %5556 = vmatprep.mubr.bf16.mxu0 0
        %5557 = vmatmul.mubr.bf16.gmra.mrb[0].mxu0 %v4941
        %v5558 = vpop.f32.mrb[0].mxu0
        %v5559 = vadd.f32 0.0, %v5558
        %v5560 = vpop.f32.mrb[0].mxu0
        %v5561 = vadd.f32 0.0, %v5560
        %v5562 = vpop.f32.mrb[0].mxu0
        %v5563 = vadd.f32 0.0, %v5562
        %v5564 = vpop.f32.mrb[0].mxu0
        %v5565 = vadd.f32 0.0, %v5564
        %5566 = vmatprep.mubr.bf16.mxu0 0
        %5567 = vmatmul.mubr.bf16.gmra.mrb[0].mxu0 %v4942
        %v5568 = vpop.f32.mrb[0].mxu0
        %v5569 = vadd.f32 0.0, %v5568
        %v5570 = vpop.f32.mrb[0].mxu0
        %v5571 = vadd.f32 0.0, %v5570
        %v5572 = vpop.f32.mrb[0].mxu0
        %v5573 = vadd.f32 0.0, %v5572
        %v5574 = vpop.f32.mrb[0].mxu0
        %v5575 = vadd.f32 0.0, %v5574
        %5576 = vmatprep.mubr.bf16.mxu0 0
        %5577 = vmatmul.mubr.bf16.gmra.mrb[0].mxu0 %v4943
        %v5578 = vpop.f32.mrb[0].mxu0
        %v5579 = vadd.f32 0.0, %v5578
        %v5580 = vpop.f32.mrb[0].mxu0
        %v5581 = vadd.f32 0.0, %v5580
        %v5582 = vpop.f32.mrb[0].mxu0
        %v5583 = vadd.f32 0.0, %v5582
        %v5584 = vpop.f32.mrb[0].mxu0
        %v5585 = vadd.f32 0.0, %v5584
        %5586 = vmatprep.mubr.bf16.mxu0 0
        %5587 = vmatmul.mubr.bf16.gmra.mrb[0].mxu0 %v4944
        %v5588 = vpop.f32.mrb[0].mxu0
        %v5589 = vadd.f32 0.0, %v5588
        %v5590 = vpop.f32.mrb[0].mxu0
        %v5591 = vadd.f32 0.0, %v5590
        %v5592 = vpop.f32.mrb[0].mxu0
        %v5593 = vadd.f32 0.0, %v5592
        %v5594 = vpop.f32.mrb[0].mxu0
        %v5595 = vadd.f32 0.0, %v5594
        %5596 = vmatprep.mubr.bf16.mxu0 0
        %5597 = vmatmul.mubr.bf16.gmra.mrb[0].mxu0 %v4945
        %v5598 = vpop.f32.mrb[0].mxu0
        %v5599 = vadd.f32 0.0, %v5598
        %v5600 = vpop.f32.mrb[0].mxu0
        %v5601 = vadd.f32 0.0, %v5600
        %v5602 = vpop.f32.mrb[0].mxu0
        %v5603 = vadd.f32 0.0, %v5602
        %v5604 = vpop.f32.mrb[0].mxu0
        %v5605 = vadd.f32 0.0, %v5604
        %5606 = vmatprep.mubr.bf16.mxu0 0
        %5607 = vmatmul.mubr.bf16.gmra.mrb[0].mxu0 %v4946
        %v5608 = vpop.f32.mrb[0].mxu0
        %v5609 = vadd.f32 0.0, %v5608
        %v5610 = vpop.f32.mrb[0].mxu0
        %v5611 = vadd.f32 0.0, %v5610
        %v5612 = vpop.f32.mrb[0].mxu0
        %v5613 = vadd.f32 0.0, %v5612
        %v5614 = vpop.f32.mrb[0].mxu0
        %v5615 = vadd.f32 0.0, %v5614
        %5616 = vmatprep.mubr.bf16.mxu0 0
        %5617 = vmatmul.mubr.bf16.gmra.mrb[0].mxu0 %v4947
        %v5618 = vpop.f32.mrb[0].mxu0
        %v5619 = vadd.f32 0.0, %v5618
        %v5620 = vpop.f32.mrb[0].mxu0
        %v5621 = vadd.f32 0.0, %v5620
        %v5622 = vpop.f32.mrb[0].mxu0
        %v5623 = vadd.f32 0.0, %v5622
        %v5624 = vpop.f32.mrb[0].mxu0
        %v5625 = vadd.f32 0.0, %v5624
        %5626 = vmatprep.mubr.bf16.mxu0 0
        %5627 = vmatmul.mubr.bf16.gmra.mrb[0].mxu0 %v4948
        %v5628 = vpop.f32.mrb[0].mxu0
        %v5629 = vadd.f32 0.0, %v5628
        %v5630 = vpop.f32.mrb[0].mxu0
        %v5631 = vadd.f32 0.0, %v5630
        %v5632 = vpop.f32.mrb[0].mxu0
        %v5633 = vadd.f32 0.0, %v5632
        %v5634 = vpop.f32.mrb[0].mxu0
        %v5635 = vadd.f32 0.0, %v5634
        %5636 = vmatprep.mubr.bf16.mxu0 0
        %5637 = vmatmul.mubr.bf16.gmra.mrb[0].mxu0 %v4949
        %v5638 = vpop.f32.mrb[0].mxu0
        %v5639 = vadd.f32 0.0, %v5638
        %v5640 = vpop.f32.mrb[0].mxu0
        %v5641 = vadd.f32 0.0, %v5640
        %v5642 = vpop.f32.mrb[0].mxu0
        %v5643 = vadd.f32 0.0, %v5642
        %v5644 = vpop.f32.mrb[0].mxu0
        %v5645 = vadd.f32 0.0, %v5644
        %5646 = vmatprep.mubr.bf16.mxu0 0
        %5647 = vmatmul.mubr.bf16.gmra.mrb[0].mxu0 %v4950
        %v5648 = vpop.f32.mrb[0].mxu0
        %v5649 = vadd.f32 0.0, %v5648
        %v5650 = vpop.f32.mrb[0].mxu0
        %v5651 = vadd.f32 0.0, %v5650
        %v5652 = vpop.f32.mrb[0].mxu0
        %v5653 = vadd.f32 0.0, %v5652
        %v5654 = vpop.f32.mrb[0].mxu0
        %v5655 = vadd.f32 0.0, %v5654
        %5656 = vmatprep.mubr.bf16.mxu0 0
        %5657 = vmatmul.mubr.bf16.gmra.mrb[0].mxu0 %v4951
        %v5658 = vpop.f32.mrb[0].mxu0
        %v5659 = vadd.f32 0.0, %v5658
        %v5660 = vpop.f32.mrb[0].mxu0
        %v5661 = vadd.f32 0.0, %v5660
        %v5662 = vpop.f32.mrb[0].mxu0
        %v5663 = vadd.f32 0.0, %v5662
        %v5664 = vpop.f32.mrb[0].mxu0
        %v5665 = vadd.f32 0.0, %v5664
        %5666 = vmatprep.mubr.bf16.mxu0 0
        %5667 = vmatmul.mubr.bf16.gmra.mrb[0].mxu0 %v4952
        %v5668 = vpop.f32.mrb[0].mxu0
        %v5669 = vadd.f32 0.0, %v5668
        %v5670 = vpop.f32.mrb[0].mxu0
        %v5671 = vadd.f32 0.0, %v5670
        %v5672 = vpop.f32.mrb[0].mxu0
        %v5673 = vadd.f32 0.0, %v5672
        %v5674 = vpop.f32.mrb[0].mxu0
        %v5675 = vadd.f32 0.0, %v5674
        %5676 = vmatprep.mubr.bf16.mxu0 0
        %5677 = vmatmul.mubr.bf16.gmra.mrb[0].mxu0 %v4953
        %v5678 = vpop.f32.mrb[0].mxu0
        %v5679 = vadd.f32 0.0, %v5678
        %v5680 = vpop.f32.mrb[0].mxu0
        %v5681 = vadd.f32 0.0, %v5680
        %v5682 = vpop.f32.mrb[0].mxu0
        %v5683 = vadd.f32 0.0, %v5682
        %v5684 = vpop.f32.mrb[0].mxu0
        %v5685 = vadd.f32 0.0, %v5684
        %5686 = vmatprep.mubr.bf16.mxu0 0
        %5687 = vmatmul.mubr.bf16.gmra.mrb[0].mxu0 %v4954
        %v5688 = vpop.f32.mrb[0].mxu0
        %v5689 = vadd.f32 0.0, %v5688
        %v5690 = vpop.f32.mrb[0].mxu0
        %v5691 = vadd.f32 0.0, %v5690
        %v5692 = vpop.f32.mrb[0].mxu0
        %v5693 = vadd.f32 0.0, %v5692
        %v5694 = vpop.f32.mrb[0].mxu0
        %v5695 = vadd.f32 0.0, %v5694
        %5696 = vmatprep.mubr.bf16.mxu0 0
        %5697 = vmatmul.mubr.bf16.gmra.mrb[0].mxu0 %v4955
        %v5698 = vpop.f32.mrb[0].mxu0
        %v5699 = vadd.f32 0.0, %v5698
        %v5700 = vpop.f32.mrb[0].mxu0
        %v5701 = vadd.f32 0.0, %v5700
        %v5702 = vpop.f32.mrb[0].mxu0
        %v5703 = vadd.f32 0.0, %v5702
        %v5704 = vpop.f32.mrb[0].mxu0
        %v5705 = vadd.f32 0.0, %v5704
        %5706 = vmatprep.mubr.bf16.mxu0 0
        %5707 = vmatmul.mubr.bf16.gmra.mrb[0].mxu0 %v4956
        %v5708 = vpop.f32.mrb[0].mxu0
        %v5709 = vadd.f32 0.0, %v5708
        %v5710 = vpop.f32.mrb[0].mxu0
        %v5711 = vadd.f32 0.0, %v5710
        %v5712 = vpop.f32.mrb[0].mxu0
        %v5713 = vadd.f32 0.0, %v5712
        %v5714 = vpop.f32.mrb[0].mxu0
        %v5715 = vadd.f32 0.0, %v5714
        %5716 = vmatprep.mubr.bf16.mxu0 0
        %5717 = vmatmul.mubr.bf16.gmra.mrb[0].mxu0 %v4957
        %v5718 = vpop.f32.mrb[0].mxu0
        %v5719 = vadd.f32 0.0, %v5718
        %v5720 = vpop.f32.mrb[0].mxu0
        %v5721 = vadd.f32 0.0, %v5720
        %v5722 = vpop.f32.mrb[0].mxu0
        %v5723 = vadd.f32 0.0, %v5722
        %v5724 = vpop.f32.mrb[0].mxu0
        %v5725 = vadd.f32 0.0, %v5724
        %5726 = vmatprep.mubr.bf16.mxu0 0
        %5727 = vmatmul.mubr.bf16.gmra.mrb[0].mxu0 %v4958
        %v5728 = vpop.f32.mrb[0].mxu0
        %v5729 = vadd.f32 0.0, %v5728
        %v5730 = vpop.f32.mrb[0].mxu0
        %v5731 = vadd.f32 0.0, %v5730
        %v5732 = vpop.f32.mrb[0].mxu0
        %v5733 = vadd.f32 0.0, %v5732
        %v5734 = vpop.f32.mrb[0].mxu0
        %v5735 = vadd.f32 0.0, %v5734
        %5736 = vmatprep.mubr.bf16.mxu0 0
        %5737 = vmatmul.mubr.bf16.gmra.mrb[0].mxu0 %v4959
        %v5738 = vpop.f32.mrb[0].mxu0
        %v5739 = vadd.f32 0.0, %v5738
        %v5740 = vpop.f32.mrb[0].mxu0
        %v5741 = vadd.f32 0.0, %v5740
        %v5742 = vpop.f32.mrb[0].mxu0
        %v5743 = vadd.f32 0.0, %v5742
        %v5744 = vpop.f32.mrb[0].mxu0
        %v5745 = vadd.f32 0.0, %v5744
        %5746 = vmatprep.mubr.bf16.mxu0 0
        %5747 = vmatmul.mubr.bf16.gmra.mrb[0].mxu0 %v4960
        %v5748 = vpop.f32.mrb[0].mxu0
        %v5749 = vadd.f32 0.0, %v5748
        %v5750 = vpop.f32.mrb[0].mxu0
        %v5751 = vadd.f32 0.0, %v5750
        %v5752 = vpop.f32.mrb[0].mxu0
        %v5753 = vadd.f32 0.0, %v5752
        %v5754 = vpop.f32.mrb[0].mxu0
        %v5755 = vadd.f32 0.0, %v5754
        %5756 = vmatprep.mubr.bf16.mxu0 0
        %5757 = vmatmul.mubr.bf16.gmra.mrb[0].mxu0 %v4961
        %v5758 = vpop.f32.mrb[0].mxu0
        %v5759 = vadd.f32 0.0, %v5758
        %v5760 = vpop.f32.mrb[0].mxu0
        %v5761 = vadd.f32 0.0, %v5760
        %v5762 = vpop.f32.mrb[0].mxu0
        %v5763 = vadd.f32 0.0, %v5762
        %v5764 = vpop.f32.mrb[0].mxu0
        %v5765 = vadd.f32 0.0, %v5764
        %5766 = vmatprep.mubr.bf16.mxu0 0
        %5767 = vmatmul.mubr.bf16.gmra.mrb[0].mxu0 %v4962
        %v5768 = vpop.f32.mrb[0].mxu0
        %v5769 = vadd.f32 0.0, %v5768
        %v5770 = vpop.f32.mrb[0].mxu0
        %v5771 = vadd.f32 0.0, %v5770
        %v5772 = vpop.f32.mrb[0].mxu0
        %v5773 = vadd.f32 0.0, %v5772
        %v5774 = vpop.f32.mrb[0].mxu0
        %v5775 = vadd.f32 0.0, %v5774
        %5776 = vmatprep.mubr.bf16.mxu0 0
        %5777 = vmatmul.mubr.bf16.gmra.mrb[0].mxu0 %v4963
        %v5778 = vpop.f32.mrb[0].mxu0
        %v5779 = vadd.f32 0.0, %v5778
        %v5780 = vpop.f32.mrb[0].mxu0
        %v5781 = vadd.f32 0.0, %v5780
        %v5782 = vpop.f32.mrb[0].mxu0
        %v5783 = vadd.f32 0.0, %v5782
        %v5784 = vpop.f32.mrb[0].mxu0
        %v5785 = vadd.f32 0.0, %v5784
        %5786 = vmatprep.mubr.bf16.mxu0 0
        %5787 = vmatmul.mubr.bf16.gmra.mrb[0].mxu0 %v4964
        %v5788 = vpop.f32.mrb[0].mxu0
        %v5789 = vadd.f32 0.0, %v5788
        %v5790 = vpop.f32.mrb[0].mxu0
        %v5791 = vadd.f32 0.0, %v5790
        %v5792 = vpop.f32.mrb[0].mxu0
        %v5793 = vadd.f32 0.0, %v5792
        %v5794 = vpop.f32.mrb[0].mxu0
        %v5795 = vadd.f32 0.0, %v5794
        %5796 = vmatprep.mubr.bf16.mxu0 0
        %5797 = vmatmul.mubr.bf16.gmra.mrb[0].mxu0 %v4965
        %v5798 = vpop.f32.mrb[0].mxu0
        %v5799 = vadd.f32 0.0, %v5798
        %v5800 = vpop.f32.mrb[0].mxu0
        %v5801 = vadd.f32 0.0, %v5800
        %v5802 = vpop.f32.mrb[0].mxu0
        %v5803 = vadd.f32 0.0, %v5802
        %v5804 = vpop.f32.mrb[0].mxu0
        %v5805 = vadd.f32 0.0, %v5804
        %5806 = vmatprep.mubr.bf16.mxu0 0
        %5807 = vmatmul.mubr.bf16.gmra.mrb[0].mxu0 %v4966
        %v5808 = vpop.f32.mrb[0].mxu0
        %v5809 = vadd.f32 0.0, %v5808
        %v5810 = vpop.f32.mrb[0].mxu0
        %v5811 = vadd.f32 0.0, %v5810
        %v5812 = vpop.f32.mrb[0].mxu0
        %v5813 = vadd.f32 0.0, %v5812
        %v5814 = vpop.f32.mrb[0].mxu0
        %v5815 = vadd.f32 0.0, %v5814
        %5816 = vmatprep.mubr.bf16.mxu0 0
        %5817 = vmatmul.mubr.bf16.gmra.mrb[0].mxu0 %v4967
        %v5818 = vpop.f32.mrb[0].mxu0
        %v5819 = vadd.f32 0.0, %v5818
        %v5820 = vpop.f32.mrb[0].mxu0
        %v5821 = vadd.f32 0.0, %v5820
        %v5822 = vpop.f32.mrb[0].mxu0
        %v5823 = vadd.f32 0.0, %v5822
        %v5824 = vpop.f32.mrb[0].mxu0
        %v5825 = vadd.f32 0.0, %v5824
        %5826 = vmatprep.mubr.bf16.mxu0 0
        %5827 = vmatmul.mubr.bf16.gmra.mrb[0].mxu0 %v4968
        %v5828 = vpop.f32.mrb[0].mxu0
        %v5829 = vadd.f32 0.0, %v5828
        %v5830 = vpop.f32.mrb[0].mxu0
        %v5831 = vadd.f32 0.0, %v5830
        %v5832 = vpop.f32.mrb[0].mxu0
        %v5833 = vadd.f32 0.0, %v5832
        %v5834 = vpop.f32.mrb[0].mxu0
        %v5835 = vadd.f32 0.0, %v5834
        %5836 = vmatprep.mubr.bf16.mxu0 0
        %5837 = vmatmul.mubr.bf16.gmra.mrb[0].mxu0 %v4969
        %v5838 = vpop.f32.mrb[0].mxu0
        %v5839 = vadd.f32 0.0, %v5838
        %v5840 = vpop.f32.mrb[0].mxu0
        %v5841 = vadd.f32 0.0, %v5840
        %v5842 = vpop.f32.mrb[0].mxu0
        %v5843 = vadd.f32 0.0, %v5842
        %v5844 = vpop.f32.mrb[0].mxu0
        %v5845 = vadd.f32 0.0, %v5844
        %5846 = vmatprep.mubr.bf16.mxu0 0
        %5847 = vmatmul.mubr.bf16.gmra.mrb[0].mxu0 %v4970
        %v5848 = vpop.f32.mrb[0].mxu0
        %v5849 = vadd.f32 0.0, %v5848
        %v5850 = vpop.f32.mrb[0].mxu0
        %v5851 = vadd.f32 0.0, %v5850
        %v5852 = vpop.f32.mrb[0].mxu0
        %v5853 = vadd.f32 0.0, %v5852
        %v5854 = vpop.f32.mrb[0].mxu0
        %v5855 = vadd.f32 0.0, %v5854
        %5856 = vmatprep.mubr.bf16.mxu0 0
        %5857 = vmatmul.mubr.bf16.gmra.mrb[0].mxu0 %v4971
        %v5858 = vpop.f32.mrb[0].mxu0
        %v5859 = vadd.f32 0.0, %v5858
        %v5860 = vpop.f32.mrb[0].mxu0
        %v5861 = vadd.f32 0.0, %v5860
        %v5862 = vpop.f32.mrb[0].mxu0
        %v5863 = vadd.f32 0.0, %v5862
        %v5864 = vpop.f32.mrb[0].mxu0
        %v5865 = vadd.f32 0.0, %v5864
        %5866 = vmatprep.mubr.bf16.mxu0 0
        %5867 = vmatmul.mubr.bf16.gmra.mrb[0].mxu0 %v4972
        %v5868 = vpop.f32.mrb[0].mxu0
        %v5869 = vadd.f32 0.0, %v5868
        %v5870 = vpop.f32.mrb[0].mxu0
        %v5871 = vadd.f32 0.0, %v5870
        %v5872 = vpop.f32.mrb[0].mxu0
        %v5873 = vadd.f32 0.0, %v5872
        %v5874 = vpop.f32.mrb[0].mxu0
        %v5875 = vadd.f32 0.0, %v5874
        %5876 = vmatprep.mubr.bf16.mxu0 0
        %5877 = vmatmul.mubr.bf16.gmra.mrb[0].mxu0 %v4973
        %v5878 = vpop.f32.mrb[0].mxu0
        %v5879 = vadd.f32 0.0, %v5878
        %v5880 = vpop.f32.mrb[0].mxu0
        %v5881 = vadd.f32 0.0, %v5880
        %v5882 = vpop.f32.mrb[0].mxu0
        %v5883 = vadd.f32 0.0, %v5882
        %v5884 = vpop.f32.mrb[0].mxu0
        %v5885 = vadd.f32 0.0, %v5884
        %5886 = vmatprep.mubr.bf16.mxu0 0
        %5887 = vmatmul.mubr.bf16.gmra.mrb[0].mxu0 %v4974
        %v5888 = vpop.f32.mrb[0].mxu0
        %v5889 = vadd.f32 0.0, %v5888
        %v5890 = vpop.f32.mrb[0].mxu0
        %v5891 = vadd.f32 0.0, %v5890
        %v5892 = vpop.f32.mrb[0].mxu0
        %v5893 = vadd.f32 0.0, %v5892
        %v5894 = vpop.f32.mrb[0].mxu0
        %v5895 = vadd.f32 0.0, %v5894
        %5896 = vmatprep.mubr.bf16.mxu0 0
        %5897 = vmatmul.mubr.bf16.gmra.mrb[0].mxu0 %v4975
        %v5898 = vpop.f32.mrb[0].mxu0
        %v5899 = vadd.f32 0.0, %v5898
        %v5900 = vpop.f32.mrb[0].mxu0
        %v5901 = vadd.f32 0.0, %v5900
        %v5902 = vpop.f32.mrb[0].mxu0
        %v5903 = vadd.f32 0.0, %v5902
        %v5904 = vpop.f32.mrb[0].mxu0
        %v5905 = vadd.f32 0.0, %v5904
        %5906 = vmatprep.mubr.bf16.mxu0 0
        %5907 = vmatmul.mubr.bf16.gmra.mrb[0].mxu0 %v4976
        %v5908 = vpop.f32.mrb[0].mxu0
        %v5909 = vadd.f32 0.0, %v5908
        %v5910 = vpop.f32.mrb[0].mxu0
        %v5911 = vadd.f32 0.0, %v5910
        %v5912 = vpop.f32.mrb[0].mxu0
        %v5913 = vadd.f32 0.0, %v5912
        %v5914 = vpop.f32.mrb[0].mxu0
        %v5915 = vadd.f32 0.0, %v5914
        %5916 = vmatprep.mubr.bf16.mxu0 0
        %5917 = vmatmul.mubr.bf16.gmra.mrb[0].mxu0 %v4977
        %v5918 = vpop.f32.mrb[0].mxu0
        %v5919 = vadd.f32 0.0, %v5918
        %v5920 = vpop.f32.mrb[0].mxu0
        %v5921 = vadd.f32 0.0, %v5920
        %v5922 = vpop.f32.mrb[0].mxu0
        %v5923 = vadd.f32 0.0, %v5922
        %v5924 = vpop.f32.mrb[0].mxu0
        %v5925 = vadd.f32 0.0, %v5924
        %5926 = vmatprep.mubr.bf16.mxu0 0
        %5927 = vmatmul.mubr.bf16.gmra.mrb[0].mxu0 %v4978
        %v5928 = vpop.f32.mrb[0].mxu0
        %v5929 = vadd.f32 0.0, %v5928
        %v5930 = vpop.f32.mrb[0].mxu0
        %v5931 = vadd.f32 0.0, %v5930
        %v5932 = vpop.f32.mrb[0].mxu0
        %v5933 = vadd.f32 0.0, %v5932
        %v5934 = vpop.f32.mrb[0].mxu0
        %v5935 = vadd.f32 0.0, %v5934
        %5936 = vmatprep.mubr.bf16.mxu0 0
        %5937 = vmatmul.mubr.bf16.gmra.mrb[0].mxu0 %v4979
        %v5938 = vpop.f32.mrb[0].mxu0
        %v5939 = vadd.f32 0.0, %v5938
        %v5940 = vpop.f32.mrb[0].mxu0
        %v5941 = vadd.f32 0.0, %v5940
        %v5942 = vpop.f32.mrb[0].mxu0
        %v5943 = vadd.f32 0.0, %v5942
        %v5944 = vpop.f32.mrb[0].mxu0
        %v5945 = vadd.f32 0.0, %v5944
        %5946 = vmatprep.mubr.bf16.mxu0 0
        %5947 = vmatmul.mubr.bf16.gmra.mrb[0].mxu0 %v4980
        %v5948 = vpop.f32.mrb[0].mxu0
        %v5949 = vadd.f32 0.0, %v5948
        %v5950 = vpop.f32.mrb[0].mxu0
        %v5951 = vadd.f32 0.0, %v5950
        %v5952 = vpop.f32.mrb[0].mxu0
        %v5953 = vadd.f32 0.0, %v5952
        %v5954 = vpop.f32.mrb[0].mxu0
        %v5955 = vadd.f32 0.0, %v5954
        %5956 = vmatprep.mubr.bf16.mxu0 0
        %5957 = vmatmul.mubr.bf16.gmra.mrb[0].mxu0 %v4981
        %v5958 = vpop.f32.mrb[0].mxu0
        %v5959 = vadd.f32 0.0, %v5958
        %v5960 = vpop.f32.mrb[0].mxu0
        %v5961 = vadd.f32 0.0, %v5960
        %v5962 = vpop.f32.mrb[0].mxu0
        %v5963 = vadd.f32 0.0, %v5962
        %v5964 = vpop.f32.mrb[0].mxu0
        %v5965 = vadd.f32 0.0, %v5964
        %5966 = vmatprep.mubr.bf16.mxu0 0
        %5967 = vmatmul.mubr.bf16.gmra.mrb[0].mxu0 %v4982
        %v5968 = vpop.f32.mrb[0].mxu0
        %v5969 = vadd.f32 0.0, %v5968
        %v5970 = vpop.f32.mrb[0].mxu0
        %v5971 = vadd.f32 0.0, %v5970
        %v5972 = vpop.f32.mrb[0].mxu0
        %v5973 = vadd.f32 0.0, %v5972
        %v5974 = vpop.f32.mrb[0].mxu0
        %v5975 = vadd.f32 0.0, %v5974
        %5976 = vmatprep.mubr.bf16.mxu0 0
        %5977 = vmatmul.mubr.bf16.gmra.mrb[0].mxu0 %v4983
        %v5978 = vpop.f32.mrb[0].mxu0
        %v5979 = vadd.f32 0.0, %v5978
        %v5980 = vpop.f32.mrb[0].mxu0
        %v5981 = vadd.f32 0.0, %v5980
        %v5982 = vpop.f32.mrb[0].mxu0
        %v5983 = vadd.f32 0.0, %v5982
        %v5984 = vpop.f32.mrb[0].mxu0
        %v5985 = vadd.f32 0.0, %v5984
        %5986 = vmatprep.mubr.bf16.mxu0 0
        %5987 = vmatmul.mubr.bf16.gmra.mrb[0].mxu0 %v4984
        %v5988 = vpop.f32.mrb[0].mxu0
        %v5989 = vadd.f32 0.0, %v5988
        %v5990 = vpop.f32.mrb[0].mxu0
        %v5991 = vadd.f32 0.0, %v5990
        %v5992 = vpop.f32.mrb[0].mxu0
        %v5993 = vadd.f32 0.0, %v5992
        %v5994 = vpop.f32.mrb[0].mxu0
        %v5995 = vadd.f32 0.0, %v5994
        %5996 = vmatprep.mubr.bf16.mxu0 0
        %5997 = vmatmul.mubr.bf16.gmra.mrb[0].mxu0 %v4985
        %v5998 = vpop.f32.mrb[0].mxu0
        %v5999 = vadd.f32 0.0, %v5998
        %v6000 = vpop.f32.mrb[0].mxu0
        %v6001 = vadd.f32 0.0, %v6000
        %v6002 = vpop.f32.mrb[0].mxu0
        %v6003 = vadd.f32 0.0, %v6002
        %v6004 = vpop.f32.mrb[0].mxu0
        %v6005 = vadd.f32 0.0, %v6004
        %6006 = vmatprep.mubr.bf16.mxu0 0
        %6007 = vmatmul.mubr.bf16.gmra.mrb[0].mxu0 %v4986
        %v6008 = vpop.f32.mrb[0].mxu0
        %v6009 = vadd.f32 0.0, %v6008
        %v6010 = vpop.f32.mrb[0].mxu0
        %v6011 = vadd.f32 0.0, %v6010
        %v6012 = vpop.f32.mrb[0].mxu0
        %v6013 = vadd.f32 0.0, %v6012
        %v6014 = vpop.f32.mrb[0].mxu0
        %v6015 = vadd.f32 0.0, %v6014
        %6016 = vmatprep.mubr.bf16.mxu0 0
        %6017 = vmatmul.mubr.bf16.gmra.mrb[0].mxu0 %v4987
        %v6018 = vpop.f32.mrb[0].mxu0
        %v6019 = vadd.f32 0.0, %v6018
        %v6020 = vpop.f32.mrb[0].mxu0
        %v6021 = vadd.f32 0.0, %v6020
        %v6022 = vpop.f32.mrb[0].mxu0
        %v6023 = vadd.f32 0.0, %v6022
        %v6024 = vpop.f32.mrb[0].mxu0
        %v6025 = vadd.f32 0.0, %v6024
        %6026 = vmatprep.mubr.bf16.mxu0 0
        %6027 = vmatmul.mubr.bf16.gmra.mrb[0].mxu0 %v4988
        %v6028 = vpop.f32.mrb[0].mxu0
        %v6029 = vadd.f32 0.0, %v6028
        %v6030 = vpop.f32.mrb[0].mxu0
        %v6031 = vadd.f32 0.0, %v6030
        %v6032 = vpop.f32.mrb[0].mxu0
        %v6033 = vadd.f32 0.0, %v6032
        %v6034 = vpop.f32.mrb[0].mxu0
        %v6035 = vadd.f32 0.0, %v6034
        %6036 = vmatprep.mubr.bf16.mxu0 0
        %6037 = vmatmul.mubr.bf16.gmra.mrb[0].mxu0 %v4989
        %v6038 = vpop.f32.mrb[0].mxu0
        %v6039 = vadd.f32 0.0, %v6038
        %v6040 = vpop.f32.mrb[0].mxu0
        %v6041 = vadd.f32 0.0, %v6040
        %v6042 = vpop.f32.mrb[0].mxu0
        %v6043 = vadd.f32 0.0, %v6042
        %v6044 = vpop.f32.mrb[0].mxu0
        %v6045 = vadd.f32 0.0, %v6044
        %6046 = vdwg.mxu0
        %6047 = vmatprep.subr.bf16.mxu0 %v5249
        %6048 = vmatpush1.bf16.msra.mxu0 %v5248
        %6049 = vmatprep.subr.bf16.mxu0 %v5257
        %6050 = vmatpush1.bf16.msra.mxu0 %v5256
        %6051 = vmatprep.subr.bf16.mxu0 %v5265
        %6052 = vmatpush1.bf16.msra.mxu0 %v5264
        %6053 = vmatprep.subr.bf16.mxu0 %v5273
        %6054 = vmatpush1.bf16.msra.mxu0 %v5272
        %6055 = vmatprep.subr.bf16.mxu0 %v5281
        %6056 = vmatpush1.bf16.msra.mxu0 %v5280
        %6057 = vmatprep.subr.bf16.mxu0 %v5289
        %6058 = vmatpush1.bf16.msra.mxu0 %v5288
        %6059 = vmatprep.subr.bf16.mxu0 %v5297
        %6060 = vmatpush1.bf16.msra.mxu0 %v5296
        %6061 = vmatprep.subr.bf16.mxu0 %v5305
        %6062 = vmatpush1.bf16.msra.mxu0 %v5304
        %6063 = vmatprep.subr.bf16.mxu0 0
        %6064 = vmatpush1.bf16.msra.mxu0 0
        %6065 = vmatprep.subr.bf16.mxu0 0
        %6066 = vmatpush1.bf16.msra.mxu0 0
        %6067 = vmatprep.subr.bf16.mxu0 0
        %6068 = vmatpush1.bf16.msra.mxu0 0
        %6069 = vmatprep.subr.bf16.mxu0 0
        %6070 = vmatpush1.bf16.msra.mxu0 0
        %6071 = vmatprep.subr.bf16.mxu0 0
        %6072 = vmatpush1.bf16.msra.mxu0 0
        %6073 = vmatprep.subr.bf16.mxu0 0
        %6074 = vmatpush1.bf16.msra.mxu0 0
        %6075 = vmatprep.subr.bf16.mxu0 0
        %6076 = vmatpush1.bf16.msra.mxu0 0
        %6077 = vmatprep.subr.bf16.mxu0 0
        %6078 = vmatpush1.bf16.msra.mxu0 0
        %6079 = vmatprep.mubr.bf16.mxu0 0
        %6080 = vmatmul.mubr.bf16.gmra.mrb[0].mxu0 %v4926
        %v6081 = vpop.f32.mrb[0].mxu0
        %v6082 = vadd.f32 0.0, %v6081
        %v6083 = vpop.f32.mrb[0].mxu0
        %v6084 = vadd.f32 0.0, %v6083
        %v6085 = vpop.f32.mrb[0].mxu0
        %v6086 = vadd.f32 0.0, %v6085
        %v6087 = vpop.f32.mrb[0].mxu0
        %v6088 = vadd.f32 0.0, %v6087
        %6089 = vmatprep.mubr.bf16.mxu0 0
        %6090 = vmatmul.mubr.bf16.gmra.mrb[0].mxu0 %v4927
        %v6091 = vpop.f32.mrb[0].mxu0
        %v6092 = vadd.f32 0.0, %v6091
        %v6093 = vpop.f32.mrb[0].mxu0
        %v6094 = vadd.f32 0.0, %v6093
        %v6095 = vpop.f32.mrb[0].mxu0
        %v6096 = vadd.f32 0.0, %v6095
        %v6097 = vpop.f32.mrb[0].mxu0
        %v6098 = vadd.f32 0.0, %v6097
        %6099 = vmatprep.mubr.bf16.mxu0 0
        %6100 = vmatmul.mubr.bf16.gmra.mrb[0].mxu0 %v4928
        %v6101 = vpop.f32.mrb[0].mxu0
        %v6102 = vadd.f32 0.0, %v6101
        %v6103 = vpop.f32.mrb[0].mxu0
        %v6104 = vadd.f32 0.0, %v6103
        %v6105 = vpop.f32.mrb[0].mxu0
        %v6106 = vadd.f32 0.0, %v6105
        %v6107 = vpop.f32.mrb[0].mxu0
        %v6108 = vadd.f32 0.0, %v6107
        %6109 = vmatprep.mubr.bf16.mxu0 0
        %6110 = vmatmul.mubr.bf16.gmra.mrb[0].mxu0 %v4929
        %v6111 = vpop.f32.mrb[0].mxu0
        %v6112 = vadd.f32 0.0, %v6111
        %v6113 = vpop.f32.mrb[0].mxu0
        %v6114 = vadd.f32 0.0, %v6113
        %v6115 = vpop.f32.mrb[0].mxu0
        %v6116 = vadd.f32 0.0, %v6115
        %v6117 = vpop.f32.mrb[0].mxu0
        %v6118 = vadd.f32 0.0, %v6117
        %6119 = vmatprep.mubr.bf16.mxu0 0
        %6120 = vmatmul.mubr.bf16.gmra.mrb[0].mxu0 %v4930
        %v6121 = vpop.f32.mrb[0].mxu0
        %v6122 = vadd.f32 0.0, %v6121
        %v6123 = vpop.f32.mrb[0].mxu0
        %v6124 = vadd.f32 0.0, %v6123
        %v6125 = vpop.f32.mrb[0].mxu0
        %v6126 = vadd.f32 0.0, %v6125
        %v6127 = vpop.f32.mrb[0].mxu0
        %v6128 = vadd.f32 0.0, %v6127
        %6129 = vmatprep.mubr.bf16.mxu0 0
        %6130 = vmatmul.mubr.bf16.gmra.mrb[0].mxu0 %v4931
        %v6131 = vpop.f32.mrb[0].mxu0
        %v6132 = vadd.f32 0.0, %v6131
        %v6133 = vpop.f32.mrb[0].mxu0
        %v6134 = vadd.f32 0.0, %v6133
        %v6135 = vpop.f32.mrb[0].mxu0
        %v6136 = vadd.f32 0.0, %v6135
        %v6137 = vpop.f32.mrb[0].mxu0
        %v6138 = vadd.f32 0.0, %v6137
        %6139 = vmatprep.mubr.bf16.mxu0 0
        %6140 = vmatmul.mubr.bf16.gmra.mrb[0].mxu0 %v4932
        %v6141 = vpop.f32.mrb[0].mxu0
        %v6142 = vadd.f32 0.0, %v6141
        %v6143 = vpop.f32.mrb[0].mxu0
        %v6144 = vadd.f32 0.0, %v6143
        %v6145 = vpop.f32.mrb[0].mxu0
        %v6146 = vadd.f32 0.0, %v6145
        %v6147 = vpop.f32.mrb[0].mxu0
        %v6148 = vadd.f32 0.0, %v6147
        %6149 = vmatprep.mubr.bf16.mxu0 0
        %6150 = vmatmul.mubr.bf16.gmra.mrb[0].mxu0 %v4933
        %v6151 = vpop.f32.mrb[0].mxu0
        %v6152 = vadd.f32 0.0, %v6151
        %v6153 = vpop.f32.mrb[0].mxu0
        %v6154 = vadd.f32 0.0, %v6153
        %v6155 = vpop.f32.mrb[0].mxu0
        %v6156 = vadd.f32 0.0, %v6155
        %v6157 = vpop.f32.mrb[0].mxu0
        %v6158 = vadd.f32 0.0, %v6157
        %6159 = vmatprep.mubr.bf16.mxu0 0
        %6160 = vmatmul.mubr.bf16.gmra.mrb[0].mxu0 %v4934
        %v6161 = vpop.f32.mrb[0].mxu0
        %v6162 = vadd.f32 0.0, %v6161
        %v6163 = vpop.f32.mrb[0].mxu0
        %v6164 = vadd.f32 0.0, %v6163
        %v6165 = vpop.f32.mrb[0].mxu0
        %v6166 = vadd.f32 0.0, %v6165
        %v6167 = vpop.f32.mrb[0].mxu0
        %v6168 = vadd.f32 0.0, %v6167
        %6169 = vmatprep.mubr.bf16.mxu0 0
        %6170 = vmatmul.mubr.bf16.gmra.mrb[0].mxu0 %v4935
        %v6171 = vpop.f32.mrb[0].mxu0
        %v6172 = vadd.f32 0.0, %v6171
        %v6173 = vpop.f32.mrb[0].mxu0
        %v6174 = vadd.f32 0.0, %v6173
        %v6175 = vpop.f32.mrb[0].mxu0
        %v6176 = vadd.f32 0.0, %v6175
        %v6177 = vpop.f32.mrb[0].mxu0
        %v6178 = vadd.f32 0.0, %v6177
        %6179 = vmatprep.mubr.bf16.mxu0 0
        %6180 = vmatmul.mubr.bf16.gmra.mrb[0].mxu0 %v4936
        %v6181 = vpop.f32.mrb[0].mxu0
        %v6182 = vadd.f32 0.0, %v6181
        %v6183 = vpop.f32.mrb[0].mxu0
        %v6184 = vadd.f32 0.0, %v6183
        %v6185 = vpop.f32.mrb[0].mxu0
        %v6186 = vadd.f32 0.0, %v6185
        %v6187 = vpop.f32.mrb[0].mxu0
        %v6188 = vadd.f32 0.0, %v6187
        %6189 = vmatprep.mubr.bf16.mxu0 0
        %6190 = vmatmul.mubr.bf16.gmra.mrb[0].mxu0 %v4937
        %v6191 = vpop.f32.mrb[0].mxu0
        %v6192 = vadd.f32 0.0, %v6191
        %v6193 = vpop.f32.mrb[0].mxu0
        %v6194 = vadd.f32 0.0, %v6193
        %v6195 = vpop.f32.mrb[0].mxu0
        %v6196 = vadd.f32 0.0, %v6195
        %v6197 = vpop.f32.mrb[0].mxu0
        %v6198 = vadd.f32 0.0, %v6197
        %6199 = vmatprep.mubr.bf16.mxu0 0
        %6200 = vmatmul.mubr.bf16.gmra.mrb[0].mxu0 %v4938
        %v6201 = vpop.f32.mrb[0].mxu0
        %v6202 = vadd.f32 0.0, %v6201
        %v6203 = vpop.f32.mrb[0].mxu0
        %v6204 = vadd.f32 0.0, %v6203
        %v6205 = vpop.f32.mrb[0].mxu0
        %v6206 = vadd.f32 0.0, %v6205
        %v6207 = vpop.f32.mrb[0].mxu0
        %v6208 = vadd.f32 0.0, %v6207
        %6209 = vmatprep.mubr.bf16.mxu0 0
        %6210 = vmatmul.mubr.bf16.gmra.mrb[0].mxu0 %v4939
        %v6211 = vpop.f32.mrb[0].mxu0
        %v6212 = vadd.f32 0.0, %v6211
        %v6213 = vpop.f32.mrb[0].mxu0
        %v6214 = vadd.f32 0.0, %v6213
        %v6215 = vpop.f32.mrb[0].mxu0
        %v6216 = vadd.f32 0.0, %v6215
        %v6217 = vpop.f32.mrb[0].mxu0
        %v6218 = vadd.f32 0.0, %v6217
        %6219 = vmatprep.mubr.bf16.mxu0 0
        %6220 = vmatmul.mubr.bf16.gmra.mrb[0].mxu0 %v4940
        %v6221 = vpop.f32.mrb[0].mxu0
        %v6222 = vadd.f32 0.0, %v6221
        %v6223 = vpop.f32.mrb[0].mxu0
        %v6224 = vadd.f32 0.0, %v6223
        %v6225 = vpop.f32.mrb[0].mxu0
        %v6226 = vadd.f32 0.0, %v6225
        %v6227 = vpop.f32.mrb[0].mxu0
        %v6228 = vadd.f32 0.0, %v6227
        %6229 = vmatprep.mubr.bf16.mxu0 0
        %6230 = vmatmul.mubr.bf16.gmra.mrb[0].mxu0 %v4941
        %v6231 = vpop.f32.mrb[0].mxu0
        %v6232 = vadd.f32 0.0, %v6231
        %v6233 = vpop.f32.mrb[0].mxu0
        %v6234 = vadd.f32 0.0, %v6233
        %v6235 = vpop.f32.mrb[0].mxu0
        %v6236 = vadd.f32 0.0, %v6235
        %v6237 = vpop.f32.mrb[0].mxu0
        %v6238 = vadd.f32 0.0, %v6237
        %6239 = vmatprep.mubr.bf16.mxu0 0
        %6240 = vmatmul.mubr.bf16.gmra.mrb[0].mxu0 %v4942
        %v6241 = vpop.f32.mrb[0].mxu0
        %v6242 = vadd.f32 0.0, %v6241
        %v6243 = vpop.f32.mrb[0].mxu0
        %v6244 = vadd.f32 0.0, %v6243
        %v6245 = vpop.f32.mrb[0].mxu0
        %v6246 = vadd.f32 0.0, %v6245
        %v6247 = vpop.f32.mrb[0].mxu0
        %v6248 = vadd.f32 0.0, %v6247
        %6249 = vmatprep.mubr.bf16.mxu0 0
        %6250 = vmatmul.mubr.bf16.gmra.mrb[0].mxu0 %v4943
        %v6251 = vpop.f32.mrb[0].mxu0
        %v6252 = vadd.f32 0.0, %v6251
        %v6253 = vpop.f32.mrb[0].mxu0
        %v6254 = vadd.f32 0.0, %v6253
        %v6255 = vpop.f32.mrb[0].mxu0
        %v6256 = vadd.f32 0.0, %v6255
        %v6257 = vpop.f32.mrb[0].mxu0
        %v6258 = vadd.f32 0.0, %v6257
        %6259 = vmatprep.mubr.bf16.mxu0 0
        %6260 = vmatmul.mubr.bf16.gmra.mrb[0].mxu0 %v4944
        %v6261 = vpop.f32.mrb[0].mxu0
        %v6262 = vadd.f32 0.0, %v6261
        %v6263 = vpop.f32.mrb[0].mxu0
        %v6264 = vadd.f32 0.0, %v6263
        %v6265 = vpop.f32.mrb[0].mxu0
        %v6266 = vadd.f32 0.0, %v6265
        %v6267 = vpop.f32.mrb[0].mxu0
        %v6268 = vadd.f32 0.0, %v6267
        %6269 = vmatprep.mubr.bf16.mxu0 0
        %6270 = vmatmul.mubr.bf16.gmra.mrb[0].mxu0 %v4945
        %v6271 = vpop.f32.mrb[0].mxu0
        %v6272 = vadd.f32 0.0, %v6271
        %v6273 = vpop.f32.mrb[0].mxu0
        %v6274 = vadd.f32 0.0, %v6273
        %v6275 = vpop.f32.mrb[0].mxu0
        %v6276 = vadd.f32 0.0, %v6275
        %v6277 = vpop.f32.mrb[0].mxu0
        %v6278 = vadd.f32 0.0, %v6277
        %6279 = vmatprep.mubr.bf16.mxu0 0
        %6280 = vmatmul.mubr.bf16.gmra.mrb[0].mxu0 %v4946
        %v6281 = vpop.f32.mrb[0].mxu0
        %v6282 = vadd.f32 0.0, %v6281
        %v6283 = vpop.f32.mrb[0].mxu0
        %v6284 = vadd.f32 0.0, %v6283
        %v6285 = vpop.f32.mrb[0].mxu0
        %v6286 = vadd.f32 0.0, %v6285
        %v6287 = vpop.f32.mrb[0].mxu0
        %v6288 = vadd.f32 0.0, %v6287
        %6289 = vmatprep.mubr.bf16.mxu0 0
        %6290 = vmatmul.mubr.bf16.gmra.mrb[0].mxu0 %v4947
        %v6291 = vpop.f32.mrb[0].mxu0
        %v6292 = vadd.f32 0.0, %v6291
        %v6293 = vpop.f32.mrb[0].mxu0
        %v6294 = vadd.f32 0.0, %v6293
        %v6295 = vpop.f32.mrb[0].mxu0
        %v6296 = vadd.f32 0.0, %v6295
        %v6297 = vpop.f32.mrb[0].mxu0
        %v6298 = vadd.f32 0.0, %v6297
        %6299 = vmatprep.mubr.bf16.mxu0 0
        %6300 = vmatmul.mubr.bf16.gmra.mrb[0].mxu0 %v4948
        %v6301 = vpop.f32.mrb[0].mxu0
        %v6302 = vadd.f32 0.0, %v6301
        %v6303 = vpop.f32.mrb[0].mxu0
        %v6304 = vadd.f32 0.0, %v6303
        %v6305 = vpop.f32.mrb[0].mxu0
        %v6306 = vadd.f32 0.0, %v6305
        %v6307 = vpop.f32.mrb[0].mxu0
        %v6308 = vadd.f32 0.0, %v6307
        %6309 = vmatprep.mubr.bf16.mxu0 0
        %6310 = vmatmul.mubr.bf16.gmra.mrb[0].mxu0 %v4949
        %v6311 = vpop.f32.mrb[0].mxu0
        %v6312 = vadd.f32 0.0, %v6311
        %v6313 = vpop.f32.mrb[0].mxu0
        %v6314 = vadd.f32 0.0, %v6313
        %v6315 = vpop.f32.mrb[0].mxu0
        %v6316 = vadd.f32 0.0, %v6315
        %v6317 = vpop.f32.mrb[0].mxu0
        %v6318 = vadd.f32 0.0, %v6317
        %6319 = vmatprep.mubr.bf16.mxu0 0
        %6320 = vmatmul.mubr.bf16.gmra.mrb[0].mxu0 %v4950
        %v6321 = vpop.f32.mrb[0].mxu0
        %v6322 = vadd.f32 0.0, %v6321
        %v6323 = vpop.f32.mrb[0].mxu0
        %v6324 = vadd.f32 0.0, %v6323
        %v6325 = vpop.f32.mrb[0].mxu0
        %v6326 = vadd.f32 0.0, %v6325
        %v6327 = vpop.f32.mrb[0].mxu0
        %v6328 = vadd.f32 0.0, %v6327
        %6329 = vmatprep.mubr.bf16.mxu0 0
        %6330 = vmatmul.mubr.bf16.gmra.mrb[0].mxu0 %v4951
        %v6331 = vpop.f32.mrb[0].mxu0
        %v6332 = vadd.f32 0.0, %v6331
        %v6333 = vpop.f32.mrb[0].mxu0
        %v6334 = vadd.f32 0.0, %v6333
        %v6335 = vpop.f32.mrb[0].mxu0
        %v6336 = vadd.f32 0.0, %v6335
        %v6337 = vpop.f32.mrb[0].mxu0
        %v6338 = vadd.f32 0.0, %v6337
        %6339 = vmatprep.mubr.bf16.mxu0 0
        %6340 = vmatmul.mubr.bf16.gmra.mrb[0].mxu0 %v4952
        %v6341 = vpop.f32.mrb[0].mxu0
        %v6342 = vadd.f32 0.0, %v6341
        %v6343 = vpop.f32.mrb[0].mxu0
        %v6344 = vadd.f32 0.0, %v6343
        %v6345 = vpop.f32.mrb[0].mxu0
        %v6346 = vadd.f32 0.0, %v6345
        %v6347 = vpop.f32.mrb[0].mxu0
        %v6348 = vadd.f32 0.0, %v6347
        %6349 = vmatprep.mubr.bf16.mxu0 0
        %6350 = vmatmul.mubr.bf16.gmra.mrb[0].mxu0 %v4953
        %v6351 = vpop.f32.mrb[0].mxu0
        %v6352 = vadd.f32 0.0, %v6351
        %v6353 = vpop.f32.mrb[0].mxu0
        %v6354 = vadd.f32 0.0, %v6353
        %v6355 = vpop.f32.mrb[0].mxu0
        %v6356 = vadd.f32 0.0, %v6355
        %v6357 = vpop.f32.mrb[0].mxu0
        %v6358 = vadd.f32 0.0, %v6357
        %6359 = vmatprep.mubr.bf16.mxu0 0
        %6360 = vmatmul.mubr.bf16.gmra.mrb[0].mxu0 %v4954
        %v6361 = vpop.f32.mrb[0].mxu0
        %v6362 = vadd.f32 0.0, %v6361
        %v6363 = vpop.f32.mrb[0].mxu0
        %v6364 = vadd.f32 0.0, %v6363
        %v6365 = vpop.f32.mrb[0].mxu0
        %v6366 = vadd.f32 0.0, %v6365
        %v6367 = vpop.f32.mrb[0].mxu0
        %v6368 = vadd.f32 0.0, %v6367
        %6369 = vmatprep.mubr.bf16.mxu0 0
        %6370 = vmatmul.mubr.bf16.gmra.mrb[0].mxu0 %v4955
        %v6371 = vpop.f32.mrb[0].mxu0
        %v6372 = vadd.f32 0.0, %v6371
        %v6373 = vpop.f32.mrb[0].mxu0
        %v6374 = vadd.f32 0.0, %v6373
        %v6375 = vpop.f32.mrb[0].mxu0
        %v6376 = vadd.f32 0.0, %v6375
        %v6377 = vpop.f32.mrb[0].mxu0
        %v6378 = vadd.f32 0.0, %v6377
        %6379 = vmatprep.mubr.bf16.mxu0 0
        %6380 = vmatmul.mubr.bf16.gmra.mrb[0].mxu0 %v4956
        %v6381 = vpop.f32.mrb[0].mxu0
        %v6382 = vadd.f32 0.0, %v6381
        %v6383 = vpop.f32.mrb[0].mxu0
        %v6384 = vadd.f32 0.0, %v6383
        %v6385 = vpop.f32.mrb[0].mxu0
        %v6386 = vadd.f32 0.0, %v6385
        %v6387 = vpop.f32.mrb[0].mxu0
        %v6388 = vadd.f32 0.0, %v6387
        %6389 = vmatprep.mubr.bf16.mxu0 0
        %6390 = vmatmul.mubr.bf16.gmra.mrb[0].mxu0 %v4957
        %v6391 = vpop.f32.mrb[0].mxu0
        %v6392 = vadd.f32 0.0, %v6391
        %v6393 = vpop.f32.mrb[0].mxu0
        %v6394 = vadd.f32 0.0, %v6393
        %v6395 = vpop.f32.mrb[0].mxu0
        %v6396 = vadd.f32 0.0, %v6395
        %v6397 = vpop.f32.mrb[0].mxu0
        %v6398 = vadd.f32 0.0, %v6397
        %6399 = vmatprep.mubr.bf16.mxu0 0
        %6400 = vmatmul.mubr.bf16.gmra.mrb[0].mxu0 %v4958
        %v6401 = vpop.f32.mrb[0].mxu0
        %v6402 = vadd.f32 0.0, %v6401
        %v6403 = vpop.f32.mrb[0].mxu0
        %v6404 = vadd.f32 0.0, %v6403
        %v6405 = vpop.f32.mrb[0].mxu0
        %v6406 = vadd.f32 0.0, %v6405
        %v6407 = vpop.f32.mrb[0].mxu0
        %v6408 = vadd.f32 0.0, %v6407
        %6409 = vmatprep.mubr.bf16.mxu0 0
        %6410 = vmatmul.mubr.bf16.gmra.mrb[0].mxu0 %v4959
        %v6411 = vpop.f32.mrb[0].mxu0
        %v6412 = vadd.f32 0.0, %v6411
        %v6413 = vpop.f32.mrb[0].mxu0
        %v6414 = vadd.f32 0.0, %v6413
        %v6415 = vpop.f32.mrb[0].mxu0
        %v6416 = vadd.f32 0.0, %v6415
        %v6417 = vpop.f32.mrb[0].mxu0
        %v6418 = vadd.f32 0.0, %v6417
        %6419 = vmatprep.mubr.bf16.mxu0 0
        %6420 = vmatmul.mubr.bf16.gmra.mrb[0].mxu0 %v4960
        %v6421 = vpop.f32.mrb[0].mxu0
        %v6422 = vadd.f32 0.0, %v6421
        %v6423 = vpop.f32.mrb[0].mxu0
        %v6424 = vadd.f32 0.0, %v6423
        %v6425 = vpop.f32.mrb[0].mxu0
        %v6426 = vadd.f32 0.0, %v6425
        %v6427 = vpop.f32.mrb[0].mxu0
        %v6428 = vadd.f32 0.0, %v6427
        %6429 = vmatprep.mubr.bf16.mxu0 0
        %6430 = vmatmul.mubr.bf16.gmra.mrb[0].mxu0 %v4961
        %v6431 = vpop.f32.mrb[0].mxu0
        %v6432 = vadd.f32 0.0, %v6431
        %v6433 = vpop.f32.mrb[0].mxu0
        %v6434 = vadd.f32 0.0, %v6433
        %v6435 = vpop.f32.mrb[0].mxu0
        %v6436 = vadd.f32 0.0, %v6435
        %v6437 = vpop.f32.mrb[0].mxu0
        %v6438 = vadd.f32 0.0, %v6437
        %6439 = vmatprep.mubr.bf16.mxu0 0
        %6440 = vmatmul.mubr.bf16.gmra.mrb[0].mxu0 %v4962
        %v6441 = vpop.f32.mrb[0].mxu0
        %v6442 = vadd.f32 0.0, %v6441
        %v6443 = vpop.f32.mrb[0].mxu0
        %v6444 = vadd.f32 0.0, %v6443
        %v6445 = vpop.f32.mrb[0].mxu0
        %v6446 = vadd.f32 0.0, %v6445
        %v6447 = vpop.f32.mrb[0].mxu0
        %v6448 = vadd.f32 0.0, %v6447
        %6449 = vmatprep.mubr.bf16.mxu0 0
        %6450 = vmatmul.mubr.bf16.gmra.mrb[0].mxu0 %v4963
        %v6451 = vpop.f32.mrb[0].mxu0
        %v6452 = vadd.f32 0.0, %v6451
        %v6453 = vpop.f32.mrb[0].mxu0
        %v6454 = vadd.f32 0.0, %v6453
        %v6455 = vpop.f32.mrb[0].mxu0
        %v6456 = vadd.f32 0.0, %v6455
        %v6457 = vpop.f32.mrb[0].mxu0
        %v6458 = vadd.f32 0.0, %v6457
        %6459 = vmatprep.mubr.bf16.mxu0 0
        %6460 = vmatmul.mubr.bf16.gmra.mrb[0].mxu0 %v4964
        %v6461 = vpop.f32.mrb[0].mxu0
        %v6462 = vadd.f32 0.0, %v6461
        %v6463 = vpop.f32.mrb[0].mxu0
        %v6464 = vadd.f32 0.0, %v6463
        %v6465 = vpop.f32.mrb[0].mxu0
        %v6466 = vadd.f32 0.0, %v6465
        %v6467 = vpop.f32.mrb[0].mxu0
        %v6468 = vadd.f32 0.0, %v6467
        %6469 = vmatprep.mubr.bf16.mxu0 0
        %6470 = vmatmul.mubr.bf16.gmra.mrb[0].mxu0 %v4965
        %v6471 = vpop.f32.mrb[0].mxu0
        %v6472 = vadd.f32 0.0, %v6471
        %v6473 = vpop.f32.mrb[0].mxu0
        %v6474 = vadd.f32 0.0, %v6473
        %v6475 = vpop.f32.mrb[0].mxu0
        %v6476 = vadd.f32 0.0, %v6475
        %v6477 = vpop.f32.mrb[0].mxu0
        %v6478 = vadd.f32 0.0, %v6477
        %6479 = vmatprep.mubr.bf16.mxu0 0
        %6480 = vmatmul.mubr.bf16.gmra.mrb[0].mxu0 %v4966
        %v6481 = vpop.f32.mrb[0].mxu0
        %v6482 = vadd.f32 0.0, %v6481
        %v6483 = vpop.f32.mrb[0].mxu0
        %v6484 = vadd.f32 0.0, %v6483
        %v6485 = vpop.f32.mrb[0].mxu0
        %v6486 = vadd.f32 0.0, %v6485
        %v6487 = vpop.f32.mrb[0].mxu0
        %v6488 = vadd.f32 0.0, %v6487
        %6489 = vmatprep.mubr.bf16.mxu0 0
        %6490 = vmatmul.mubr.bf16.gmra.mrb[0].mxu0 %v4967
        %v6491 = vpop.f32.mrb[0].mxu0
        %v6492 = vadd.f32 0.0, %v6491
        %v6493 = vpop.f32.mrb[0].mxu0
        %v6494 = vadd.f32 0.0, %v6493
        %v6495 = vpop.f32.mrb[0].mxu0
        %v6496 = vadd.f32 0.0, %v6495
        %v6497 = vpop.f32.mrb[0].mxu0
        %v6498 = vadd.f32 0.0, %v6497
        %6499 = vmatprep.mubr.bf16.mxu0 0
        %6500 = vmatmul.mubr.bf16.gmra.mrb[0].mxu0 %v4968
        %v6501 = vpop.f32.mrb[0].mxu0
        %v6502 = vadd.f32 0.0, %v6501
        %v6503 = vpop.f32.mrb[0].mxu0
        %v6504 = vadd.f32 0.0, %v6503
        %v6505 = vpop.f32.mrb[0].mxu0
        %v6506 = vadd.f32 0.0, %v6505
        %v6507 = vpop.f32.mrb[0].mxu0
        %v6508 = vadd.f32 0.0, %v6507
        %6509 = vmatprep.mubr.bf16.mxu0 0
        %6510 = vmatmul.mubr.bf16.gmra.mrb[0].mxu0 %v4969
        %v6511 = vpop.f32.mrb[0].mxu0
        %v6512 = vadd.f32 0.0, %v6511
        %v6513 = vpop.f32.mrb[0].mxu0
        %v6514 = vadd.f32 0.0, %v6513
        %v6515 = vpop.f32.mrb[0].mxu0
        %v6516 = vadd.f32 0.0, %v6515
        %v6517 = vpop.f32.mrb[0].mxu0
        %v6518 = vadd.f32 0.0, %v6517
        %6519 = vmatprep.mubr.bf16.mxu0 0
        %6520 = vmatmul.mubr.bf16.gmra.mrb[0].mxu0 %v4970
        %v6521 = vpop.f32.mrb[0].mxu0
        %v6522 = vadd.f32 0.0, %v6521
        %v6523 = vpop.f32.mrb[0].mxu0
        %v6524 = vadd.f32 0.0, %v6523
        %v6525 = vpop.f32.mrb[0].mxu0
        %v6526 = vadd.f32 0.0, %v6525
        %v6527 = vpop.f32.mrb[0].mxu0
        %v6528 = vadd.f32 0.0, %v6527
        %6529 = vmatprep.mubr.bf16.mxu0 0
        %6530 = vmatmul.mubr.bf16.gmra.mrb[0].mxu0 %v4971
        %v6531 = vpop.f32.mrb[0].mxu0
        %v6532 = vadd.f32 0.0, %v6531
        %v6533 = vpop.f32.mrb[0].mxu0
        %v6534 = vadd.f32 0.0, %v6533
        %v6535 = vpop.f32.mrb[0].mxu0
        %v6536 = vadd.f32 0.0, %v6535
        %v6537 = vpop.f32.mrb[0].mxu0
        %v6538 = vadd.f32 0.0, %v6537
        %6539 = vmatprep.mubr.bf16.mxu0 0
        %6540 = vmatmul.mubr.bf16.gmra.mrb[0].mxu0 %v4972
        %v6541 = vpop.f32.mrb[0].mxu0
        %v6542 = vadd.f32 0.0, %v6541
        %v6543 = vpop.f32.mrb[0].mxu0
        %v6544 = vadd.f32 0.0, %v6543
        %v6545 = vpop.f32.mrb[0].mxu0
        %v6546 = vadd.f32 0.0, %v6545
        %v6547 = vpop.f32.mrb[0].mxu0
        %v6548 = vadd.f32 0.0, %v6547
        %6549 = vmatprep.mubr.bf16.mxu0 0
        %6550 = vmatmul.mubr.bf16.gmra.mrb[0].mxu0 %v4973
        %v6551 = vpop.f32.mrb[0].mxu0
        %v6552 = vadd.f32 0.0, %v6551
        %v6553 = vpop.f32.mrb[0].mxu0
        %v6554 = vadd.f32 0.0, %v6553
        %v6555 = vpop.f32.mrb[0].mxu0
        %v6556 = vadd.f32 0.0, %v6555
        %v6557 = vpop.f32.mrb[0].mxu0
        %v6558 = vadd.f32 0.0, %v6557
        %6559 = vmatprep.mubr.bf16.mxu0 0
        %6560 = vmatmul.mubr.bf16.gmra.mrb[0].mxu0 %v4974
        %v6561 = vpop.f32.mrb[0].mxu0
        %v6562 = vadd.f32 0.0, %v6561
        %v6563 = vpop.f32.mrb[0].mxu0
        %v6564 = vadd.f32 0.0, %v6563
        %v6565 = vpop.f32.mrb[0].mxu0
        %v6566 = vadd.f32 0.0, %v6565
        %v6567 = vpop.f32.mrb[0].mxu0
        %v6568 = vadd.f32 0.0, %v6567
        %6569 = vmatprep.mubr.bf16.mxu0 0
        %6570 = vmatmul.mubr.bf16.gmra.mrb[0].mxu0 %v4975
        %v6571 = vpop.f32.mrb[0].mxu0
        %v6572 = vadd.f32 0.0, %v6571
        %v6573 = vpop.f32.mrb[0].mxu0
        %v6574 = vadd.f32 0.0, %v6573
        %v6575 = vpop.f32.mrb[0].mxu0
        %v6576 = vadd.f32 0.0, %v6575
        %v6577 = vpop.f32.mrb[0].mxu0
        %v6578 = vadd.f32 0.0, %v6577
        %6579 = vmatprep.mubr.bf16.mxu0 0
        %6580 = vmatmul.mubr.bf16.gmra.mrb[0].mxu0 %v4976
        %v6581 = vpop.f32.mrb[0].mxu0
        %v6582 = vadd.f32 0.0, %v6581
        %v6583 = vpop.f32.mrb[0].mxu0
        %v6584 = vadd.f32 0.0, %v6583
        %v6585 = vpop.f32.mrb[0].mxu0
        %v6586 = vadd.f32 0.0, %v6585
        %v6587 = vpop.f32.mrb[0].mxu0
        %v6588 = vadd.f32 0.0, %v6587
        %6589 = vmatprep.mubr.bf16.mxu0 0
        %6590 = vmatmul.mubr.bf16.gmra.mrb[0].mxu0 %v4977
        %v6591 = vpop.f32.mrb[0].mxu0
        %v6592 = vadd.f32 0.0, %v6591
        %v6593 = vpop.f32.mrb[0].mxu0
        %v6594 = vadd.f32 0.0, %v6593
        %v6595 = vpop.f32.mrb[0].mxu0
        %v6596 = vadd.f32 0.0, %v6595
        %v6597 = vpop.f32.mrb[0].mxu0
        %v6598 = vadd.f32 0.0, %v6597
        %6599 = vmatprep.mubr.bf16.mxu0 0
        %6600 = vmatmul.mubr.bf16.gmra.mrb[0].mxu0 %v4978
        %v6601 = vpop.f32.mrb[0].mxu0
        %v6602 = vadd.f32 0.0, %v6601
        %v6603 = vpop.f32.mrb[0].mxu0
        %v6604 = vadd.f32 0.0, %v6603
        %v6605 = vpop.f32.mrb[0].mxu0
        %v6606 = vadd.f32 0.0, %v6605
        %v6607 = vpop.f32.mrb[0].mxu0
        %v6608 = vadd.f32 0.0, %v6607
        %6609 = vmatprep.mubr.bf16.mxu0 0
        %6610 = vmatmul.mubr.bf16.gmra.mrb[0].mxu0 %v4979
        %v6611 = vpop.f32.mrb[0].mxu0
        %v6612 = vadd.f32 0.0, %v6611
        %v6613 = vpop.f32.mrb[0].mxu0
        %v6614 = vadd.f32 0.0, %v6613
        %v6615 = vpop.f32.mrb[0].mxu0
        %v6616 = vadd.f32 0.0, %v6615
        %v6617 = vpop.f32.mrb[0].mxu0
        %v6618 = vadd.f32 0.0, %v6617
        %6619 = vmatprep.mubr.bf16.mxu0 0
        %6620 = vmatmul.mubr.bf16.gmra.mrb[0].mxu0 %v4980
        %v6621 = vpop.f32.mrb[0].mxu0
        %v6622 = vadd.f32 0.0, %v6621
        %v6623 = vpop.f32.mrb[0].mxu0
        %v6624 = vadd.f32 0.0, %v6623
        %v6625 = vpop.f32.mrb[0].mxu0
        %v6626 = vadd.f32 0.0, %v6625
        %v6627 = vpop.f32.mrb[0].mxu0
        %v6628 = vadd.f32 0.0, %v6627
        %6629 = vmatprep.mubr.bf16.mxu0 0
        %6630 = vmatmul.mubr.bf16.gmra.mrb[0].mxu0 %v4981
        %v6631 = vpop.f32.mrb[0].mxu0
        %v6632 = vadd.f32 0.0, %v6631
        %v6633 = vpop.f32.mrb[0].mxu0
        %v6634 = vadd.f32 0.0, %v6633
        %v6635 = vpop.f32.mrb[0].mxu0
        %v6636 = vadd.f32 0.0, %v6635
        %v6637 = vpop.f32.mrb[0].mxu0
        %v6638 = vadd.f32 0.0, %v6637
        %6639 = vmatprep.mubr.bf16.mxu0 0
        %6640 = vmatmul.mubr.bf16.gmra.mrb[0].mxu0 %v4982
        %v6641 = vpop.f32.mrb[0].mxu0
        %v6642 = vadd.f32 0.0, %v6641
        %v6643 = vpop.f32.mrb[0].mxu0
        %v6644 = vadd.f32 0.0, %v6643
        %v6645 = vpop.f32.mrb[0].mxu0
        %v6646 = vadd.f32 0.0, %v6645
        %v6647 = vpop.f32.mrb[0].mxu0
        %v6648 = vadd.f32 0.0, %v6647
        %6649 = vmatprep.mubr.bf16.mxu0 0
        %6650 = vmatmul.mubr.bf16.gmra.mrb[0].mxu0 %v4983
        %v6651 = vpop.f32.mrb[0].mxu0
        %v6652 = vadd.f32 0.0, %v6651
        %v6653 = vpop.f32.mrb[0].mxu0
        %v6654 = vadd.f32 0.0, %v6653
        %v6655 = vpop.f32.mrb[0].mxu0
        %v6656 = vadd.f32 0.0, %v6655
        %v6657 = vpop.f32.mrb[0].mxu0
        %v6658 = vadd.f32 0.0, %v6657
        %6659 = vmatprep.mubr.bf16.mxu0 0
        %6660 = vmatmul.mubr.bf16.gmra.mrb[0].mxu0 %v4984
        %v6661 = vpop.f32.mrb[0].mxu0
        %v6662 = vadd.f32 0.0, %v6661
        %v6663 = vpop.f32.mrb[0].mxu0
        %v6664 = vadd.f32 0.0, %v6663
        %v6665 = vpop.f32.mrb[0].mxu0
        %v6666 = vadd.f32 0.0, %v6665
        %v6667 = vpop.f32.mrb[0].mxu0
        %v6668 = vadd.f32 0.0, %v6667
        %6669 = vmatprep.mubr.bf16.mxu0 0
        %6670 = vmatmul.mubr.bf16.gmra.mrb[0].mxu0 %v4985
        %v6671 = vpop.f32.mrb[0].mxu0
        %v6672 = vadd.f32 0.0, %v6671
        %v6673 = vpop.f32.mrb[0].mxu0
        %v6674 = vadd.f32 0.0, %v6673
        %v6675 = vpop.f32.mrb[0].mxu0
        %v6676 = vadd.f32 0.0, %v6675
        %v6677 = vpop.f32.mrb[0].mxu0
        %v6678 = vadd.f32 0.0, %v6677
        %6679 = vmatprep.mubr.bf16.mxu0 0
        %6680 = vmatmul.mubr.bf16.gmra.mrb[0].mxu0 %v4986
        %v6681 = vpop.f32.mrb[0].mxu0
        %v6682 = vadd.f32 0.0, %v6681
        %v6683 = vpop.f32.mrb[0].mxu0
        %v6684 = vadd.f32 0.0, %v6683
        %v6685 = vpop.f32.mrb[0].mxu0
        %v6686 = vadd.f32 0.0, %v6685
        %v6687 = vpop.f32.mrb[0].mxu0
        %v6688 = vadd.f32 0.0, %v6687
        %6689 = vmatprep.mubr.bf16.mxu0 0
        %6690 = vmatmul.mubr.bf16.gmra.mrb[0].mxu0 %v4987
        %v6691 = vpop.f32.mrb[0].mxu0
        %v6692 = vadd.f32 0.0, %v6691
        %v6693 = vpop.f32.mrb[0].mxu0
        %v6694 = vadd.f32 0.0, %v6693
        %v6695 = vpop.f32.mrb[0].mxu0
        %v6696 = vadd.f32 0.0, %v6695
        %v6697 = vpop.f32.mrb[0].mxu0
        %v6698 = vadd.f32 0.0, %v6697
        %6699 = vmatprep.mubr.bf16.mxu0 0
        %6700 = vmatmul.mubr.bf16.gmra.mrb[0].mxu0 %v4988
        %v6701 = vpop.f32.mrb[0].mxu0
        %v6702 = vadd.f32 0.0, %v6701
        %v6703 = vpop.f32.mrb[0].mxu0
        %v6704 = vadd.f32 0.0, %v6703
        %v6705 = vpop.f32.mrb[0].mxu0
        %v6706 = vadd.f32 0.0, %v6705
        %v6707 = vpop.f32.mrb[0].mxu0
        %v6708 = vadd.f32 0.0, %v6707
        %6709 = vmatprep.mubr.bf16.mxu0 0
        %6710 = vmatmul.mubr.bf16.gmra.mrb[0].mxu0 %v4989
        %v6711 = vpop.f32.mrb[0].mxu0
        %v6712 = vadd.f32 0.0, %v6711
        %v6713 = vpop.f32.mrb[0].mxu0
        %v6714 = vadd.f32 0.0, %v6713
        %v6715 = vpop.f32.mrb[0].mxu0
        %v6716 = vadd.f32 0.0, %v6715
        %v6717 = vpop.f32.mrb[0].mxu0
        %v6718 = vadd.f32 0.0, %v6717
        %6719 = vdwg.mxu0
        %6720 = vmatprep.subr.bf16.mxu0 %v5251
        %6721 = vmatpush1.bf16.msra.mxu0 %v5250
        %6722 = vmatprep.subr.bf16.mxu0 %v5259
        %6723 = vmatpush1.bf16.msra.mxu0 %v5258
        %6724 = vmatprep.subr.bf16.mxu0 %v5267
        %6725 = vmatpush1.bf16.msra.mxu0 %v5266
        %6726 = vmatprep.subr.bf16.mxu0 %v5275
        %6727 = vmatpush1.bf16.msra.mxu0 %v5274
        %6728 = vmatprep.subr.bf16.mxu0 %v5283
        %6729 = vmatpush1.bf16.msra.mxu0 %v5282
        %6730 = vmatprep.subr.bf16.mxu0 %v5291
        %6731 = vmatpush1.bf16.msra.mxu0 %v5290
        %6732 = vmatprep.subr.bf16.mxu0 %v5299
        %6733 = vmatpush1.bf16.msra.mxu0 %v5298
        %6734 = vmatprep.subr.bf16.mxu0 %v5307
        %6735 = vmatpush1.bf16.msra.mxu0 %v5306
        %6736 = vmatprep.subr.bf16.mxu0 0
        %6737 = vmatpush1.bf16.msra.mxu0 0
        %6738 = vmatprep.subr.bf16.mxu0 0
        %6739 = vmatpush1.bf16.msra.mxu0 0
        %6740 = vmatprep.subr.bf16.mxu0 0
        %6741 = vmatpush1.bf16.msra.mxu0 0
        %6742 = vmatprep.subr.bf16.mxu0 0
        %6743 = vmatpush1.bf16.msra.mxu0 0
        %6744 = vmatprep.subr.bf16.mxu0 0
        %6745 = vmatpush1.bf16.msra.mxu0 0
        %6746 = vmatprep.subr.bf16.mxu0 0
        %6747 = vmatpush1.bf16.msra.mxu0 0
        %6748 = vmatprep.subr.bf16.mxu0 0
        %6749 = vmatpush1.bf16.msra.mxu0 0
        %6750 = vmatprep.subr.bf16.mxu0 0
        %6751 = vmatpush1.bf16.msra.mxu0 0
        %6752 = vmatprep.mubr.bf16.mxu0 0
        %6753 = vmatmul.mubr.bf16.gmra.mrb[0].mxu0 %v4926
        %v6754 = vpop.f32.mrb[0].mxu0
        %v6755 = vadd.f32 0.0, %v6754
        %v6756 = vpop.f32.mrb[0].mxu0
        %v6757 = vadd.f32 0.0, %v6756
        %v6758 = vpop.f32.mrb[0].mxu0
        %v6759 = vadd.f32 0.0, %v6758
        %v6760 = vpop.f32.mrb[0].mxu0
        %v6761 = vadd.f32 0.0, %v6760
        %6762 = vmatprep.mubr.bf16.mxu0 0
        %6763 = vmatmul.mubr.bf16.gmra.mrb[0].mxu0 %v4927
        %v6764 = vpop.f32.mrb[0].mxu0
        %v6765 = vadd.f32 0.0, %v6764
        %v6766 = vpop.f32.mrb[0].mxu0
        %v6767 = vadd.f32 0.0, %v6766
        %v6768 = vpop.f32.mrb[0].mxu0
        %v6769 = vadd.f32 0.0, %v6768
        %v6770 = vpop.f32.mrb[0].mxu0
        %v6771 = vadd.f32 0.0, %v6770
        %6772 = vmatprep.mubr.bf16.mxu0 0
        %6773 = vmatmul.mubr.bf16.gmra.mrb[0].mxu0 %v4928
        %v6774 = vpop.f32.mrb[0].mxu0
        %v6775 = vadd.f32 0.0, %v6774
        %v6776 = vpop.f32.mrb[0].mxu0
        %v6777 = vadd.f32 0.0, %v6776
        %v6778 = vpop.f32.mrb[0].mxu0
        %v6779 = vadd.f32 0.0, %v6778
        %v6780 = vpop.f32.mrb[0].mxu0
        %v6781 = vadd.f32 0.0, %v6780
        %6782 = vmatprep.mubr.bf16.mxu0 0
        %6783 = vmatmul.mubr.bf16.gmra.mrb[0].mxu0 %v4929
        %v6784 = vpop.f32.mrb[0].mxu0
        %v6785 = vadd.f32 0.0, %v6784
        %v6786 = vpop.f32.mrb[0].mxu0
        %v6787 = vadd.f32 0.0, %v6786
        %v6788 = vpop.f32.mrb[0].mxu0
        %v6789 = vadd.f32 0.0, %v6788
        %v6790 = vpop.f32.mrb[0].mxu0
        %v6791 = vadd.f32 0.0, %v6790
        %6792 = vmatprep.mubr.bf16.mxu0 0
        %6793 = vmatmul.mubr.bf16.gmra.mrb[0].mxu0 %v4930
        %v6794 = vpop.f32.mrb[0].mxu0
        %v6795 = vadd.f32 0.0, %v6794
        %v6796 = vpop.f32.mrb[0].mxu0
        %v6797 = vadd.f32 0.0, %v6796
        %v6798 = vpop.f32.mrb[0].mxu0
        %v6799 = vadd.f32 0.0, %v6798
        %v6800 = vpop.f32.mrb[0].mxu0
        %v6801 = vadd.f32 0.0, %v6800
        %6802 = vmatprep.mubr.bf16.mxu0 0
        %6803 = vmatmul.mubr.bf16.gmra.mrb[0].mxu0 %v4931
        %v6804 = vpop.f32.mrb[0].mxu0
        %v6805 = vadd.f32 0.0, %v6804
        %v6806 = vpop.f32.mrb[0].mxu0
        %v6807 = vadd.f32 0.0, %v6806
        %v6808 = vpop.f32.mrb[0].mxu0
        %v6809 = vadd.f32 0.0, %v6808
        %v6810 = vpop.f32.mrb[0].mxu0
        %v6811 = vadd.f32 0.0, %v6810
        %6812 = vmatprep.mubr.bf16.mxu0 0
        %6813 = vmatmul.mubr.bf16.gmra.mrb[0].mxu0 %v4932
        %v6814 = vpop.f32.mrb[0].mxu0
        %v6815 = vadd.f32 0.0, %v6814
        %v6816 = vpop.f32.mrb[0].mxu0
        %v6817 = vadd.f32 0.0, %v6816
        %v6818 = vpop.f32.mrb[0].mxu0
        %v6819 = vadd.f32 0.0, %v6818
        %v6820 = vpop.f32.mrb[0].mxu0
        %v6821 = vadd.f32 0.0, %v6820
        %6822 = vmatprep.mubr.bf16.mxu0 0
        %6823 = vmatmul.mubr.bf16.gmra.mrb[0].mxu0 %v4933
        %v6824 = vpop.f32.mrb[0].mxu0
        %v6825 = vadd.f32 0.0, %v6824
        %v6826 = vpop.f32.mrb[0].mxu0
        %v6827 = vadd.f32 0.0, %v6826
        %v6828 = vpop.f32.mrb[0].mxu0
        %v6829 = vadd.f32 0.0, %v6828
        %v6830 = vpop.f32.mrb[0].mxu0
        %v6831 = vadd.f32 0.0, %v6830
        %6832 = vmatprep.mubr.bf16.mxu0 0
        %6833 = vmatmul.mubr.bf16.gmra.mrb[0].mxu0 %v4934
        %v6834 = vpop.f32.mrb[0].mxu0
        %v6835 = vadd.f32 0.0, %v6834
        %v6836 = vpop.f32.mrb[0].mxu0
        %v6837 = vadd.f32 0.0, %v6836
        %v6838 = vpop.f32.mrb[0].mxu0
        %v6839 = vadd.f32 0.0, %v6838
        %v6840 = vpop.f32.mrb[0].mxu0
        %v6841 = vadd.f32 0.0, %v6840
        %6842 = vmatprep.mubr.bf16.mxu0 0
        %6843 = vmatmul.mubr.bf16.gmra.mrb[0].mxu0 %v4935
        %v6844 = vpop.f32.mrb[0].mxu0
        %v6845 = vadd.f32 0.0, %v6844
        %v6846 = vpop.f32.mrb[0].mxu0
        %v6847 = vadd.f32 0.0, %v6846
        %v6848 = vpop.f32.mrb[0].mxu0
        %v6849 = vadd.f32 0.0, %v6848
        %v6850 = vpop.f32.mrb[0].mxu0
        %v6851 = vadd.f32 0.0, %v6850
        %6852 = vmatprep.mubr.bf16.mxu0 0
        %6853 = vmatmul.mubr.bf16.gmra.mrb[0].mxu0 %v4936
        %v6854 = vpop.f32.mrb[0].mxu0
        %v6855 = vadd.f32 0.0, %v6854
        %v6856 = vpop.f32.mrb[0].mxu0
        %v6857 = vadd.f32 0.0, %v6856
        %v6858 = vpop.f32.mrb[0].mxu0
        %v6859 = vadd.f32 0.0, %v6858
        %v6860 = vpop.f32.mrb[0].mxu0
        %v6861 = vadd.f32 0.0, %v6860
        %6862 = vmatprep.mubr.bf16.mxu0 0
        %6863 = vmatmul.mubr.bf16.gmra.mrb[0].mxu0 %v4937
        %v6864 = vpop.f32.mrb[0].mxu0
        %v6865 = vadd.f32 0.0, %v6864
        %v6866 = vpop.f32.mrb[0].mxu0
        %v6867 = vadd.f32 0.0, %v6866
        %v6868 = vpop.f32.mrb[0].mxu0
        %v6869 = vadd.f32 0.0, %v6868
        %v6870 = vpop.f32.mrb[0].mxu0
        %v6871 = vadd.f32 0.0, %v6870
        %6872 = vmatprep.mubr.bf16.mxu0 0
        %6873 = vmatmul.mubr.bf16.gmra.mrb[0].mxu0 %v4938
        %v6874 = vpop.f32.mrb[0].mxu0
        %v6875 = vadd.f32 0.0, %v6874
        %v6876 = vpop.f32.mrb[0].mxu0
        %v6877 = vadd.f32 0.0, %v6876
        %v6878 = vpop.f32.mrb[0].mxu0
        %v6879 = vadd.f32 0.0, %v6878
        %v6880 = vpop.f32.mrb[0].mxu0
        %v6881 = vadd.f32 0.0, %v6880
        %6882 = vmatprep.mubr.bf16.mxu0 0
        %6883 = vmatmul.mubr.bf16.gmra.mrb[0].mxu0 %v4939
        %v6884 = vpop.f32.mrb[0].mxu0
        %v6885 = vadd.f32 0.0, %v6884
        %v6886 = vpop.f32.mrb[0].mxu0
        %v6887 = vadd.f32 0.0, %v6886
        %v6888 = vpop.f32.mrb[0].mxu0
        %v6889 = vadd.f32 0.0, %v6888
        %v6890 = vpop.f32.mrb[0].mxu0
        %v6891 = vadd.f32 0.0, %v6890
        %6892 = vmatprep.mubr.bf16.mxu0 0
        %6893 = vmatmul.mubr.bf16.gmra.mrb[0].mxu0 %v4940
        %v6894 = vpop.f32.mrb[0].mxu0
        %v6895 = vadd.f32 0.0, %v6894
        %v6896 = vpop.f32.mrb[0].mxu0
        %v6897 = vadd.f32 0.0, %v6896
        %v6898 = vpop.f32.mrb[0].mxu0
        %v6899 = vadd.f32 0.0, %v6898
        %v6900 = vpop.f32.mrb[0].mxu0
        %v6901 = vadd.f32 0.0, %v6900
        %6902 = vmatprep.mubr.bf16.mxu0 0
        %6903 = vmatmul.mubr.bf16.gmra.mrb[0].mxu0 %v4941
        %v6904 = vpop.f32.mrb[0].mxu0
        %v6905 = vadd.f32 0.0, %v6904
        %v6906 = vpop.f32.mrb[0].mxu0
        %v6907 = vadd.f32 0.0, %v6906
        %v6908 = vpop.f32.mrb[0].mxu0
        %v6909 = vadd.f32 0.0, %v6908
        %v6910 = vpop.f32.mrb[0].mxu0
        %v6911 = vadd.f32 0.0, %v6910
        %6912 = vmatprep.mubr.bf16.mxu0 0
        %6913 = vmatmul.mubr.bf16.gmra.mrb[0].mxu0 %v4942
        %v6914 = vpop.f32.mrb[0].mxu0
        %v6915 = vadd.f32 0.0, %v6914
        %v6916 = vpop.f32.mrb[0].mxu0
        %v6917 = vadd.f32 0.0, %v6916
        %v6918 = vpop.f32.mrb[0].mxu0
        %v6919 = vadd.f32 0.0, %v6918
        %v6920 = vpop.f32.mrb[0].mxu0
        %v6921 = vadd.f32 0.0, %v6920
        %6922 = vmatprep.mubr.bf16.mxu0 0
        %6923 = vmatmul.mubr.bf16.gmra.mrb[0].mxu0 %v4943
        %v6924 = vpop.f32.mrb[0].mxu0
        %v6925 = vadd.f32 0.0, %v6924
        %v6926 = vpop.f32.mrb[0].mxu0
        %v6927 = vadd.f32 0.0, %v6926
        %v6928 = vpop.f32.mrb[0].mxu0
        %v6929 = vadd.f32 0.0, %v6928
        %v6930 = vpop.f32.mrb[0].mxu0
        %v6931 = vadd.f32 0.0, %v6930
        %6932 = vmatprep.mubr.bf16.mxu0 0
        %6933 = vmatmul.mubr.bf16.gmra.mrb[0].mxu0 %v4944
        %v6934 = vpop.f32.mrb[0].mxu0
        %v6935 = vadd.f32 0.0, %v6934
        %v6936 = vpop.f32.mrb[0].mxu0
        %v6937 = vadd.f32 0.0, %v6936
        %v6938 = vpop.f32.mrb[0].mxu0
        %v6939 = vadd.f32 0.0, %v6938
        %v6940 = vpop.f32.mrb[0].mxu0
        %v6941 = vadd.f32 0.0, %v6940
        %6942 = vmatprep.mubr.bf16.mxu0 0
        %6943 = vmatmul.mubr.bf16.gmra.mrb[0].mxu0 %v4945
        %v6944 = vpop.f32.mrb[0].mxu0
        %v6945 = vadd.f32 0.0, %v6944
        %v6946 = vpop.f32.mrb[0].mxu0
        %v6947 = vadd.f32 0.0, %v6946
        %v6948 = vpop.f32.mrb[0].mxu0
        %v6949 = vadd.f32 0.0, %v6948
        %v6950 = vpop.f32.mrb[0].mxu0
        %v6951 = vadd.f32 0.0, %v6950
        %6952 = vmatprep.mubr.bf16.mxu0 0
        %6953 = vmatmul.mubr.bf16.gmra.mrb[0].mxu0 %v4946
        %v6954 = vpop.f32.mrb[0].mxu0
        %v6955 = vadd.f32 0.0, %v6954
        %v6956 = vpop.f32.mrb[0].mxu0
        %v6957 = vadd.f32 0.0, %v6956
        %v6958 = vpop.f32.mrb[0].mxu0
        %v6959 = vadd.f32 0.0, %v6958
        %v6960 = vpop.f32.mrb[0].mxu0
        %v6961 = vadd.f32 0.0, %v6960
        %6962 = vmatprep.mubr.bf16.mxu0 0
        %6963 = vmatmul.mubr.bf16.gmra.mrb[0].mxu0 %v4947
        %v6964 = vpop.f32.mrb[0].mxu0
        %v6965 = vadd.f32 0.0, %v6964
        %v6966 = vpop.f32.mrb[0].mxu0
        %v6967 = vadd.f32 0.0, %v6966
        %v6968 = vpop.f32.mrb[0].mxu0
        %v6969 = vadd.f32 0.0, %v6968
        %v6970 = vpop.f32.mrb[0].mxu0
        %v6971 = vadd.f32 0.0, %v6970
        %6972 = vmatprep.mubr.bf16.mxu0 0
        %6973 = vmatmul.mubr.bf16.gmra.mrb[0].mxu0 %v4948
        %v6974 = vpop.f32.mrb[0].mxu0
        %v6975 = vadd.f32 0.0, %v6974
        %v6976 = vpop.f32.mrb[0].mxu0
        %v6977 = vadd.f32 0.0, %v6976
        %v6978 = vpop.f32.mrb[0].mxu0
        %v6979 = vadd.f32 0.0, %v6978
        %v6980 = vpop.f32.mrb[0].mxu0
        %v6981 = vadd.f32 0.0, %v6980
        %6982 = vmatprep.mubr.bf16.mxu0 0
        %6983 = vmatmul.mubr.bf16.gmra.mrb[0].mxu0 %v4949
        %v6984 = vpop.f32.mrb[0].mxu0
        %v6985 = vadd.f32 0.0, %v6984
        %v6986 = vpop.f32.mrb[0].mxu0
        %v6987 = vadd.f32 0.0, %v6986
        %v6988 = vpop.f32.mrb[0].mxu0
        %v6989 = vadd.f32 0.0, %v6988
        %v6990 = vpop.f32.mrb[0].mxu0
        %v6991 = vadd.f32 0.0, %v6990
        %6992 = vmatprep.mubr.bf16.mxu0 0
        %6993 = vmatmul.mubr.bf16.gmra.mrb[0].mxu0 %v4950
        %v6994 = vpop.f32.mrb[0].mxu0
        %v6995 = vadd.f32 0.0, %v6994
        %v6996 = vpop.f32.mrb[0].mxu0
        %v6997 = vadd.f32 0.0, %v6996
        %v6998 = vpop.f32.mrb[0].mxu0
        %v6999 = vadd.f32 0.0, %v6998
        %v7000 = vpop.f32.mrb[0].mxu0
        %v7001 = vadd.f32 0.0, %v7000
        %7002 = vmatprep.mubr.bf16.mxu0 0
        %7003 = vmatmul.mubr.bf16.gmra.mrb[0].mxu0 %v4951
        %v7004 = vpop.f32.mrb[0].mxu0
        %v7005 = vadd.f32 0.0, %v7004
        %v7006 = vpop.f32.mrb[0].mxu0
        %v7007 = vadd.f32 0.0, %v7006
        %v7008 = vpop.f32.mrb[0].mxu0
        %v7009 = vadd.f32 0.0, %v7008
        %v7010 = vpop.f32.mrb[0].mxu0
        %v7011 = vadd.f32 0.0, %v7010
        %7012 = vmatprep.mubr.bf16.mxu0 0
        %7013 = vmatmul.mubr.bf16.gmra.mrb[0].mxu0 %v4952
        %v7014 = vpop.f32.mrb[0].mxu0
        %v7015 = vadd.f32 0.0, %v7014
        %v7016 = vpop.f32.mrb[0].mxu0
        %v7017 = vadd.f32 0.0, %v7016
        %v7018 = vpop.f32.mrb[0].mxu0
        %v7019 = vadd.f32 0.0, %v7018
        %v7020 = vpop.f32.mrb[0].mxu0
        %v7021 = vadd.f32 0.0, %v7020
        %7022 = vmatprep.mubr.bf16.mxu0 0
        %7023 = vmatmul.mubr.bf16.gmra.mrb[0].mxu0 %v4953
        %v7024 = vpop.f32.mrb[0].mxu0
        %v7025 = vadd.f32 0.0, %v7024
        %v7026 = vpop.f32.mrb[0].mxu0
        %v7027 = vadd.f32 0.0, %v7026
        %v7028 = vpop.f32.mrb[0].mxu0
        %v7029 = vadd.f32 0.0, %v7028
        %v7030 = vpop.f32.mrb[0].mxu0
        %v7031 = vadd.f32 0.0, %v7030
        %7032 = vmatprep.mubr.bf16.mxu0 0
        %7033 = vmatmul.mubr.bf16.gmra.mrb[0].mxu0 %v4954
        %v7034 = vpop.f32.mrb[0].mxu0
        %v7035 = vadd.f32 0.0, %v7034
        %v7036 = vpop.f32.mrb[0].mxu0
        %v7037 = vadd.f32 0.0, %v7036
        %v7038 = vpop.f32.mrb[0].mxu0
        %v7039 = vadd.f32 0.0, %v7038
        %v7040 = vpop.f32.mrb[0].mxu0
        %v7041 = vadd.f32 0.0, %v7040
        %7042 = vmatprep.mubr.bf16.mxu0 0
        %7043 = vmatmul.mubr.bf16.gmra.mrb[0].mxu0 %v4955
        %v7044 = vpop.f32.mrb[0].mxu0
        %v7045 = vadd.f32 0.0, %v7044
        %v7046 = vpop.f32.mrb[0].mxu0
        %v7047 = vadd.f32 0.0, %v7046
        %v7048 = vpop.f32.mrb[0].mxu0
        %v7049 = vadd.f32 0.0, %v7048
        %v7050 = vpop.f32.mrb[0].mxu0
        %v7051 = vadd.f32 0.0, %v7050
        %7052 = vmatprep.mubr.bf16.mxu0 0
        %7053 = vmatmul.mubr.bf16.gmra.mrb[0].mxu0 %v4956
        %v7054 = vpop.f32.mrb[0].mxu0
        %v7055 = vadd.f32 0.0, %v7054
        %v7056 = vpop.f32.mrb[0].mxu0
        %v7057 = vadd.f32 0.0, %v7056
        %v7058 = vpop.f32.mrb[0].mxu0
        %v7059 = vadd.f32 0.0, %v7058
        %v7060 = vpop.f32.mrb[0].mxu0
        %v7061 = vadd.f32 0.0, %v7060
        %7062 = vmatprep.mubr.bf16.mxu0 0
        %7063 = vmatmul.mubr.bf16.gmra.mrb[0].mxu0 %v4957
        %v7064 = vpop.f32.mrb[0].mxu0
        %v7065 = vadd.f32 0.0, %v7064
        %v7066 = vpop.f32.mrb[0].mxu0
        %v7067 = vadd.f32 0.0, %v7066
        %v7068 = vpop.f32.mrb[0].mxu0
        %v7069 = vadd.f32 0.0, %v7068
        %v7070 = vpop.f32.mrb[0].mxu0
        %v7071 = vadd.f32 0.0, %v7070
        %7072 = vmatprep.mubr.bf16.mxu0 0
        %7073 = vmatmul.mubr.bf16.gmra.mrb[0].mxu0 %v4958
        %v7074 = vpop.f32.mrb[0].mxu0
        %v7075 = vadd.f32 0.0, %v7074
        %v7076 = vpop.f32.mrb[0].mxu0
        %v7077 = vadd.f32 0.0, %v7076
        %v7078 = vpop.f32.mrb[0].mxu0
        %v7079 = vadd.f32 0.0, %v7078
        %v7080 = vpop.f32.mrb[0].mxu0
        %v7081 = vadd.f32 0.0, %v7080
        %7082 = vmatprep.mubr.bf16.mxu0 0
        %7083 = vmatmul.mubr.bf16.gmra.mrb[0].mxu0 %v4959
        %v7084 = vpop.f32.mrb[0].mxu0
        %v7085 = vadd.f32 0.0, %v7084
        %v7086 = vpop.f32.mrb[0].mxu0
        %v7087 = vadd.f32 0.0, %v7086
        %v7088 = vpop.f32.mrb[0].mxu0
        %v7089 = vadd.f32 0.0, %v7088
        %v7090 = vpop.f32.mrb[0].mxu0
        %v7091 = vadd.f32 0.0, %v7090
        %7092 = vmatprep.mubr.bf16.mxu0 0
        %7093 = vmatmul.mubr.bf16.gmra.mrb[0].mxu0 %v4960
        %v7094 = vpop.f32.mrb[0].mxu0
        %v7095 = vadd.f32 0.0, %v7094
        %v7096 = vpop.f32.mrb[0].mxu0
        %v7097 = vadd.f32 0.0, %v7096
        %v7098 = vpop.f32.mrb[0].mxu0
        %v7099 = vadd.f32 0.0, %v7098
        %v7100 = vpop.f32.mrb[0].mxu0
        %v7101 = vadd.f32 0.0, %v7100
        %7102 = vmatprep.mubr.bf16.mxu0 0
        %7103 = vmatmul.mubr.bf16.gmra.mrb[0].mxu0 %v4961
        %v7104 = vpop.f32.mrb[0].mxu0
        %v7105 = vadd.f32 0.0, %v7104
        %v7106 = vpop.f32.mrb[0].mxu0
        %v7107 = vadd.f32 0.0, %v7106
        %v7108 = vpop.f32.mrb[0].mxu0
        %v7109 = vadd.f32 0.0, %v7108
        %v7110 = vpop.f32.mrb[0].mxu0
        %v7111 = vadd.f32 0.0, %v7110
        %7112 = vmatprep.mubr.bf16.mxu0 0
        %7113 = vmatmul.mubr.bf16.gmra.mrb[0].mxu0 %v4962
        %v7114 = vpop.f32.mrb[0].mxu0
        %v7115 = vadd.f32 0.0, %v7114
        %v7116 = vpop.f32.mrb[0].mxu0
        %v7117 = vadd.f32 0.0, %v7116
        %v7118 = vpop.f32.mrb[0].mxu0
        %v7119 = vadd.f32 0.0, %v7118
        %v7120 = vpop.f32.mrb[0].mxu0
        %v7121 = vadd.f32 0.0, %v7120
        %7122 = vmatprep.mubr.bf16.mxu0 0
        %7123 = vmatmul.mubr.bf16.gmra.mrb[0].mxu0 %v4963
        %v7124 = vpop.f32.mrb[0].mxu0
        %v7125 = vadd.f32 0.0, %v7124
        %v7126 = vpop.f32.mrb[0].mxu0
        %v7127 = vadd.f32 0.0, %v7126
        %v7128 = vpop.f32.mrb[0].mxu0
        %v7129 = vadd.f32 0.0, %v7128
        %v7130 = vpop.f32.mrb[0].mxu0
        %v7131 = vadd.f32 0.0, %v7130
        %7132 = vmatprep.mubr.bf16.mxu0 0
        %7133 = vmatmul.mubr.bf16.gmra.mrb[0].mxu0 %v4964
        %v7134 = vpop.f32.mrb[0].mxu0
        %v7135 = vadd.f32 0.0, %v7134
        %v7136 = vpop.f32.mrb[0].mxu0
        %v7137 = vadd.f32 0.0, %v7136
        %v7138 = vpop.f32.mrb[0].mxu0
        %v7139 = vadd.f32 0.0, %v7138
        %v7140 = vpop.f32.mrb[0].mxu0
        %v7141 = vadd.f32 0.0, %v7140
        %7142 = vmatprep.mubr.bf16.mxu0 0
        %7143 = vmatmul.mubr.bf16.gmra.mrb[0].mxu0 %v4965
        %v7144 = vpop.f32.mrb[0].mxu0
        %v7145 = vadd.f32 0.0, %v7144
        %v7146 = vpop.f32.mrb[0].mxu0
        %v7147 = vadd.f32 0.0, %v7146
        %v7148 = vpop.f32.mrb[0].mxu0
        %v7149 = vadd.f32 0.0, %v7148
        %v7150 = vpop.f32.mrb[0].mxu0
        %v7151 = vadd.f32 0.0, %v7150
        %7152 = vmatprep.mubr.bf16.mxu0 0
        %7153 = vmatmul.mubr.bf16.gmra.mrb[0].mxu0 %v4966
        %v7154 = vpop.f32.mrb[0].mxu0
        %v7155 = vadd.f32 0.0, %v7154
        %v7156 = vpop.f32.mrb[0].mxu0
        %v7157 = vadd.f32 0.0, %v7156
        %v7158 = vpop.f32.mrb[0].mxu0
        %v7159 = vadd.f32 0.0, %v7158
        %v7160 = vpop.f32.mrb[0].mxu0
        %v7161 = vadd.f32 0.0, %v7160
        %7162 = vmatprep.mubr.bf16.mxu0 0
        %7163 = vmatmul.mubr.bf16.gmra.mrb[0].mxu0 %v4967
        %v7164 = vpop.f32.mrb[0].mxu0
        %v7165 = vadd.f32 0.0, %v7164
        %v7166 = vpop.f32.mrb[0].mxu0
        %v7167 = vadd.f32 0.0, %v7166
        %v7168 = vpop.f32.mrb[0].mxu0
        %v7169 = vadd.f32 0.0, %v7168
        %v7170 = vpop.f32.mrb[0].mxu0
        %v7171 = vadd.f32 0.0, %v7170
        %7172 = vmatprep.mubr.bf16.mxu0 0
        %7173 = vmatmul.mubr.bf16.gmra.mrb[0].mxu0 %v4968
        %v7174 = vpop.f32.mrb[0].mxu0
        %v7175 = vadd.f32 0.0, %v7174
        %v7176 = vpop.f32.mrb[0].mxu0
        %v7177 = vadd.f32 0.0, %v7176
        %v7178 = vpop.f32.mrb[0].mxu0
        %v7179 = vadd.f32 0.0, %v7178
        %v7180 = vpop.f32.mrb[0].mxu0
        %v7181 = vadd.f32 0.0, %v7180
        %7182 = vmatprep.mubr.bf16.mxu0 0
        %7183 = vmatmul.mubr.bf16.gmra.mrb[0].mxu0 %v4969
        %v7184 = vpop.f32.mrb[0].mxu0
        %v7185 = vadd.f32 0.0, %v7184
        %v7186 = vpop.f32.mrb[0].mxu0
        %v7187 = vadd.f32 0.0, %v7186
        %v7188 = vpop.f32.mrb[0].mxu0
        %v7189 = vadd.f32 0.0, %v7188
        %v7190 = vpop.f32.mrb[0].mxu0
        %v7191 = vadd.f32 0.0, %v7190
        %7192 = vmatprep.mubr.bf16.mxu0 0
        %7193 = vmatmul.mubr.bf16.gmra.mrb[0].mxu0 %v4970
        %v7194 = vpop.f32.mrb[0].mxu0
        %v7195 = vadd.f32 0.0, %v7194
        %v7196 = vpop.f32.mrb[0].mxu0
        %v7197 = vadd.f32 0.0, %v7196
        %v7198 = vpop.f32.mrb[0].mxu0
        %v7199 = vadd.f32 0.0, %v7198
        %v7200 = vpop.f32.mrb[0].mxu0
        %v7201 = vadd.f32 0.0, %v7200
        %7202 = vmatprep.mubr.bf16.mxu0 0
        %7203 = vmatmul.mubr.bf16.gmra.mrb[0].mxu0 %v4971
        %v7204 = vpop.f32.mrb[0].mxu0
        %v7205 = vadd.f32 0.0, %v7204
        %v7206 = vpop.f32.mrb[0].mxu0
        %v7207 = vadd.f32 0.0, %v7206
        %v7208 = vpop.f32.mrb[0].mxu0
        %v7209 = vadd.f32 0.0, %v7208
        %v7210 = vpop.f32.mrb[0].mxu0
        %v7211 = vadd.f32 0.0, %v7210
        %7212 = vmatprep.mubr.bf16.mxu0 0
        %7213 = vmatmul.mubr.bf16.gmra.mrb[0].mxu0 %v4972
        %v7214 = vpop.f32.mrb[0].mxu0
        %v7215 = vadd.f32 0.0, %v7214
        %v7216 = vpop.f32.mrb[0].mxu0
        %v7217 = vadd.f32 0.0, %v7216
        %v7218 = vpop.f32.mrb[0].mxu0
        %v7219 = vadd.f32 0.0, %v7218
        %v7220 = vpop.f32.mrb[0].mxu0
        %v7221 = vadd.f32 0.0, %v7220
        %7222 = vmatprep.mubr.bf16.mxu0 0
        %7223 = vmatmul.mubr.bf16.gmra.mrb[0].mxu0 %v4973
        %v7224 = vpop.f32.mrb[0].mxu0
        %v7225 = vadd.f32 0.0, %v7224
        %v7226 = vpop.f32.mrb[0].mxu0
        %v7227 = vadd.f32 0.0, %v7226
        %v7228 = vpop.f32.mrb[0].mxu0
        %v7229 = vadd.f32 0.0, %v7228
        %v7230 = vpop.f32.mrb[0].mxu0
        %v7231 = vadd.f32 0.0, %v7230
        %7232 = vmatprep.mubr.bf16.mxu0 0
        %7233 = vmatmul.mubr.bf16.gmra.mrb[0].mxu0 %v4974
        %v7234 = vpop.f32.mrb[0].mxu0
        %v7235 = vadd.f32 0.0, %v7234
        %v7236 = vpop.f32.mrb[0].mxu0
        %v7237 = vadd.f32 0.0, %v7236
        %v7238 = vpop.f32.mrb[0].mxu0
        %v7239 = vadd.f32 0.0, %v7238
        %v7240 = vpop.f32.mrb[0].mxu0
        %v7241 = vadd.f32 0.0, %v7240
        %7242 = vmatprep.mubr.bf16.mxu0 0
        %7243 = vmatmul.mubr.bf16.gmra.mrb[0].mxu0 %v4975
        %v7244 = vpop.f32.mrb[0].mxu0
        %v7245 = vadd.f32 0.0, %v7244
        %v7246 = vpop.f32.mrb[0].mxu0
        %v7247 = vadd.f32 0.0, %v7246
        %v7248 = vpop.f32.mrb[0].mxu0
        %v7249 = vadd.f32 0.0, %v7248
        %v7250 = vpop.f32.mrb[0].mxu0
        %v7251 = vadd.f32 0.0, %v7250
        %7252 = vmatprep.mubr.bf16.mxu0 0
        %7253 = vmatmul.mubr.bf16.gmra.mrb[0].mxu0 %v4976
        %v7254 = vpop.f32.mrb[0].mxu0
        %v7255 = vadd.f32 0.0, %v7254
        %v7256 = vpop.f32.mrb[0].mxu0
        %v7257 = vadd.f32 0.0, %v7256
        %v7258 = vpop.f32.mrb[0].mxu0
        %v7259 = vadd.f32 0.0, %v7258
        %v7260 = vpop.f32.mrb[0].mxu0
        %v7261 = vadd.f32 0.0, %v7260
        %7262 = vmatprep.mubr.bf16.mxu0 0
        %7263 = vmatmul.mubr.bf16.gmra.mrb[0].mxu0 %v4977
        %v7264 = vpop.f32.mrb[0].mxu0
        %v7265 = vadd.f32 0.0, %v7264
        %v7266 = vpop.f32.mrb[0].mxu0
        %v7267 = vadd.f32 0.0, %v7266
        %v7268 = vpop.f32.mrb[0].mxu0
        %v7269 = vadd.f32 0.0, %v7268
        %v7270 = vpop.f32.mrb[0].mxu0
        %v7271 = vadd.f32 0.0, %v7270
        %7272 = vmatprep.mubr.bf16.mxu0 0
        %7273 = vmatmul.mubr.bf16.gmra.mrb[0].mxu0 %v4978
        %v7274 = vpop.f32.mrb[0].mxu0
        %v7275 = vadd.f32 0.0, %v7274
        %v7276 = vpop.f32.mrb[0].mxu0
        %v7277 = vadd.f32 0.0, %v7276
        %v7278 = vpop.f32.mrb[0].mxu0
        %v7279 = vadd.f32 0.0, %v7278
        %v7280 = vpop.f32.mrb[0].mxu0
        %v7281 = vadd.f32 0.0, %v7280
        %7282 = vmatprep.mubr.bf16.mxu0 0
        %7283 = vmatmul.mubr.bf16.gmra.mrb[0].mxu0 %v4979
        %v7284 = vpop.f32.mrb[0].mxu0
        %v7285 = vadd.f32 0.0, %v7284
        %v7286 = vpop.f32.mrb[0].mxu0
        %v7287 = vadd.f32 0.0, %v7286
        %v7288 = vpop.f32.mrb[0].mxu0
        %v7289 = vadd.f32 0.0, %v7288
        %v7290 = vpop.f32.mrb[0].mxu0
        %v7291 = vadd.f32 0.0, %v7290
        %7292 = vmatprep.mubr.bf16.mxu0 0
        %7293 = vmatmul.mubr.bf16.gmra.mrb[0].mxu0 %v4980
        %v7294 = vpop.f32.mrb[0].mxu0
        %v7295 = vadd.f32 0.0, %v7294
        %v7296 = vpop.f32.mrb[0].mxu0
        %v7297 = vadd.f32 0.0, %v7296
        %v7298 = vpop.f32.mrb[0].mxu0
        %v7299 = vadd.f32 0.0, %v7298
        %v7300 = vpop.f32.mrb[0].mxu0
        %v7301 = vadd.f32 0.0, %v7300
        %7302 = vmatprep.mubr.bf16.mxu0 0
        %7303 = vmatmul.mubr.bf16.gmra.mrb[0].mxu0 %v4981
        %v7304 = vpop.f32.mrb[0].mxu0
        %v7305 = vadd.f32 0.0, %v7304
        %v7306 = vpop.f32.mrb[0].mxu0
        %v7307 = vadd.f32 0.0, %v7306
        %v7308 = vpop.f32.mrb[0].mxu0
        %v7309 = vadd.f32 0.0, %v7308
        %v7310 = vpop.f32.mrb[0].mxu0
        %v7311 = vadd.f32 0.0, %v7310
        %7312 = vmatprep.mubr.bf16.mxu0 0
        %7313 = vmatmul.mubr.bf16.gmra.mrb[0].mxu0 %v4982
        %v7314 = vpop.f32.mrb[0].mxu0
        %v7315 = vadd.f32 0.0, %v7314
        %v7316 = vpop.f32.mrb[0].mxu0
        %v7317 = vadd.f32 0.0, %v7316
        %v7318 = vpop.f32.mrb[0].mxu0
        %v7319 = vadd.f32 0.0, %v7318
        %v7320 = vpop.f32.mrb[0].mxu0
        %v7321 = vadd.f32 0.0, %v7320
        %7322 = vmatprep.mubr.bf16.mxu0 0
        %7323 = vmatmul.mubr.bf16.gmra.mrb[0].mxu0 %v4983
        %v7324 = vpop.f32.mrb[0].mxu0
        %v7325 = vadd.f32 0.0, %v7324
        %v7326 = vpop.f32.mrb[0].mxu0
        %v7327 = vadd.f32 0.0, %v7326
        %v7328 = vpop.f32.mrb[0].mxu0
        %v7329 = vadd.f32 0.0, %v7328
        %v7330 = vpop.f32.mrb[0].mxu0
        %v7331 = vadd.f32 0.0, %v7330
        %7332 = vmatprep.mubr.bf16.mxu0 0
        %7333 = vmatmul.mubr.bf16.gmra.mrb[0].mxu0 %v4984
        %v7334 = vpop.f32.mrb[0].mxu0
        %v7335 = vadd.f32 0.0, %v7334
        %v7336 = vpop.f32.mrb[0].mxu0
        %v7337 = vadd.f32 0.0, %v7336
        %v7338 = vpop.f32.mrb[0].mxu0
        %v7339 = vadd.f32 0.0, %v7338
        %v7340 = vpop.f32.mrb[0].mxu0
        %v7341 = vadd.f32 0.0, %v7340
        %7342 = vmatprep.mubr.bf16.mxu0 0
        %7343 = vmatmul.mubr.bf16.gmra.mrb[0].mxu0 %v4985
        %v7344 = vpop.f32.mrb[0].mxu0
        %v7345 = vadd.f32 0.0, %v7344
        %v7346 = vpop.f32.mrb[0].mxu0
        %v7347 = vadd.f32 0.0, %v7346
        %v7348 = vpop.f32.mrb[0].mxu0
        %v7349 = vadd.f32 0.0, %v7348
        %v7350 = vpop.f32.mrb[0].mxu0
        %v7351 = vadd.f32 0.0, %v7350
        %7352 = vmatprep.mubr.bf16.mxu0 0
        %7353 = vmatmul.mubr.bf16.gmra.mrb[0].mxu0 %v4986
        %v7354 = vpop.f32.mrb[0].mxu0
        %v7355 = vadd.f32 0.0, %v7354
        %v7356 = vpop.f32.mrb[0].mxu0
        %v7357 = vadd.f32 0.0, %v7356
        %v7358 = vpop.f32.mrb[0].mxu0
        %v7359 = vadd.f32 0.0, %v7358
        %v7360 = vpop.f32.mrb[0].mxu0
        %v7361 = vadd.f32 0.0, %v7360
        %7362 = vmatprep.mubr.bf16.mxu0 0
        %7363 = vmatmul.mubr.bf16.gmra.mrb[0].mxu0 %v4987
        %v7364 = vpop.f32.mrb[0].mxu0
        %v7365 = vadd.f32 0.0, %v7364
        %v7366 = vpop.f32.mrb[0].mxu0
        %v7367 = vadd.f32 0.0, %v7366
        %v7368 = vpop.f32.mrb[0].mxu0
        %v7369 = vadd.f32 0.0, %v7368
        %v7370 = vpop.f32.mrb[0].mxu0
        %v7371 = vadd.f32 0.0, %v7370
        %7372 = vmatprep.mubr.bf16.mxu0 0
        %7373 = vmatmul.mubr.bf16.gmra.mrb[0].mxu0 %v4988
        %v7374 = vpop.f32.mrb[0].mxu0
        %v7375 = vadd.f32 0.0, %v7374
        %v7376 = vpop.f32.mrb[0].mxu0
        %v7377 = vadd.f32 0.0, %v7376
        %v7378 = vpop.f32.mrb[0].mxu0
        %v7379 = vadd.f32 0.0, %v7378
        %v7380 = vpop.f32.mrb[0].mxu0
        %v7381 = vadd.f32 0.0, %v7380
        %7382 = vmatprep.mubr.bf16.mxu0 0
        %7383 = vmatmul.mubr.bf16.gmra.mrb[0].mxu0 %v4989
        %v7384 = vpop.f32.mrb[0].mxu0
        %v7385 = vadd.f32 0.0, %v7384
        %v7386 = vpop.f32.mrb[0].mxu0
        %v7387 = vadd.f32 0.0, %v7386
        %v7388 = vpop.f32.mrb[0].mxu0
        %v7389 = vadd.f32 0.0, %v7388
        %v7390 = vpop.f32.mrb[0].mxu0
        %v7391 = vadd.f32 0.0, %v7390
        %7392 = vdwg.mxu0
        %7393 = vmatprep.subr.bf16.mxu0 %v5253
        %7394 = vmatpush1.bf16.msra.mxu0 %v5252
        %7395 = vmatprep.subr.bf16.mxu0 %v5261
        %7396 = vmatpush1.bf16.msra.mxu0 %v5260
        %7397 = vmatprep.subr.bf16.mxu0 %v5269
        %7398 = vmatpush1.bf16.msra.mxu0 %v5268
        %7399 = vmatprep.subr.bf16.mxu0 %v5277
        %7400 = vmatpush1.bf16.msra.mxu0 %v5276
        %7401 = vmatprep.subr.bf16.mxu0 %v5285
        %7402 = vmatpush1.bf16.msra.mxu0 %v5284
        %7403 = vmatprep.subr.bf16.mxu0 %v5293
        %7404 = vmatpush1.bf16.msra.mxu0 %v5292
        %7405 = vmatprep.subr.bf16.mxu0 %v5301
        %7406 = vmatpush1.bf16.msra.mxu0 %v5300
        %7407 = vmatprep.subr.bf16.mxu0 %v5309
        %7408 = vmatpush1.bf16.msra.mxu0 %v5308
        %7409 = vmatprep.subr.bf16.mxu0 0
        %7410 = vmatpush1.bf16.msra.mxu0 0
        %7411 = vmatprep.subr.bf16.mxu0 0
        %7412 = vmatpush1.bf16.msra.mxu0 0
        %7413 = vmatprep.subr.bf16.mxu0 0
        %7414 = vmatpush1.bf16.msra.mxu0 0
        %7415 = vmatprep.subr.bf16.mxu0 0
        %7416 = vmatpush1.bf16.msra.mxu0 0
        %7417 = vmatprep.subr.bf16.mxu0 0
        %7418 = vmatpush1.bf16.msra.mxu0 0
        %7419 = vmatprep.subr.bf16.mxu0 0
        %7420 = vmatpush1.bf16.msra.mxu0 0
        %7421 = vmatprep.subr.bf16.mxu0 0
        %7422 = vmatpush1.bf16.msra.mxu0 0
        %7423 = vmatprep.subr.bf16.mxu0 0
        %7424 = vmatpush1.bf16.msra.mxu0 0
        %7425 = vmatprep.mubr.bf16.mxu0 0
        %7426 = vmatmul.mubr.bf16.gmra.mrb[0].mxu0 %v4926
        %v7427 = vpop.f32.mrb[0].mxu0
        %v7428 = vadd.f32 0.0, %v7427
        %v7429 = vpop.f32.mrb[0].mxu0
        %v7430 = vadd.f32 0.0, %v7429
        %v7431 = vpop.f32.mrb[0].mxu0
        %v7432 = vadd.f32 0.0, %v7431
        %v7433 = vpop.f32.mrb[0].mxu0
        %v7434 = vadd.f32 0.0, %v7433
        %7435 = vmatprep.mubr.bf16.mxu0 0
        %7436 = vmatmul.mubr.bf16.gmra.mrb[0].mxu0 %v4927
        %v7437 = vpop.f32.mrb[0].mxu0
        %v7438 = vadd.f32 0.0, %v7437
        %v7439 = vpop.f32.mrb[0].mxu0
        %v7440 = vadd.f32 0.0, %v7439
        %v7441 = vpop.f32.mrb[0].mxu0
        %v7442 = vadd.f32 0.0, %v7441
        %v7443 = vpop.f32.mrb[0].mxu0
        %v7444 = vadd.f32 0.0, %v7443
        %7445 = vmatprep.mubr.bf16.mxu0 0
        %7446 = vmatmul.mubr.bf16.gmra.mrb[0].mxu0 %v4928
        %v7447 = vpop.f32.mrb[0].mxu0
        %v7448 = vadd.f32 0.0, %v7447
        %v7449 = vpop.f32.mrb[0].mxu0
        %v7450 = vadd.f32 0.0, %v7449
        %v7451 = vpop.f32.mrb[0].mxu0
        %v7452 = vadd.f32 0.0, %v7451
        %v7453 = vpop.f32.mrb[0].mxu0
        %v7454 = vadd.f32 0.0, %v7453
        %7455 = vmatprep.mubr.bf16.mxu0 0
        %7456 = vmatmul.mubr.bf16.gmra.mrb[0].mxu0 %v4929
        %v7457 = vpop.f32.mrb[0].mxu0
        %v7458 = vadd.f32 0.0, %v7457
        %v7459 = vpop.f32.mrb[0].mxu0
        %v7460 = vadd.f32 0.0, %v7459
        %v7461 = vpop.f32.mrb[0].mxu0
        %v7462 = vadd.f32 0.0, %v7461
        %v7463 = vpop.f32.mrb[0].mxu0
        %v7464 = vadd.f32 0.0, %v7463
        %7465 = vmatprep.mubr.bf16.mxu0 0
        %7466 = vmatmul.mubr.bf16.gmra.mrb[0].mxu0 %v4930
        %v7467 = vpop.f32.mrb[0].mxu0
        %v7468 = vadd.f32 0.0, %v7467
        %v7469 = vpop.f32.mrb[0].mxu0
        %v7470 = vadd.f32 0.0, %v7469
        %v7471 = vpop.f32.mrb[0].mxu0
        %v7472 = vadd.f32 0.0, %v7471
        %v7473 = vpop.f32.mrb[0].mxu0
        %v7474 = vadd.f32 0.0, %v7473
        %7475 = vmatprep.mubr.bf16.mxu0 0
        %7476 = vmatmul.mubr.bf16.gmra.mrb[0].mxu0 %v4931
        %v7477 = vpop.f32.mrb[0].mxu0
        %v7478 = vadd.f32 0.0, %v7477
        %v7479 = vpop.f32.mrb[0].mxu0
        %v7480 = vadd.f32 0.0, %v7479
        %v7481 = vpop.f32.mrb[0].mxu0
        %v7482 = vadd.f32 0.0, %v7481
        %v7483 = vpop.f32.mrb[0].mxu0
        %v7484 = vadd.f32 0.0, %v7483
        %7485 = vmatprep.mubr.bf16.mxu0 0
        %7486 = vmatmul.mubr.bf16.gmra.mrb[0].mxu0 %v4932
        %v7487 = vpop.f32.mrb[0].mxu0
        %v7488 = vadd.f32 0.0, %v7487
        %v7489 = vpop.f32.mrb[0].mxu0
        %v7490 = vadd.f32 0.0, %v7489
        %v7491 = vpop.f32.mrb[0].mxu0
        %v7492 = vadd.f32 0.0, %v7491
        %v7493 = vpop.f32.mrb[0].mxu0
        %v7494 = vadd.f32 0.0, %v7493
        %7495 = vmatprep.mubr.bf16.mxu0 0
        %7496 = vmatmul.mubr.bf16.gmra.mrb[0].mxu0 %v4933
        %v7497 = vpop.f32.mrb[0].mxu0
        %v7498 = vadd.f32 0.0, %v7497
        %v7499 = vpop.f32.mrb[0].mxu0
        %v7500 = vadd.f32 0.0, %v7499
        %v7501 = vpop.f32.mrb[0].mxu0
        %v7502 = vadd.f32 0.0, %v7501
        %v7503 = vpop.f32.mrb[0].mxu0
        %v7504 = vadd.f32 0.0, %v7503
        %7505 = vmatprep.mubr.bf16.mxu0 0
        %7506 = vmatmul.mubr.bf16.gmra.mrb[0].mxu0 %v4934
        %v7507 = vpop.f32.mrb[0].mxu0
        %v7508 = vadd.f32 0.0, %v7507
        %v7509 = vpop.f32.mrb[0].mxu0
        %v7510 = vadd.f32 0.0, %v7509
        %v7511 = vpop.f32.mrb[0].mxu0
        %v7512 = vadd.f32 0.0, %v7511
        %v7513 = vpop.f32.mrb[0].mxu0
        %v7514 = vadd.f32 0.0, %v7513
        %7515 = vmatprep.mubr.bf16.mxu0 0
        %7516 = vmatmul.mubr.bf16.gmra.mrb[0].mxu0 %v4935
        %v7517 = vpop.f32.mrb[0].mxu0
        %v7518 = vadd.f32 0.0, %v7517
        %v7519 = vpop.f32.mrb[0].mxu0
        %v7520 = vadd.f32 0.0, %v7519
        %v7521 = vpop.f32.mrb[0].mxu0
        %v7522 = vadd.f32 0.0, %v7521
        %v7523 = vpop.f32.mrb[0].mxu0
        %v7524 = vadd.f32 0.0, %v7523
        %7525 = vmatprep.mubr.bf16.mxu0 0
        %7526 = vmatmul.mubr.bf16.gmra.mrb[0].mxu0 %v4936
        %v7527 = vpop.f32.mrb[0].mxu0
        %v7528 = vadd.f32 0.0, %v7527
        %v7529 = vpop.f32.mrb[0].mxu0
        %v7530 = vadd.f32 0.0, %v7529
        %v7531 = vpop.f32.mrb[0].mxu0
        %v7532 = vadd.f32 0.0, %v7531
        %v7533 = vpop.f32.mrb[0].mxu0
        %v7534 = vadd.f32 0.0, %v7533
        %7535 = vmatprep.mubr.bf16.mxu0 0
        %7536 = vmatmul.mubr.bf16.gmra.mrb[0].mxu0 %v4937
        %v7537 = vpop.f32.mrb[0].mxu0
        %v7538 = vadd.f32 0.0, %v7537
        %v7539 = vpop.f32.mrb[0].mxu0
        %v7540 = vadd.f32 0.0, %v7539
        %v7541 = vpop.f32.mrb[0].mxu0
        %v7542 = vadd.f32 0.0, %v7541
        %v7543 = vpop.f32.mrb[0].mxu0
        %v7544 = vadd.f32 0.0, %v7543
        %7545 = vmatprep.mubr.bf16.mxu0 0
        %7546 = vmatmul.mubr.bf16.gmra.mrb[0].mxu0 %v4938
        %v7547 = vpop.f32.mrb[0].mxu0
        %v7548 = vadd.f32 0.0, %v7547
        %v7549 = vpop.f32.mrb[0].mxu0
        %v7550 = vadd.f32 0.0, %v7549
        %v7551 = vpop.f32.mrb[0].mxu0
        %v7552 = vadd.f32 0.0, %v7551
        %v7553 = vpop.f32.mrb[0].mxu0
        %v7554 = vadd.f32 0.0, %v7553
        %7555 = vmatprep.mubr.bf16.mxu0 0
        %7556 = vmatmul.mubr.bf16.gmra.mrb[0].mxu0 %v4939
        %v7557 = vpop.f32.mrb[0].mxu0
        %v7558 = vadd.f32 0.0, %v7557
        %v7559 = vpop.f32.mrb[0].mxu0
        %v7560 = vadd.f32 0.0, %v7559
        %v7561 = vpop.f32.mrb[0].mxu0
        %v7562 = vadd.f32 0.0, %v7561
        %v7563 = vpop.f32.mrb[0].mxu0
        %v7564 = vadd.f32 0.0, %v7563
        %7565 = vmatprep.mubr.bf16.mxu0 0
        %7566 = vmatmul.mubr.bf16.gmra.mrb[0].mxu0 %v4940
        %v7567 = vpop.f32.mrb[0].mxu0
        %v7568 = vadd.f32 0.0, %v7567
        %v7569 = vpop.f32.mrb[0].mxu0
        %v7570 = vadd.f32 0.0, %v7569
        %v7571 = vpop.f32.mrb[0].mxu0
        %v7572 = vadd.f32 0.0, %v7571
        %v7573 = vpop.f32.mrb[0].mxu0
        %v7574 = vadd.f32 0.0, %v7573
        %7575 = vmatprep.mubr.bf16.mxu0 0
        %7576 = vmatmul.mubr.bf16.gmra.mrb[0].mxu0 %v4941
        %v7577 = vpop.f32.mrb[0].mxu0
        %v7578 = vadd.f32 0.0, %v7577
        %v7579 = vpop.f32.mrb[0].mxu0
        %v7580 = vadd.f32 0.0, %v7579
        %v7581 = vpop.f32.mrb[0].mxu0
        %v7582 = vadd.f32 0.0, %v7581
        %v7583 = vpop.f32.mrb[0].mxu0
        %v7584 = vadd.f32 0.0, %v7583
        %7585 = vmatprep.mubr.bf16.mxu0 0
        %7586 = vmatmul.mubr.bf16.gmra.mrb[0].mxu0 %v4942
        %v7587 = vpop.f32.mrb[0].mxu0
        %v7588 = vadd.f32 0.0, %v7587
        %v7589 = vpop.f32.mrb[0].mxu0
        %v7590 = vadd.f32 0.0, %v7589
        %v7591 = vpop.f32.mrb[0].mxu0
        %v7592 = vadd.f32 0.0, %v7591
        %v7593 = vpop.f32.mrb[0].mxu0
        %v7594 = vadd.f32 0.0, %v7593
        %7595 = vmatprep.mubr.bf16.mxu0 0
        %7596 = vmatmul.mubr.bf16.gmra.mrb[0].mxu0 %v4943
        %v7597 = vpop.f32.mrb[0].mxu0
        %v7598 = vadd.f32 0.0, %v7597
        %v7599 = vpop.f32.mrb[0].mxu0
        %v7600 = vadd.f32 0.0, %v7599
        %v7601 = vpop.f32.mrb[0].mxu0
        %v7602 = vadd.f32 0.0, %v7601
        %v7603 = vpop.f32.mrb[0].mxu0
        %v7604 = vadd.f32 0.0, %v7603
        %7605 = vmatprep.mubr.bf16.mxu0 0
        %7606 = vmatmul.mubr.bf16.gmra.mrb[0].mxu0 %v4944
        %v7607 = vpop.f32.mrb[0].mxu0
        %v7608 = vadd.f32 0.0, %v7607
        %v7609 = vpop.f32.mrb[0].mxu0
        %v7610 = vadd.f32 0.0, %v7609
        %v7611 = vpop.f32.mrb[0].mxu0
        %v7612 = vadd.f32 0.0, %v7611
        %v7613 = vpop.f32.mrb[0].mxu0
        %v7614 = vadd.f32 0.0, %v7613
        %7615 = vmatprep.mubr.bf16.mxu0 0
        %7616 = vmatmul.mubr.bf16.gmra.mrb[0].mxu0 %v4945
        %v7617 = vpop.f32.mrb[0].mxu0
        %v7618 = vadd.f32 0.0, %v7617
        %v7619 = vpop.f32.mrb[0].mxu0
        %v7620 = vadd.f32 0.0, %v7619
        %v7621 = vpop.f32.mrb[0].mxu0
        %v7622 = vadd.f32 0.0, %v7621
        %v7623 = vpop.f32.mrb[0].mxu0
        %v7624 = vadd.f32 0.0, %v7623
        %7625 = vmatprep.mubr.bf16.mxu0 0
        %7626 = vmatmul.mubr.bf16.gmra.mrb[0].mxu0 %v4946
        %v7627 = vpop.f32.mrb[0].mxu0
        %v7628 = vadd.f32 0.0, %v7627
        %v7629 = vpop.f32.mrb[0].mxu0
        %v7630 = vadd.f32 0.0, %v7629
        %v7631 = vpop.f32.mrb[0].mxu0
        %v7632 = vadd.f32 0.0, %v7631
        %v7633 = vpop.f32.mrb[0].mxu0
        %v7634 = vadd.f32 0.0, %v7633
        %7635 = vmatprep.mubr.bf16.mxu0 0
        %7636 = vmatmul.mubr.bf16.gmra.mrb[0].mxu0 %v4947
        %v7637 = vpop.f32.mrb[0].mxu0
        %v7638 = vadd.f32 0.0, %v7637
        %v7639 = vpop.f32.mrb[0].mxu0
        %v7640 = vadd.f32 0.0, %v7639
        %v7641 = vpop.f32.mrb[0].mxu0
        %v7642 = vadd.f32 0.0, %v7641
        %v7643 = vpop.f32.mrb[0].mxu0
        %v7644 = vadd.f32 0.0, %v7643
        %7645 = vmatprep.mubr.bf16.mxu0 0
        %7646 = vmatmul.mubr.bf16.gmra.mrb[0].mxu0 %v4948
        %v7647 = vpop.f32.mrb[0].mxu0
        %v7648 = vadd.f32 0.0, %v7647
        %v7649 = vpop.f32.mrb[0].mxu0
        %v7650 = vadd.f32 0.0, %v7649
        %v7651 = vpop.f32.mrb[0].mxu0
        %v7652 = vadd.f32 0.0, %v7651
        %v7653 = vpop.f32.mrb[0].mxu0
        %v7654 = vadd.f32 0.0, %v7653
        %7655 = vmatprep.mubr.bf16.mxu0 0
        %7656 = vmatmul.mubr.bf16.gmra.mrb[0].mxu0 %v4949
        %v7657 = vpop.f32.mrb[0].mxu0
        %v7658 = vadd.f32 0.0, %v7657
        %v7659 = vpop.f32.mrb[0].mxu0
        %v7660 = vadd.f32 0.0, %v7659
        %v7661 = vpop.f32.mrb[0].mxu0
        %v7662 = vadd.f32 0.0, %v7661
        %v7663 = vpop.f32.mrb[0].mxu0
        %v7664 = vadd.f32 0.0, %v7663
        %7665 = vmatprep.mubr.bf16.mxu0 0
        %7666 = vmatmul.mubr.bf16.gmra.mrb[0].mxu0 %v4950
        %v7667 = vpop.f32.mrb[0].mxu0
        %v7668 = vadd.f32 0.0, %v7667
        %v7669 = vpop.f32.mrb[0].mxu0
        %v7670 = vadd.f32 0.0, %v7669
        %v7671 = vpop.f32.mrb[0].mxu0
        %v7672 = vadd.f32 0.0, %v7671
        %v7673 = vpop.f32.mrb[0].mxu0
        %v7674 = vadd.f32 0.0, %v7673
        %7675 = vmatprep.mubr.bf16.mxu0 0
        %7676 = vmatmul.mubr.bf16.gmra.mrb[0].mxu0 %v4951
        %v7677 = vpop.f32.mrb[0].mxu0
        %v7678 = vadd.f32 0.0, %v7677
        %v7679 = vpop.f32.mrb[0].mxu0
        %v7680 = vadd.f32 0.0, %v7679
        %v7681 = vpop.f32.mrb[0].mxu0
        %v7682 = vadd.f32 0.0, %v7681
        %v7683 = vpop.f32.mrb[0].mxu0
        %v7684 = vadd.f32 0.0, %v7683
        %7685 = vmatprep.mubr.bf16.mxu0 0
        %7686 = vmatmul.mubr.bf16.gmra.mrb[0].mxu0 %v4952
        %v7687 = vpop.f32.mrb[0].mxu0
        %v7688 = vadd.f32 0.0, %v7687
        %v7689 = vpop.f32.mrb[0].mxu0
        %v7690 = vadd.f32 0.0, %v7689
        %v7691 = vpop.f32.mrb[0].mxu0
        %v7692 = vadd.f32 0.0, %v7691
        %v7693 = vpop.f32.mrb[0].mxu0
        %v7694 = vadd.f32 0.0, %v7693
        %7695 = vmatprep.mubr.bf16.mxu0 0
        %7696 = vmatmul.mubr.bf16.gmra.mrb[0].mxu0 %v4953
        %v7697 = vpop.f32.mrb[0].mxu0
        %v7698 = vadd.f32 0.0, %v7697
        %v7699 = vpop.f32.mrb[0].mxu0
        %v7700 = vadd.f32 0.0, %v7699
        %v7701 = vpop.f32.mrb[0].mxu0
        %v7702 = vadd.f32 0.0, %v7701
        %v7703 = vpop.f32.mrb[0].mxu0
        %v7704 = vadd.f32 0.0, %v7703
        %7705 = vmatprep.mubr.bf16.mxu0 0
        %7706 = vmatmul.mubr.bf16.gmra.mrb[0].mxu0 %v4954
        %v7707 = vpop.f32.mrb[0].mxu0
        %v7708 = vadd.f32 0.0, %v7707
        %v7709 = vpop.f32.mrb[0].mxu0
        %v7710 = vadd.f32 0.0, %v7709
        %v7711 = vpop.f32.mrb[0].mxu0
        %v7712 = vadd.f32 0.0, %v7711
        %v7713 = vpop.f32.mrb[0].mxu0
        %v7714 = vadd.f32 0.0, %v7713
        %7715 = vmatprep.mubr.bf16.mxu0 0
        %7716 = vmatmul.mubr.bf16.gmra.mrb[0].mxu0 %v4955
        %v7717 = vpop.f32.mrb[0].mxu0
        %v7718 = vadd.f32 0.0, %v7717
        %v7719 = vpop.f32.mrb[0].mxu0
        %v7720 = vadd.f32 0.0, %v7719
        %v7721 = vpop.f32.mrb[0].mxu0
        %v7722 = vadd.f32 0.0, %v7721
        %v7723 = vpop.f32.mrb[0].mxu0
        %v7724 = vadd.f32 0.0, %v7723
        %7725 = vmatprep.mubr.bf16.mxu0 0
        %7726 = vmatmul.mubr.bf16.gmra.mrb[0].mxu0 %v4956
        %v7727 = vpop.f32.mrb[0].mxu0
        %v7728 = vadd.f32 0.0, %v7727
        %v7729 = vpop.f32.mrb[0].mxu0
        %v7730 = vadd.f32 0.0, %v7729
        %v7731 = vpop.f32.mrb[0].mxu0
        %v7732 = vadd.f32 0.0, %v7731
        %v7733 = vpop.f32.mrb[0].mxu0
        %v7734 = vadd.f32 0.0, %v7733
        %7735 = vmatprep.mubr.bf16.mxu0 0
        %7736 = vmatmul.mubr.bf16.gmra.mrb[0].mxu0 %v4957
        %v7737 = vpop.f32.mrb[0].mxu0
        %v7738 = vadd.f32 0.0, %v7737
        %v7739 = vpop.f32.mrb[0].mxu0
        %v7740 = vadd.f32 0.0, %v7739
        %v7741 = vpop.f32.mrb[0].mxu0
        %v7742 = vadd.f32 0.0, %v7741
        %v7743 = vpop.f32.mrb[0].mxu0
        %v7744 = vadd.f32 0.0, %v7743
        %7745 = vmatprep.mubr.bf16.mxu0 0
        %7746 = vmatmul.mubr.bf16.gmra.mrb[0].mxu0 %v4958
        %v7747 = vpop.f32.mrb[0].mxu0
        %v7748 = vadd.f32 0.0, %v7747
        %v7749 = vpop.f32.mrb[0].mxu0
        %v7750 = vadd.f32 0.0, %v7749
        %v7751 = vpop.f32.mrb[0].mxu0
        %v7752 = vadd.f32 0.0, %v7751
        %v7753 = vpop.f32.mrb[0].mxu0
        %v7754 = vadd.f32 0.0, %v7753
        %7755 = vmatprep.mubr.bf16.mxu0 0
        %7756 = vmatmul.mubr.bf16.gmra.mrb[0].mxu0 %v4959
        %v7757 = vpop.f32.mrb[0].mxu0
        %v7758 = vadd.f32 0.0, %v7757
        %v7759 = vpop.f32.mrb[0].mxu0
        %v7760 = vadd.f32 0.0, %v7759
        %v7761 = vpop.f32.mrb[0].mxu0
        %v7762 = vadd.f32 0.0, %v7761
        %v7763 = vpop.f32.mrb[0].mxu0
        %v7764 = vadd.f32 0.0, %v7763
        %7765 = vmatprep.mubr.bf16.mxu0 0
        %7766 = vmatmul.mubr.bf16.gmra.mrb[0].mxu0 %v4960
        %v7767 = vpop.f32.mrb[0].mxu0
        %v7768 = vadd.f32 0.0, %v7767
        %v7769 = vpop.f32.mrb[0].mxu0
        %v7770 = vadd.f32 0.0, %v7769
        %v7771 = vpop.f32.mrb[0].mxu0
        %v7772 = vadd.f32 0.0, %v7771
        %v7773 = vpop.f32.mrb[0].mxu0
        %v7774 = vadd.f32 0.0, %v7773
        %7775 = vmatprep.mubr.bf16.mxu0 0
        %7776 = vmatmul.mubr.bf16.gmra.mrb[0].mxu0 %v4961
        %v7777 = vpop.f32.mrb[0].mxu0
        %v7778 = vadd.f32 0.0, %v7777
        %v7779 = vpop.f32.mrb[0].mxu0
        %v7780 = vadd.f32 0.0, %v7779
        %v7781 = vpop.f32.mrb[0].mxu0
        %v7782 = vadd.f32 0.0, %v7781
        %v7783 = vpop.f32.mrb[0].mxu0
        %v7784 = vadd.f32 0.0, %v7783
        %7785 = vmatprep.mubr.bf16.mxu0 0
        %7786 = vmatmul.mubr.bf16.gmra.mrb[0].mxu0 %v4962
        %v7787 = vpop.f32.mrb[0].mxu0
        %v7788 = vadd.f32 0.0, %v7787
        %v7789 = vpop.f32.mrb[0].mxu0
        %v7790 = vadd.f32 0.0, %v7789
        %v7791 = vpop.f32.mrb[0].mxu0
        %v7792 = vadd.f32 0.0, %v7791
        %v7793 = vpop.f32.mrb[0].mxu0
        %v7794 = vadd.f32 0.0, %v7793
        %7795 = vmatprep.mubr.bf16.mxu0 0
        %7796 = vmatmul.mubr.bf16.gmra.mrb[0].mxu0 %v4963
        %v7797 = vpop.f32.mrb[0].mxu0
        %v7798 = vadd.f32 0.0, %v7797
        %v7799 = vpop.f32.mrb[0].mxu0
        %v7800 = vadd.f32 0.0, %v7799
        %v7801 = vpop.f32.mrb[0].mxu0
        %v7802 = vadd.f32 0.0, %v7801
        %v7803 = vpop.f32.mrb[0].mxu0
        %v7804 = vadd.f32 0.0, %v7803
        %7805 = vmatprep.mubr.bf16.mxu0 0
        %7806 = vmatmul.mubr.bf16.gmra.mrb[0].mxu0 %v4964
        %v7807 = vpop.f32.mrb[0].mxu0
        %v7808 = vadd.f32 0.0, %v7807
        %v7809 = vpop.f32.mrb[0].mxu0
        %v7810 = vadd.f32 0.0, %v7809
        %v7811 = vpop.f32.mrb[0].mxu0
        %v7812 = vadd.f32 0.0, %v7811
        %v7813 = vpop.f32.mrb[0].mxu0
        %v7814 = vadd.f32 0.0, %v7813
        %7815 = vmatprep.mubr.bf16.mxu0 0
        %7816 = vmatmul.mubr.bf16.gmra.mrb[0].mxu0 %v4965
        %v7817 = vpop.f32.mrb[0].mxu0
        %v7818 = vadd.f32 0.0, %v7817
        %v7819 = vpop.f32.mrb[0].mxu0
        %v7820 = vadd.f32 0.0, %v7819
        %v7821 = vpop.f32.mrb[0].mxu0
        %v7822 = vadd.f32 0.0, %v7821
        %v7823 = vpop.f32.mrb[0].mxu0
        %v7824 = vadd.f32 0.0, %v7823
        %7825 = vmatprep.mubr.bf16.mxu0 0
        %7826 = vmatmul.mubr.bf16.gmra.mrb[0].mxu0 %v4966
        %v7827 = vpop.f32.mrb[0].mxu0
        %v7828 = vadd.f32 0.0, %v7827
        %v7829 = vpop.f32.mrb[0].mxu0
        %v7830 = vadd.f32 0.0, %v7829
        %v7831 = vpop.f32.mrb[0].mxu0
        %v7832 = vadd.f32 0.0, %v7831
        %v7833 = vpop.f32.mrb[0].mxu0
        %v7834 = vadd.f32 0.0, %v7833
        %7835 = vmatprep.mubr.bf16.mxu0 0
        %7836 = vmatmul.mubr.bf16.gmra.mrb[0].mxu0 %v4967
        %v7837 = vpop.f32.mrb[0].mxu0
        %v7838 = vadd.f32 0.0, %v7837
        %v7839 = vpop.f32.mrb[0].mxu0
        %v7840 = vadd.f32 0.0, %v7839
        %v7841 = vpop.f32.mrb[0].mxu0
        %v7842 = vadd.f32 0.0, %v7841
        %v7843 = vpop.f32.mrb[0].mxu0
        %v7844 = vadd.f32 0.0, %v7843
        %7845 = vmatprep.mubr.bf16.mxu0 0
        %7846 = vmatmul.mubr.bf16.gmra.mrb[0].mxu0 %v4968
        %v7847 = vpop.f32.mrb[0].mxu0
        %v7848 = vadd.f32 0.0, %v7847
        %v7849 = vpop.f32.mrb[0].mxu0
        %v7850 = vadd.f32 0.0, %v7849
        %v7851 = vpop.f32.mrb[0].mxu0
        %v7852 = vadd.f32 0.0, %v7851
        %v7853 = vpop.f32.mrb[0].mxu0
        %v7854 = vadd.f32 0.0, %v7853
        %7855 = vmatprep.mubr.bf16.mxu0 0
        %7856 = vmatmul.mubr.bf16.gmra.mrb[0].mxu0 %v4969
        %v7857 = vpop.f32.mrb[0].mxu0
        %v7858 = vadd.f32 0.0, %v7857
        %v7859 = vpop.f32.mrb[0].mxu0
        %v7860 = vadd.f32 0.0, %v7859
        %v7861 = vpop.f32.mrb[0].mxu0
        %v7862 = vadd.f32 0.0, %v7861
        %v7863 = vpop.f32.mrb[0].mxu0
        %v7864 = vadd.f32 0.0, %v7863
        %7865 = vmatprep.mubr.bf16.mxu0 0
        %7866 = vmatmul.mubr.bf16.gmra.mrb[0].mxu0 %v4970
        %v7867 = vpop.f32.mrb[0].mxu0
        %v7868 = vadd.f32 0.0, %v7867
        %v7869 = vpop.f32.mrb[0].mxu0
        %v7870 = vadd.f32 0.0, %v7869
        %v7871 = vpop.f32.mrb[0].mxu0
        %v7872 = vadd.f32 0.0, %v7871
        %v7873 = vpop.f32.mrb[0].mxu0
        %v7874 = vadd.f32 0.0, %v7873
        %7875 = vmatprep.mubr.bf16.mxu0 0
        %7876 = vmatmul.mubr.bf16.gmra.mrb[0].mxu0 %v4971
        %v7877 = vpop.f32.mrb[0].mxu0
        %v7878 = vadd.f32 0.0, %v7877
        %v7879 = vpop.f32.mrb[0].mxu0
        %v7880 = vadd.f32 0.0, %v7879
        %v7881 = vpop.f32.mrb[0].mxu0
        %v7882 = vadd.f32 0.0, %v7881
        %v7883 = vpop.f32.mrb[0].mxu0
        %v7884 = vadd.f32 0.0, %v7883
        %7885 = vmatprep.mubr.bf16.mxu0 0
        %7886 = vmatmul.mubr.bf16.gmra.mrb[0].mxu0 %v4972
        %v7887 = vpop.f32.mrb[0].mxu0
        %v7888 = vadd.f32 0.0, %v7887
        %v7889 = vpop.f32.mrb[0].mxu0
        %v7890 = vadd.f32 0.0, %v7889
        %v7891 = vpop.f32.mrb[0].mxu0
        %v7892 = vadd.f32 0.0, %v7891
        %v7893 = vpop.f32.mrb[0].mxu0
        %v7894 = vadd.f32 0.0, %v7893
        %7895 = vmatprep.mubr.bf16.mxu0 0
        %7896 = vmatmul.mubr.bf16.gmra.mrb[0].mxu0 %v4973
        %v7897 = vpop.f32.mrb[0].mxu0
        %v7898 = vadd.f32 0.0, %v7897
        %v7899 = vpop.f32.mrb[0].mxu0
        %v7900 = vadd.f32 0.0, %v7899
        %v7901 = vpop.f32.mrb[0].mxu0
        %v7902 = vadd.f32 0.0, %v7901
        %v7903 = vpop.f32.mrb[0].mxu0
        %v7904 = vadd.f32 0.0, %v7903
        %7905 = vmatprep.mubr.bf16.mxu0 0
        %7906 = vmatmul.mubr.bf16.gmra.mrb[0].mxu0 %v4974
        %v7907 = vpop.f32.mrb[0].mxu0
        %v7908 = vadd.f32 0.0, %v7907
        %v7909 = vpop.f32.mrb[0].mxu0
        %v7910 = vadd.f32 0.0, %v7909
        %v7911 = vpop.f32.mrb[0].mxu0
        %v7912 = vadd.f32 0.0, %v7911
        %v7913 = vpop.f32.mrb[0].mxu0
        %v7914 = vadd.f32 0.0, %v7913
        %7915 = vmatprep.mubr.bf16.mxu0 0
        %7916 = vmatmul.mubr.bf16.gmra.mrb[0].mxu0 %v4975
        %v7917 = vpop.f32.mrb[0].mxu0
        %v7918 = vadd.f32 0.0, %v7917
        %v7919 = vpop.f32.mrb[0].mxu0
        %v7920 = vadd.f32 0.0, %v7919
        %v7921 = vpop.f32.mrb[0].mxu0
        %v7922 = vadd.f32 0.0, %v7921
        %v7923 = vpop.f32.mrb[0].mxu0
        %v7924 = vadd.f32 0.0, %v7923
        %7925 = vmatprep.mubr.bf16.mxu0 0
        %7926 = vmatmul.mubr.bf16.gmra.mrb[0].mxu0 %v4976
        %v7927 = vpop.f32.mrb[0].mxu0
        %v7928 = vadd.f32 0.0, %v7927
        %v7929 = vpop.f32.mrb[0].mxu0
        %v7930 = vadd.f32 0.0, %v7929
        %v7931 = vpop.f32.mrb[0].mxu0
        %v7932 = vadd.f32 0.0, %v7931
        %v7933 = vpop.f32.mrb[0].mxu0
        %v7934 = vadd.f32 0.0, %v7933
        %7935 = vmatprep.mubr.bf16.mxu0 0
        %7936 = vmatmul.mubr.bf16.gmra.mrb[0].mxu0 %v4977
        %v7937 = vpop.f32.mrb[0].mxu0
        %v7938 = vadd.f32 0.0, %v7937
        %v7939 = vpop.f32.mrb[0].mxu0
        %v7940 = vadd.f32 0.0, %v7939
        %v7941 = vpop.f32.mrb[0].mxu0
        %v7942 = vadd.f32 0.0, %v7941
        %v7943 = vpop.f32.mrb[0].mxu0
        %v7944 = vadd.f32 0.0, %v7943
        %7945 = vmatprep.mubr.bf16.mxu0 0
        %7946 = vmatmul.mubr.bf16.gmra.mrb[0].mxu0 %v4978
        %v7947 = vpop.f32.mrb[0].mxu0
        %v7948 = vadd.f32 0.0, %v7947
        %v7949 = vpop.f32.mrb[0].mxu0
        %v7950 = vadd.f32 0.0, %v7949
        %v7951 = vpop.f32.mrb[0].mxu0
        %v7952 = vadd.f32 0.0, %v7951
        %v7953 = vpop.f32.mrb[0].mxu0
        %v7954 = vadd.f32 0.0, %v7953
        %7955 = vmatprep.mubr.bf16.mxu0 0
        %7956 = vmatmul.mubr.bf16.gmra.mrb[0].mxu0 %v4979
        %v7957 = vpop.f32.mrb[0].mxu0
        %v7958 = vadd.f32 0.0, %v7957
        %v7959 = vpop.f32.mrb[0].mxu0
        %v7960 = vadd.f32 0.0, %v7959
        %v7961 = vpop.f32.mrb[0].mxu0
        %v7962 = vadd.f32 0.0, %v7961
        %v7963 = vpop.f32.mrb[0].mxu0
        %v7964 = vadd.f32 0.0, %v7963
        %7965 = vmatprep.mubr.bf16.mxu0 0
        %7966 = vmatmul.mubr.bf16.gmra.mrb[0].mxu0 %v4980
        %v7967 = vpop.f32.mrb[0].mxu0
        %v7968 = vadd.f32 0.0, %v7967
        %v7969 = vpop.f32.mrb[0].mxu0
        %v7970 = vadd.f32 0.0, %v7969
        %v7971 = vpop.f32.mrb[0].mxu0
        %v7972 = vadd.f32 0.0, %v7971
        %v7973 = vpop.f32.mrb[0].mxu0
        %v7974 = vadd.f32 0.0, %v7973
        %7975 = vmatprep.mubr.bf16.mxu0 0
        %7976 = vmatmul.mubr.bf16.gmra.mrb[0].mxu0 %v4981
        %v7977 = vpop.f32.mrb[0].mxu0
        %v7978 = vadd.f32 0.0, %v7977
        %v7979 = vpop.f32.mrb[0].mxu0
        %v7980 = vadd.f32 0.0, %v7979
        %v7981 = vpop.f32.mrb[0].mxu0
        %v7982 = vadd.f32 0.0, %v7981
        %v7983 = vpop.f32.mrb[0].mxu0
        %v7984 = vadd.f32 0.0, %v7983
        %7985 = vmatprep.mubr.bf16.mxu0 0
        %7986 = vmatmul.mubr.bf16.gmra.mrb[0].mxu0 %v4982
        %v7987 = vpop.f32.mrb[0].mxu0
        %v7988 = vadd.f32 0.0, %v7987
        %v7989 = vpop.f32.mrb[0].mxu0
        %v7990 = vadd.f32 0.0, %v7989
        %v7991 = vpop.f32.mrb[0].mxu0
        %v7992 = vadd.f32 0.0, %v7991
        %v7993 = vpop.f32.mrb[0].mxu0
        %v7994 = vadd.f32 0.0, %v7993
        %7995 = vmatprep.mubr.bf16.mxu0 0
        %7996 = vmatmul.mubr.bf16.gmra.mrb[0].mxu0 %v4983
        %v7997 = vpop.f32.mrb[0].mxu0
        %v7998 = vadd.f32 0.0, %v7997
        %v7999 = vpop.f32.mrb[0].mxu0
        %v8000 = vadd.f32 0.0, %v7999
        %v8001 = vpop.f32.mrb[0].mxu0
        %v8002 = vadd.f32 0.0, %v8001
        %v8003 = vpop.f32.mrb[0].mxu0
        %v8004 = vadd.f32 0.0, %v8003
        %8005 = vmatprep.mubr.bf16.mxu0 0
        %8006 = vmatmul.mubr.bf16.gmra.mrb[0].mxu0 %v4984
        %v8007 = vpop.f32.mrb[0].mxu0
        %v8008 = vadd.f32 0.0, %v8007
        %v8009 = vpop.f32.mrb[0].mxu0
        %v8010 = vadd.f32 0.0, %v8009
        %v8011 = vpop.f32.mrb[0].mxu0
        %v8012 = vadd.f32 0.0, %v8011
        %v8013 = vpop.f32.mrb[0].mxu0
        %v8014 = vadd.f32 0.0, %v8013
        %8015 = vmatprep.mubr.bf16.mxu0 0
        %8016 = vmatmul.mubr.bf16.gmra.mrb[0].mxu0 %v4985
        %v8017 = vpop.f32.mrb[0].mxu0
        %v8018 = vadd.f32 0.0, %v8017
        %v8019 = vpop.f32.mrb[0].mxu0
        %v8020 = vadd.f32 0.0, %v8019
        %v8021 = vpop.f32.mrb[0].mxu0
        %v8022 = vadd.f32 0.0, %v8021
        %v8023 = vpop.f32.mrb[0].mxu0
        %v8024 = vadd.f32 0.0, %v8023
        %8025 = vmatprep.mubr.bf16.mxu0 0
        %8026 = vmatmul.mubr.bf16.gmra.mrb[0].mxu0 %v4986
        %v8027 = vpop.f32.mrb[0].mxu0
        %v8028 = vadd.f32 0.0, %v8027
        %v8029 = vpop.f32.mrb[0].mxu0
        %v8030 = vadd.f32 0.0, %v8029
        %v8031 = vpop.f32.mrb[0].mxu0
        %v8032 = vadd.f32 0.0, %v8031
        %v8033 = vpop.f32.mrb[0].mxu0
        %v8034 = vadd.f32 0.0, %v8033
        %8035 = vmatprep.mubr.bf16.mxu0 0
        %8036 = vmatmul.mubr.bf16.gmra.mrb[0].mxu0 %v4987
        %v8037 = vpop.f32.mrb[0].mxu0
        %v8038 = vadd.f32 0.0, %v8037
        %v8039 = vpop.f32.mrb[0].mxu0
        %v8040 = vadd.f32 0.0, %v8039
        %v8041 = vpop.f32.mrb[0].mxu0
        %v8042 = vadd.f32 0.0, %v8041
        %v8043 = vpop.f32.mrb[0].mxu0
        %v8044 = vadd.f32 0.0, %v8043
        %8045 = vmatprep.mubr.bf16.mxu0 0
        %8046 = vmatmul.mubr.bf16.gmra.mrb[0].mxu0 %v4988
        %v8047 = vpop.f32.mrb[0].mxu0
        %v8048 = vadd.f32 0.0, %v8047
        %v8049 = vpop.f32.mrb[0].mxu0
        %v8050 = vadd.f32 0.0, %v8049
        %v8051 = vpop.f32.mrb[0].mxu0
        %v8052 = vadd.f32 0.0, %v8051
        %v8053 = vpop.f32.mrb[0].mxu0
        %v8054 = vadd.f32 0.0, %v8053
        %8055 = vmatprep.mubr.bf16.mxu0 0
        %8056 = vmatmul.mubr.bf16.gmra.mrb[0].mxu0 %v4989
        %v8057 = vpop.f32.mrb[0].mxu0
        %v8058 = vadd.f32 0.0, %v8057
        %v8059 = vpop.f32.mrb[0].mxu0
        %v8060 = vadd.f32 0.0, %v8059
        %v8061 = vpop.f32.mrb[0].mxu0
        %v8062 = vadd.f32 0.0, %v8061
        %v8063 = vpop.f32.mrb[0].mxu0
        %v8064 = vadd.f32 0.0, %v8063
        %8065 = vdwg.mxu0
        %v8066 = vmax.f32 %v5409, %v5413
        %v8067 = vmax.f32 %v8066, %v5419
        %v8068 = vmax.f32 %v8067, %v5423
        %v8069 = vmax.f32 %v8068, %v5429
        %v8070 = vmax.f32 %v8069, %v5433
        %v8071 = vmax.f32 %v8070, %v5439
        %v8072 = vmax.f32 %v8071, %v5443
        %v8073 = vmax.f32 %v8072, %v5449
        %v8074 = vmax.f32 %v8073, %v5453
        %v8075 = vmax.f32 %v8074, %v5459
        %v8076 = vmax.f32 %v8075, %v5463
        %v8077 = vmax.f32 %v8076, %v5469
        %v8078 = vmax.f32 %v8077, %v5473
        %v8079 = vmax.f32 %v8078, %v5479
        %v8080 = vmax.f32 %v8079, %v5483
        %v8081 = vmax.f32 %v8080, %v5489
        %v8082 = vmax.f32 %v8081, %v5493
        %v8083 = vmax.f32 %v8082, %v5499
        %v8084 = vmax.f32 %v8083, %v5503
        %v8085 = vmax.f32 %v8084, %v5509
        %v8086 = vmax.f32 %v8085, %v5513
        %v8087 = vmax.f32 %v8086, %v5519
        %v8088 = vmax.f32 %v8087, %v5523
        %v8089 = vmax.f32 %v8088, %v5529
        %v8090 = vmax.f32 %v8089, %v5533
        %v8091 = vmax.f32 %v8090, %v5539
        %v8092 = vmax.f32 %v8091, %v5543
        %v8093 = vmax.f32 %v8092, %v5549
        %v8094 = vmax.f32 %v8093, %v5553
        %v8095 = vmax.f32 %v8094, %v5559
        %v8096 = vmax.f32 %v8095, %v5563
        %v8097 = vmax.f32 %v8096, %v5569
        %v8098 = vmax.f32 %v8097, %v5573
        %v8099 = vmax.f32 %v8098, %v5579
        %v8100 = vmax.f32 %v8099, %v5583
        %v8101 = vmax.f32 %v8100, %v5589
        %v8102 = vmax.f32 %v8101, %v5593
        %v8103 = vmax.f32 %v8102, %v5599
        %v8104 = vmax.f32 %v8103, %v5603
        %v8105 = vmax.f32 %v8104, %v5609
        %v8106 = vmax.f32 %v8105, %v5613
        %v8107 = vmax.f32 %v8106, %v5619
        %v8108 = vmax.f32 %v8107, %v5623
        %v8109 = vmax.f32 %v8108, %v5629
        %v8110 = vmax.f32 %v8109, %v5633
        %v8111 = vmax.f32 %v8110, %v5639
        %v8112 = vmax.f32 %v8111, %v5643
        %v8113 = vmax.f32 %v8112, %v5649
        %v8114 = vmax.f32 %v8113, %v5653
        %v8115 = vmax.f32 %v8114, %v5659
        %v8116 = vmax.f32 %v8115, %v5663
        %v8117 = vmax.f32 %v8116, %v5669
        %v8118 = vmax.f32 %v8117, %v5673
        %v8119 = vmax.f32 %v8118, %v5679
        %v8120 = vmax.f32 %v8119, %v5683
        %v8121 = vmax.f32 %v8120, %v5689
        %v8122 = vmax.f32 %v8121, %v5693
        %v8123 = vmax.f32 %v8122, %v5699
        %v8124 = vmax.f32 %v8123, %v5703
        %v8125 = vmax.f32 %v8124, %v5709
        %v8126 = vmax.f32 %v8125, %v5713
        %v8127 = vmax.f32 %v8126, %v5719
        %v8128 = vmax.f32 %v8127, %v5723
        %v8129 = vmax.f32 %v8128, %v5729
        %v8130 = vmax.f32 %v8129, %v5733
        %v8131 = vmax.f32 %v8130, %v5739
        %v8132 = vmax.f32 %v8131, %v5743
        %v8133 = vmax.f32 %v8132, %v5749
        %v8134 = vmax.f32 %v8133, %v5753
        %v8135 = vmax.f32 %v8134, %v5759
        %v8136 = vmax.f32 %v8135, %v5763
        %v8137 = vmax.f32 %v8136, %v5769
        %v8138 = vmax.f32 %v8137, %v5773
        %v8139 = vmax.f32 %v8138, %v5779
        %v8140 = vmax.f32 %v8139, %v5783
        %v8141 = vmax.f32 %v8140, %v5789
        %v8142 = vmax.f32 %v8141, %v5793
        %v8143 = vmax.f32 %v8142, %v5799
        %v8144 = vmax.f32 %v8143, %v5803
        %v8145 = vmax.f32 %v8144, %v5809
        %v8146 = vmax.f32 %v8145, %v5813
        %v8147 = vmax.f32 %v8146, %v5819
        %v8148 = vmax.f32 %v8147, %v5823
        %v8149 = vmax.f32 %v8148, %v5829
        %v8150 = vmax.f32 %v8149, %v5833
        %v8151 = vmax.f32 %v8150, %v5839
        %v8152 = vmax.f32 %v8151, %v5843
        %v8153 = vmax.f32 %v8152, %v5849
        %v8154 = vmax.f32 %v8153, %v5853
        %v8155 = vmax.f32 %v8154, %v5859
        %v8156 = vmax.f32 %v8155, %v5863
        %v8157 = vmax.f32 %v8156, %v5869
        %v8158 = vmax.f32 %v8157, %v5873
        %v8159 = vmax.f32 %v8158, %v5879
        %v8160 = vmax.f32 %v8159, %v5883
        %v8161 = vmax.f32 %v8160, %v5889
        %v8162 = vmax.f32 %v8161, %v5893
        %v8163 = vmax.f32 %v8162, %v5899
        %v8164 = vmax.f32 %v8163, %v5903
        %v8165 = vmax.f32 %v8164, %v5909
        %v8166 = vmax.f32 %v8165, %v5913
        %v8167 = vmax.f32 %v8166, %v5919
        %v8168 = vmax.f32 %v8167, %v5923
        %v8169 = vmax.f32 %v8168, %v5929
        %v8170 = vmax.f32 %v8169, %v5933
        %v8171 = vmax.f32 %v8170, %v5939
        %v8172 = vmax.f32 %v8171, %v5943
        %v8173 = vmax.f32 %v8172, %v5949
        %v8174 = vmax.f32 %v8173, %v5953
        %v8175 = vmax.f32 %v8174, %v5959
        %v8176 = vmax.f32 %v8175, %v5963
        %v8177 = vmax.f32 %v8176, %v5969
        %v8178 = vmax.f32 %v8177, %v5973
        %v8179 = vmax.f32 %v8178, %v5979
        %v8180 = vmax.f32 %v8179, %v5983
        %v8181 = vmax.f32 %v8180, %v5989
        %v8182 = vmax.f32 %v8181, %v5993
        %v8183 = vmax.f32 %v8182, %v5999
        %v8184 = vmax.f32 %v8183, %v6003
        %v8185 = vmax.f32 %v8184, %v6009
        %v8186 = vmax.f32 %v8185, %v6013
        %v8187 = vmax.f32 %v8186, %v6019
        %v8188 = vmax.f32 %v8187, %v6023
        %v8189 = vmax.f32 %v8188, %v6029
        %v8190 = vmax.f32 %v8189, %v6033
        %v8191 = vmax.f32 %v8190, %v6039
        %v8192 = vmax.f32 %v8191, %v6043
        %v8193 = vmax.f32 %v5411, %v5415
        %v8194 = vmax.f32 %v8193, %v5421
        %v8195 = vmax.f32 %v8194, %v5425
        %v8196 = vmax.f32 %v8195, %v5431
        %v8197 = vmax.f32 %v8196, %v5435
        %v8198 = vmax.f32 %v8197, %v5441
        %v8199 = vmax.f32 %v8198, %v5445
        %v8200 = vmax.f32 %v8199, %v5451
        %v8201 = vmax.f32 %v8200, %v5455
        %v8202 = vmax.f32 %v8201, %v5461
        %v8203 = vmax.f32 %v8202, %v5465
        %v8204 = vmax.f32 %v8203, %v5471
        %v8205 = vmax.f32 %v8204, %v5475
        %v8206 = vmax.f32 %v8205, %v5481
        %v8207 = vmax.f32 %v8206, %v5485
        %v8208 = vmax.f32 %v8207, %v5491
        %v8209 = vmax.f32 %v8208, %v5495
        %v8210 = vmax.f32 %v8209, %v5501
        %v8211 = vmax.f32 %v8210, %v5505
        %v8212 = vmax.f32 %v8211, %v5511
        %v8213 = vmax.f32 %v8212, %v5515
        %v8214 = vmax.f32 %v8213, %v5521
        %v8215 = vmax.f32 %v8214, %v5525
        %v8216 = vmax.f32 %v8215, %v5531
        %v8217 = vmax.f32 %v8216, %v5535
        %v8218 = vmax.f32 %v8217, %v5541
        %v8219 = vmax.f32 %v8218, %v5545
        %v8220 = vmax.f32 %v8219, %v5551
        %v8221 = vmax.f32 %v8220, %v5555
        %v8222 = vmax.f32 %v8221, %v5561
        %v8223 = vmax.f32 %v8222, %v5565
        %v8224 = vmax.f32 %v8223, %v5571
        %v8225 = vmax.f32 %v8224, %v5575
        %v8226 = vmax.f32 %v8225, %v5581
        %v8227 = vmax.f32 %v8226, %v5585
        %v8228 = vmax.f32 %v8227, %v5591
        %v8229 = vmax.f32 %v8228, %v5595
        %v8230 = vmax.f32 %v8229, %v5601
        %v8231 = vmax.f32 %v8230, %v5605
        %v8232 = vmax.f32 %v8231, %v5611
        %v8233 = vmax.f32 %v8232, %v5615
        %v8234 = vmax.f32 %v8233, %v5621
        %v8235 = vmax.f32 %v8234, %v5625
        %v8236 = vmax.f32 %v8235, %v5631
        %v8237 = vmax.f32 %v8236, %v5635
        %v8238 = vmax.f32 %v8237, %v5641
        %v8239 = vmax.f32 %v8238, %v5645
        %v8240 = vmax.f32 %v8239, %v5651
        %v8241 = vmax.f32 %v8240, %v5655
        %v8242 = vmax.f32 %v8241, %v5661
        %v8243 = vmax.f32 %v8242, %v5665
        %v8244 = vmax.f32 %v8243, %v5671
        %v8245 = vmax.f32 %v8244, %v5675
        %v8246 = vmax.f32 %v8245, %v5681
        %v8247 = vmax.f32 %v8246, %v5685
        %v8248 = vmax.f32 %v8247, %v5691
        %v8249 = vmax.f32 %v8248, %v5695
        %v8250 = vmax.f32 %v8249, %v5701
        %v8251 = vmax.f32 %v8250, %v5705
        %v8252 = vmax.f32 %v8251, %v5711
        %v8253 = vmax.f32 %v8252, %v5715
        %v8254 = vmax.f32 %v8253, %v5721
        %v8255 = vmax.f32 %v8254, %v5725
        %v8256 = vmax.f32 %v8255, %v5731
        %v8257 = vmax.f32 %v8256, %v5735
        %v8258 = vmax.f32 %v8257, %v5741
        %v8259 = vmax.f32 %v8258, %v5745
        %v8260 = vmax.f32 %v8259, %v5751
        %v8261 = vmax.f32 %v8260, %v5755
        %v8262 = vmax.f32 %v8261, %v5761
        %v8263 = vmax.f32 %v8262, %v5765
        %v8264 = vmax.f32 %v8263, %v5771
        %v8265 = vmax.f32 %v8264, %v5775
        %v8266 = vmax.f32 %v8265, %v5781
        %v8267 = vmax.f32 %v8266, %v5785
        %v8268 = vmax.f32 %v8267, %v5791
        %v8269 = vmax.f32 %v8268, %v5795
        %v8270 = vmax.f32 %v8269, %v5801
        %v8271 = vmax.f32 %v8270, %v5805
        %v8272 = vmax.f32 %v8271, %v5811
        %v8273 = vmax.f32 %v8272, %v5815
        %v8274 = vmax.f32 %v8273, %v5821
        %v8275 = vmax.f32 %v8274, %v5825
        %v8276 = vmax.f32 %v8275, %v5831
        %v8277 = vmax.f32 %v8276, %v5835
        %v8278 = vmax.f32 %v8277, %v5841
        %v8279 = vmax.f32 %v8278, %v5845
        %v8280 = vmax.f32 %v8279, %v5851
        %v8281 = vmax.f32 %v8280, %v5855
        %v8282 = vmax.f32 %v8281, %v5861
        %v8283 = vmax.f32 %v8282, %v5865
        %v8284 = vmax.f32 %v8283, %v5871
        %v8285 = vmax.f32 %v8284, %v5875
        %v8286 = vmax.f32 %v8285, %v5881
        %v8287 = vmax.f32 %v8286, %v5885
        %v8288 = vmax.f32 %v8287, %v5891
        %v8289 = vmax.f32 %v8288, %v5895
        %v8290 = vmax.f32 %v8289, %v5901
        %v8291 = vmax.f32 %v8290, %v5905
        %v8292 = vmax.f32 %v8291, %v5911
        %v8293 = vmax.f32 %v8292, %v5915
        %v8294 = vmax.f32 %v8293, %v5921
        %v8295 = vmax.f32 %v8294, %v5925
        %v8296 = vmax.f32 %v8295, %v5931
        %v8297 = vmax.f32 %v8296, %v5935
        %v8298 = vmax.f32 %v8297, %v5941
        %v8299 = vmax.f32 %v8298, %v5945
        %v8300 = vmax.f32 %v8299, %v5951
        %v8301 = vmax.f32 %v8300, %v5955
        %v8302 = vmax.f32 %v8301, %v5961
        %v8303 = vmax.f32 %v8302, %v5965
        %v8304 = vmax.f32 %v8303, %v5971
        %v8305 = vmax.f32 %v8304, %v5975
        %v8306 = vmax.f32 %v8305, %v5981
        %v8307 = vmax.f32 %v8306, %v5985
        %v8308 = vmax.f32 %v8307, %v5991
        %v8309 = vmax.f32 %v8308, %v5995
        %v8310 = vmax.f32 %v8309, %v6001
        %v8311 = vmax.f32 %v8310, %v6005
        %v8312 = vmax.f32 %v8311, %v6011
        %v8313 = vmax.f32 %v8312, %v6015
        %v8314 = vmax.f32 %v8313, %v6021
        %v8315 = vmax.f32 %v8314, %v6025
        %v8316 = vmax.f32 %v8315, %v6031
        %v8317 = vmax.f32 %v8316, %v6035
        %v8318 = vmax.f32 %v8317, %v6041
        %v8319 = vmax.f32 %v8318, %v6045
        %v8320 = vmax.f32 %v6082, %v6086
        %v8321 = vmax.f32 %v8320, %v6092
        %v8322 = vmax.f32 %v8321, %v6096
        %v8323 = vmax.f32 %v8322, %v6102
        %v8324 = vmax.f32 %v8323, %v6106
        %v8325 = vmax.f32 %v8324, %v6112
        %v8326 = vmax.f32 %v8325, %v6116
        %v8327 = vmax.f32 %v8326, %v6122
        %v8328 = vmax.f32 %v8327, %v6126
        %v8329 = vmax.f32 %v8328, %v6132
        %v8330 = vmax.f32 %v8329, %v6136
        %v8331 = vmax.f32 %v8330, %v6142
        %v8332 = vmax.f32 %v8331, %v6146
        %v8333 = vmax.f32 %v8332, %v6152
        %v8334 = vmax.f32 %v8333, %v6156
        %v8335 = vmax.f32 %v8334, %v6162
        %v8336 = vmax.f32 %v8335, %v6166
        %v8337 = vmax.f32 %v8336, %v6172
        %v8338 = vmax.f32 %v8337, %v6176
        %v8339 = vmax.f32 %v8338, %v6182
        %v8340 = vmax.f32 %v8339, %v6186
        %v8341 = vmax.f32 %v8340, %v6192
        %v8342 = vmax.f32 %v8341, %v6196
        %v8343 = vmax.f32 %v8342, %v6202
        %v8344 = vmax.f32 %v8343, %v6206
        %v8345 = vmax.f32 %v8344, %v6212
        %v8346 = vmax.f32 %v8345, %v6216
        %v8347 = vmax.f32 %v8346, %v6222
        %v8348 = vmax.f32 %v8347, %v6226
        %v8349 = vmax.f32 %v8348, %v6232
        %v8350 = vmax.f32 %v8349, %v6236
        %v8351 = vmax.f32 %v8350, %v6242
        %v8352 = vmax.f32 %v8351, %v6246
        %v8353 = vmax.f32 %v8352, %v6252
        %v8354 = vmax.f32 %v8353, %v6256
        %v8355 = vmax.f32 %v8354, %v6262
        %v8356 = vmax.f32 %v8355, %v6266
        %v8357 = vmax.f32 %v8356, %v6272
        %v8358 = vmax.f32 %v8357, %v6276
        %v8359 = vmax.f32 %v8358, %v6282
        %v8360 = vmax.f32 %v8359, %v6286
        %v8361 = vmax.f32 %v8360, %v6292
        %v8362 = vmax.f32 %v8361, %v6296
        %v8363 = vmax.f32 %v8362, %v6302
        %v8364 = vmax.f32 %v8363, %v6306
        %v8365 = vmax.f32 %v8364, %v6312
        %v8366 = vmax.f32 %v8365, %v6316
        %v8367 = vmax.f32 %v8366, %v6322
        %v8368 = vmax.f32 %v8367, %v6326
        %v8369 = vmax.f32 %v8368, %v6332
        %v8370 = vmax.f32 %v8369, %v6336
        %v8371 = vmax.f32 %v8370, %v6342
        %v8372 = vmax.f32 %v8371, %v6346
        %v8373 = vmax.f32 %v8372, %v6352
        %v8374 = vmax.f32 %v8373, %v6356
        %v8375 = vmax.f32 %v8374, %v6362
        %v8376 = vmax.f32 %v8375, %v6366
        %v8377 = vmax.f32 %v8376, %v6372
        %v8378 = vmax.f32 %v8377, %v6376
        %v8379 = vmax.f32 %v8378, %v6382
        %v8380 = vmax.f32 %v8379, %v6386
        %v8381 = vmax.f32 %v8380, %v6392
        %v8382 = vmax.f32 %v8381, %v6396
        %v8383 = vmax.f32 %v8382, %v6402
        %v8384 = vmax.f32 %v8383, %v6406
        %v8385 = vmax.f32 %v8384, %v6412
        %v8386 = vmax.f32 %v8385, %v6416
        %v8387 = vmax.f32 %v8386, %v6422
        %v8388 = vmax.f32 %v8387, %v6426
        %v8389 = vmax.f32 %v8388, %v6432
        %v8390 = vmax.f32 %v8389, %v6436
        %v8391 = vmax.f32 %v8390, %v6442
        %v8392 = vmax.f32 %v8391, %v6446
        %v8393 = vmax.f32 %v8392, %v6452
        %v8394 = vmax.f32 %v8393, %v6456
        %v8395 = vmax.f32 %v8394, %v6462
        %v8396 = vmax.f32 %v8395, %v6466
        %v8397 = vmax.f32 %v8396, %v6472
        %v8398 = vmax.f32 %v8397, %v6476
        %v8399 = vmax.f32 %v8398, %v6482
        %v8400 = vmax.f32 %v8399, %v6486
        %v8401 = vmax.f32 %v8400, %v6492
        %v8402 = vmax.f32 %v8401, %v6496
        %v8403 = vmax.f32 %v8402, %v6502
        %v8404 = vmax.f32 %v8403, %v6506
        %v8405 = vmax.f32 %v8404, %v6512
        %v8406 = vmax.f32 %v8405, %v6516
        %v8407 = vmax.f32 %v8406, %v6522
        %v8408 = vmax.f32 %v8407, %v6526
        %v8409 = vmax.f32 %v8408, %v6532
        %v8410 = vmax.f32 %v8409, %v6536
        %v8411 = vmax.f32 %v8410, %v6542
        %v8412 = vmax.f32 %v8411, %v6546
        %v8413 = vmax.f32 %v8412, %v6552
        %v8414 = vmax.f32 %v8413, %v6556
        %v8415 = vmax.f32 %v8414, %v6562
        %v8416 = vmax.f32 %v8415, %v6566
        %v8417 = vmax.f32 %v8416, %v6572
        %v8418 = vmax.f32 %v8417, %v6576
        %v8419 = vmax.f32 %v8418, %v6582
        %v8420 = vmax.f32 %v8419, %v6586
        %v8421 = vmax.f32 %v8420, %v6592
        %v8422 = vmax.f32 %v8421, %v6596
        %v8423 = vmax.f32 %v8422, %v6602
        %v8424 = vmax.f32 %v8423, %v6606
        %v8425 = vmax.f32 %v8424, %v6612
        %v8426 = vmax.f32 %v8425, %v6616
        %v8427 = vmax.f32 %v8426, %v6622
        %v8428 = vmax.f32 %v8427, %v6626
        %v8429 = vmax.f32 %v8428, %v6632
        %v8430 = vmax.f32 %v8429, %v6636
        %v8431 = vmax.f32 %v8430, %v6642
        %v8432 = vmax.f32 %v8431, %v6646
        %v8433 = vmax.f32 %v8432, %v6652
        %v8434 = vmax.f32 %v8433, %v6656
        %v8435 = vmax.f32 %v8434, %v6662
        %v8436 = vmax.f32 %v8435, %v6666
        %v8437 = vmax.f32 %v8436, %v6672
        %v8438 = vmax.f32 %v8437, %v6676
        %v8439 = vmax.f32 %v8438, %v6682
        %v8440 = vmax.f32 %v8439, %v6686
        %v8441 = vmax.f32 %v8440, %v6692
        %v8442 = vmax.f32 %v8441, %v6696
        %v8443 = vmax.f32 %v8442, %v6702
        %v8444 = vmax.f32 %v8443, %v6706
        %v8445 = vmax.f32 %v8444, %v6712
        %v8446 = vmax.f32 %v8445, %v6716
        %v8447 = vmax.f32 %v6084, %v6088
        %v8448 = vmax.f32 %v8447, %v6094
        %v8449 = vmax.f32 %v8448, %v6098
        %v8450 = vmax.f32 %v8449, %v6104
        %v8451 = vmax.f32 %v8450, %v6108
        %v8452 = vmax.f32 %v8451, %v6114
        %v8453 = vmax.f32 %v8452, %v6118
        %v8454 = vmax.f32 %v8453, %v6124
        %v8455 = vmax.f32 %v8454, %v6128
        %v8456 = vmax.f32 %v8455, %v6134
        %v8457 = vmax.f32 %v8456, %v6138
        %v8458 = vmax.f32 %v8457, %v6144
        %v8459 = vmax.f32 %v8458, %v6148
        %v8460 = vmax.f32 %v8459, %v6154
        %v8461 = vmax.f32 %v8460, %v6158
        %v8462 = vmax.f32 %v8461, %v6164
        %v8463 = vmax.f32 %v8462, %v6168
        %v8464 = vmax.f32 %v8463, %v6174
        %v8465 = vmax.f32 %v8464, %v6178
        %v8466 = vmax.f32 %v8465, %v6184
        %v8467 = vmax.f32 %v8466, %v6188
        %v8468 = vmax.f32 %v8467, %v6194
        %v8469 = vmax.f32 %v8468, %v6198
        %v8470 = vmax.f32 %v8469, %v6204
        %v8471 = vmax.f32 %v8470, %v6208
        %v8472 = vmax.f32 %v8471, %v6214
        %v8473 = vmax.f32 %v8472, %v6218
        %v8474 = vmax.f32 %v8473, %v6224
        %v8475 = vmax.f32 %v8474, %v6228
        %v8476 = vmax.f32 %v8475, %v6234
        %v8477 = vmax.f32 %v8476, %v6238
        %v8478 = vmax.f32 %v8477, %v6244
        %v8479 = vmax.f32 %v8478, %v6248
        %v8480 = vmax.f32 %v8479, %v6254
        %v8481 = vmax.f32 %v8480, %v6258
        %v8482 = vmax.f32 %v8481, %v6264
        %v8483 = vmax.f32 %v8482, %v6268
        %v8484 = vmax.f32 %v8483, %v6274
        %v8485 = vmax.f32 %v8484, %v6278
        %v8486 = vmax.f32 %v8485, %v6284
        %v8487 = vmax.f32 %v8486, %v6288
        %v8488 = vmax.f32 %v8487, %v6294
        %v8489 = vmax.f32 %v8488, %v6298
        %v8490 = vmax.f32 %v8489, %v6304
        %v8491 = vmax.f32 %v8490, %v6308
        %v8492 = vmax.f32 %v8491, %v6314
        %v8493 = vmax.f32 %v8492, %v6318
        %v8494 = vmax.f32 %v8493, %v6324
        %v8495 = vmax.f32 %v8494, %v6328
        %v8496 = vmax.f32 %v8495, %v6334
        %v8497 = vmax.f32 %v8496, %v6338
        %v8498 = vmax.f32 %v8497, %v6344
        %v8499 = vmax.f32 %v8498, %v6348
        %v8500 = vmax.f32 %v8499, %v6354
        %v8501 = vmax.f32 %v8500, %v6358
        %v8502 = vmax.f32 %v8501, %v6364
        %v8503 = vmax.f32 %v8502, %v6368
        %v8504 = vmax.f32 %v8503, %v6374
        %v8505 = vmax.f32 %v8504, %v6378
        %v8506 = vmax.f32 %v8505, %v6384
        %v8507 = vmax.f32 %v8506, %v6388
        %v8508 = vmax.f32 %v8507, %v6394
        %v8509 = vmax.f32 %v8508, %v6398
        %v8510 = vmax.f32 %v8509, %v6404
        %v8511 = vmax.f32 %v8510, %v6408
        %v8512 = vmax.f32 %v8511, %v6414
        %v8513 = vmax.f32 %v8512, %v6418
        %v8514 = vmax.f32 %v8513, %v6424
        %v8515 = vmax.f32 %v8514, %v6428
        %v8516 = vmax.f32 %v8515, %v6434
        %v8517 = vmax.f32 %v8516, %v6438
        %v8518 = vmax.f32 %v8517, %v6444
        %v8519 = vmax.f32 %v8518, %v6448
        %v8520 = vmax.f32 %v8519, %v6454
        %v8521 = vmax.f32 %v8520, %v6458
        %v8522 = vmax.f32 %v8521, %v6464
        %v8523 = vmax.f32 %v8522, %v6468
        %v8524 = vmax.f32 %v8523, %v6474
        %v8525 = vmax.f32 %v8524, %v6478
        %v8526 = vmax.f32 %v8525, %v6484
        %v8527 = vmax.f32 %v8526, %v6488
        %v8528 = vmax.f32 %v8527, %v6494
        %v8529 = vmax.f32 %v8528, %v6498
        %v8530 = vmax.f32 %v8529, %v6504
        %v8531 = vmax.f32 %v8530, %v6508
        %v8532 = vmax.f32 %v8531, %v6514
        %v8533 = vmax.f32 %v8532, %v6518
        %v8534 = vmax.f32 %v8533, %v6524
        %v8535 = vmax.f32 %v8534, %v6528
        %v8536 = vmax.f32 %v8535, %v6534
        %v8537 = vmax.f32 %v8536, %v6538
        %v8538 = vmax.f32 %v8537, %v6544
        %v8539 = vmax.f32 %v8538, %v6548
        %v8540 = vmax.f32 %v8539, %v6554
        %v8541 = vmax.f32 %v8540, %v6558
        %v8542 = vmax.f32 %v8541, %v6564
        %v8543 = vmax.f32 %v8542, %v6568
        %v8544 = vmax.f32 %v8543, %v6574
        %v8545 = vmax.f32 %v8544, %v6578
        %v8546 = vmax.f32 %v8545, %v6584
        %v8547 = vmax.f32 %v8546, %v6588
        %v8548 = vmax.f32 %v8547, %v6594
        %v8549 = vmax.f32 %v8548, %v6598
        %v8550 = vmax.f32 %v8549, %v6604
        %v8551 = vmax.f32 %v8550, %v6608
        %v8552 = vmax.f32 %v8551, %v6614
        %v8553 = vmax.f32 %v8552, %v6618
        %v8554 = vmax.f32 %v8553, %v6624
        %v8555 = vmax.f32 %v8554, %v6628
        %v8556 = vmax.f32 %v8555, %v6634
        %v8557 = vmax.f32 %v8556, %v6638
        %v8558 = vmax.f32 %v8557, %v6644
        %v8559 = vmax.f32 %v8558, %v6648
        %v8560 = vmax.f32 %v8559, %v6654
        %v8561 = vmax.f32 %v8560, %v6658
        %v8562 = vmax.f32 %v8561, %v6664
        %v8563 = vmax.f32 %v8562, %v6668
        %v8564 = vmax.f32 %v8563, %v6674
        %v8565 = vmax.f32 %v8564, %v6678
        %v8566 = vmax.f32 %v8565, %v6684
        %v8567 = vmax.f32 %v8566, %v6688
        %v8568 = vmax.f32 %v8567, %v6694
        %v8569 = vmax.f32 %v8568, %v6698
        %v8570 = vmax.f32 %v8569, %v6704
        %v8571 = vmax.f32 %v8570, %v6708
        %v8572 = vmax.f32 %v8571, %v6714
        %v8573 = vmax.f32 %v8572, %v6718
        %v8574 = vmax.f32 %v6755, %v6759
        %v8575 = vmax.f32 %v8574, %v6765
        %v8576 = vmax.f32 %v8575, %v6769
        %v8577 = vmax.f32 %v8576, %v6775
        %v8578 = vmax.f32 %v8577, %v6779
        %v8579 = vmax.f32 %v8578, %v6785
        %v8580 = vmax.f32 %v8579, %v6789
        %v8581 = vmax.f32 %v8580, %v6795
        %v8582 = vmax.f32 %v8581, %v6799
        %v8583 = vmax.f32 %v8582, %v6805
        %v8584 = vmax.f32 %v8583, %v6809
        %v8585 = vmax.f32 %v8584, %v6815
        %v8586 = vmax.f32 %v8585, %v6819
        %v8587 = vmax.f32 %v8586, %v6825
        %v8588 = vmax.f32 %v8587, %v6829
        %v8589 = vmax.f32 %v8588, %v6835
        %v8590 = vmax.f32 %v8589, %v6839
        %v8591 = vmax.f32 %v8590, %v6845
        %v8592 = vmax.f32 %v8591, %v6849
        %v8593 = vmax.f32 %v8592, %v6855
        %v8594 = vmax.f32 %v8593, %v6859
        %v8595 = vmax.f32 %v8594, %v6865
        %v8596 = vmax.f32 %v8595, %v6869
        %v8597 = vmax.f32 %v8596, %v6875
        %v8598 = vmax.f32 %v8597, %v6879
        %v8599 = vmax.f32 %v8598, %v6885
        %v8600 = vmax.f32 %v8599, %v6889
        %v8601 = vmax.f32 %v8600, %v6895
        %v8602 = vmax.f32 %v8601, %v6899
        %v8603 = vmax.f32 %v8602, %v6905
        %v8604 = vmax.f32 %v8603, %v6909
        %v8605 = vmax.f32 %v8604, %v6915
        %v8606 = vmax.f32 %v8605, %v6919
        %v8607 = vmax.f32 %v8606, %v6925
        %v8608 = vmax.f32 %v8607, %v6929
        %v8609 = vmax.f32 %v8608, %v6935
        %v8610 = vmax.f32 %v8609, %v6939
        %v8611 = vmax.f32 %v8610, %v6945
        %v8612 = vmax.f32 %v8611, %v6949
        %v8613 = vmax.f32 %v8612, %v6955
        %v8614 = vmax.f32 %v8613, %v6959
        %v8615 = vmax.f32 %v8614, %v6965
        %v8616 = vmax.f32 %v8615, %v6969
        %v8617 = vmax.f32 %v8616, %v6975
        %v8618 = vmax.f32 %v8617, %v6979
        %v8619 = vmax.f32 %v8618, %v6985
        %v8620 = vmax.f32 %v8619, %v6989
        %v8621 = vmax.f32 %v8620, %v6995
        %v8622 = vmax.f32 %v8621, %v6999
        %v8623 = vmax.f32 %v8622, %v7005
        %v8624 = vmax.f32 %v8623, %v7009
        %v8625 = vmax.f32 %v8624, %v7015
        %v8626 = vmax.f32 %v8625, %v7019
        %v8627 = vmax.f32 %v8626, %v7025
        %v8628 = vmax.f32 %v8627, %v7029
        %v8629 = vmax.f32 %v8628, %v7035
        %v8630 = vmax.f32 %v8629, %v7039
        %v8631 = vmax.f32 %v8630, %v7045
        %v8632 = vmax.f32 %v8631, %v7049
        %v8633 = vmax.f32 %v8632, %v7055
        %v8634 = vmax.f32 %v8633, %v7059
        %v8635 = vmax.f32 %v8634, %v7065
        %v8636 = vmax.f32 %v8635, %v7069
        %v8637 = vmax.f32 %v8636, %v7075
        %v8638 = vmax.f32 %v8637, %v7079
        %v8639 = vmax.f32 %v8638, %v7085
        %v8640 = vmax.f32 %v8639, %v7089
        %v8641 = vmax.f32 %v8640, %v7095
        %v8642 = vmax.f32 %v8641, %v7099
        %v8643 = vmax.f32 %v8642, %v7105
        %v8644 = vmax.f32 %v8643, %v7109
        %v8645 = vmax.f32 %v8644, %v7115
        %v8646 = vmax.f32 %v8645, %v7119
        %v8647 = vmax.f32 %v8646, %v7125
        %v8648 = vmax.f32 %v8647, %v7129
        %v8649 = vmax.f32 %v8648, %v7135
        %v8650 = vmax.f32 %v8649, %v7139
        %v8651 = vmax.f32 %v8650, %v7145
        %v8652 = vmax.f32 %v8651, %v7149
        %v8653 = vmax.f32 %v8652, %v7155
        %v8654 = vmax.f32 %v8653, %v7159
        %v8655 = vmax.f32 %v8654, %v7165
        %v8656 = vmax.f32 %v8655, %v7169
        %v8657 = vmax.f32 %v8656, %v7175
        %v8658 = vmax.f32 %v8657, %v7179
        %v8659 = vmax.f32 %v8658, %v7185
        %v8660 = vmax.f32 %v8659, %v7189
        %v8661 = vmax.f32 %v8660, %v7195
        %v8662 = vmax.f32 %v8661, %v7199
        %v8663 = vmax.f32 %v8662, %v7205
        %v8664 = vmax.f32 %v8663, %v7209
        %v8665 = vmax.f32 %v8664, %v7215
        %v8666 = vmax.f32 %v8665, %v7219
        %v8667 = vmax.f32 %v8666, %v7225
        %v8668 = vmax.f32 %v8667, %v7229
        %v8669 = vmax.f32 %v8668, %v7235
        %v8670 = vmax.f32 %v8669, %v7239
        %v8671 = vmax.f32 %v8670, %v7245
        %v8672 = vmax.f32 %v8671, %v7249
        %v8673 = vmax.f32 %v8672, %v7255
        %v8674 = vmax.f32 %v8673, %v7259
        %v8675 = vmax.f32 %v8674, %v7265
        %v8676 = vmax.f32 %v8675, %v7269
        %v8677 = vmax.f32 %v8676, %v7275
        %v8678 = vmax.f32 %v8677, %v7279
        %v8679 = vmax.f32 %v8678, %v7285
        %v8680 = vmax.f32 %v8679, %v7289
        %v8681 = vmax.f32 %v8680, %v7295
        %v8682 = vmax.f32 %v8681, %v7299
        %v8683 = vmax.f32 %v8682, %v7305
        %v8684 = vmax.f32 %v8683, %v7309
        %v8685 = vmax.f32 %v8684, %v7315
        %v8686 = vmax.f32 %v8685, %v7319
        %v8687 = vmax.f32 %v8686, %v7325
        %v8688 = vmax.f32 %v8687, %v7329
        %v8689 = vmax.f32 %v8688, %v7335
        %v8690 = vmax.f32 %v8689, %v7339
        %v8691 = vmax.f32 %v8690, %v7345
        %v8692 = vmax.f32 %v8691, %v7349
        %v8693 = vmax.f32 %v8692, %v7355
        %v8694 = vmax.f32 %v8693, %v7359
        %v8695 = vmax.f32 %v8694, %v7365
        %v8696 = vmax.f32 %v8695, %v7369
        %v8697 = vmax.f32 %v8696, %v7375
        %v8698 = vmax.f32 %v8697, %v7379
        %v8699 = vmax.f32 %v8698, %v7385
        %v8700 = vmax.f32 %v8699, %v7389
        %v8701 = vmax.f32 %v6757, %v6761
        %v8702 = vmax.f32 %v8701, %v6767
        %v8703 = vmax.f32 %v8702, %v6771
        %v8704 = vmax.f32 %v8703, %v6777
        %v8705 = vmax.f32 %v8704, %v6781
        %v8706 = vmax.f32 %v8705, %v6787
        %v8707 = vmax.f32 %v8706, %v6791
        %v8708 = vmax.f32 %v8707, %v6797
        %v8709 = vmax.f32 %v8708, %v6801
        %v8710 = vmax.f32 %v8709, %v6807
        %v8711 = vmax.f32 %v8710, %v6811
        %v8712 = vmax.f32 %v8711, %v6817
        %v8713 = vmax.f32 %v8712, %v6821
        %v8714 = vmax.f32 %v8713, %v6827
        %v8715 = vmax.f32 %v8714, %v6831
        %v8716 = vmax.f32 %v8715, %v6837
        %v8717 = vmax.f32 %v8716, %v6841
        %v8718 = vmax.f32 %v8717, %v6847
        %v8719 = vmax.f32 %v8718, %v6851
        %v8720 = vmax.f32 %v8719, %v6857
        %v8721 = vmax.f32 %v8720, %v6861
        %v8722 = vmax.f32 %v8721, %v6867
        %v8723 = vmax.f32 %v8722, %v6871
        %v8724 = vmax.f32 %v8723, %v6877
        %v8725 = vmax.f32 %v8724, %v6881
        %v8726 = vmax.f32 %v8725, %v6887
        %v8727 = vmax.f32 %v8726, %v6891
        %v8728 = vmax.f32 %v8727, %v6897
        %v8729 = vmax.f32 %v8728, %v6901
        %v8730 = vmax.f32 %v8729, %v6907
        %v8731 = vmax.f32 %v8730, %v6911
        %v8732 = vmax.f32 %v8731, %v6917
        %v8733 = vmax.f32 %v8732, %v6921
        %v8734 = vmax.f32 %v8733, %v6927
        %v8735 = vmax.f32 %v8734, %v6931
        %v8736 = vmax.f32 %v8735, %v6937
        %v8737 = vmax.f32 %v8736, %v6941
        %v8738 = vmax.f32 %v8737, %v6947
        %v8739 = vmax.f32 %v8738, %v6951
        %v8740 = vmax.f32 %v8739, %v6957
        %v8741 = vmax.f32 %v8740, %v6961
        %v8742 = vmax.f32 %v8741, %v6967
        %v8743 = vmax.f32 %v8742, %v6971
        %v8744 = vmax.f32 %v8743, %v6977
        %v8745 = vmax.f32 %v8744, %v6981
        %v8746 = vmax.f32 %v8745, %v6987
        %v8747 = vmax.f32 %v8746, %v6991
        %v8748 = vmax.f32 %v8747, %v6997
        %v8749 = vmax.f32 %v8748, %v7001
        %v8750 = vmax.f32 %v8749, %v7007
        %v8751 = vmax.f32 %v8750, %v7011
        %v8752 = vmax.f32 %v8751, %v7017
        %v8753 = vmax.f32 %v8752, %v7021
        %v8754 = vmax.f32 %v8753, %v7027
        %v8755 = vmax.f32 %v8754, %v7031
        %v8756 = vmax.f32 %v8755, %v7037
        %v8757 = vmax.f32 %v8756, %v7041
        %v8758 = vmax.f32 %v8757, %v7047
        %v8759 = vmax.f32 %v8758, %v7051
        %v8760 = vmax.f32 %v8759, %v7057
        %v8761 = vmax.f32 %v8760, %v7061
        %v8762 = vmax.f32 %v8761, %v7067
        %v8763 = vmax.f32 %v8762, %v7071
        %v8764 = vmax.f32 %v8763, %v7077
        %v8765 = vmax.f32 %v8764, %v7081
        %v8766 = vmax.f32 %v8765, %v7087
        %v8767 = vmax.f32 %v8766, %v7091
        %v8768 = vmax.f32 %v8767, %v7097
        %v8769 = vmax.f32 %v8768, %v7101
        %v8770 = vmax.f32 %v8769, %v7107
        %v8771 = vmax.f32 %v8770, %v7111
        %v8772 = vmax.f32 %v8771, %v7117
        %v8773 = vmax.f32 %v8772, %v7121
        %v8774 = vmax.f32 %v8773, %v7127
        %v8775 = vmax.f32 %v8774, %v7131
        %v8776 = vmax.f32 %v8775, %v7137
        %v8777 = vmax.f32 %v8776, %v7141
        %v8778 = vmax.f32 %v8777, %v7147
        %v8779 = vmax.f32 %v8778, %v7151
        %v8780 = vmax.f32 %v8779, %v7157
        %v8781 = vmax.f32 %v8780, %v7161
        %v8782 = vmax.f32 %v8781, %v7167
        %v8783 = vmax.f32 %v8782, %v7171
        %v8784 = vmax.f32 %v8783, %v7177
        %v8785 = vmax.f32 %v8784, %v7181
        %v8786 = vmax.f32 %v8785, %v7187
        %v8787 = vmax.f32 %v8786, %v7191
        %v8788 = vmax.f32 %v8787, %v7197
        %v8789 = vmax.f32 %v8788, %v7201
        %v8790 = vmax.f32 %v8789, %v7207
        %v8791 = vmax.f32 %v8790, %v7211
        %v8792 = vmax.f32 %v8791, %v7217
        %v8793 = vmax.f32 %v8792, %v7221
        %v8794 = vmax.f32 %v8793, %v7227
        %v8795 = vmax.f32 %v8794, %v7231
        %v8796 = vmax.f32 %v8795, %v7237
        %v8797 = vmax.f32 %v8796, %v7241
        %v8798 = vmax.f32 %v8797, %v7247
        %v8799 = vmax.f32 %v8798, %v7251
        %v8800 = vmax.f32 %v8799, %v7257
        %v8801 = vmax.f32 %v8800, %v7261
        %v8802 = vmax.f32 %v8801, %v7267
        %v8803 = vmax.f32 %v8802, %v7271
        %v8804 = vmax.f32 %v8803, %v7277
        %v8805 = vmax.f32 %v8804, %v7281
        %v8806 = vmax.f32 %v8805, %v7287
        %v8807 = vmax.f32 %v8806, %v7291
        %v8808 = vmax.f32 %v8807, %v7297
        %v8809 = vmax.f32 %v8808, %v7301
        %v8810 = vmax.f32 %v8809, %v7307
        %v8811 = vmax.f32 %v8810, %v7311
        %v8812 = vmax.f32 %v8811, %v7317
        %v8813 = vmax.f32 %v8812, %v7321
        %v8814 = vmax.f32 %v8813, %v7327
        %v8815 = vmax.f32 %v8814, %v7331
        %v8816 = vmax.f32 %v8815, %v7337
        %v8817 = vmax.f32 %v8816, %v7341
        %v8818 = vmax.f32 %v8817, %v7347
        %v8819 = vmax.f32 %v8818, %v7351
        %v8820 = vmax.f32 %v8819, %v7357
        %v8821 = vmax.f32 %v8820, %v7361
        %v8822 = vmax.f32 %v8821, %v7367
        %v8823 = vmax.f32 %v8822, %v7371
        %v8824 = vmax.f32 %v8823, %v7377
        %v8825 = vmax.f32 %v8824, %v7381
        %v8826 = vmax.f32 %v8825, %v7387
        %v8827 = vmax.f32 %v8826, %v7391
        %v8828 = vmax.f32 %v7428, %v7432
        %v8829 = vmax.f32 %v8828, %v7438
        %v8830 = vmax.f32 %v8829, %v7442
        %v8831 = vmax.f32 %v8830, %v7448
        %v8832 = vmax.f32 %v8831, %v7452
        %v8833 = vmax.f32 %v8832, %v7458
        %v8834 = vmax.f32 %v8833, %v7462
        %v8835 = vmax.f32 %v8834, %v7468
        %v8836 = vmax.f32 %v8835, %v7472
        %v8837 = vmax.f32 %v8836, %v7478
        %v8838 = vmax.f32 %v8837, %v7482
        %v8839 = vmax.f32 %v8838, %v7488
        %v8840 = vmax.f32 %v8839, %v7492
        %v8841 = vmax.f32 %v8840, %v7498
        %v8842 = vmax.f32 %v8841, %v7502
        %v8843 = vmax.f32 %v8842, %v7508
        %v8844 = vmax.f32 %v8843, %v7512
        %v8845 = vmax.f32 %v8844, %v7518
        %v8846 = vmax.f32 %v8845, %v7522
        %v8847 = vmax.f32 %v8846, %v7528
        %v8848 = vmax.f32 %v8847, %v7532
        %v8849 = vmax.f32 %v8848, %v7538
        %v8850 = vmax.f32 %v8849, %v7542
        %v8851 = vmax.f32 %v8850, %v7548
        %v8852 = vmax.f32 %v8851, %v7552
        %v8853 = vmax.f32 %v8852, %v7558
        %v8854 = vmax.f32 %v8853, %v7562
        %v8855 = vmax.f32 %v8854, %v7568
        %v8856 = vmax.f32 %v8855, %v7572
        %v8857 = vmax.f32 %v8856, %v7578
        %v8858 = vmax.f32 %v8857, %v7582
        %v8859 = vmax.f32 %v8858, %v7588
        %v8860 = vmax.f32 %v8859, %v7592
        %v8861 = vmax.f32 %v8860, %v7598
        %v8862 = vmax.f32 %v8861, %v7602
        %v8863 = vmax.f32 %v8862, %v7608
        %v8864 = vmax.f32 %v8863, %v7612
        %v8865 = vmax.f32 %v8864, %v7618
        %v8866 = vmax.f32 %v8865, %v7622
        %v8867 = vmax.f32 %v8866, %v7628
        %v8868 = vmax.f32 %v8867, %v7632
        %v8869 = vmax.f32 %v8868, %v7638
        %v8870 = vmax.f32 %v8869, %v7642
        %v8871 = vmax.f32 %v8870, %v7648
        %v8872 = vmax.f32 %v8871, %v7652
        %v8873 = vmax.f32 %v8872, %v7658
        %v8874 = vmax.f32 %v8873, %v7662
        %v8875 = vmax.f32 %v8874, %v7668
        %v8876 = vmax.f32 %v8875, %v7672
        %v8877 = vmax.f32 %v8876, %v7678
        %v8878 = vmax.f32 %v8877, %v7682
        %v8879 = vmax.f32 %v8878, %v7688
        %v8880 = vmax.f32 %v8879, %v7692
        %v8881 = vmax.f32 %v8880, %v7698
        %v8882 = vmax.f32 %v8881, %v7702
        %v8883 = vmax.f32 %v8882, %v7708
        %v8884 = vmax.f32 %v8883, %v7712
        %v8885 = vmax.f32 %v8884, %v7718
        %v8886 = vmax.f32 %v8885, %v7722
        %v8887 = vmax.f32 %v8886, %v7728
        %v8888 = vmax.f32 %v8887, %v7732
        %v8889 = vmax.f32 %v8888, %v7738
        %v8890 = vmax.f32 %v8889, %v7742
        %v8891 = vmax.f32 %v8890, %v7748
        %v8892 = vmax.f32 %v8891, %v7752
        %v8893 = vmax.f32 %v8892, %v7758
        %v8894 = vmax.f32 %v8893, %v7762
        %v8895 = vmax.f32 %v8894, %v7768
        %v8896 = vmax.f32 %v8895, %v7772
        %v8897 = vmax.f32 %v8896, %v7778
        %v8898 = vmax.f32 %v8897, %v7782
        %v8899 = vmax.f32 %v8898, %v7788
        %v8900 = vmax.f32 %v8899, %v7792
        %v8901 = vmax.f32 %v8900, %v7798
        %v8902 = vmax.f32 %v8901, %v7802
        %v8903 = vmax.f32 %v8902, %v7808
        %v8904 = vmax.f32 %v8903, %v7812
        %v8905 = vmax.f32 %v8904, %v7818
        %v8906 = vmax.f32 %v8905, %v7822
        %v8907 = vmax.f32 %v8906, %v7828
        %v8908 = vmax.f32 %v8907, %v7832
        %v8909 = vmax.f32 %v8908, %v7838
        %v8910 = vmax.f32 %v8909, %v7842
        %v8911 = vmax.f32 %v8910, %v7848
        %v8912 = vmax.f32 %v8911, %v7852
        %v8913 = vmax.f32 %v8912, %v7858
        %v8914 = vmax.f32 %v8913, %v7862
        %v8915 = vmax.f32 %v8914, %v7868
        %v8916 = vmax.f32 %v8915, %v7872
        %v8917 = vmax.f32 %v8916, %v7878
        %v8918 = vmax.f32 %v8917, %v7882
        %v8919 = vmax.f32 %v8918, %v7888
        %v8920 = vmax.f32 %v8919, %v7892
        %v8921 = vmax.f32 %v8920, %v7898
        %v8922 = vmax.f32 %v8921, %v7902
        %v8923 = vmax.f32 %v8922, %v7908
        %v8924 = vmax.f32 %v8923, %v7912
        %v8925 = vmax.f32 %v8924, %v7918
        %v8926 = vmax.f32 %v8925, %v7922
        %v8927 = vmax.f32 %v8926, %v7928
        %v8928 = vmax.f32 %v8927, %v7932
        %v8929 = vmax.f32 %v8928, %v7938
        %v8930 = vmax.f32 %v8929, %v7942
        %v8931 = vmax.f32 %v8930, %v7948
        %v8932 = vmax.f32 %v8931, %v7952
        %v8933 = vmax.f32 %v8932, %v7958
        %v8934 = vmax.f32 %v8933, %v7962
        %v8935 = vmax.f32 %v8934, %v7968
        %v8936 = vmax.f32 %v8935, %v7972
        %v8937 = vmax.f32 %v8936, %v7978
        %v8938 = vmax.f32 %v8937, %v7982
        %v8939 = vmax.f32 %v8938, %v7988
        %v8940 = vmax.f32 %v8939, %v7992
        %v8941 = vmax.f32 %v8940, %v7998
        %v8942 = vmax.f32 %v8941, %v8002
        %v8943 = vmax.f32 %v8942, %v8008
        %v8944 = vmax.f32 %v8943, %v8012
        %v8945 = vmax.f32 %v8944, %v8018
        %v8946 = vmax.f32 %v8945, %v8022
        %v8947 = vmax.f32 %v8946, %v8028
        %v8948 = vmax.f32 %v8947, %v8032
        %v8949 = vmax.f32 %v8948, %v8038
        %v8950 = vmax.f32 %v8949, %v8042
        %v8951 = vmax.f32 %v8950, %v8048
        %v8952 = vmax.f32 %v8951, %v8052
        %v8953 = vmax.f32 %v8952, %v8058
        %v8954 = vmax.f32 %v8953, %v8062
        %v8955 = vmax.f32 %v7430, %v7434
        %v8956 = vmax.f32 %v8955, %v7440
        %v8957 = vmax.f32 %v8956, %v7444
        %v8958 = vmax.f32 %v8957, %v7450
        %v8959 = vmax.f32 %v8958, %v7454
        %v8960 = vmax.f32 %v8959, %v7460
        %v8961 = vmax.f32 %v8960, %v7464
        %v8962 = vmax.f32 %v8961, %v7470
        %v8963 = vmax.f32 %v8962, %v7474
        %v8964 = vmax.f32 %v8963, %v7480
        %v8965 = vmax.f32 %v8964, %v7484
        %v8966 = vmax.f32 %v8965, %v7490
        %v8967 = vmax.f32 %v8966, %v7494
        %v8968 = vmax.f32 %v8967, %v7500
        %v8969 = vmax.f32 %v8968, %v7504
        %v8970 = vmax.f32 %v8969, %v7510
        %v8971 = vmax.f32 %v8970, %v7514
        %v8972 = vmax.f32 %v8971, %v7520
        %v8973 = vmax.f32 %v8972, %v7524
        %v8974 = vmax.f32 %v8973, %v7530
        %v8975 = vmax.f32 %v8974, %v7534
        %v8976 = vmax.f32 %v8975, %v7540
        %v8977 = vmax.f32 %v8976, %v7544
        %v8978 = vmax.f32 %v8977, %v7550
        %v8979 = vmax.f32 %v8978, %v7554
        %v8980 = vmax.f32 %v8979, %v7560
        %v8981 = vmax.f32 %v8980, %v7564
        %v8982 = vmax.f32 %v8981, %v7570
        %v8983 = vmax.f32 %v8982, %v7574
        %v8984 = vmax.f32 %v8983, %v7580
        %v8985 = vmax.f32 %v8984, %v7584
        %v8986 = vmax.f32 %v8985, %v7590
        %v8987 = vmax.f32 %v8986, %v7594
        %v8988 = vmax.f32 %v8987, %v7600
        %v8989 = vmax.f32 %v8988, %v7604
        %v8990 = vmax.f32 %v8989, %v7610
        %v8991 = vmax.f32 %v8990, %v7614
        %v8992 = vmax.f32 %v8991, %v7620
        %v8993 = vmax.f32 %v8992, %v7624
        %v8994 = vmax.f32 %v8993, %v7630
        %v8995 = vmax.f32 %v8994, %v7634
        %v8996 = vmax.f32 %v8995, %v7640
        %v8997 = vmax.f32 %v8996, %v7644
        %v8998 = vmax.f32 %v8997, %v7650
        %v8999 = vmax.f32 %v8998, %v7654
        %v9000 = vmax.f32 %v8999, %v7660
        %v9001 = vmax.f32 %v9000, %v7664
        %v9002 = vmax.f32 %v9001, %v7670
        %v9003 = vmax.f32 %v9002, %v7674
        %v9004 = vmax.f32 %v9003, %v7680
        %v9005 = vmax.f32 %v9004, %v7684
        %v9006 = vmax.f32 %v9005, %v7690
        %v9007 = vmax.f32 %v9006, %v7694
        %v9008 = vmax.f32 %v9007, %v7700
        %v9009 = vmax.f32 %v9008, %v7704
        %v9010 = vmax.f32 %v9009, %v7710
        %v9011 = vmax.f32 %v9010, %v7714
        %v9012 = vmax.f32 %v9011, %v7720
        %v9013 = vmax.f32 %v9012, %v7724
        %v9014 = vmax.f32 %v9013, %v7730
        %v9015 = vmax.f32 %v9014, %v7734
        %v9016 = vmax.f32 %v9015, %v7740
        %v9017 = vmax.f32 %v9016, %v7744
        %v9018 = vmax.f32 %v9017, %v7750
        %v9019 = vmax.f32 %v9018, %v7754
        %v9020 = vmax.f32 %v9019, %v7760
        %v9021 = vmax.f32 %v9020, %v7764
        %v9022 = vmax.f32 %v9021, %v7770
        %v9023 = vmax.f32 %v9022, %v7774
        %v9024 = vmax.f32 %v9023, %v7780
        %v9025 = vmax.f32 %v9024, %v7784
        %v9026 = vmax.f32 %v9025, %v7790
        %v9027 = vmax.f32 %v9026, %v7794
        %v9028 = vmax.f32 %v9027, %v7800
        %v9029 = vmax.f32 %v9028, %v7804
        %v9030 = vmax.f32 %v9029, %v7810
        %v9031 = vmax.f32 %v9030, %v7814
        %v9032 = vmax.f32 %v9031, %v7820
        %v9033 = vmax.f32 %v9032, %v7824
        %v9034 = vmax.f32 %v9033, %v7830
        %v9035 = vmax.f32 %v9034, %v7834
        %v9036 = vmax.f32 %v9035, %v7840
        %v9037 = vmax.f32 %v9036, %v7844
        %v9038 = vmax.f32 %v9037, %v7850
        %v9039 = vmax.f32 %v9038, %v7854
        %v9040 = vmax.f32 %v9039, %v7860
        %v9041 = vmax.f32 %v9040, %v7864
        %v9042 = vmax.f32 %v9041, %v7870
        %v9043 = vmax.f32 %v9042, %v7874
        %v9044 = vmax.f32 %v9043, %v7880
        %v9045 = vmax.f32 %v9044, %v7884
        %v9046 = vmax.f32 %v9045, %v7890
        %v9047 = vmax.f32 %v9046, %v7894
        %v9048 = vmax.f32 %v9047, %v7900
        %v9049 = vmax.f32 %v9048, %v7904
        %v9050 = vmax.f32 %v9049, %v7910
        %v9051 = vmax.f32 %v9050, %v7914
        %v9052 = vmax.f32 %v9051, %v7920
        %v9053 = vmax.f32 %v9052, %v7924
        %v9054 = vmax.f32 %v9053, %v7930
        %v9055 = vmax.f32 %v9054, %v7934
        %v9056 = vmax.f32 %v9055, %v7940
        %v9057 = vmax.f32 %v9056, %v7944
        %v9058 = vmax.f32 %v9057, %v7950
        %v9059 = vmax.f32 %v9058, %v7954
        %v9060 = vmax.f32 %v9059, %v7960
        %v9061 = vmax.f32 %v9060, %v7964
        %v9062 = vmax.f32 %v9061, %v7970
        %v9063 = vmax.f32 %v9062, %v7974
        %v9064 = vmax.f32 %v9063, %v7980
        %v9065 = vmax.f32 %v9064, %v7984
        %v9066 = vmax.f32 %v9065, %v7990
        %v9067 = vmax.f32 %v9066, %v7994
        %v9068 = vmax.f32 %v9067, %v8000
        %v9069 = vmax.f32 %v9068, %v8004
        %v9070 = vmax.f32 %v9069, %v8010
        %v9071 = vmax.f32 %v9070, %v8014
        %v9072 = vmax.f32 %v9071, %v8020
        %v9073 = vmax.f32 %v9072, %v8024
        %v9074 = vmax.f32 %v9073, %v8030
        %v9075 = vmax.f32 %v9074, %v8034
        %v9076 = vmax.f32 %v9075, %v8040
        %v9077 = vmax.f32 %v9076, %v8044
        %v9078 = vmax.f32 %v9077, %v8050
        %v9079 = vmax.f32 %v9078, %v8054
        %v9080 = vmax.f32 %v9079, %v8060
        %v9081 = vmax.f32 %v9080, %v8064
        %p9082 = scmp.eq.s32.totalorder %s38, 0
        // Predicated region
        $region125: #{pointnet_forward.1} parent=87 // pred_check
          %p9083 = pneg %p9082
        $region126: #{pointnet_forward.1} parent=87 // pred_check_branch
          %9085 = sbr.rel (%p9083) target = $region128
        $region127: #{pointnet_forward.1} parent=87 // pred_region
          %9086 = vst [vmem:[#allocation2] sm:$0xff] %v8192
          %9087 = vst [vmem:[#allocation2 + $0x8] sm:$0xff] %v8319
          %9088 = vst [vmem:[#allocation2 + $0x10] sm:$0xff] %v8446
          %9089 = vst [vmem:[#allocation2 + $0x18] sm:$0xff] %v8573
          %9090 = vst [vmem:[#allocation2 + $0x20] sm:$0xff] %v8700
          %9091 = vst [vmem:[#allocation2 + $0x28] sm:$0xff] %v8827
          %9092 = vst [vmem:[#allocation2 + $0x30] sm:$0xff] %v8954
          %9093 = vst [vmem:[#allocation2 + $0x38] sm:$0xff] %v9081
          %9094 = vst [vmem:[%s693] sm:$0xff] 0.0
        $region128: #{pointnet_forward.1} parent=87 // pred_fallthru
          _
        %p9095 = scmp.ne.s32.totalorder %s38, 0
        // Predicated region
        $region129: #{pointnet_forward.1} parent=87 // pred_check
          %p9096 = pneg %p9095
        $region130: #{pointnet_forward.1} parent=87 // pred_check_branch
          %9098 = sbr.rel (%p9096) target = $region132
        $region131: #{pointnet_forward.1} parent=87 // pred_region
          %v9099 = vld [vmem:[#allocation2] sm:$0xff]
          %v9100 = vld [vmem:[#allocation2 + $0x8] sm:$0xff]
          %v9101 = vld [vmem:[#allocation2 + $0x10] sm:$0xff]
          %v9102 = vld [vmem:[#allocation2 + $0x18] sm:$0xff]
          %v9103 = vld [vmem:[#allocation2 + $0x20] sm:$0xff]
          %v9104 = vld [vmem:[#allocation2 + $0x28] sm:$0xff]
          %v9105 = vld [vmem:[#allocation2 + $0x30] sm:$0xff]
          %v9106 = vld [vmem:[#allocation2 + $0x38] sm:$0xff]
          %v9107 = vmax.f32 %v9099, %v8192
          %v9108 = vmax.f32 %v9100, %v8319
          %v9109 = vmax.f32 %v9101, %v8446
          %v9110 = vmax.f32 %v9102, %v8573
          %v9111 = vmax.f32 %v9103, %v8700
          %v9112 = vmax.f32 %v9104, %v8827
          %v9113 = vmax.f32 %v9105, %v8954
          %v9114 = vmax.f32 %v9106, %v9081
          %9115 = vst [vmem:[#allocation2] sm:$0xff] %v9107
          %9116 = vst [vmem:[#allocation2 + $0x8] sm:$0xff] %v9108
          %9117 = vst [vmem:[#allocation2 + $0x10] sm:$0xff] %v9109
          %9118 = vst [vmem:[#allocation2 + $0x18] sm:$0xff] %v9110
          %9119 = vst [vmem:[#allocation2 + $0x20] sm:$0xff] %v9111
          %9120 = vst [vmem:[#allocation2 + $0x28] sm:$0xff] %v9112
          %9121 = vst [vmem:[#allocation2 + $0x30] sm:$0xff] %v9113
          %9122 = vst [vmem:[#allocation2 + $0x38] sm:$0xff] %v9114
        $region132: #{pointnet_forward.1} parent=87 // pred_fallthru
          _
        // Predicated region
        $region133: #{pointnet_forward.1} parent=87 // pred_check
          %p9123 = pneg %p9082
        $region134: #{pointnet_forward.1} parent=87 // pred_check_branch
          %9125 = sbr.rel (%p9123) target = $region136
        $region135: #{pointnet_forward.1} parent=87 // pred_region
          %v9126 = vld [vmem:[#allocation2] sm:$0xff]
          %v9127 = vld [vmem:[#allocation2 + $0x8] sm:$0xff]
          %v9128 = vld [vmem:[#allocation2 + $0x10] sm:$0xff]
          %v9129 = vld [vmem:[#allocation2 + $0x18] sm:$0xff]
          %v9130 = vld [vmem:[#allocation2 + $0x20] sm:$0xff]
          %v9131 = vld [vmem:[#allocation2 + $0x28] sm:$0xff]
          %v9132 = vld [vmem:[#allocation2 + $0x30] sm:$0xff]
          %v9133 = vld [vmem:[#allocation2 + $0x38] sm:$0xff]
          %v9134 = vrot.slane %v9126, 4
          %v9135 = vmax.f32 %v9126, %v9134
          %v9136 = vrot.slane %v9135, 2
          %v9137 = vmax.f32 %v9135, %v9136
          %v9138 = vrot.slane %v9137, 1
          %v9139 = vmax.f32 %v9137, %v9138
          %v9140 = vrot.slane %v9127, 4
          %v9141 = vmax.f32 %v9127, %v9140
          %v9142 = vrot.slane %v9141, 2
          %v9143 = vmax.f32 %v9141, %v9142
          %v9144 = vrot.slane %v9143, 1
          %v9145 = vmax.f32 %v9143, %v9144
          %v9146 = vrot.slane %v9128, 4
          %v9147 = vmax.f32 %v9128, %v9146
          %v9148 = vrot.slane %v9147, 2
          %v9149 = vmax.f32 %v9147, %v9148
          %v9150 = vrot.slane %v9149, 1
          %v9151 = vmax.f32 %v9149, %v9150
          %v9152 = vrot.slane %v9129, 4
          %v9153 = vmax.f32 %v9129, %v9152
          %v9154 = vrot.slane %v9153, 2
          %v9155 = vmax.f32 %v9153, %v9154
          %v9156 = vrot.slane %v9155, 1
          %v9157 = vmax.f32 %v9155, %v9156
          %v9158 = vrot.slane %v9130, 4
          %v9159 = vmax.f32 %v9130, %v9158
          %v9160 = vrot.slane %v9159, 2
          %v9161 = vmax.f32 %v9159, %v9160
          %v9162 = vrot.slane %v9161, 1
          %v9163 = vmax.f32 %v9161, %v9162
          %v9164 = vrot.slane %v9131, 4
          %v9165 = vmax.f32 %v9131, %v9164
          %v9166 = vrot.slane %v9165, 2
          %v9167 = vmax.f32 %v9165, %v9166
          %v9168 = vrot.slane %v9167, 1
          %v9169 = vmax.f32 %v9167, %v9168
          %v9170 = vrot.slane %v9132, 4
          %v9171 = vmax.f32 %v9132, %v9170
          %v9172 = vrot.slane %v9171, 2
          %v9173 = vmax.f32 %v9171, %v9172
          %v9174 = vrot.slane %v9173, 1
          %v9175 = vmax.f32 %v9173, %v9174
          %v9176 = vrot.slane %v9133, 4
          %v9177 = vmax.f32 %v9133, %v9176
          %v9178 = vrot.slane %v9177, 2
          %v9179 = vmax.f32 %v9177, %v9178
          %v9180 = vrot.slane %v9179, 1
          %v9181 = vmax.f32 %v9179, %v9180
          %v9182 = vld [vmem:[%s10] sm:$0xff]
          %v9184 = vlaneseq
          %v9185 = vshrl.u32 %v9184, 7
          %v9186 = vsub.s32 0, %v9185
          %v9187 = vrot.slane %v9182, %v9186
          %v9188 = vlaneseq
          %v9189 = vshrl.u32 %v9188, 7
          %v9190 = vsub.s32 1, %v9189
          %v9191 = vrot.slane %v9182, %v9190
          %v9192 = vlaneseq
          %v9193 = vshrl.u32 %v9192, 7
          %v9194 = vsub.s32 2, %v9193
          %v9195 = vrot.slane %v9182, %v9194
          %v9196 = vlaneseq
          %v9197 = vshrl.u32 %v9196, 7
          %v9198 = vsub.s32 3, %v9197
          %v9199 = vrot.slane %v9182, %v9198
          %v9200 = vlaneseq
          %v9201 = vshrl.u32 %v9200, 7
          %v9202 = vsub.s32 4, %v9201
          %v9203 = vrot.slane %v9182, %v9202
          %v9204 = vlaneseq
          %v9205 = vshrl.u32 %v9204, 7
          %v9206 = vsub.s32 5, %v9205
          %v9207 = vrot.slane %v9182, %v9206
          %v9208 = vlaneseq
          %v9209 = vshrl.u32 %v9208, 7
          %v9210 = vsub.s32 6, %v9209
          %v9211 = vrot.slane %v9182, %v9210
          %v9212 = vlaneseq
          %v9213 = vshrl.u32 %v9212, 7
          %v9214 = vsub.s32 7, %v9213
          %v9215 = vrot.slane %v9182, %v9214
          %v9224 = vadd.f32 %v9139, %v9187
          %v9225 = vadd.f32 %v9145, %v9191
          %v9226 = vadd.f32 %v9151, %v9195
          %v9227 = vadd.f32 %v9157, %v9199
          %v9228 = vadd.f32 %v9163, %v9203
          %v9229 = vadd.f32 %v9169, %v9207
          %v9230 = vadd.f32 %v9175, %v9211
          %v9231 = vadd.f32 %v9181, %v9215
          %v9232 = vmax.f32 %v9224, 0.0
          %v9233 = vmax.f32 %v9225, 0.0
          %v9234 = vmax.f32 %v9226, 0.0
          %v9235 = vmax.f32 %v9227, 0.0
          %v9236 = vmax.f32 %v9228, 0.0
          %v9237 = vmax.f32 %v9229, 0.0
          %v9238 = vmax.f32 %v9230, 0.0
          %v9239 = vmax.f32 %v9231, 0.0
          %v9240 = vlaneseq
          %v9241 = vshrl.u32 %v9240, 7
          %v9242 = vsub.s32 0, %v9241
          %v9243 = vrot.slane %v9232, %v9242
          %v9244 = vlaneseq
          %v9245 = vshrl.u32 %v9244, 7
          %v9246 = vsub.s32 0, %v9245
          %v9247 = vrot.slane %v9233, %v9246
          %v9248 = vlaneseq
          %v9249 = vshrl.u32 %v9248, 7
          %v9250 = vsub.s32 0, %v9249
          %v9251 = vrot.slane %v9234, %v9250
          %v9252 = vlaneseq
          %v9253 = vshrl.u32 %v9252, 7
          %v9254 = vsub.s32 0, %v9253
          %v9255 = vrot.slane %v9235, %v9254
          %v9256 = vlaneseq
          %v9257 = vshrl.u32 %v9256, 7
          %v9258 = vsub.s32 0, %v9257
          %v9259 = vrot.slane %v9236, %v9258
          %v9260 = vlaneseq
          %v9261 = vshrl.u32 %v9260, 7
          %v9262 = vsub.s32 0, %v9261
          %v9263 = vrot.slane %v9237, %v9262
          %v9264 = vlaneseq
          %v9265 = vshrl.u32 %v9264, 7
          %v9266 = vsub.s32 0, %v9265
          %v9267 = vrot.slane %v9238, %v9266
          %v9268 = vlaneseq
          %v9269 = vshrl.u32 %v9268, 7
          %v9270 = vsub.s32 0, %v9269
          %v9271 = vrot.slane %v9239, %v9270
          %v9272 = vpack.c.bf16 %v9243, %v9243
          %v9273 = vpack.c.bf16 %v9247, %v9247
          %v9274 = vpack.c.bf16 %v9251, %v9251
          %v9275 = vpack.c.bf16 %v9255, %v9255
          %v9276 = vpack.c.bf16 %v9259, %v9259
          %v9277 = vpack.c.bf16 %v9263, %v9263
          %v9278 = vpack.c.bf16 %v9267, %v9267
          %v9279 = vpack.c.bf16 %v9271, %v9271
          %v9280 = vld [vmem:[%s11] sm:$0xff]
          %v9281 = vld [vmem:[%s11 + $0x8] sm:$0xff]
          %v9282 = vld [vmem:[%s11 + $0x10] sm:$0xff]
          %v9283 = vld [vmem:[%s11 + $0x18] sm:$0xff]
          %v9284 = vld [vmem:[%s11 + $0x20] sm:$0xff]
          %v9285 = vld [vmem:[%s11 + $0x28] sm:$0xff]
          %v9286 = vld [vmem:[%s11 + $0x30] sm:$0xff]
          %v9287 = vld [vmem:[%s11 + $0x38] sm:$0xff]
          %v9288 = vld [vmem:[%s11 + $0x40] sm:$0xff]
          %v9289 = vld [vmem:[%s11 + $0x48] sm:$0xff]
          %v9290 = vld [vmem:[%s11 + $0x50] sm:$0xff]
          %v9291 = vld [vmem:[%s11 + $0x58] sm:$0xff]
          %v9292 = vld [vmem:[%s11 + $0x60] sm:$0xff]
          %v9293 = vld [vmem:[%s11 + $0x68] sm:$0xff]
          %v9294 = vld [vmem:[%s11 + $0x70] sm:$0xff]
          %v9295 = vld [vmem:[%s11 + $0x78] sm:$0xff]
          %v9296 = vld [vmem:[%s11 + $0x80] sm:$0xff]
          %v9297 = vld [vmem:[%s11 + $0x88] sm:$0xff]
          %v9298 = vld [vmem:[%s11 + $0x90] sm:$0xff]
          %v9299 = vld [vmem:[%s11 + $0x98] sm:$0xff]
          %v9300 = vld [vmem:[%s11 + $0xa0] sm:$0xff]
          %v9301 = vld [vmem:[%s11 + $0xa8] sm:$0xff]
          %v9302 = vld [vmem:[%s11 + $0xb0] sm:$0xff]
          %v9303 = vld [vmem:[%s11 + $0xb8] sm:$0xff]
          %v9304 = vld [vmem:[%s11 + $0xc0] sm:$0xff]
          %v9305 = vld [vmem:[%s11 + $0xc8] sm:$0xff]
          %v9306 = vld [vmem:[%s11 + $0xd0] sm:$0xff]
          %v9307 = vld [vmem:[%s11 + $0xd8] sm:$0xff]
          %v9308 = vld [vmem:[%s11 + $0xe0] sm:$0xff]
          %v9309 = vld [vmem:[%s11 + $0xe8] sm:$0xff]
          %v9310 = vld [vmem:[%s11 + $0xf0] sm:$0xff]
          %v9311 = vld [vmem:[%s11 + $0xf8] sm:$0xff]
          %v9312 = vld [vmem:[%s11 + $0x100] sm:$0xff]
          %v9313 = vld [vmem:[%s11 + $0x108] sm:$0xff]
          %v9314 = vld [vmem:[%s11 + $0x110] sm:$0xff]
          %v9315 = vld [vmem:[%s11 + $0x118] sm:$0xff]
          %v9316 = vld [vmem:[%s11 + $0x120] sm:$0xff]
          %v9317 = vld [vmem:[%s11 + $0x128] sm:$0xff]
          %v9318 = vld [vmem:[%s11 + $0x130] sm:$0xff]
          %v9319 = vld [vmem:[%s11 + $0x138] sm:$0xff]
          %v9320 = vld [vmem:[%s11 + $0x140] sm:$0xff]
          %v9321 = vld [vmem:[%s11 + $0x148] sm:$0xff]
          %v9322 = vld [vmem:[%s11 + $0x150] sm:$0xff]
          %v9323 = vld [vmem:[%s11 + $0x158] sm:$0xff]
          %v9324 = vld [vmem:[%s11 + $0x160] sm:$0xff]
          %v9325 = vld [vmem:[%s11 + $0x168] sm:$0xff]
          %v9326 = vld [vmem:[%s11 + $0x170] sm:$0xff]
          %v9327 = vld [vmem:[%s11 + $0x178] sm:$0xff]
          %v9328 = vld [vmem:[%s11 + $0x180] sm:$0xff]
          %v9329 = vld [vmem:[%s11 + $0x188] sm:$0xff]
          %v9330 = vld [vmem:[%s11 + $0x190] sm:$0xff]
          %v9331 = vld [vmem:[%s11 + $0x198] sm:$0xff]
          %v9332 = vld [vmem:[%s11 + $0x1a0] sm:$0xff]
          %v9333 = vld [vmem:[%s11 + $0x1a8] sm:$0xff]
          %v9334 = vld [vmem:[%s11 + $0x1b0] sm:$0xff]
          %v9335 = vld [vmem:[%s11 + $0x1b8] sm:$0xff]
          %v9336 = vld [vmem:[%s11 + $0x1c0] sm:$0xff]
          %v9337 = vld [vmem:[%s11 + $0x1c8] sm:$0xff]
          %v9338 = vld [vmem:[%s11 + $0x1d0] sm:$0xff]
          %v9339 = vld [vmem:[%s11 + $0x1d8] sm:$0xff]
          %v9340 = vld [vmem:[%s11 + $0x1e0] sm:$0xff]
          %v9341 = vld [vmem:[%s11 + $0x1e8] sm:$0xff]
          %v9342 = vld [vmem:[%s11 + $0x1f0] sm:$0xff]
          %v9343 = vld [vmem:[%s11 + $0x1f8] sm:$0xff]
          %v9344 = vld [vmem:[%s11 + $0x200] sm:$0xff]
          %v9345 = vld [vmem:[%s11 + $0x208] sm:$0xff]
          %v9346 = vld [vmem:[%s11 + $0x210] sm:$0xff]
          %v9347 = vld [vmem:[%s11 + $0x218] sm:$0xff]
          %v9348 = vld [vmem:[%s11 + $0x220] sm:$0xff]
          %v9349 = vld [vmem:[%s11 + $0x228] sm:$0xff]
          %v9350 = vld [vmem:[%s11 + $0x230] sm:$0xff]
          %v9351 = vld [vmem:[%s11 + $0x238] sm:$0xff]
          %v9352 = vld [vmem:[%s11 + $0x240] sm:$0xff]
          %v9353 = vld [vmem:[%s11 + $0x248] sm:$0xff]
          %v9354 = vld [vmem:[%s11 + $0x250] sm:$0xff]
          %v9355 = vld [vmem:[%s11 + $0x258] sm:$0xff]
          %v9356 = vld [vmem:[%s11 + $0x260] sm:$0xff]
          %v9357 = vld [vmem:[%s11 + $0x268] sm:$0xff]
          %v9358 = vld [vmem:[%s11 + $0x270] sm:$0xff]
          %v9359 = vld [vmem:[%s11 + $0x278] sm:$0xff]
          %v9360 = vld [vmem:[%s11 + $0x280] sm:$0xff]
          %v9361 = vld [vmem:[%s11 + $0x288] sm:$0xff]
          %v9362 = vld [vmem:[%s11 + $0x290] sm:$0xff]
          %v9363 = vld [vmem:[%s11 + $0x298] sm:$0xff]
          %v9364 = vld [vmem:[%s11 + $0x2a0] sm:$0xff]
          %v9365 = vld [vmem:[%s11 + $0x2a8] sm:$0xff]
          %v9366 = vld [vmem:[%s11 + $0x2b0] sm:$0xff]
          %v9367 = vld [vmem:[%s11 + $0x2b8] sm:$0xff]
          %v9368 = vld [vmem:[%s11 + $0x2c0] sm:$0xff]
          %v9369 = vld [vmem:[%s11 + $0x2c8] sm:$0xff]
          %v9370 = vld [vmem:[%s11 + $0x2d0] sm:$0xff]
          %v9371 = vld [vmem:[%s11 + $0x2d8] sm:$0xff]
          %v9372 = vld [vmem:[%s11 + $0x2e0] sm:$0xff]
          %v9373 = vld [vmem:[%s11 + $0x2e8] sm:$0xff]
          %v9374 = vld [vmem:[%s11 + $0x2f0] sm:$0xff]
          %v9375 = vld [vmem:[%s11 + $0x2f8] sm:$0xff]
          %v9376 = vld [vmem:[%s11 + $0x300] sm:$0xff]
          %v9377 = vld [vmem:[%s11 + $0x308] sm:$0xff]
          %v9378 = vld [vmem:[%s11 + $0x310] sm:$0xff]
          %v9379 = vld [vmem:[%s11 + $0x318] sm:$0xff]
          %v9380 = vld [vmem:[%s11 + $0x320] sm:$0xff]
          %v9381 = vld [vmem:[%s11 + $0x328] sm:$0xff]
          %v9382 = vld [vmem:[%s11 + $0x330] sm:$0xff]
          %v9383 = vld [vmem:[%s11 + $0x338] sm:$0xff]
          %v9384 = vld [vmem:[%s11 + $0x340] sm:$0xff]
          %v9385 = vld [vmem:[%s11 + $0x348] sm:$0xff]
          %v9386 = vld [vmem:[%s11 + $0x350] sm:$0xff]
          %v9387 = vld [vmem:[%s11 + $0x358] sm:$0xff]
          %v9388 = vld [vmem:[%s11 + $0x360] sm:$0xff]
          %v9389 = vld [vmem:[%s11 + $0x368] sm:$0xff]
          %v9390 = vld [vmem:[%s11 + $0x370] sm:$0xff]
          %v9391 = vld [vmem:[%s11 + $0x378] sm:$0xff]
          %v9392 = vld [vmem:[%s11 + $0x380] sm:$0xff]
          %v9393 = vld [vmem:[%s11 + $0x388] sm:$0xff]
          %v9394 = vld [vmem:[%s11 + $0x390] sm:$0xff]
          %v9395 = vld [vmem:[%s11 + $0x398] sm:$0xff]
          %v9396 = vld [vmem:[%s11 + $0x3a0] sm:$0xff]
          %v9397 = vld [vmem:[%s11 + $0x3a8] sm:$0xff]
          %v9398 = vld [vmem:[%s11 + $0x3b0] sm:$0xff]
          %v9399 = vld [vmem:[%s11 + $0x3b8] sm:$0xff]
          %v9400 = vld [vmem:[%s11 + $0x3c0] sm:$0xff]
          %v9401 = vld [vmem:[%s11 + $0x3c8] sm:$0xff]
          %v9402 = vld [vmem:[%s11 + $0x3d0] sm:$0xff]
          %v9403 = vld [vmem:[%s11 + $0x3d8] sm:$0xff]
          %v9404 = vld [vmem:[%s11 + $0x3e0] sm:$0xff]
          %v9405 = vld [vmem:[%s11 + $0x3e8] sm:$0xff]
          %v9406 = vld [vmem:[%s11 + $0x3f0] sm:$0xff]
          %v9407 = vld [vmem:[%s11 + $0x3f8] sm:$0xff]
          %v9408 = vld [vmem:[%s11 + $0x400] sm:$0xff]
          %v9409 = vld [vmem:[%s11 + $0x408] sm:$0xff]
          %v9410 = vld [vmem:[%s11 + $0x410] sm:$0xff]
          %v9411 = vld [vmem:[%s11 + $0x418] sm:$0xff]
          %v9412 = vld [vmem:[%s11 + $0x420] sm:$0xff]
          %v9413 = vld [vmem:[%s11 + $0x428] sm:$0xff]
          %v9414 = vld [vmem:[%s11 + $0x430] sm:$0xff]
          %v9415 = vld [vmem:[%s11 + $0x438] sm:$0xff]
          %v9416 = vld [vmem:[%s11 + $0x440] sm:$0xff]
          %v9417 = vld [vmem:[%s11 + $0x448] sm:$0xff]
          %v9418 = vld [vmem:[%s11 + $0x450] sm:$0xff]
          %v9419 = vld [vmem:[%s11 + $0x458] sm:$0xff]
          %v9420 = vld [vmem:[%s11 + $0x460] sm:$0xff]
          %v9421 = vld [vmem:[%s11 + $0x468] sm:$0xff]
          %v9422 = vld [vmem:[%s11 + $0x470] sm:$0xff]
          %v9423 = vld [vmem:[%s11 + $0x478] sm:$0xff]
          %v9424 = vld [vmem:[%s11 + $0x480] sm:$0xff]
          %v9425 = vld [vmem:[%s11 + $0x488] sm:$0xff]
          %v9426 = vld [vmem:[%s11 + $0x490] sm:$0xff]
          %v9427 = vld [vmem:[%s11 + $0x498] sm:$0xff]
          %v9428 = vld [vmem:[%s11 + $0x4a0] sm:$0xff]
          %v9429 = vld [vmem:[%s11 + $0x4a8] sm:$0xff]
          %v9430 = vld [vmem:[%s11 + $0x4b0] sm:$0xff]
          %v9431 = vld [vmem:[%s11 + $0x4b8] sm:$0xff]
          %v9432 = vld [vmem:[%s11 + $0x4c0] sm:$0xff]
          %v9433 = vld [vmem:[%s11 + $0x4c8] sm:$0xff]
          %v9434 = vld [vmem:[%s11 + $0x4d0] sm:$0xff]
          %v9435 = vld [vmem:[%s11 + $0x4d8] sm:$0xff]
          %v9436 = vld [vmem:[%s11 + $0x4e0] sm:$0xff]
          %v9437 = vld [vmem:[%s11 + $0x4e8] sm:$0xff]
          %v9438 = vld [vmem:[%s11 + $0x4f0] sm:$0xff]
          %v9439 = vld [vmem:[%s11 + $0x4f8] sm:$0xff]
          %v9440 = vld [vmem:[%s11 + $0x500] sm:$0xff]
          %v9441 = vld [vmem:[%s11 + $0x508] sm:$0xff]
          %v9442 = vld [vmem:[%s11 + $0x510] sm:$0xff]
          %v9443 = vld [vmem:[%s11 + $0x518] sm:$0xff]
          %v9444 = vld [vmem:[%s11 + $0x520] sm:$0xff]
          %v9445 = vld [vmem:[%s11 + $0x528] sm:$0xff]
          %v9446 = vld [vmem:[%s11 + $0x530] sm:$0xff]
          %v9447 = vld [vmem:[%s11 + $0x538] sm:$0xff]
          %v9448 = vld [vmem:[%s11 + $0x540] sm:$0xff]
          %v9449 = vld [vmem:[%s11 + $0x548] sm:$0xff]
          %v9450 = vld [vmem:[%s11 + $0x550] sm:$0xff]
          %v9451 = vld [vmem:[%s11 + $0x558] sm:$0xff]
          %v9452 = vld [vmem:[%s11 + $0x560] sm:$0xff]
          %v9453 = vld [vmem:[%s11 + $0x568] sm:$0xff]
          %v9454 = vld [vmem:[%s11 + $0x570] sm:$0xff]
          %v9455 = vld [vmem:[%s11 + $0x578] sm:$0xff]
          %v9456 = vld [vmem:[%s11 + $0x580] sm:$0xff]
          %v9457 = vld [vmem:[%s11 + $0x588] sm:$0xff]
          %v9458 = vld [vmem:[%s11 + $0x590] sm:$0xff]
          %v9459 = vld [vmem:[%s11 + $0x598] sm:$0xff]
          %v9460 = vld [vmem:[%s11 + $0x5a0] sm:$0xff]
          %v9461 = vld [vmem:[%s11 + $0x5a8] sm:$0xff]
          %v9462 = vld [vmem:[%s11 + $0x5b0] sm:$0xff]
          %v9463 = vld [vmem:[%s11 + $0x5b8] sm:$0xff]
          %v9464 = vld [vmem:[%s11 + $0x5c0] sm:$0xff]
          %v9465 = vld [vmem:[%s11 + $0x5c8] sm:$0xff]
          %v9466 = vld [vmem:[%s11 + $0x5d0] sm:$0xff]
          %v9467 = vld [vmem:[%s11 + $0x5d8] sm:$0xff]
          %v9468 = vld [vmem:[%s11 + $0x5e0] sm:$0xff]
          %v9469 = vld [vmem:[%s11 + $0x5e8] sm:$0xff]
          %v9470 = vld [vmem:[%s11 + $0x5f0] sm:$0xff]
          %v9471 = vld [vmem:[%s11 + $0x5f8] sm:$0xff]
          %v9472 = vld [vmem:[%s11 + $0x600] sm:$0xff]
          %v9473 = vld [vmem:[%s11 + $0x608] sm:$0xff]
          %v9474 = vld [vmem:[%s11 + $0x610] sm:$0xff]
          %v9475 = vld [vmem:[%s11 + $0x618] sm:$0xff]
          %v9476 = vld [vmem:[%s11 + $0x620] sm:$0xff]
          %v9477 = vld [vmem:[%s11 + $0x628] sm:$0xff]
          %v9478 = vld [vmem:[%s11 + $0x630] sm:$0xff]
          %v9479 = vld [vmem:[%s11 + $0x638] sm:$0xff]
          %v9480 = vld [vmem:[%s11 + $0x640] sm:$0xff]
          %v9481 = vld [vmem:[%s11 + $0x648] sm:$0xff]
          %v9482 = vld [vmem:[%s11 + $0x650] sm:$0xff]
          %v9483 = vld [vmem:[%s11 + $0x658] sm:$0xff]
          %v9484 = vld [vmem:[%s11 + $0x660] sm:$0xff]
          %v9485 = vld [vmem:[%s11 + $0x668] sm:$0xff]
          %v9486 = vld [vmem:[%s11 + $0x670] sm:$0xff]
          %v9487 = vld [vmem:[%s11 + $0x678] sm:$0xff]
          %v9488 = vld [vmem:[%s11 + $0x680] sm:$0xff]
          %v9489 = vld [vmem:[%s11 + $0x688] sm:$0xff]
          %v9490 = vld [vmem:[%s11 + $0x690] sm:$0xff]
          %v9491 = vld [vmem:[%s11 + $0x698] sm:$0xff]
          %v9492 = vld [vmem:[%s11 + $0x6a0] sm:$0xff]
          %v9493 = vld [vmem:[%s11 + $0x6a8] sm:$0xff]
          %v9494 = vld [vmem:[%s11 + $0x6b0] sm:$0xff]
          %v9495 = vld [vmem:[%s11 + $0x6b8] sm:$0xff]
          %v9496 = vld [vmem:[%s11 + $0x6c0] sm:$0xff]
          %v9497 = vld [vmem:[%s11 + $0x6c8] sm:$0xff]
          %v9498 = vld [vmem:[%s11 + $0x6d0] sm:$0xff]
          %v9499 = vld [vmem:[%s11 + $0x6d8] sm:$0xff]
          %v9500 = vld [vmem:[%s11 + $0x6e0] sm:$0xff]
          %v9501 = vld [vmem:[%s11 + $0x6e8] sm:$0xff]
          %v9502 = vld [vmem:[%s11 + $0x6f0] sm:$0xff]
          %v9503 = vld [vmem:[%s11 + $0x6f8] sm:$0xff]
          %v9504 = vld [vmem:[%s11 + $0x700] sm:$0xff]
          %v9505 = vld [vmem:[%s11 + $0x708] sm:$0xff]
          %v9506 = vld [vmem:[%s11 + $0x710] sm:$0xff]
          %v9507 = vld [vmem:[%s11 + $0x718] sm:$0xff]
          %v9508 = vld [vmem:[%s11 + $0x720] sm:$0xff]
          %v9509 = vld [vmem:[%s11 + $0x728] sm:$0xff]
          %v9510 = vld [vmem:[%s11 + $0x730] sm:$0xff]
          %v9511 = vld [vmem:[%s11 + $0x738] sm:$0xff]
          %v9512 = vld [vmem:[%s11 + $0x740] sm:$0xff]
          %v9513 = vld [vmem:[%s11 + $0x748] sm:$0xff]
          %v9514 = vld [vmem:[%s11 + $0x750] sm:$0xff]
          %v9515 = vld [vmem:[%s11 + $0x758] sm:$0xff]
          %v9516 = vld [vmem:[%s11 + $0x760] sm:$0xff]
          %v9517 = vld [vmem:[%s11 + $0x768] sm:$0xff]
          %v9518 = vld [vmem:[%s11 + $0x770] sm:$0xff]
          %v9519 = vld [vmem:[%s11 + $0x778] sm:$0xff]
          %v9520 = vld [vmem:[%s11 + $0x780] sm:$0xff]
          %v9521 = vld [vmem:[%s11 + $0x788] sm:$0xff]
          %v9522 = vld [vmem:[%s11 + $0x790] sm:$0xff]
          %v9523 = vld [vmem:[%s11 + $0x798] sm:$0xff]
          %v9524 = vld [vmem:[%s11 + $0x7a0] sm:$0xff]
          %v9525 = vld [vmem:[%s11 + $0x7a8] sm:$0xff]
          %v9526 = vld [vmem:[%s11 + $0x7b0] sm:$0xff]
          %v9527 = vld [vmem:[%s11 + $0x7b8] sm:$0xff]
          %v9528 = vld [vmem:[%s11 + $0x7c0] sm:$0xff]
          %v9529 = vld [vmem:[%s11 + $0x7c8] sm:$0xff]
          %v9530 = vld [vmem:[%s11 + $0x7d0] sm:$0xff]
          %v9531 = vld [vmem:[%s11 + $0x7d8] sm:$0xff]
          %v9532 = vld [vmem:[%s11 + $0x7e0] sm:$0xff]
          %v9533 = vld [vmem:[%s11 + $0x7e8] sm:$0xff]
          %v9534 = vld [vmem:[%s11 + $0x7f0] sm:$0xff]
          %v9535 = vld [vmem:[%s11 + $0x7f8] sm:$0xff]
          %v9536 = vld [vmem:[#allocation14] sm:$0xf]
          %v9538 = vlaneseq
          %v9539 = vshrl.u32 %v9538, 7
          %v9540 = vsub.s32 0, %v9539
          %v9541 = vrot.slane %v9536, %v9540
          %v9542 = vlaneseq
          %v9543 = vshrl.u32 %v9542, 7
          %v9544 = vsub.s32 1, %v9543
          %v9545 = vrot.slane %v9536, %v9544
          %v9546 = vlaneseq
          %v9547 = vshrl.u32 %v9546, 7
          %v9548 = vsub.s32 2, %v9547
          %v9549 = vrot.slane %v9536, %v9548
          %v9550 = vlaneseq
          %v9551 = vshrl.u32 %v9550, 7
          %v9552 = vsub.s32 3, %v9551
          %v9553 = vrot.slane %v9536, %v9552
          %v9814 = vunpack.c.l.b16 %v9280
          %v9815 = vunpack.c.h.b16 %v9280
          %v9816 = vunpack.c.l.b16 %v9281
          %v9817 = vunpack.c.h.b16 %v9281
          %v9818 = vunpack.c.l.b16 %v9282
          %v9819 = vunpack.c.h.b16 %v9282
          %v9820 = vunpack.c.l.b16 %v9283
          %v9821 = vunpack.c.h.b16 %v9283
          %v9822 = vunpack.c.l.b16 %v9284
          %v9823 = vunpack.c.h.b16 %v9284
          %v9824 = vunpack.c.l.b16 %v9285
          %v9825 = vunpack.c.h.b16 %v9285
          %v9826 = vunpack.c.l.b16 %v9286
          %v9827 = vunpack.c.h.b16 %v9286
          %v9828 = vunpack.c.l.b16 %v9287
          %v9829 = vunpack.c.h.b16 %v9287
          %v9830 = vunpack.c.l.b16 %v9288
          %v9831 = vunpack.c.h.b16 %v9288
          %v9832 = vunpack.c.l.b16 %v9289
          %v9833 = vunpack.c.h.b16 %v9289
          %v9834 = vunpack.c.l.b16 %v9290
          %v9835 = vunpack.c.h.b16 %v9290
          %v9836 = vunpack.c.l.b16 %v9291
          %v9837 = vunpack.c.h.b16 %v9291
          %v9838 = vunpack.c.l.b16 %v9292
          %v9839 = vunpack.c.h.b16 %v9292
          %v9840 = vunpack.c.l.b16 %v9293
          %v9841 = vunpack.c.h.b16 %v9293
          %v9842 = vunpack.c.l.b16 %v9294
          %v9843 = vunpack.c.h.b16 %v9294
          %v9844 = vunpack.c.l.b16 %v9295
          %v9845 = vunpack.c.h.b16 %v9295
          %v9846 = vunpack.c.l.b16 %v9296
          %v9847 = vunpack.c.h.b16 %v9296
          %v9848 = vunpack.c.l.b16 %v9297
          %v9849 = vunpack.c.h.b16 %v9297
          %v9850 = vunpack.c.l.b16 %v9298
          %v9851 = vunpack.c.h.b16 %v9298
          %v9852 = vunpack.c.l.b16 %v9299
          %v9853 = vunpack.c.h.b16 %v9299
          %v9854 = vunpack.c.l.b16 %v9300
          %v9855 = vunpack.c.h.b16 %v9300
          %v9856 = vunpack.c.l.b16 %v9301
          %v9857 = vunpack.c.h.b16 %v9301
          %v9858 = vunpack.c.l.b16 %v9302
          %v9859 = vunpack.c.h.b16 %v9302
          %v9860 = vunpack.c.l.b16 %v9303
          %v9861 = vunpack.c.h.b16 %v9303
          %v9862 = vunpack.c.l.b16 %v9304
          %v9863 = vunpack.c.h.b16 %v9304
          %v9864 = vunpack.c.l.b16 %v9305
          %v9865 = vunpack.c.h.b16 %v9305
          %v9866 = vunpack.c.l.b16 %v9306
          %v9867 = vunpack.c.h.b16 %v9306
          %v9868 = vunpack.c.l.b16 %v9307
          %v9869 = vunpack.c.h.b16 %v9307
          %v9870 = vunpack.c.l.b16 %v9308
          %v9871 = vunpack.c.h.b16 %v9308
          %v9872 = vunpack.c.l.b16 %v9309
          %v9873 = vunpack.c.h.b16 %v9309
          %v9874 = vunpack.c.l.b16 %v9310
          %v9875 = vunpack.c.h.b16 %v9310
          %v9876 = vunpack.c.l.b16 %v9311
          %v9877 = vunpack.c.h.b16 %v9311
          %v9878 = vunpack.c.l.b16 %v9312
          %v9879 = vunpack.c.h.b16 %v9312
          %v9880 = vunpack.c.l.b16 %v9313
          %v9881 = vunpack.c.h.b16 %v9313
          %v9882 = vunpack.c.l.b16 %v9314
          %v9883 = vunpack.c.h.b16 %v9314
          %v9884 = vunpack.c.l.b16 %v9315
          %v9885 = vunpack.c.h.b16 %v9315
          %v9886 = vunpack.c.l.b16 %v9316
          %v9887 = vunpack.c.h.b16 %v9316
          %v9888 = vunpack.c.l.b16 %v9317
          %v9889 = vunpack.c.h.b16 %v9317
          %v9890 = vunpack.c.l.b16 %v9318
          %v9891 = vunpack.c.h.b16 %v9318
          %v9892 = vunpack.c.l.b16 %v9319
          %v9893 = vunpack.c.h.b16 %v9319
          %v9894 = vunpack.c.l.b16 %v9320
          %v9895 = vunpack.c.h.b16 %v9320
          %v9896 = vunpack.c.l.b16 %v9321
          %v9897 = vunpack.c.h.b16 %v9321
          %v9898 = vunpack.c.l.b16 %v9322
          %v9899 = vunpack.c.h.b16 %v9322
          %v9900 = vunpack.c.l.b16 %v9323
          %v9901 = vunpack.c.h.b16 %v9323
          %v9902 = vunpack.c.l.b16 %v9324
          %v9903 = vunpack.c.h.b16 %v9324
          %v9904 = vunpack.c.l.b16 %v9325
          %v9905 = vunpack.c.h.b16 %v9325
          %v9906 = vunpack.c.l.b16 %v9326
          %v9907 = vunpack.c.h.b16 %v9326
          %v9908 = vunpack.c.l.b16 %v9327
          %v9909 = vunpack.c.h.b16 %v9327
          %v9910 = vunpack.c.l.b16 %v9328
          %v9911 = vunpack.c.h.b16 %v9328
          %v9912 = vunpack.c.l.b16 %v9329
          %v9913 = vunpack.c.h.b16 %v9329
          %v9914 = vunpack.c.l.b16 %v9330
          %v9915 = vunpack.c.h.b16 %v9330
          %v9916 = vunpack.c.l.b16 %v9331
          %v9917 = vunpack.c.h.b16 %v9331
          %v9918 = vunpack.c.l.b16 %v9332
          %v9919 = vunpack.c.h.b16 %v9332
          %v9920 = vunpack.c.l.b16 %v9333
          %v9921 = vunpack.c.h.b16 %v9333
          %v9922 = vunpack.c.l.b16 %v9334
          %v9923 = vunpack.c.h.b16 %v9334
          %v9924 = vunpack.c.l.b16 %v9335
          %v9925 = vunpack.c.h.b16 %v9335
          %v9926 = vunpack.c.l.b16 %v9336
          %v9927 = vunpack.c.h.b16 %v9336
          %v9928 = vunpack.c.l.b16 %v9337
          %v9929 = vunpack.c.h.b16 %v9337
          %v9930 = vunpack.c.l.b16 %v9338
          %v9931 = vunpack.c.h.b16 %v9338
          %v9932 = vunpack.c.l.b16 %v9339
          %v9933 = vunpack.c.h.b16 %v9339
          %v9934 = vunpack.c.l.b16 %v9340
          %v9935 = vunpack.c.h.b16 %v9340
          %v9936 = vunpack.c.l.b16 %v9341
          %v9937 = vunpack.c.h.b16 %v9341
          %v9938 = vunpack.c.l.b16 %v9342
          %v9939 = vunpack.c.h.b16 %v9342
          %v9940 = vunpack.c.l.b16 %v9343
          %v9941 = vunpack.c.h.b16 %v9343
          %v9942 = vunpack.c.l.b16 %v9344
          %v9943 = vunpack.c.h.b16 %v9344
          %v9944 = vunpack.c.l.b16 %v9345
          %v9945 = vunpack.c.h.b16 %v9345
          %v9946 = vunpack.c.l.b16 %v9346
          %v9947 = vunpack.c.h.b16 %v9346
          %v9948 = vunpack.c.l.b16 %v9347
          %v9949 = vunpack.c.h.b16 %v9347
          %v9950 = vunpack.c.l.b16 %v9348
          %v9951 = vunpack.c.h.b16 %v9348
          %v9952 = vunpack.c.l.b16 %v9349
          %v9953 = vunpack.c.h.b16 %v9349
          %v9954 = vunpack.c.l.b16 %v9350
          %v9955 = vunpack.c.h.b16 %v9350
          %v9956 = vunpack.c.l.b16 %v9351
          %v9957 = vunpack.c.h.b16 %v9351
          %v9958 = vunpack.c.l.b16 %v9352
          %v9959 = vunpack.c.h.b16 %v9352
          %v9960 = vunpack.c.l.b16 %v9353
          %v9961 = vunpack.c.h.b16 %v9353
          %v9962 = vunpack.c.l.b16 %v9354
          %v9963 = vunpack.c.h.b16 %v9354
          %v9964 = vunpack.c.l.b16 %v9355
          %v9965 = vunpack.c.h.b16 %v9355
          %v9966 = vunpack.c.l.b16 %v9356
          %v9967 = vunpack.c.h.b16 %v9356
          %v9968 = vunpack.c.l.b16 %v9357
          %v9969 = vunpack.c.h.b16 %v9357
          %v9970 = vunpack.c.l.b16 %v9358
          %v9971 = vunpack.c.h.b16 %v9358
          %v9972 = vunpack.c.l.b16 %v9359
          %v9973 = vunpack.c.h.b16 %v9359
          %v9974 = vunpack.c.l.b16 %v9360
          %v9975 = vunpack.c.h.b16 %v9360
          %v9976 = vunpack.c.l.b16 %v9361
          %v9977 = vunpack.c.h.b16 %v9361
          %v9978 = vunpack.c.l.b16 %v9362
          %v9979 = vunpack.c.h.b16 %v9362
          %v9980 = vunpack.c.l.b16 %v9363
          %v9981 = vunpack.c.h.b16 %v9363
          %v9982 = vunpack.c.l.b16 %v9364
          %v9983 = vunpack.c.h.b16 %v9364
          %v9984 = vunpack.c.l.b16 %v9365
          %v9985 = vunpack.c.h.b16 %v9365
          %v9986 = vunpack.c.l.b16 %v9366
          %v9987 = vunpack.c.h.b16 %v9366
          %v9988 = vunpack.c.l.b16 %v9367
          %v9989 = vunpack.c.h.b16 %v9367
          %v9990 = vunpack.c.l.b16 %v9368
          %v9991 = vunpack.c.h.b16 %v9368
          %v9992 = vunpack.c.l.b16 %v9369
          %v9993 = vunpack.c.h.b16 %v9369
          %v9994 = vunpack.c.l.b16 %v9370
          %v9995 = vunpack.c.h.b16 %v9370
          %v9996 = vunpack.c.l.b16 %v9371
          %v9997 = vunpack.c.h.b16 %v9371
          %v9998 = vunpack.c.l.b16 %v9372
          %v9999 = vunpack.c.h.b16 %v9372
          %v10000 = vunpack.c.l.b16 %v9373
          %v10001 = vunpack.c.h.b16 %v9373
          %v10002 = vunpack.c.l.b16 %v9374
          %v10003 = vunpack.c.h.b16 %v9374
          %v10004 = vunpack.c.l.b16 %v9375
          %v10005 = vunpack.c.h.b16 %v9375
          %v10006 = vunpack.c.l.b16 %v9376
          %v10007 = vunpack.c.h.b16 %v9376
          %v10008 = vunpack.c.l.b16 %v9377
          %v10009 = vunpack.c.h.b16 %v9377
          %v10010 = vunpack.c.l.b16 %v9378
          %v10011 = vunpack.c.h.b16 %v9378
          %v10012 = vunpack.c.l.b16 %v9379
          %v10013 = vunpack.c.h.b16 %v9379
          %v10014 = vunpack.c.l.b16 %v9380
          %v10015 = vunpack.c.h.b16 %v9380
          %v10016 = vunpack.c.l.b16 %v9381
          %v10017 = vunpack.c.h.b16 %v9381
          %v10018 = vunpack.c.l.b16 %v9382
          %v10019 = vunpack.c.h.b16 %v9382
          %v10020 = vunpack.c.l.b16 %v9383
          %v10021 = vunpack.c.h.b16 %v9383
          %v10022 = vunpack.c.l.b16 %v9384
          %v10023 = vunpack.c.h.b16 %v9384
          %v10024 = vunpack.c.l.b16 %v9385
          %v10025 = vunpack.c.h.b16 %v9385
          %v10026 = vunpack.c.l.b16 %v9386
          %v10027 = vunpack.c.h.b16 %v9386
          %v10028 = vunpack.c.l.b16 %v9387
          %v10029 = vunpack.c.h.b16 %v9387
          %v10030 = vunpack.c.l.b16 %v9388
          %v10031 = vunpack.c.h.b16 %v9388
          %v10032 = vunpack.c.l.b16 %v9389
          %v10033 = vunpack.c.h.b16 %v9389
          %v10034 = vunpack.c.l.b16 %v9390
          %v10035 = vunpack.c.h.b16 %v9390
          %v10036 = vunpack.c.l.b16 %v9391
          %v10037 = vunpack.c.h.b16 %v9391
          %v10038 = vunpack.c.l.b16 %v9392
          %v10039 = vunpack.c.h.b16 %v9392
          %v10040 = vunpack.c.l.b16 %v9393
          %v10041 = vunpack.c.h.b16 %v9393
          %v10042 = vunpack.c.l.b16 %v9394
          %v10043 = vunpack.c.h.b16 %v9394
          %v10044 = vunpack.c.l.b16 %v9395
          %v10045 = vunpack.c.h.b16 %v9395
          %v10046 = vunpack.c.l.b16 %v9396
          %v10047 = vunpack.c.h.b16 %v9396
          %v10048 = vunpack.c.l.b16 %v9397
          %v10049 = vunpack.c.h.b16 %v9397
          %v10050 = vunpack.c.l.b16 %v9398
          %v10051 = vunpack.c.h.b16 %v9398
          %v10052 = vunpack.c.l.b16 %v9399
          %v10053 = vunpack.c.h.b16 %v9399
          %v10054 = vunpack.c.l.b16 %v9400
          %v10055 = vunpack.c.h.b16 %v9400
          %v10056 = vunpack.c.l.b16 %v9401
          %v10057 = vunpack.c.h.b16 %v9401
          %v10058 = vunpack.c.l.b16 %v9402
          %v10059 = vunpack.c.h.b16 %v9402
          %v10060 = vunpack.c.l.b16 %v9403
          %v10061 = vunpack.c.h.b16 %v9403
          %v10062 = vunpack.c.l.b16 %v9404
          %v10063 = vunpack.c.h.b16 %v9404
          %v10064 = vunpack.c.l.b16 %v9405
          %v10065 = vunpack.c.h.b16 %v9405
          %v10066 = vunpack.c.l.b16 %v9406
          %v10067 = vunpack.c.h.b16 %v9406
          %v10068 = vunpack.c.l.b16 %v9407
          %v10069 = vunpack.c.h.b16 %v9407
          %v10070 = vunpack.c.l.b16 %v9408
          %v10071 = vunpack.c.h.b16 %v9408
          %v10072 = vunpack.c.l.b16 %v9409
          %v10073 = vunpack.c.h.b16 %v9409
          %v10074 = vunpack.c.l.b16 %v9410
          %v10075 = vunpack.c.h.b16 %v9410
          %v10076 = vunpack.c.l.b16 %v9411
          %v10077 = vunpack.c.h.b16 %v9411
          %v10078 = vunpack.c.l.b16 %v9412
          %v10079 = vunpack.c.h.b16 %v9412
          %v10080 = vunpack.c.l.b16 %v9413
          %v10081 = vunpack.c.h.b16 %v9413
          %v10082 = vunpack.c.l.b16 %v9414
          %v10083 = vunpack.c.h.b16 %v9414
          %v10084 = vunpack.c.l.b16 %v9415
          %v10085 = vunpack.c.h.b16 %v9415
          %v10086 = vunpack.c.l.b16 %v9416
          %v10087 = vunpack.c.h.b16 %v9416
          %v10088 = vunpack.c.l.b16 %v9417
          %v10089 = vunpack.c.h.b16 %v9417
          %v10090 = vunpack.c.l.b16 %v9418
          %v10091 = vunpack.c.h.b16 %v9418
          %v10092 = vunpack.c.l.b16 %v9419
          %v10093 = vunpack.c.h.b16 %v9419
          %v10094 = vunpack.c.l.b16 %v9420
          %v10095 = vunpack.c.h.b16 %v9420
          %v10096 = vunpack.c.l.b16 %v9421
          %v10097 = vunpack.c.h.b16 %v9421
          %v10098 = vunpack.c.l.b16 %v9422
          %v10099 = vunpack.c.h.b16 %v9422
          %v10100 = vunpack.c.l.b16 %v9423
          %v10101 = vunpack.c.h.b16 %v9423
          %v10102 = vunpack.c.l.b16 %v9424
          %v10103 = vunpack.c.h.b16 %v9424
          %v10104 = vunpack.c.l.b16 %v9425
          %v10105 = vunpack.c.h.b16 %v9425
          %v10106 = vunpack.c.l.b16 %v9426
          %v10107 = vunpack.c.h.b16 %v9426
          %v10108 = vunpack.c.l.b16 %v9427
          %v10109 = vunpack.c.h.b16 %v9427
          %v10110 = vunpack.c.l.b16 %v9428
          %v10111 = vunpack.c.h.b16 %v9428
          %v10112 = vunpack.c.l.b16 %v9429
          %v10113 = vunpack.c.h.b16 %v9429
          %v10114 = vunpack.c.l.b16 %v9430
          %v10115 = vunpack.c.h.b16 %v9430
          %v10116 = vunpack.c.l.b16 %v9431
          %v10117 = vunpack.c.h.b16 %v9431
          %v10118 = vunpack.c.l.b16 %v9432
          %v10119 = vunpack.c.h.b16 %v9432
          %v10120 = vunpack.c.l.b16 %v9433
          %v10121 = vunpack.c.h.b16 %v9433
          %v10122 = vunpack.c.l.b16 %v9434
          %v10123 = vunpack.c.h.b16 %v9434
          %v10124 = vunpack.c.l.b16 %v9435
          %v10125 = vunpack.c.h.b16 %v9435
          %v10126 = vunpack.c.l.b16 %v9436
          %v10127 = vunpack.c.h.b16 %v9436
          %v10128 = vunpack.c.l.b16 %v9437
          %v10129 = vunpack.c.h.b16 %v9437
          %v10130 = vunpack.c.l.b16 %v9438
          %v10131 = vunpack.c.h.b16 %v9438
          %v10132 = vunpack.c.l.b16 %v9439
          %v10133 = vunpack.c.h.b16 %v9439
          %v10134 = vunpack.c.l.b16 %v9440
          %v10135 = vunpack.c.h.b16 %v9440
          %v10136 = vunpack.c.l.b16 %v9441
          %v10137 = vunpack.c.h.b16 %v9441
          %v10138 = vunpack.c.l.b16 %v9442
          %v10139 = vunpack.c.h.b16 %v9442
          %v10140 = vunpack.c.l.b16 %v9443
          %v10141 = vunpack.c.h.b16 %v9443
          %v10142 = vunpack.c.l.b16 %v9444
          %v10143 = vunpack.c.h.b16 %v9444
          %v10144 = vunpack.c.l.b16 %v9445
          %v10145 = vunpack.c.h.b16 %v9445
          %v10146 = vunpack.c.l.b16 %v9446
          %v10147 = vunpack.c.h.b16 %v9446
          %v10148 = vunpack.c.l.b16 %v9447
          %v10149 = vunpack.c.h.b16 %v9447
          %v10150 = vunpack.c.l.b16 %v9448
          %v10151 = vunpack.c.h.b16 %v9448
          %v10152 = vunpack.c.l.b16 %v9449
          %v10153 = vunpack.c.h.b16 %v9449
          %v10154 = vunpack.c.l.b16 %v9450
          %v10155 = vunpack.c.h.b16 %v9450
          %v10156 = vunpack.c.l.b16 %v9451
          %v10157 = vunpack.c.h.b16 %v9451
          %v10158 = vunpack.c.l.b16 %v9452
          %v10159 = vunpack.c.h.b16 %v9452
          %v10160 = vunpack.c.l.b16 %v9453
          %v10161 = vunpack.c.h.b16 %v9453
          %v10162 = vunpack.c.l.b16 %v9454
          %v10163 = vunpack.c.h.b16 %v9454
          %v10164 = vunpack.c.l.b16 %v9455
          %v10165 = vunpack.c.h.b16 %v9455
          %v10166 = vunpack.c.l.b16 %v9456
          %v10167 = vunpack.c.h.b16 %v9456
          %v10168 = vunpack.c.l.b16 %v9457
          %v10169 = vunpack.c.h.b16 %v9457
          %v10170 = vunpack.c.l.b16 %v9458
          %v10171 = vunpack.c.h.b16 %v9458
          %v10172 = vunpack.c.l.b16 %v9459
          %v10173 = vunpack.c.h.b16 %v9459
          %v10174 = vunpack.c.l.b16 %v9460
          %v10175 = vunpack.c.h.b16 %v9460
          %v10176 = vunpack.c.l.b16 %v9461
          %v10177 = vunpack.c.h.b16 %v9461
          %v10178 = vunpack.c.l.b16 %v9462
          %v10179 = vunpack.c.h.b16 %v9462
          %v10180 = vunpack.c.l.b16 %v9463
          %v10181 = vunpack.c.h.b16 %v9463
          %v10182 = vunpack.c.l.b16 %v9464
          %v10183 = vunpack.c.h.b16 %v9464
          %v10184 = vunpack.c.l.b16 %v9465
          %v10185 = vunpack.c.h.b16 %v9465
          %v10186 = vunpack.c.l.b16 %v9466
          %v10187 = vunpack.c.h.b16 %v9466
          %v10188 = vunpack.c.l.b16 %v9467
          %v10189 = vunpack.c.h.b16 %v9467
          %v10190 = vunpack.c.l.b16 %v9468
          %v10191 = vunpack.c.h.b16 %v9468
          %v10192 = vunpack.c.l.b16 %v9469
          %v10193 = vunpack.c.h.b16 %v9469
          %v10194 = vunpack.c.l.b16 %v9470
          %v10195 = vunpack.c.h.b16 %v9470
          %v10196 = vunpack.c.l.b16 %v9471
          %v10197 = vunpack.c.h.b16 %v9471
          %v10198 = vunpack.c.l.b16 %v9472
          %v10199 = vunpack.c.h.b16 %v9472
          %v10200 = vunpack.c.l.b16 %v9473
          %v10201 = vunpack.c.h.b16 %v9473
          %v10202 = vunpack.c.l.b16 %v9474
          %v10203 = vunpack.c.h.b16 %v9474
          %v10204 = vunpack.c.l.b16 %v9475
          %v10205 = vunpack.c.h.b16 %v9475
          %v10206 = vunpack.c.l.b16 %v9476
          %v10207 = vunpack.c.h.b16 %v9476
          %v10208 = vunpack.c.l.b16 %v9477
          %v10209 = vunpack.c.h.b16 %v9477
          %v10210 = vunpack.c.l.b16 %v9478
          %v10211 = vunpack.c.h.b16 %v9478
          %v10212 = vunpack.c.l.b16 %v9479
          %v10213 = vunpack.c.h.b16 %v9479
          %v10214 = vunpack.c.l.b16 %v9480
          %v10215 = vunpack.c.h.b16 %v9480
          %v10216 = vunpack.c.l.b16 %v9481
          %v10217 = vunpack.c.h.b16 %v9481
          %v10218 = vunpack.c.l.b16 %v9482
          %v10219 = vunpack.c.h.b16 %v9482
          %v10220 = vunpack.c.l.b16 %v9483
          %v10221 = vunpack.c.h.b16 %v9483
          %v10222 = vunpack.c.l.b16 %v9484
          %v10223 = vunpack.c.h.b16 %v9484
          %v10224 = vunpack.c.l.b16 %v9485
          %v10225 = vunpack.c.h.b16 %v9485
          %v10226 = vunpack.c.l.b16 %v9486
          %v10227 = vunpack.c.h.b16 %v9486
          %v10228 = vunpack.c.l.b16 %v9487
          %v10229 = vunpack.c.h.b16 %v9487
          %v10230 = vunpack.c.l.b16 %v9488
          %v10231 = vunpack.c.h.b16 %v9488
          %v10232 = vunpack.c.l.b16 %v9489
          %v10233 = vunpack.c.h.b16 %v9489
          %v10234 = vunpack.c.l.b16 %v9490
          %v10235 = vunpack.c.h.b16 %v9490
          %v10236 = vunpack.c.l.b16 %v9491
          %v10237 = vunpack.c.h.b16 %v9491
          %v10238 = vunpack.c.l.b16 %v9492
          %v10239 = vunpack.c.h.b16 %v9492
          %v10240 = vunpack.c.l.b16 %v9493
          %v10241 = vunpack.c.h.b16 %v9493
          %v10242 = vunpack.c.l.b16 %v9494
          %v10243 = vunpack.c.h.b16 %v9494
          %v10244 = vunpack.c.l.b16 %v9495
          %v10245 = vunpack.c.h.b16 %v9495
          %v10246 = vunpack.c.l.b16 %v9496
          %v10247 = vunpack.c.h.b16 %v9496
          %v10248 = vunpack.c.l.b16 %v9497
          %v10249 = vunpack.c.h.b16 %v9497
          %v10250 = vunpack.c.l.b16 %v9498
          %v10251 = vunpack.c.h.b16 %v9498
          %v10252 = vunpack.c.l.b16 %v9499
          %v10253 = vunpack.c.h.b16 %v9499
          %v10254 = vunpack.c.l.b16 %v9500
          %v10255 = vunpack.c.h.b16 %v9500
          %v10256 = vunpack.c.l.b16 %v9501
          %v10257 = vunpack.c.h.b16 %v9501
          %v10258 = vunpack.c.l.b16 %v9502
          %v10259 = vunpack.c.h.b16 %v9502
          %v10260 = vunpack.c.l.b16 %v9503
          %v10261 = vunpack.c.h.b16 %v9503
          %v10262 = vunpack.c.l.b16 %v9504
          %v10263 = vunpack.c.h.b16 %v9504
          %v10264 = vunpack.c.l.b16 %v9505
          %v10265 = vunpack.c.h.b16 %v9505
          %v10266 = vunpack.c.l.b16 %v9506
          %v10267 = vunpack.c.h.b16 %v9506
          %v10268 = vunpack.c.l.b16 %v9507
          %v10269 = vunpack.c.h.b16 %v9507
          %v10270 = vunpack.c.l.b16 %v9508
          %v10271 = vunpack.c.h.b16 %v9508
          %v10272 = vunpack.c.l.b16 %v9509
          %v10273 = vunpack.c.h.b16 %v9509
          %v10274 = vunpack.c.l.b16 %v9510
          %v10275 = vunpack.c.h.b16 %v9510
          %v10276 = vunpack.c.l.b16 %v9511
          %v10277 = vunpack.c.h.b16 %v9511
          %v10278 = vunpack.c.l.b16 %v9512
          %v10279 = vunpack.c.h.b16 %v9512
          %v10280 = vunpack.c.l.b16 %v9513
          %v10281 = vunpack.c.h.b16 %v9513
          %v10282 = vunpack.c.l.b16 %v9514
          %v10283 = vunpack.c.h.b16 %v9514
          %v10284 = vunpack.c.l.b16 %v9515
          %v10285 = vunpack.c.h.b16 %v9515
          %v10286 = vunpack.c.l.b16 %v9516
          %v10287 = vunpack.c.h.b16 %v9516
          %v10288 = vunpack.c.l.b16 %v9517
          %v10289 = vunpack.c.h.b16 %v9517
          %v10290 = vunpack.c.l.b16 %v9518
          %v10291 = vunpack.c.h.b16 %v9518
          %v10292 = vunpack.c.l.b16 %v9519
          %v10293 = vunpack.c.h.b16 %v9519
          %v10294 = vunpack.c.l.b16 %v9520
          %v10295 = vunpack.c.h.b16 %v9520
          %v10296 = vunpack.c.l.b16 %v9521
          %v10297 = vunpack.c.h.b16 %v9521
          %v10298 = vunpack.c.l.b16 %v9522
          %v10299 = vunpack.c.h.b16 %v9522
          %v10300 = vunpack.c.l.b16 %v9523
          %v10301 = vunpack.c.h.b16 %v9523
          %v10302 = vunpack.c.l.b16 %v9524
          %v10303 = vunpack.c.h.b16 %v9524
          %v10304 = vunpack.c.l.b16 %v9525
          %v10305 = vunpack.c.h.b16 %v9525
          %v10306 = vunpack.c.l.b16 %v9526
          %v10307 = vunpack.c.h.b16 %v9526
          %v10308 = vunpack.c.l.b16 %v9527
          %v10309 = vunpack.c.h.b16 %v9527
          %v10310 = vunpack.c.l.b16 %v9528
          %v10311 = vunpack.c.h.b16 %v9528
          %v10312 = vunpack.c.l.b16 %v9529
          %v10313 = vunpack.c.h.b16 %v9529
          %v10314 = vunpack.c.l.b16 %v9530
          %v10315 = vunpack.c.h.b16 %v9530
          %v10316 = vunpack.c.l.b16 %v9531
          %v10317 = vunpack.c.h.b16 %v9531
          %v10318 = vunpack.c.l.b16 %v9532
          %v10319 = vunpack.c.h.b16 %v9532
          %v10320 = vunpack.c.l.b16 %v9533
          %v10321 = vunpack.c.h.b16 %v9533
          %v10322 = vunpack.c.l.b16 %v9534
          %v10323 = vunpack.c.h.b16 %v9534
          %v10324 = vunpack.c.l.b16 %v9535
          %v10325 = vunpack.c.h.b16 %v9535
          %v10326 = vpack.c.b16 %v9818, %v9814
          %v10327 = vpack.c.b16 %v9819, %v9815
          %v10328 = vpack.c.b16 %v9820, %v9816
          %v10329 = vpack.c.b16 %v9821, %v9817
          %v10330 = vpack.c.b16 %v9826, %v9822
          %v10331 = vpack.c.b16 %v9827, %v9823
          %v10332 = vpack.c.b16 %v9828, %v9824
          %v10333 = vpack.c.b16 %v9829, %v9825
          %v10334 = vpack.c.b16 %v9834, %v9830
          %v10335 = vpack.c.b16 %v9835, %v9831
          %v10336 = vpack.c.b16 %v9836, %v9832
          %v10337 = vpack.c.b16 %v9837, %v9833
          %v10338 = vpack.c.b16 %v9842, %v9838
          %v10339 = vpack.c.b16 %v9843, %v9839
          %v10340 = vpack.c.b16 %v9844, %v9840
          %v10341 = vpack.c.b16 %v9845, %v9841
          %v10342 = vpack.c.b16 %v9850, %v9846
          %v10343 = vpack.c.b16 %v9851, %v9847
          %v10344 = vpack.c.b16 %v9852, %v9848
          %v10345 = vpack.c.b16 %v9853, %v9849
          %v10346 = vpack.c.b16 %v9858, %v9854
          %v10347 = vpack.c.b16 %v9859, %v9855
          %v10348 = vpack.c.b16 %v9860, %v9856
          %v10349 = vpack.c.b16 %v9861, %v9857
          %v10350 = vpack.c.b16 %v9866, %v9862
          %v10351 = vpack.c.b16 %v9867, %v9863
          %v10352 = vpack.c.b16 %v9868, %v9864
          %v10353 = vpack.c.b16 %v9869, %v9865
          %v10354 = vpack.c.b16 %v9874, %v9870
          %v10355 = vpack.c.b16 %v9875, %v9871
          %v10356 = vpack.c.b16 %v9876, %v9872
          %v10357 = vpack.c.b16 %v9877, %v9873
          %v10358 = vpack.c.b16 %v9882, %v9878
          %v10359 = vpack.c.b16 %v9883, %v9879
          %v10360 = vpack.c.b16 %v9884, %v9880
          %v10361 = vpack.c.b16 %v9885, %v9881
          %v10362 = vpack.c.b16 %v9890, %v9886
          %v10363 = vpack.c.b16 %v9891, %v9887
          %v10364 = vpack.c.b16 %v9892, %v9888
          %v10365 = vpack.c.b16 %v9893, %v9889
          %v10366 = vpack.c.b16 %v9898, %v9894
          %v10367 = vpack.c.b16 %v9899, %v9895
          %v10368 = vpack.c.b16 %v9900, %v9896
          %v10369 = vpack.c.b16 %v9901, %v9897
          %v10370 = vpack.c.b16 %v9906, %v9902
          %v10371 = vpack.c.b16 %v9907, %v9903
          %v10372 = vpack.c.b16 %v9908, %v9904
          %v10373 = vpack.c.b16 %v9909, %v9905
          %v10374 = vpack.c.b16 %v9914, %v9910
          %v10375 = vpack.c.b16 %v9915, %v9911
          %v10376 = vpack.c.b16 %v9916, %v9912
          %v10377 = vpack.c.b16 %v9917, %v9913
          %v10378 = vpack.c.b16 %v9922, %v9918
          %v10379 = vpack.c.b16 %v9923, %v9919
          %v10380 = vpack.c.b16 %v9924, %v9920
          %v10381 = vpack.c.b16 %v9925, %v9921
          %v10382 = vpack.c.b16 %v9930, %v9926
          %v10383 = vpack.c.b16 %v9931, %v9927
          %v10384 = vpack.c.b16 %v9932, %v9928
          %v10385 = vpack.c.b16 %v9933, %v9929
          %v10386 = vpack.c.b16 %v9938, %v9934
          %v10387 = vpack.c.b16 %v9939, %v9935
          %v10388 = vpack.c.b16 %v9940, %v9936
          %v10389 = vpack.c.b16 %v9941, %v9937
          %v10390 = vpack.c.b16 %v9946, %v9942
          %v10391 = vpack.c.b16 %v9947, %v9943
          %v10392 = vpack.c.b16 %v9948, %v9944
          %v10393 = vpack.c.b16 %v9949, %v9945
          %v10394 = vpack.c.b16 %v9954, %v9950
          %v10395 = vpack.c.b16 %v9955, %v9951
          %v10396 = vpack.c.b16 %v9956, %v9952
          %v10397 = vpack.c.b16 %v9957, %v9953
          %v10398 = vpack.c.b16 %v9962, %v9958
          %v10399 = vpack.c.b16 %v9963, %v9959
          %v10400 = vpack.c.b16 %v9964, %v9960
          %v10401 = vpack.c.b16 %v9965, %v9961
          %v10402 = vpack.c.b16 %v9970, %v9966
          %v10403 = vpack.c.b16 %v9971, %v9967
          %v10404 = vpack.c.b16 %v9972, %v9968
          %v10405 = vpack.c.b16 %v9973, %v9969
          %v10406 = vpack.c.b16 %v9978, %v9974
          %v10407 = vpack.c.b16 %v9979, %v9975
          %v10408 = vpack.c.b16 %v9980, %v9976
          %v10409 = vpack.c.b16 %v9981, %v9977
          %v10410 = vpack.c.b16 %v9986, %v9982
          %v10411 = vpack.c.b16 %v9987, %v9983
          %v10412 = vpack.c.b16 %v9988, %v9984
          %v10413 = vpack.c.b16 %v9989, %v9985
          %v10414 = vpack.c.b16 %v9994, %v9990
          %v10415 = vpack.c.b16 %v9995, %v9991
          %v10416 = vpack.c.b16 %v9996, %v9992
          %v10417 = vpack.c.b16 %v9997, %v9993
          %v10418 = vpack.c.b16 %v10002, %v9998
          %v10419 = vpack.c.b16 %v10003, %v9999
          %v10420 = vpack.c.b16 %v10004, %v10000
          %v10421 = vpack.c.b16 %v10005, %v10001
          %v10422 = vpack.c.b16 %v10010, %v10006
          %v10423 = vpack.c.b16 %v10011, %v10007
          %v10424 = vpack.c.b16 %v10012, %v10008
          %v10425 = vpack.c.b16 %v10013, %v10009
          %v10426 = vpack.c.b16 %v10018, %v10014
          %v10427 = vpack.c.b16 %v10019, %v10015
          %v10428 = vpack.c.b16 %v10020, %v10016
          %v10429 = vpack.c.b16 %v10021, %v10017
          %v10430 = vpack.c.b16 %v10026, %v10022
          %v10431 = vpack.c.b16 %v10027, %v10023
          %v10432 = vpack.c.b16 %v10028, %v10024
          %v10433 = vpack.c.b16 %v10029, %v10025
          %v10434 = vpack.c.b16 %v10034, %v10030
          %v10435 = vpack.c.b16 %v10035, %v10031
          %v10436 = vpack.c.b16 %v10036, %v10032
          %v10437 = vpack.c.b16 %v10037, %v10033
          %v10438 = vpack.c.b16 %v10042, %v10038
          %v10439 = vpack.c.b16 %v10043, %v10039
          %v10440 = vpack.c.b16 %v10044, %v10040
          %v10441 = vpack.c.b16 %v10045, %v10041
          %v10442 = vpack.c.b16 %v10050, %v10046
          %v10443 = vpack.c.b16 %v10051, %v10047
          %v10444 = vpack.c.b16 %v10052, %v10048
          %v10445 = vpack.c.b16 %v10053, %v10049
          %v10446 = vpack.c.b16 %v10058, %v10054
          %v10447 = vpack.c.b16 %v10059, %v10055
          %v10448 = vpack.c.b16 %v10060, %v10056
          %v10449 = vpack.c.b16 %v10061, %v10057
          %v10450 = vpack.c.b16 %v10066, %v10062
          %v10451 = vpack.c.b16 %v10067, %v10063
          %v10452 = vpack.c.b16 %v10068, %v10064
          %v10453 = vpack.c.b16 %v10069, %v10065
          %v10454 = vpack.c.b16 %v10074, %v10070
          %v10455 = vpack.c.b16 %v10075, %v10071
          %v10456 = vpack.c.b16 %v10076, %v10072
          %v10457 = vpack.c.b16 %v10077, %v10073
          %v10458 = vpack.c.b16 %v10082, %v10078
          %v10459 = vpack.c.b16 %v10083, %v10079
          %v10460 = vpack.c.b16 %v10084, %v10080
          %v10461 = vpack.c.b16 %v10085, %v10081
          %v10462 = vpack.c.b16 %v10090, %v10086
          %v10463 = vpack.c.b16 %v10091, %v10087
          %v10464 = vpack.c.b16 %v10092, %v10088
          %v10465 = vpack.c.b16 %v10093, %v10089
          %v10466 = vpack.c.b16 %v10098, %v10094
          %v10467 = vpack.c.b16 %v10099, %v10095
          %v10468 = vpack.c.b16 %v10100, %v10096
          %v10469 = vpack.c.b16 %v10101, %v10097
          %v10470 = vpack.c.b16 %v10106, %v10102
          %v10471 = vpack.c.b16 %v10107, %v10103
          %v10472 = vpack.c.b16 %v10108, %v10104
          %v10473 = vpack.c.b16 %v10109, %v10105
          %v10474 = vpack.c.b16 %v10114, %v10110
          %v10475 = vpack.c.b16 %v10115, %v10111
          %v10476 = vpack.c.b16 %v10116, %v10112
          %v10477 = vpack.c.b16 %v10117, %v10113
          %v10478 = vpack.c.b16 %v10122, %v10118
          %v10479 = vpack.c.b16 %v10123, %v10119
          %v10480 = vpack.c.b16 %v10124, %v10120
          %v10481 = vpack.c.b16 %v10125, %v10121
          %v10482 = vpack.c.b16 %v10130, %v10126
          %v10483 = vpack.c.b16 %v10131, %v10127
          %v10484 = vpack.c.b16 %v10132, %v10128
          %v10485 = vpack.c.b16 %v10133, %v10129
          %v10486 = vpack.c.b16 %v10138, %v10134
          %v10487 = vpack.c.b16 %v10139, %v10135
          %v10488 = vpack.c.b16 %v10140, %v10136
          %v10489 = vpack.c.b16 %v10141, %v10137
          %v10490 = vpack.c.b16 %v10146, %v10142
          %v10491 = vpack.c.b16 %v10147, %v10143
          %v10492 = vpack.c.b16 %v10148, %v10144
          %v10493 = vpack.c.b16 %v10149, %v10145
          %v10494 = vpack.c.b16 %v10154, %v10150
          %v10495 = vpack.c.b16 %v10155, %v10151
          %v10496 = vpack.c.b16 %v10156, %v10152
          %v10497 = vpack.c.b16 %v10157, %v10153
          %v10498 = vpack.c.b16 %v10162, %v10158
          %v10499 = vpack.c.b16 %v10163, %v10159
          %v10500 = vpack.c.b16 %v10164, %v10160
          %v10501 = vpack.c.b16 %v10165, %v10161
          %v10502 = vpack.c.b16 %v10170, %v10166
          %v10503 = vpack.c.b16 %v10171, %v10167
          %v10504 = vpack.c.b16 %v10172, %v10168
          %v10505 = vpack.c.b16 %v10173, %v10169
          %v10506 = vpack.c.b16 %v10178, %v10174
          %v10507 = vpack.c.b16 %v10179, %v10175
          %v10508 = vpack.c.b16 %v10180, %v10176
          %v10509 = vpack.c.b16 %v10181, %v10177
          %v10510 = vpack.c.b16 %v10186, %v10182
          %v10511 = vpack.c.b16 %v10187, %v10183
          %v10512 = vpack.c.b16 %v10188, %v10184
          %v10513 = vpack.c.b16 %v10189, %v10185
          %v10514 = vpack.c.b16 %v10194, %v10190
          %v10515 = vpack.c.b16 %v10195, %v10191
          %v10516 = vpack.c.b16 %v10196, %v10192
          %v10517 = vpack.c.b16 %v10197, %v10193
          %v10518 = vpack.c.b16 %v10202, %v10198
          %v10519 = vpack.c.b16 %v10203, %v10199
          %v10520 = vpack.c.b16 %v10204, %v10200
          %v10521 = vpack.c.b16 %v10205, %v10201
          %v10522 = vpack.c.b16 %v10210, %v10206
          %v10523 = vpack.c.b16 %v10211, %v10207
          %v10524 = vpack.c.b16 %v10212, %v10208
          %v10525 = vpack.c.b16 %v10213, %v10209
          %v10526 = vpack.c.b16 %v10218, %v10214
          %v10527 = vpack.c.b16 %v10219, %v10215
          %v10528 = vpack.c.b16 %v10220, %v10216
          %v10529 = vpack.c.b16 %v10221, %v10217
          %v10530 = vpack.c.b16 %v10226, %v10222
          %v10531 = vpack.c.b16 %v10227, %v10223
          %v10532 = vpack.c.b16 %v10228, %v10224
          %v10533 = vpack.c.b16 %v10229, %v10225
          %v10534 = vpack.c.b16 %v10234, %v10230
          %v10535 = vpack.c.b16 %v10235, %v10231
          %v10536 = vpack.c.b16 %v10236, %v10232
          %v10537 = vpack.c.b16 %v10237, %v10233
          %v10538 = vpack.c.b16 %v10242, %v10238
          %v10539 = vpack.c.b16 %v10243, %v10239
          %v10540 = vpack.c.b16 %v10244, %v10240
          %v10541 = vpack.c.b16 %v10245, %v10241
          %v10542 = vpack.c.b16 %v10250, %v10246
          %v10543 = vpack.c.b16 %v10251, %v10247
          %v10544 = vpack.c.b16 %v10252, %v10248
          %v10545 = vpack.c.b16 %v10253, %v10249
          %v10546 = vpack.c.b16 %v10258, %v10254
          %v10547 = vpack.c.b16 %v10259, %v10255
          %v10548 = vpack.c.b16 %v10260, %v10256
          %v10549 = vpack.c.b16 %v10261, %v10257
          %v10550 = vpack.c.b16 %v10266, %v10262
          %v10551 = vpack.c.b16 %v10267, %v10263
          %v10552 = vpack.c.b16 %v10268, %v10264
          %v10553 = vpack.c.b16 %v10269, %v10265
          %v10554 = vpack.c.b16 %v10274, %v10270
          %v10555 = vpack.c.b16 %v10275, %v10271
          %v10556 = vpack.c.b16 %v10276, %v10272
          %v10557 = vpack.c.b16 %v10277, %v10273
          %v10558 = vpack.c.b16 %v10282, %v10278
          %v10559 = vpack.c.b16 %v10283, %v10279
          %v10560 = vpack.c.b16 %v10284, %v10280
          %v10561 = vpack.c.b16 %v10285, %v10281
          %v10562 = vpack.c.b16 %v10290, %v10286
          %v10563 = vpack.c.b16 %v10291, %v10287
          %v10564 = vpack.c.b16 %v10292, %v10288
          %v10565 = vpack.c.b16 %v10293, %v10289
          %v10566 = vpack.c.b16 %v10298, %v10294
          %v10567 = vpack.c.b16 %v10299, %v10295
          %v10568 = vpack.c.b16 %v10300, %v10296
          %v10569 = vpack.c.b16 %v10301, %v10297
          %v10570 = vpack.c.b16 %v10306, %v10302
          %v10571 = vpack.c.b16 %v10307, %v10303
          %v10572 = vpack.c.b16 %v10308, %v10304
          %v10573 = vpack.c.b16 %v10309, %v10305
          %v10574 = vpack.c.b16 %v10314, %v10310
          %v10575 = vpack.c.b16 %v10315, %v10311
          %v10576 = vpack.c.b16 %v10316, %v10312
          %v10577 = vpack.c.b16 %v10317, %v10313
          %v10578 = vpack.c.b16 %v10322, %v10318
          %v10579 = vpack.c.b16 %v10323, %v10319
          %v10580 = vpack.c.b16 %v10324, %v10320
          %v10581 = vpack.c.b16 %v10325, %v10321
          %10838 = vmatprep.subr.bf16.mxu0 %v10327
          %10839 = vmatpush1.bf16.msra.mxu0 %v10326
          %10840 = vmatprep.subr.bf16.mxu0 %v10331
          %10841 = vmatpush1.bf16.msra.mxu0 %v10330
          %10842 = vmatprep.subr.bf16.mxu0 %v10335
          %10843 = vmatpush1.bf16.msra.mxu0 %v10334
          %10844 = vmatprep.subr.bf16.mxu0 %v10339
          %10845 = vmatpush1.bf16.msra.mxu0 %v10338
          %10846 = vmatprep.subr.bf16.mxu0 %v10343
          %10847 = vmatpush1.bf16.msra.mxu0 %v10342
          %10848 = vmatprep.subr.bf16.mxu0 %v10347
          %10849 = vmatpush1.bf16.msra.mxu0 %v10346
          %10850 = vmatprep.subr.bf16.mxu0 %v10351
          %10851 = vmatpush1.bf16.msra.mxu0 %v10350
          %10852 = vmatprep.subr.bf16.mxu0 %v10355
          %10853 = vmatpush1.bf16.msra.mxu0 %v10354
          %10854 = vmatprep.subr.bf16.mxu0 %v10359
          %10855 = vmatpush1.bf16.msra.mxu0 %v10358
          %10856 = vmatprep.subr.bf16.mxu0 %v10363
          %10857 = vmatpush1.bf16.msra.mxu0 %v10362
          %10858 = vmatprep.subr.bf16.mxu0 %v10367
          %10859 = vmatpush1.bf16.msra.mxu0 %v10366
          %10860 = vmatprep.subr.bf16.mxu0 %v10371
          %10861 = vmatpush1.bf16.msra.mxu0 %v10370
          %10862 = vmatprep.subr.bf16.mxu0 %v10375
          %10863 = vmatpush1.bf16.msra.mxu0 %v10374
          %10864 = vmatprep.subr.bf16.mxu0 %v10379
          %10865 = vmatpush1.bf16.msra.mxu0 %v10378
          %10866 = vmatprep.subr.bf16.mxu0 %v10383
          %10867 = vmatpush1.bf16.msra.mxu0 %v10382
          %10868 = vmatprep.subr.bf16.mxu0 %v10387
          %10869 = vmatpush1.bf16.msra.mxu0 %v10386
          %10870 = vmatprep.mubr.bf16.mxu0 %v9273
          %10871 = vmatmul.mubr.bf16.gmra.mrb[0].mxu0 %v9272
          %v10872 = vpop.f32.mrb[0].mxu0
          %v10873 = vadd.f32 %v9541, %v10872
          %v10874 = vpop.f32.mrb[0].mxu0
          %v10875 = vadd.f32 %v9545, %v10874
          %v10876 = vpop.f32.mrb[0].mxu0
          %v10877 = vpop.f32.mrb[0].mxu0
          %10878 = vdwg.mxu0
          %10879 = vmatprep.subr.bf16.mxu0 %v10391
          %10880 = vmatpush1.bf16.msra.mxu0 %v10390
          %10881 = vmatprep.subr.bf16.mxu0 %v10395
          %10882 = vmatpush1.bf16.msra.mxu0 %v10394
          %10883 = vmatprep.subr.bf16.mxu0 %v10399
          %10884 = vmatpush1.bf16.msra.mxu0 %v10398
          %10885 = vmatprep.subr.bf16.mxu0 %v10403
          %10886 = vmatpush1.bf16.msra.mxu0 %v10402
          %10887 = vmatprep.subr.bf16.mxu0 %v10407
          %10888 = vmatpush1.bf16.msra.mxu0 %v10406
          %10889 = vmatprep.subr.bf16.mxu0 %v10411
          %10890 = vmatpush1.bf16.msra.mxu0 %v10410
          %10891 = vmatprep.subr.bf16.mxu0 %v10415
          %10892 = vmatpush1.bf16.msra.mxu0 %v10414
          %10893 = vmatprep.subr.bf16.mxu0 %v10419
          %10894 = vmatpush1.bf16.msra.mxu0 %v10418
          %10895 = vmatprep.subr.bf16.mxu0 %v10423
          %10896 = vmatpush1.bf16.msra.mxu0 %v10422
          %10897 = vmatprep.subr.bf16.mxu0 %v10427
          %10898 = vmatpush1.bf16.msra.mxu0 %v10426
          %10899 = vmatprep.subr.bf16.mxu0 %v10431
          %10900 = vmatpush1.bf16.msra.mxu0 %v10430
          %10901 = vmatprep.subr.bf16.mxu0 %v10435
          %10902 = vmatpush1.bf16.msra.mxu0 %v10434
          %10903 = vmatprep.subr.bf16.mxu0 %v10439
          %10904 = vmatpush1.bf16.msra.mxu0 %v10438
          %10905 = vmatprep.subr.bf16.mxu0 %v10443
          %10906 = vmatpush1.bf16.msra.mxu0 %v10442
          %10907 = vmatprep.subr.bf16.mxu0 %v10447
          %10908 = vmatpush1.bf16.msra.mxu0 %v10446
          %10909 = vmatprep.subr.bf16.mxu0 %v10451
          %10910 = vmatpush1.bf16.msra.mxu0 %v10450
          %10911 = vmatprep.mubr.bf16.mxu0 %v9275
          %10912 = vmatmul.mubr.bf16.gmra.mrb[0].mxu0 %v9274
          %v10913 = vpop.f32.mrb[0].mxu0
          %v10914 = vadd.f32 %v10873, %v10913
          %v10915 = vpop.f32.mrb[0].mxu0
          %v10916 = vadd.f32 %v10875, %v10915
          %v10917 = vpop.f32.mrb[0].mxu0
          %v10918 = vpop.f32.mrb[0].mxu0
          %10919 = vdwg.mxu0
          %10920 = vmatprep.subr.bf16.mxu0 %v10455
          %10921 = vmatpush1.bf16.msra.mxu0 %v10454
          %10922 = vmatprep.subr.bf16.mxu0 %v10459
          %10923 = vmatpush1.bf16.msra.mxu0 %v10458
          %10924 = vmatprep.subr.bf16.mxu0 %v10463
          %10925 = vmatpush1.bf16.msra.mxu0 %v10462
          %10926 = vmatprep.subr.bf16.mxu0 %v10467
          %10927 = vmatpush1.bf16.msra.mxu0 %v10466
          %10928 = vmatprep.subr.bf16.mxu0 %v10471
          %10929 = vmatpush1.bf16.msra.mxu0 %v10470
          %10930 = vmatprep.subr.bf16.mxu0 %v10475
          %10931 = vmatpush1.bf16.msra.mxu0 %v10474
          %10932 = vmatprep.subr.bf16.mxu0 %v10479
          %10933 = vmatpush1.bf16.msra.mxu0 %v10478
          %10934 = vmatprep.subr.bf16.mxu0 %v10483
          %10935 = vmatpush1.bf16.msra.mxu0 %v10482
          %10936 = vmatprep.subr.bf16.mxu0 %v10487
          %10937 = vmatpush1.bf16.msra.mxu0 %v10486
          %10938 = vmatprep.subr.bf16.mxu0 %v10491
          %10939 = vmatpush1.bf16.msra.mxu0 %v10490
          %10940 = vmatprep.subr.bf16.mxu0 %v10495
          %10941 = vmatpush1.bf16.msra.mxu0 %v10494
          %10942 = vmatprep.subr.bf16.mxu0 %v10499
          %10943 = vmatpush1.bf16.msra.mxu0 %v10498
          %10944 = vmatprep.subr.bf16.mxu0 %v10503
          %10945 = vmatpush1.bf16.msra.mxu0 %v10502
          %10946 = vmatprep.subr.bf16.mxu0 %v10507
          %10947 = vmatpush1.bf16.msra.mxu0 %v10506
          %10948 = vmatprep.subr.bf16.mxu0 %v10511
          %10949 = vmatpush1.bf16.msra.mxu0 %v10510
          %10950 = vmatprep.subr.bf16.mxu0 %v10515
          %10951 = vmatpush1.bf16.msra.mxu0 %v10514
          %10952 = vmatprep.mubr.bf16.mxu0 %v9277
          %10953 = vmatmul.mubr.bf16.gmra.mrb[0].mxu0 %v9276
          %v10954 = vpop.f32.mrb[0].mxu0
          %v10955 = vadd.f32 %v10914, %v10954
          %v10956 = vpop.f32.mrb[0].mxu0
          %v10957 = vadd.f32 %v10916, %v10956
          %v10958 = vpop.f32.mrb[0].mxu0
          %v10959 = vpop.f32.mrb[0].mxu0
          %10960 = vdwg.mxu0
          %10961 = vmatprep.subr.bf16.mxu0 %v10519
          %10962 = vmatpush1.bf16.msra.mxu0 %v10518
          %10963 = vmatprep.subr.bf16.mxu0 %v10523
          %10964 = vmatpush1.bf16.msra.mxu0 %v10522
          %10965 = vmatprep.subr.bf16.mxu0 %v10527
          %10966 = vmatpush1.bf16.msra.mxu0 %v10526
          %10967 = vmatprep.subr.bf16.mxu0 %v10531
          %10968 = vmatpush1.bf16.msra.mxu0 %v10530
          %10969 = vmatprep.subr.bf16.mxu0 %v10535
          %10970 = vmatpush1.bf16.msra.mxu0 %v10534
          %10971 = vmatprep.subr.bf16.mxu0 %v10539
          %10972 = vmatpush1.bf16.msra.mxu0 %v10538
          %10973 = vmatprep.subr.bf16.mxu0 %v10543
          %10974 = vmatpush1.bf16.msra.mxu0 %v10542
          %10975 = vmatprep.subr.bf16.mxu0 %v10547
          %10976 = vmatpush1.bf16.msra.mxu0 %v10546
          %10977 = vmatprep.subr.bf16.mxu0 %v10551
          %10978 = vmatpush1.bf16.msra.mxu0 %v10550
          %10979 = vmatprep.subr.bf16.mxu0 %v10555
          %10980 = vmatpush1.bf16.msra.mxu0 %v10554
          %10981 = vmatprep.subr.bf16.mxu0 %v10559
          %10982 = vmatpush1.bf16.msra.mxu0 %v10558
          %10983 = vmatprep.subr.bf16.mxu0 %v10563
          %10984 = vmatpush1.bf16.msra.mxu0 %v10562
          %10985 = vmatprep.subr.bf16.mxu0 %v10567
          %10986 = vmatpush1.bf16.msra.mxu0 %v10566
          %10987 = vmatprep.subr.bf16.mxu0 %v10571
          %10988 = vmatpush1.bf16.msra.mxu0 %v10570
          %10989 = vmatprep.subr.bf16.mxu0 %v10575
          %10990 = vmatpush1.bf16.msra.mxu0 %v10574
          %10991 = vmatprep.subr.bf16.mxu0 %v10579
          %10992 = vmatpush1.bf16.msra.mxu0 %v10578
          %10993 = vmatprep.mubr.bf16.mxu0 %v9279
          %10994 = vmatmul.mubr.bf16.gmra.mrb[0].mxu0 %v9278
          %v10995 = vpop.f32.mrb[0].mxu0
          %v10996 = vadd.f32 %v10955, %v10995
          %v10997 = vpop.f32.mrb[0].mxu0
          %v10998 = vadd.f32 %v10957, %v10997
          %v10999 = vpop.f32.mrb[0].mxu0
          %v11000 = vpop.f32.mrb[0].mxu0
          %11001 = vdwg.mxu0
          %11002 = vmatprep.subr.bf16.mxu0 %v10329
          %11003 = vmatpush1.bf16.msra.mxu0 %v10328
          %11004 = vmatprep.subr.bf16.mxu0 %v10333
          %11005 = vmatpush1.bf16.msra.mxu0 %v10332
          %11006 = vmatprep.subr.bf16.mxu0 %v10337
          %11007 = vmatpush1.bf16.msra.mxu0 %v10336
          %11008 = vmatprep.subr.bf16.mxu0 %v10341
          %11009 = vmatpush1.bf16.msra.mxu0 %v10340
          %11010 = vmatprep.subr.bf16.mxu0 %v10345
          %11011 = vmatpush1.bf16.msra.mxu0 %v10344
          %11012 = vmatprep.subr.bf16.mxu0 %v10349
          %11013 = vmatpush1.bf16.msra.mxu0 %v10348
          %11014 = vmatprep.subr.bf16.mxu0 %v10353
          %11015 = vmatpush1.bf16.msra.mxu0 %v10352
          %11016 = vmatprep.subr.bf16.mxu0 %v10357
          %11017 = vmatpush1.bf16.msra.mxu0 %v10356
          %11018 = vmatprep.subr.bf16.mxu0 %v10361
          %11019 = vmatpush1.bf16.msra.mxu0 %v10360
          %11020 = vmatprep.subr.bf16.mxu0 %v10365
          %11021 = vmatpush1.bf16.msra.mxu0 %v10364
          %11022 = vmatprep.subr.bf16.mxu0 %v10369
          %11023 = vmatpush1.bf16.msra.mxu0 %v10368
          %11024 = vmatprep.subr.bf16.mxu0 %v10373
          %11025 = vmatpush1.bf16.msra.mxu0 %v10372
          %11026 = vmatprep.subr.bf16.mxu0 %v10377
          %11027 = vmatpush1.bf16.msra.mxu0 %v10376
          %11028 = vmatprep.subr.bf16.mxu0 %v10381
          %11029 = vmatpush1.bf16.msra.mxu0 %v10380
          %11030 = vmatprep.subr.bf16.mxu0 %v10385
          %11031 = vmatpush1.bf16.msra.mxu0 %v10384
          %11032 = vmatprep.subr.bf16.mxu0 %v10389
          %11033 = vmatpush1.bf16.msra.mxu0 %v10388
          %11034 = vmatprep.mubr.bf16.mxu0 %v9273
          %11035 = vmatmul.mubr.bf16.gmra.mrb[0].mxu0 %v9272
          %v11036 = vpop.f32.mrb[0].mxu0
          %v11037 = vadd.f32 %v9549, %v11036
          %v11038 = vpop.f32.mrb[0].mxu0
          %v11039 = vadd.f32 %v9553, %v11038
          %v11040 = vpop.f32.mrb[0].mxu0
          %v11041 = vpop.f32.mrb[0].mxu0
          %11042 = vdwg.mxu0
          %11043 = vmatprep.subr.bf16.mxu0 %v10393
          %11044 = vmatpush1.bf16.msra.mxu0 %v10392
          %11045 = vmatprep.subr.bf16.mxu0 %v10397
          %11046 = vmatpush1.bf16.msra.mxu0 %v10396
          %11047 = vmatprep.subr.bf16.mxu0 %v10401
          %11048 = vmatpush1.bf16.msra.mxu0 %v10400
          %11049 = vmatprep.subr.bf16.mxu0 %v10405
          %11050 = vmatpush1.bf16.msra.mxu0 %v10404
          %11051 = vmatprep.subr.bf16.mxu0 %v10409
          %11052 = vmatpush1.bf16.msra.mxu0 %v10408
          %11053 = vmatprep.subr.bf16.mxu0 %v10413
          %11054 = vmatpush1.bf16.msra.mxu0 %v10412
          %11055 = vmatprep.subr.bf16.mxu0 %v10417
          %11056 = vmatpush1.bf16.msra.mxu0 %v10416
          %11057 = vmatprep.subr.bf16.mxu0 %v10421
          %11058 = vmatpush1.bf16.msra.mxu0 %v10420
          %11059 = vmatprep.subr.bf16.mxu0 %v10425
          %11060 = vmatpush1.bf16.msra.mxu0 %v10424
          %11061 = vmatprep.subr.bf16.mxu0 %v10429
          %11062 = vmatpush1.bf16.msra.mxu0 %v10428
          %11063 = vmatprep.subr.bf16.mxu0 %v10433
          %11064 = vmatpush1.bf16.msra.mxu0 %v10432
          %11065 = vmatprep.subr.bf16.mxu0 %v10437
          %11066 = vmatpush1.bf16.msra.mxu0 %v10436
          %11067 = vmatprep.subr.bf16.mxu0 %v10441
          %11068 = vmatpush1.bf16.msra.mxu0 %v10440
          %11069 = vmatprep.subr.bf16.mxu0 %v10445
          %11070 = vmatpush1.bf16.msra.mxu0 %v10444
          %11071 = vmatprep.subr.bf16.mxu0 %v10449
          %11072 = vmatpush1.bf16.msra.mxu0 %v10448
          %11073 = vmatprep.subr.bf16.mxu0 %v10453
          %11074 = vmatpush1.bf16.msra.mxu0 %v10452
          %11075 = vmatprep.mubr.bf16.mxu0 %v9275
          %11076 = vmatmul.mubr.bf16.gmra.mrb[0].mxu0 %v9274
          %v11077 = vpop.f32.mrb[0].mxu0
          %v11078 = vadd.f32 %v11037, %v11077
          %v11079 = vpop.f32.mrb[0].mxu0
          %v11080 = vadd.f32 %v11039, %v11079
          %v11081 = vpop.f32.mrb[0].mxu0
          %v11082 = vpop.f32.mrb[0].mxu0
          %11083 = vdwg.mxu0
          %11084 = vmatprep.subr.bf16.mxu0 %v10457
          %11085 = vmatpush1.bf16.msra.mxu0 %v10456
          %11086 = vmatprep.subr.bf16.mxu0 %v10461
          %11087 = vmatpush1.bf16.msra.mxu0 %v10460
          %11088 = vmatprep.subr.bf16.mxu0 %v10465
          %11089 = vmatpush1.bf16.msra.mxu0 %v10464
          %11090 = vmatprep.subr.bf16.mxu0 %v10469
          %11091 = vmatpush1.bf16.msra.mxu0 %v10468
          %11092 = vmatprep.subr.bf16.mxu0 %v10473
          %11093 = vmatpush1.bf16.msra.mxu0 %v10472
          %11094 = vmatprep.subr.bf16.mxu0 %v10477
          %11095 = vmatpush1.bf16.msra.mxu0 %v10476
          %11096 = vmatprep.subr.bf16.mxu0 %v10481
          %11097 = vmatpush1.bf16.msra.mxu0 %v10480
          %11098 = vmatprep.subr.bf16.mxu0 %v10485
          %11099 = vmatpush1.bf16.msra.mxu0 %v10484
          %11100 = vmatprep.subr.bf16.mxu0 %v10489
          %11101 = vmatpush1.bf16.msra.mxu0 %v10488
          %11102 = vmatprep.subr.bf16.mxu0 %v10493
          %11103 = vmatpush1.bf16.msra.mxu0 %v10492
          %11104 = vmatprep.subr.bf16.mxu0 %v10497
          %11105 = vmatpush1.bf16.msra.mxu0 %v10496
          %11106 = vmatprep.subr.bf16.mxu0 %v10501
          %11107 = vmatpush1.bf16.msra.mxu0 %v10500
          %11108 = vmatprep.subr.bf16.mxu0 %v10505
          %11109 = vmatpush1.bf16.msra.mxu0 %v10504
          %11110 = vmatprep.subr.bf16.mxu0 %v10509
          %11111 = vmatpush1.bf16.msra.mxu0 %v10508
          %11112 = vmatprep.subr.bf16.mxu0 %v10513
          %11113 = vmatpush1.bf16.msra.mxu0 %v10512
          %11114 = vmatprep.subr.bf16.mxu0 %v10517
          %11115 = vmatpush1.bf16.msra.mxu0 %v10516
          %11116 = vmatprep.mubr.bf16.mxu0 %v9277
          %11117 = vmatmul.mubr.bf16.gmra.mrb[0].mxu0 %v9276
          %v11118 = vpop.f32.mrb[0].mxu0
          %v11119 = vadd.f32 %v11078, %v11118
          %v11120 = vpop.f32.mrb[0].mxu0
          %v11121 = vadd.f32 %v11080, %v11120
          %v11122 = vpop.f32.mrb[0].mxu0
          %v11123 = vpop.f32.mrb[0].mxu0
          %11124 = vdwg.mxu0
          %11125 = vmatprep.subr.bf16.mxu0 %v10521
          %11126 = vmatpush1.bf16.msra.mxu0 %v10520
          %11127 = vmatprep.subr.bf16.mxu0 %v10525
          %11128 = vmatpush1.bf16.msra.mxu0 %v10524
          %11129 = vmatprep.subr.bf16.mxu0 %v10529
          %11130 = vmatpush1.bf16.msra.mxu0 %v10528
          %11131 = vmatprep.subr.bf16.mxu0 %v10533
          %11132 = vmatpush1.bf16.msra.mxu0 %v10532
          %11133 = vmatprep.subr.bf16.mxu0 %v10537
          %11134 = vmatpush1.bf16.msra.mxu0 %v10536
          %11135 = vmatprep.subr.bf16.mxu0 %v10541
          %11136 = vmatpush1.bf16.msra.mxu0 %v10540
          %11137 = vmatprep.subr.bf16.mxu0 %v10545
          %11138 = vmatpush1.bf16.msra.mxu0 %v10544
          %11139 = vmatprep.subr.bf16.mxu0 %v10549
          %11140 = vmatpush1.bf16.msra.mxu0 %v10548
          %11141 = vmatprep.subr.bf16.mxu0 %v10553
          %11142 = vmatpush1.bf16.msra.mxu0 %v10552
          %11143 = vmatprep.subr.bf16.mxu0 %v10557
          %11144 = vmatpush1.bf16.msra.mxu0 %v10556
          %11145 = vmatprep.subr.bf16.mxu0 %v10561
          %11146 = vmatpush1.bf16.msra.mxu0 %v10560
          %11147 = vmatprep.subr.bf16.mxu0 %v10565
          %11148 = vmatpush1.bf16.msra.mxu0 %v10564
          %11149 = vmatprep.subr.bf16.mxu0 %v10569
          %11150 = vmatpush1.bf16.msra.mxu0 %v10568
          %11151 = vmatprep.subr.bf16.mxu0 %v10573
          %11152 = vmatpush1.bf16.msra.mxu0 %v10572
          %11153 = vmatprep.subr.bf16.mxu0 %v10577
          %11154 = vmatpush1.bf16.msra.mxu0 %v10576
          %11155 = vmatprep.subr.bf16.mxu0 %v10581
          %11156 = vmatpush1.bf16.msra.mxu0 %v10580
          %11157 = vmatprep.mubr.bf16.mxu0 %v9279
          %11158 = vmatmul.mubr.bf16.gmra.mrb[0].mxu0 %v9278
          %v11159 = vpop.f32.mrb[0].mxu0
          %v11160 = vadd.f32 %v11119, %v11159
          %v11161 = vpop.f32.mrb[0].mxu0
          %v11162 = vadd.f32 %v11121, %v11161
          %v11163 = vpop.f32.mrb[0].mxu0
          %v11164 = vpop.f32.mrb[0].mxu0
          %11165 = vdwg.mxu0
          %v11166 = vmax.f32 %v10996, 0.0
          %v11167 = vmax.f32 %v10998, 0.0
          %v11168 = vmax.f32 %v11160, 0.0
          %v11169 = vmax.f32 %v11162, 0.0
          %v11170 = vpack.c.bf16 %v11166, %v11166
          %v11171 = vpack.c.bf16 %v11167, %v11167
          %v11172 = vpack.c.bf16 %v11168, %v11168
          %v11173 = vpack.c.bf16 %v11169, %v11169
          %v11174 = vld [vmem:[%s13] sm:$0xff]
          %v11175 = vld [vmem:[%s13 + $0x8] sm:$0xff]
          %v11176 = vld [vmem:[%s13 + $0x10] sm:$0xff]
          %v11177 = vld [vmem:[%s13 + $0x18] sm:$0xff]
          %v11178 = vld [vmem:[%s13 + $0x20] sm:$0xff]
          %v11179 = vld [vmem:[%s13 + $0x28] sm:$0xff]
          %v11180 = vld [vmem:[%s13 + $0x30] sm:$0xff]
          %v11181 = vld [vmem:[%s13 + $0x38] sm:$0xff]
          %v11182 = vld [vmem:[%s13 + $0x40] sm:$0xff]
          %v11183 = vld [vmem:[%s13 + $0x48] sm:$0xff]
          %v11184 = vld [vmem:[%s13 + $0x50] sm:$0xff]
          %v11185 = vld [vmem:[%s13 + $0x58] sm:$0xff]
          %v11186 = vld [vmem:[%s13 + $0x60] sm:$0xff]
          %v11187 = vld [vmem:[%s13 + $0x68] sm:$0xff]
          %v11188 = vld [vmem:[%s13 + $0x70] sm:$0xff]
          %v11189 = vld [vmem:[%s13 + $0x78] sm:$0xff]
          %v11190 = vld [vmem:[%s13 + $0x80] sm:$0xff]
          %v11191 = vld [vmem:[%s13 + $0x88] sm:$0xff]
          %v11192 = vld [vmem:[%s13 + $0x90] sm:$0xff]
          %v11193 = vld [vmem:[%s13 + $0x98] sm:$0xff]
          %v11194 = vld [vmem:[%s13 + $0xa0] sm:$0xff]
          %v11195 = vld [vmem:[%s13 + $0xa8] sm:$0xff]
          %v11196 = vld [vmem:[%s13 + $0xb0] sm:$0xff]
          %v11197 = vld [vmem:[%s13 + $0xb8] sm:$0xff]
          %v11198 = vld [vmem:[%s13 + $0xc0] sm:$0xff]
          %v11199 = vld [vmem:[%s13 + $0xc8] sm:$0xff]
          %v11200 = vld [vmem:[%s13 + $0xd0] sm:$0xff]
          %v11201 = vld [vmem:[%s13 + $0xd8] sm:$0xff]
          %v11202 = vld [vmem:[%s13 + $0xe0] sm:$0xff]
          %v11203 = vld [vmem:[%s13 + $0xe8] sm:$0xff]
          %v11204 = vld [vmem:[%s13 + $0xf0] sm:$0xff]
          %v11205 = vld [vmem:[%s13 + $0xf8] sm:$0xff]
          %v11206 = vld [vmem:[%s13 + $0x100] sm:$0xff]
          %v11207 = vld [vmem:[%s13 + $0x108] sm:$0xff]
          %v11208 = vld [vmem:[%s13 + $0x110] sm:$0xff]
          %v11209 = vld [vmem:[%s13 + $0x118] sm:$0xff]
          %v11210 = vld [vmem:[%s13 + $0x120] sm:$0xff]
          %v11211 = vld [vmem:[%s13 + $0x128] sm:$0xff]
          %v11212 = vld [vmem:[%s13 + $0x130] sm:$0xff]
          %v11213 = vld [vmem:[%s13 + $0x138] sm:$0xff]
          %v11214 = vld [vmem:[%s13 + $0x140] sm:$0xff]
          %v11215 = vld [vmem:[%s13 + $0x148] sm:$0xff]
          %v11216 = vld [vmem:[%s13 + $0x150] sm:$0xff]
          %v11217 = vld [vmem:[%s13 + $0x158] sm:$0xff]
          %v11218 = vld [vmem:[%s13 + $0x160] sm:$0xff]
          %v11219 = vld [vmem:[%s13 + $0x168] sm:$0xff]
          %v11220 = vld [vmem:[%s13 + $0x170] sm:$0xff]
          %v11221 = vld [vmem:[%s13 + $0x178] sm:$0xff]
          %v11222 = vld [vmem:[%s13 + $0x180] sm:$0xff]
          %v11223 = vld [vmem:[%s13 + $0x188] sm:$0xff]
          %v11224 = vld [vmem:[%s13 + $0x190] sm:$0xff]
          %v11225 = vld [vmem:[%s13 + $0x198] sm:$0xff]
          %v11226 = vld [vmem:[%s13 + $0x1a0] sm:$0xff]
          %v11227 = vld [vmem:[%s13 + $0x1a8] sm:$0xff]
          %v11228 = vld [vmem:[%s13 + $0x1b0] sm:$0xff]
          %v11229 = vld [vmem:[%s13 + $0x1b8] sm:$0xff]
          %v11230 = vld [vmem:[%s13 + $0x1c0] sm:$0xff]
          %v11231 = vld [vmem:[%s13 + $0x1c8] sm:$0xff]
          %v11232 = vld [vmem:[%s13 + $0x1d0] sm:$0xff]
          %v11233 = vld [vmem:[%s13 + $0x1d8] sm:$0xff]
          %v11234 = vld [vmem:[%s13 + $0x1e0] sm:$0xff]
          %v11235 = vld [vmem:[%s13 + $0x1e8] sm:$0xff]
          %v11236 = vld [vmem:[%s13 + $0x1f0] sm:$0xff]
          %v11237 = vld [vmem:[%s13 + $0x1f8] sm:$0xff]
          %v11238 = vld [vmem:[%s14] sm:$0x3]
          %v11240 = vlaneseq
          %v11241 = vshrl.u32 %v11240, 7
          %v11242 = vsub.s32 0, %v11241
          %v11243 = vrot.slane %v11238, %v11242
          %v11244 = vlaneseq
          %v11245 = vshrl.u32 %v11244, 7
          %v11246 = vsub.s32 1, %v11245
          %v11247 = vrot.slane %v11238, %v11246
          %v11314 = vunpack.c.l.b16 %v11174
          %v11315 = vunpack.c.h.b16 %v11174
          %v11316 = vunpack.c.l.b16 %v11175
          %v11317 = vunpack.c.h.b16 %v11175
          %v11318 = vunpack.c.l.b16 %v11176
          %v11319 = vunpack.c.h.b16 %v11176
          %v11320 = vunpack.c.l.b16 %v11177
          %v11321 = vunpack.c.h.b16 %v11177
          %v11322 = vunpack.c.l.b16 %v11178
          %v11323 = vunpack.c.h.b16 %v11178
          %v11324 = vunpack.c.l.b16 %v11179
          %v11325 = vunpack.c.h.b16 %v11179
          %v11326 = vunpack.c.l.b16 %v11180
          %v11327 = vunpack.c.h.b16 %v11180
          %v11328 = vunpack.c.l.b16 %v11181
          %v11329 = vunpack.c.h.b16 %v11181
          %v11330 = vunpack.c.l.b16 %v11182
          %v11331 = vunpack.c.h.b16 %v11182
          %v11332 = vunpack.c.l.b16 %v11183
          %v11333 = vunpack.c.h.b16 %v11183
          %v11334 = vunpack.c.l.b16 %v11184
          %v11335 = vunpack.c.h.b16 %v11184
          %v11336 = vunpack.c.l.b16 %v11185
          %v11337 = vunpack.c.h.b16 %v11185
          %v11338 = vunpack.c.l.b16 %v11186
          %v11339 = vunpack.c.h.b16 %v11186
          %v11340 = vunpack.c.l.b16 %v11187
          %v11341 = vunpack.c.h.b16 %v11187
          %v11342 = vunpack.c.l.b16 %v11188
          %v11343 = vunpack.c.h.b16 %v11188
          %v11344 = vunpack.c.l.b16 %v11189
          %v11345 = vunpack.c.h.b16 %v11189
          %v11346 = vunpack.c.l.b16 %v11190
          %v11347 = vunpack.c.h.b16 %v11190
          %v11348 = vunpack.c.l.b16 %v11191
          %v11349 = vunpack.c.h.b16 %v11191
          %v11350 = vunpack.c.l.b16 %v11192
          %v11351 = vunpack.c.h.b16 %v11192
          %v11352 = vunpack.c.l.b16 %v11193
          %v11353 = vunpack.c.h.b16 %v11193
          %v11354 = vunpack.c.l.b16 %v11194
          %v11355 = vunpack.c.h.b16 %v11194
          %v11356 = vunpack.c.l.b16 %v11195
          %v11357 = vunpack.c.h.b16 %v11195
          %v11358 = vunpack.c.l.b16 %v11196
          %v11359 = vunpack.c.h.b16 %v11196
          %v11360 = vunpack.c.l.b16 %v11197
          %v11361 = vunpack.c.h.b16 %v11197
          %v11362 = vunpack.c.l.b16 %v11198
          %v11363 = vunpack.c.h.b16 %v11198
          %v11364 = vunpack.c.l.b16 %v11199
          %v11365 = vunpack.c.h.b16 %v11199
          %v11366 = vunpack.c.l.b16 %v11200
          %v11367 = vunpack.c.h.b16 %v11200
          %v11368 = vunpack.c.l.b16 %v11201
          %v11369 = vunpack.c.h.b16 %v11201
          %v11370 = vunpack.c.l.b16 %v11202
          %v11371 = vunpack.c.h.b16 %v11202
          %v11372 = vunpack.c.l.b16 %v11203
          %v11373 = vunpack.c.h.b16 %v11203
          %v11374 = vunpack.c.l.b16 %v11204
          %v11375 = vunpack.c.h.b16 %v11204
          %v11376 = vunpack.c.l.b16 %v11205
          %v11377 = vunpack.c.h.b16 %v11205
          %v11378 = vunpack.c.l.b16 %v11206
          %v11379 = vunpack.c.h.b16 %v11206
          %v11380 = vunpack.c.l.b16 %v11207
          %v11381 = vunpack.c.h.b16 %v11207
          %v11382 = vunpack.c.l.b16 %v11208
          %v11383 = vunpack.c.h.b16 %v11208
          %v11384 = vunpack.c.l.b16 %v11209
          %v11385 = vunpack.c.h.b16 %v11209
          %v11386 = vunpack.c.l.b16 %v11210
          %v11387 = vunpack.c.h.b16 %v11210
          %v11388 = vunpack.c.l.b16 %v11211
          %v11389 = vunpack.c.h.b16 %v11211
          %v11390 = vunpack.c.l.b16 %v11212
          %v11391 = vunpack.c.h.b16 %v11212
          %v11392 = vunpack.c.l.b16 %v11213
          %v11393 = vunpack.c.h.b16 %v11213
          %v11394 = vunpack.c.l.b16 %v11214
          %v11395 = vunpack.c.h.b16 %v11214
          %v11396 = vunpack.c.l.b16 %v11215
          %v11397 = vunpack.c.h.b16 %v11215
          %v11398 = vunpack.c.l.b16 %v11216
          %v11399 = vunpack.c.h.b16 %v11216
          %v11400 = vunpack.c.l.b16 %v11217
          %v11401 = vunpack.c.h.b16 %v11217
          %v11402 = vunpack.c.l.b16 %v11218
          %v11403 = vunpack.c.h.b16 %v11218
          %v11404 = vunpack.c.l.b16 %v11219
          %v11405 = vunpack.c.h.b16 %v11219
          %v11406 = vunpack.c.l.b16 %v11220
          %v11407 = vunpack.c.h.b16 %v11220
          %v11408 = vunpack.c.l.b16 %v11221
          %v11409 = vunpack.c.h.b16 %v11221
          %v11410 = vunpack.c.l.b16 %v11222
          %v11411 = vunpack.c.h.b16 %v11222
          %v11412 = vunpack.c.l.b16 %v11223
          %v11413 = vunpack.c.h.b16 %v11223
          %v11414 = vunpack.c.l.b16 %v11224
          %v11415 = vunpack.c.h.b16 %v11224
          %v11416 = vunpack.c.l.b16 %v11225
          %v11417 = vunpack.c.h.b16 %v11225
          %v11418 = vunpack.c.l.b16 %v11226
          %v11419 = vunpack.c.h.b16 %v11226
          %v11420 = vunpack.c.l.b16 %v11227
          %v11421 = vunpack.c.h.b16 %v11227
          %v11422 = vunpack.c.l.b16 %v11228
          %v11423 = vunpack.c.h.b16 %v11228
          %v11424 = vunpack.c.l.b16 %v11229
          %v11425 = vunpack.c.h.b16 %v11229
          %v11426 = vunpack.c.l.b16 %v11230
          %v11427 = vunpack.c.h.b16 %v11230
          %v11428 = vunpack.c.l.b16 %v11231
          %v11429 = vunpack.c.h.b16 %v11231
          %v11430 = vunpack.c.l.b16 %v11232
          %v11431 = vunpack.c.h.b16 %v11232
          %v11432 = vunpack.c.l.b16 %v11233
          %v11433 = vunpack.c.h.b16 %v11233
          %v11434 = vunpack.c.l.b16 %v11234
          %v11435 = vunpack.c.h.b16 %v11234
          %v11436 = vunpack.c.l.b16 %v11235
          %v11437 = vunpack.c.h.b16 %v11235
          %v11438 = vunpack.c.l.b16 %v11236
          %v11439 = vunpack.c.h.b16 %v11236
          %v11440 = vunpack.c.l.b16 %v11237
          %v11441 = vunpack.c.h.b16 %v11237
          %v11442 = vpack.c.b16 %v11316, %v11314
          %v11443 = vpack.c.b16 %v11317, %v11315
          %v11444 = vpack.c.b16 %v11320, %v11318
          %v11445 = vpack.c.b16 %v11321, %v11319
          %v11446 = vpack.c.b16 %v11324, %v11322
          %v11447 = vpack.c.b16 %v11325, %v11323
          %v11448 = vpack.c.b16 %v11328, %v11326
          %v11449 = vpack.c.b16 %v11329, %v11327
          %v11450 = vpack.c.b16 %v11332, %v11330
          %v11451 = vpack.c.b16 %v11333, %v11331
          %v11452 = vpack.c.b16 %v11336, %v11334
          %v11453 = vpack.c.b16 %v11337, %v11335
          %v11454 = vpack.c.b16 %v11340, %v11338
          %v11455 = vpack.c.b16 %v11341, %v11339
          %v11456 = vpack.c.b16 %v11344, %v11342
          %v11457 = vpack.c.b16 %v11345, %v11343
          %v11458 = vpack.c.b16 %v11348, %v11346
          %v11459 = vpack.c.b16 %v11349, %v11347
          %v11460 = vpack.c.b16 %v11352, %v11350
          %v11461 = vpack.c.b16 %v11353, %v11351
          %v11462 = vpack.c.b16 %v11356, %v11354
          %v11463 = vpack.c.b16 %v11357, %v11355
          %v11464 = vpack.c.b16 %v11360, %v11358
          %v11465 = vpack.c.b16 %v11361, %v11359
          %v11466 = vpack.c.b16 %v11364, %v11362
          %v11467 = vpack.c.b16 %v11365, %v11363
          %v11468 = vpack.c.b16 %v11368, %v11366
          %v11469 = vpack.c.b16 %v11369, %v11367
          %v11470 = vpack.c.b16 %v11372, %v11370
          %v11471 = vpack.c.b16 %v11373, %v11371
          %v11472 = vpack.c.b16 %v11376, %v11374
          %v11473 = vpack.c.b16 %v11377, %v11375
          %v11474 = vpack.c.b16 %v11380, %v11378
          %v11475 = vpack.c.b16 %v11381, %v11379
          %v11476 = vpack.c.b16 %v11384, %v11382
          %v11477 = vpack.c.b16 %v11385, %v11383
          %v11478 = vpack.c.b16 %v11388, %v11386
          %v11479 = vpack.c.b16 %v11389, %v11387
          %v11480 = vpack.c.b16 %v11392, %v11390
          %v11481 = vpack.c.b16 %v11393, %v11391
          %v11482 = vpack.c.b16 %v11396, %v11394
          %v11483 = vpack.c.b16 %v11397, %v11395
          %v11484 = vpack.c.b16 %v11400, %v11398
          %v11485 = vpack.c.b16 %v11401, %v11399
          %v11486 = vpack.c.b16 %v11404, %v11402
          %v11487 = vpack.c.b16 %v11405, %v11403
          %v11488 = vpack.c.b16 %v11408, %v11406
          %v11489 = vpack.c.b16 %v11409, %v11407
          %v11490 = vpack.c.b16 %v11412, %v11410
          %v11491 = vpack.c.b16 %v11413, %v11411
          %v11492 = vpack.c.b16 %v11416, %v11414
          %v11493 = vpack.c.b16 %v11417, %v11415
          %v11494 = vpack.c.b16 %v11420, %v11418
          %v11495 = vpack.c.b16 %v11421, %v11419
          %v11496 = vpack.c.b16 %v11424, %v11422
          %v11497 = vpack.c.b16 %v11425, %v11423
          %v11498 = vpack.c.b16 %v11428, %v11426
          %v11499 = vpack.c.b16 %v11429, %v11427
          %v11500 = vpack.c.b16 %v11432, %v11430
          %v11501 = vpack.c.b16 %v11433, %v11431
          %v11502 = vpack.c.b16 %v11436, %v11434
          %v11503 = vpack.c.b16 %v11437, %v11435
          %v11504 = vpack.c.b16 %v11440, %v11438
          %v11505 = vpack.c.b16 %v11441, %v11439
          %11570 = vmatprep.subr.bf16.mxu0 %v11443
          %11571 = vmatpush1.bf16.msra.mxu0 %v11442
          %11572 = vmatprep.subr.bf16.mxu0 %v11445
          %11573 = vmatpush1.bf16.msra.mxu0 %v11444
          %11574 = vmatprep.subr.bf16.mxu0 %v11447
          %11575 = vmatpush1.bf16.msra.mxu0 %v11446
          %11576 = vmatprep.subr.bf16.mxu0 %v11449
          %11577 = vmatpush1.bf16.msra.mxu0 %v11448
          %11578 = vmatprep.subr.bf16.mxu0 %v11451
          %11579 = vmatpush1.bf16.msra.mxu0 %v11450
          %11580 = vmatprep.subr.bf16.mxu0 %v11453
          %11581 = vmatpush1.bf16.msra.mxu0 %v11452
          %11582 = vmatprep.subr.bf16.mxu0 %v11455
          %11583 = vmatpush1.bf16.msra.mxu0 %v11454
          %11584 = vmatprep.subr.bf16.mxu0 %v11457
          %11585 = vmatpush1.bf16.msra.mxu0 %v11456
          %11586 = vmatprep.subr.bf16.mxu0 %v11459
          %11587 = vmatpush1.bf16.msra.mxu0 %v11458
          %11588 = vmatprep.subr.bf16.mxu0 %v11461
          %11589 = vmatpush1.bf16.msra.mxu0 %v11460
          %11590 = vmatprep.subr.bf16.mxu0 %v11463
          %11591 = vmatpush1.bf16.msra.mxu0 %v11462
          %11592 = vmatprep.subr.bf16.mxu0 %v11465
          %11593 = vmatpush1.bf16.msra.mxu0 %v11464
          %11594 = vmatprep.subr.bf16.mxu0 %v11467
          %11595 = vmatpush1.bf16.msra.mxu0 %v11466
          %11596 = vmatprep.subr.bf16.mxu0 %v11469
          %11597 = vmatpush1.bf16.msra.mxu0 %v11468
          %11598 = vmatprep.subr.bf16.mxu0 %v11471
          %11599 = vmatpush1.bf16.msra.mxu0 %v11470
          %11600 = vmatprep.subr.bf16.mxu0 %v11473
          %11601 = vmatpush1.bf16.msra.mxu0 %v11472
          %11602 = vmatprep.mubr.bf16.mxu0 %v11171
          %11603 = vmatmul.mubr.bf16.gmra.mrb[0].mxu0 %v11170
          %v11604 = vpop.f32.mrb[0].mxu0
          %v11605 = vadd.f32 %v11243, %v11604
          %v11606 = vpop.f32.mrb[0].mxu0
          %v11607 = vadd.f32 %v11247, %v11606
          %v11608 = vpop.f32.mrb[0].mxu0
          %v11609 = vpop.f32.mrb[0].mxu0
          %11610 = vdwg.mxu0
          %11611 = vmatprep.subr.bf16.mxu0 %v11475
          %11612 = vmatpush1.bf16.msra.mxu0 %v11474
          %11613 = vmatprep.subr.bf16.mxu0 %v11477
          %11614 = vmatpush1.bf16.msra.mxu0 %v11476
          %11615 = vmatprep.subr.bf16.mxu0 %v11479
          %11616 = vmatpush1.bf16.msra.mxu0 %v11478
          %11617 = vmatprep.subr.bf16.mxu0 %v11481
          %11618 = vmatpush1.bf16.msra.mxu0 %v11480
          %11619 = vmatprep.subr.bf16.mxu0 %v11483
          %11620 = vmatpush1.bf16.msra.mxu0 %v11482
          %11621 = vmatprep.subr.bf16.mxu0 %v11485
          %11622 = vmatpush1.bf16.msra.mxu0 %v11484
          %11623 = vmatprep.subr.bf16.mxu0 %v11487
          %11624 = vmatpush1.bf16.msra.mxu0 %v11486
          %11625 = vmatprep.subr.bf16.mxu0 %v11489
          %11626 = vmatpush1.bf16.msra.mxu0 %v11488
          %11627 = vmatprep.subr.bf16.mxu0 %v11491
          %11628 = vmatpush1.bf16.msra.mxu0 %v11490
          %11629 = vmatprep.subr.bf16.mxu0 %v11493
          %11630 = vmatpush1.bf16.msra.mxu0 %v11492
          %11631 = vmatprep.subr.bf16.mxu0 %v11495
          %11632 = vmatpush1.bf16.msra.mxu0 %v11494
          %11633 = vmatprep.subr.bf16.mxu0 %v11497
          %11634 = vmatpush1.bf16.msra.mxu0 %v11496
          %11635 = vmatprep.subr.bf16.mxu0 %v11499
          %11636 = vmatpush1.bf16.msra.mxu0 %v11498
          %11637 = vmatprep.subr.bf16.mxu0 %v11501
          %11638 = vmatpush1.bf16.msra.mxu0 %v11500
          %11639 = vmatprep.subr.bf16.mxu0 %v11503
          %11640 = vmatpush1.bf16.msra.mxu0 %v11502
          %11641 = vmatprep.subr.bf16.mxu0 %v11505
          %11642 = vmatpush1.bf16.msra.mxu0 %v11504
          %11643 = vmatprep.mubr.bf16.mxu0 %v11173
          %11644 = vmatmul.mubr.bf16.gmra.mrb[0].mxu0 %v11172
          %v11645 = vpop.f32.mrb[0].mxu0
          %v11646 = vadd.f32 %v11605, %v11645
          %v11647 = vpop.f32.mrb[0].mxu0
          %v11648 = vadd.f32 %v11607, %v11647
          %v11649 = vpop.f32.mrb[0].mxu0
          %v11650 = vpop.f32.mrb[0].mxu0
          %11651 = vdwg.mxu0
          %v11652 = vmax.f32 %v11646, 0.0
          %v11653 = vmax.f32 %v11648, 0.0
          %v11654 = vpack.c.bf16 %v11652, %v11652
          %v11655 = vpack.c.bf16 %v11653, %v11653
          %v11656 = vld [vmem:[%s15] sm:$0xf]
          %v11657 = vld [vmem:[%s15 + $0x4] sm:$0xf]
          %v11658 = vld [vmem:[%s15 + $0x8] sm:$0xf]
          %v11659 = vld [vmem:[%s15 + $0xc] sm:$0xf]
          %v11660 = vld [vmem:[%s15 + $0x10] sm:$0xf]
          %v11661 = vld [vmem:[%s15 + $0x14] sm:$0xf]
          %v11662 = vld [vmem:[%s15 + $0x18] sm:$0xf]
          %v11663 = vld [vmem:[%s15 + $0x1c] sm:$0xf]
          %v11664 = vld [vmem:[%s15 + $0x20] sm:$0xf]
          %v11665 = vld [vmem:[%s15 + $0x24] sm:$0xf]
          %v11666 = vld [vmem:[%s15 + $0x28] sm:$0xf]
          %v11667 = vld [vmem:[%s15 + $0x2c] sm:$0xf]
          %v11668 = vld [vmem:[%s15 + $0x30] sm:$0xf]
          %v11669 = vld [vmem:[%s15 + $0x34] sm:$0xf]
          %v11670 = vld [vmem:[%s15 + $0x38] sm:$0xf]
          %v11671 = vld [vmem:[%s15 + $0x3c] sm:$0xf]
          %v11672 = vld [vmem:[%s15 + $0x40] sm:$0xf]
          %v11673 = vld [vmem:[%s15 + $0x44] sm:$0xf]
          %v11674 = vld [vmem:[%s15 + $0x48] sm:$0xf]
          %v11675 = vld [vmem:[%s15 + $0x4c] sm:$0xf]
          %v11676 = vld [vmem:[%s15 + $0x50] sm:$0xf]
          %v11677 = vld [vmem:[%s15 + $0x54] sm:$0xf]
          %v11678 = vld [vmem:[%s15 + $0x58] sm:$0xf]
          %v11679 = vld [vmem:[%s15 + $0x5c] sm:$0xf]
          %v11680 = vld [vmem:[%s15 + $0x60] sm:$0xf]
          %v11681 = vld [vmem:[%s15 + $0x64] sm:$0xf]
          %v11682 = vld [vmem:[%s15 + $0x68] sm:$0xf]
          %v11683 = vld [vmem:[%s15 + $0x6c] sm:$0xf]
          %v11684 = vld [vmem:[%s15 + $0x70] sm:$0xf]
          %v11685 = vld [vmem:[%s15 + $0x74] sm:$0xf]
          %v11686 = vld [vmem:[%s15 + $0x78] sm:$0xf]
          %v11687 = vld [vmem:[%s15 + $0x7c] sm:$0xf]
          %v11688 = vld [vmem:[#allocation16] sm:$0x1]
          %v11690 = vlaneseq
          %v11691 = vshrl.u32 %v11690, 7
          %v11692 = vsub.s32 0, %v11691
          %v11693 = vrot.slane %v11688, %v11692
          %v11727 = vunpack.c.l.b16 %v11656
          %v11728 = vunpack.c.l.b16 %v11657
          %v11729 = vunpack.c.l.b16 %v11658
          %v11730 = vunpack.c.l.b16 %v11659
          %v11731 = vunpack.c.l.b16 %v11660
          %v11732 = vunpack.c.l.b16 %v11661
          %v11733 = vunpack.c.l.b16 %v11662
          %v11734 = vunpack.c.l.b16 %v11663
          %v11735 = vunpack.c.l.b16 %v11664
          %v11736 = vunpack.c.l.b16 %v11665
          %v11737 = vunpack.c.l.b16 %v11666
          %v11738 = vunpack.c.l.b16 %v11667
          %v11739 = vunpack.c.l.b16 %v11668
          %v11740 = vunpack.c.l.b16 %v11669
          %v11741 = vunpack.c.l.b16 %v11670
          %v11742 = vunpack.c.l.b16 %v11671
          %v11743 = vunpack.c.l.b16 %v11672
          %v11744 = vunpack.c.l.b16 %v11673
          %v11745 = vunpack.c.l.b16 %v11674
          %v11746 = vunpack.c.l.b16 %v11675
          %v11747 = vunpack.c.l.b16 %v11676
          %v11748 = vunpack.c.l.b16 %v11677
          %v11749 = vunpack.c.l.b16 %v11678
          %v11750 = vunpack.c.l.b16 %v11679
          %v11751 = vunpack.c.l.b16 %v11680
          %v11752 = vunpack.c.l.b16 %v11681
          %v11753 = vunpack.c.l.b16 %v11682
          %v11754 = vunpack.c.l.b16 %v11683
          %v11755 = vunpack.c.l.b16 %v11684
          %v11756 = vunpack.c.l.b16 %v11685
          %v11757 = vunpack.c.l.b16 %v11686
          %v11758 = vunpack.c.l.b16 %v11687
          %v11759 = vpack.c.b16 %v11728, %v11727
          %v11760 = vpack.c.b16 %v11730, %v11729
          %v11761 = vpack.c.b16 %v11732, %v11731
          %v11762 = vpack.c.b16 %v11734, %v11733
          %v11763 = vpack.c.b16 %v11736, %v11735
          %v11764 = vpack.c.b16 %v11738, %v11737
          %v11765 = vpack.c.b16 %v11740, %v11739
          %v11766 = vpack.c.b16 %v11742, %v11741
          %v11767 = vpack.c.b16 %v11744, %v11743
          %v11768 = vpack.c.b16 %v11746, %v11745
          %v11769 = vpack.c.b16 %v11748, %v11747
          %v11770 = vpack.c.b16 %v11750, %v11749
          %v11771 = vpack.c.b16 %v11752, %v11751
          %v11772 = vpack.c.b16 %v11754, %v11753
          %v11773 = vpack.c.b16 %v11756, %v11755
          %v11774 = vpack.c.b16 %v11758, %v11757
          %11791 = vmatprep.subr.bf16.mxu0 0
          %11792 = vmatpush1.bf16.msra.mxu0 %v11759
          %11793 = vmatprep.subr.bf16.mxu0 0
          %11794 = vmatpush1.bf16.msra.mxu0 %v11760
          %11795 = vmatprep.subr.bf16.mxu0 0
          %11796 = vmatpush1.bf16.msra.mxu0 %v11761
          %11797 = vmatprep.subr.bf16.mxu0 0
          %11798 = vmatpush1.bf16.msra.mxu0 %v11762
          %11799 = vmatprep.subr.bf16.mxu0 0
          %11800 = vmatpush1.bf16.msra.mxu0 %v11763
          %11801 = vmatprep.subr.bf16.mxu0 0
          %11802 = vmatpush1.bf16.msra.mxu0 %v11764
          %11803 = vmatprep.subr.bf16.mxu0 0
          %11804 = vmatpush1.bf16.msra.mxu0 %v11765
          %11805 = vmatprep.subr.bf16.mxu0 0
          %11806 = vmatpush1.bf16.msra.mxu0 %v11766
          %11807 = vmatprep.subr.bf16.mxu0 0
          %11808 = vmatpush1.bf16.msra.mxu0 %v11767
          %11809 = vmatprep.subr.bf16.mxu0 0
          %11810 = vmatpush1.bf16.msra.mxu0 %v11768
          %11811 = vmatprep.subr.bf16.mxu0 0
          %11812 = vmatpush1.bf16.msra.mxu0 %v11769
          %11813 = vmatprep.subr.bf16.mxu0 0
          %11814 = vmatpush1.bf16.msra.mxu0 %v11770
          %11815 = vmatprep.subr.bf16.mxu0 0
          %11816 = vmatpush1.bf16.msra.mxu0 %v11771
          %11817 = vmatprep.subr.bf16.mxu0 0
          %11818 = vmatpush1.bf16.msra.mxu0 %v11772
          %11819 = vmatprep.subr.bf16.mxu0 0
          %11820 = vmatpush1.bf16.msra.mxu0 %v11773
          %11821 = vmatprep.subr.bf16.mxu0 0
          %11822 = vmatpush1.bf16.msra.mxu0 %v11774
          %11823 = vmatprep.mubr.bf16.mxu0 %v11655
          %11824 = vmatmul.mubr.bf16.gmra.mrb[0].mxu0 %v11654
          %v11825 = vpop.f32.mrb[0].mxu0
          %v11826 = vadd.f32 %v11693, %v11825
          %v11827 = vpop.f32.mrb[0].mxu0
          %v11828 = vpop.f32.mrb[0].mxu0
          %v11829 = vpop.f32.mrb[0].mxu0
          %11830 = vdwg.mxu0
          %11831 = vst [vmem:[%s693] sm:$0xff] %v11826
        $region136: #{pointnet_forward.1} parent=87 // pred_fallthru
          _
        %p11832 = scmp.lt.s32.totalorder %s37, 1
        %s11833 = scalar_select %p11832, %s37, 1
        %s11834 = smul.addr %s11833, 8
        %s11835 = scalar_lea.vmem %s17, %s11834
        // Predicated region
        $region137: #{pointnet_forward.1} parent=87 // pred_check
          %p11836 = pneg %p427
        $region138: #{pointnet_forward.1} parent=87 // pred_check_branch
          %11838 = sbr.rel (%p11836) target = $region140
        $region139: #{pointnet_forward.1} parent=87 // pred_region
          _
        $region140: #{pointnet_forward.1} parent=87 // pred_fallthru
          _
      $region88: #{pointnet_forward.1} parent=5 // pred_fallthru
        _
      %p11839 = scmp.le.s32.totalorder 2, %s28
      // Predicated region
      $region141: #{pointnet_forward.1} parent=5 // pred_check
        %p11840 = pneg %p11839
      $region142: #{pointnet_forward.1} parent=5 // pred_check_branch
        %11842 = sbr.rel (%p11840) target = $region144
      $region143: #{pointnet_forward.1} parent=5 // pred_region
        %s11843 = ssub.s32 %s28, 2
        // Predicated region
        $region145: #{pointnet_forward.1} parent=143 // pred_check
          %p11844 = pneg %p433
        $region146: #{pointnet_forward.1} parent=143 // pred_check_branch
          %11846 = sbr.rel (%p11844) target = $region148
        $region147: #{pointnet_forward.1} parent=143 // pred_region
          %p11847 = scmp.lt.s32.totalorder %s39, 1
          %s11848 = scalar_select %p11847, %s39, 1
          %s11849 = smul.addr %s11848, 8
          %s11850 = scalar_lea.vmem %s17, %s11849
        $region148: #{pointnet_forward.1} parent=143 // pred_fallthru
          _
      $region144: #{pointnet_forward.1} parent=5 // pred_fallthru
        _
    $region6: #{pointnet_forward.1} parent=1 // loop_footer
      %s32 = sadd.s32 1, %s28
    $region7: #{pointnet_forward.1} parent=1 // loop_footer_branch
      %27 = sbr.rel target = $region3
    $region8: #{pointnet_forward.1} parent=1 // loop_exit
      _
    %11851 = vsyncpa [#allocation4], 1
    %s11852 = scalar_lea.sflag [#allocation4], 1
    %11853 = vsyncpa %s11852, 1
    %11854 = vsyncpa [#allocation6], 1
    %11855 = vsyncpa [#allocation9], 1
    %11856 = vsyncpa [#allocation12], 1
    %11857 = vsyncpa [#allocation15], 1

</llo_original>
